<compile_context>
chip_gen: v7x
topology: tpu7x:2x2x1
jax: 0.10.0
libtpu: 0.0.40
codegen_flags: <defaults>
</compile_context>

<pallas_src>
import math

import jax
import jax.numpy as jnp
from jax.experimental import pallas as pl
from jax.experimental.pallas import tpu as pltpu

# ---- LatentModule(mod='a') static configuration ---------------------------
SEQ_LEN = 220                 # InputModel seq_len
FEAT = 73                     # InputModel feat_dim
D = 32                        # conv out channels == transformer d_model (nfeat)
KSIZE = 28                    # conv kernel size
STRIDE = 3                    # conv stride
L_OUT = (SEQ_LEN - KSIZE) // STRIDE + 1   # 65 conv output positions (== u)
NHEAD = 4
HEAD_DIM = D // NHEAD         # 8
FF_HID = 16                   # transformer feedforward dim (nhid)
LN_EPS = 1e-5

# Grouped-conv layout: one output row consumes 10 consecutive "row triples".
N_GROUP = -(-KSIZE // STRIDE)             # 10 tap groups
GROUP_W = STRIDE * FEAT                   # 219 lanes per folded triple
N_TRIPLE = L_OUT + N_GROUP - 1            # 74 triples per batch element
PAD_LEN = N_TRIPLE * STRIDE               # 222 padded time steps


def _layer_norm(x, g, b):
    mu = jnp.mean(x, axis=-1, keepdims=True)
    xc = x - mu
    var = jnp.mean(xc * xc, axis=-1, keepdims=True)
    return xc * jax.lax.rsqrt(var + LN_EPS) * g + b


def _latent_kernel(x3_ref, wc_ref, bc_ref, pe_ref,
                   wq_ref, bq_ref, wk_ref, bk_ref, wv_ref, bv_ref,
                   wo_ref, bo_ref, g1_ref, b1_ref,
                   w1f_ref, bf1_ref, w2f_ref, bf2_ref, g2_ref, b2_ref,
                   o_ref):
    f32 = jnp.float32

    # -- InputModel: Conv1d(FEAT->D, k=28, stride=3) as 10 contiguous matmuls --
    x3 = x3_ref[0]                                        # (74, 219)
    conv = jnp.zeros((L_OUT, D), f32)
    for j in range(N_GROUP):                              # static unroll (10)
        conv += jnp.dot(x3[j:j + L_OUT, :], wc_ref[j],
                        preferred_element_type=f32)
    conv += bc_ref[...]                                   # (1, D) broadcast

    # -- TransformerModel: scale + positional encoding --
    # TODO(synk): all nn.Dropout(0.4) layers are identity here (inference mode).
    h = conv * math.sqrt(D) + pe_ref[...]                 # (65, 32)

    # -- TransformerEncoderLayer: multi-head self-attention (per-head weights) --
    scale = 1.0 / math.sqrt(HEAD_DIM)
    attn = jnp.zeros((L_OUT, D), f32)
    for hd in range(NHEAD):                               # static unroll (4)
        q = jnp.dot(h, wq_ref[hd], preferred_element_type=f32) + bq_ref[hd]
        k = jnp.dot(h, wk_ref[hd], preferred_element_type=f32) + bk_ref[hd]
        v = jnp.dot(h, wv_ref[hd], preferred_element_type=f32) + bv_ref[hd]
        s = jnp.dot(q, k.T, preferred_element_type=f32) * scale    # (65, 65)
        s = s - jnp.max(s, axis=-1, keepdims=True)
        p = jnp.exp(s)
        p = p / jnp.sum(p, axis=-1, keepdims=True)
        hv = jnp.dot(p, v, preferred_element_type=f32)              # (65, 8)
        attn += jnp.dot(hv, wo_ref[hd], preferred_element_type=f32)
    attn += bo_ref[...]

    x1 = _layer_norm(h + attn, g1_ref[...], b1_ref[...])

    # -- feedforward block + second layernorm --
    ff = jnp.dot(x1, w1f_ref[...], preferred_element_type=f32) + bf1_ref[...]
    ff = jnp.maximum(ff, 0.0)                              # (65, 16)
    ff = jnp.dot(ff, w2f_ref[...], preferred_element_type=f32) + bf2_ref[...]
    x2 = _layer_norm(x1 + ff, g2_ref[...], b2_ref[...])

    # -- LatentModule final relu --
    o_ref[0] = jnp.maximum(x2, 0.0).astype(o_ref.dtype)


def latent_module_forward(src, params):
    """src: (B, SEQ_LEN, FEAT) f32 -> (B, L_OUT, D) f32 (LatentModule forward)."""
    (conv_w, conv_b, pe, wqkv, bqkv, wo, bo,
     g1, b1, w1f, bf1, w2f, bf2, g2, b2) = params
    B = src.shape[0]
    assert src.shape[1:] == (SEQ_LEN, FEAT)

    # Layout plumbing: fold each stride-3 row triple into one lane-dense row.
    x_pad = jnp.pad(src, ((0, 0), (0, PAD_LEN - SEQ_LEN), (0, 0)))
    x3 = x_pad.reshape(B, N_TRIPLE, GROUP_W)              # (B, 74, 219)

    # Regroup the PyTorch conv weight (D, FEAT, KSIZE) the same way:
    #   wc[j, r*FEAT + f, o] = conv_w[o, f, 3*j + r]   (zero for taps >= KSIZE)
    wk_taps = jnp.transpose(conv_w, (2, 1, 0))            # (28, 73, 32)
    wk_taps = jnp.pad(wk_taps, ((0, N_GROUP * STRIDE - KSIZE), (0, 0), (0, 0)))
    wc = wk_taps.reshape(N_GROUP, GROUP_W, D)             # (10, 219, 32)
    bc = conv_b.reshape(1, D)

    # Pre-split attention projections per head (avoids in-kernel lane slicing).
    def per_head(w):      # (D, D) -> (NHEAD, D, HEAD_DIM)
        return jnp.transpose(w.reshape(D, NHEAD, HEAD_DIM), (1, 0, 2))

    def per_head_b(bvec):  # (1, D) -> (NHEAD, 1, HEAD_DIM)
        return jnp.transpose(bvec.reshape(1, NHEAD, HEAD_DIM), (1, 0, 2))

    wq = per_head(wqkv[:, :D]);        bq = per_head_b(bqkv[:, :D])
    wk = per_head(wqkv[:, D:2 * D]);   bk = per_head_b(bqkv[:, D:2 * D])
    wv = per_head(wqkv[:, 2 * D:]);    bv = per_head_b(bqkv[:, 2 * D:])
    woh = wo.reshape(NHEAD, HEAD_DIM, D)                  # out-proj, per head

    const = lambda a: pl.BlockSpec(a.shape, lambda b: (0,) * len(a.shape))

    flops = 2 * B * (N_GROUP * L_OUT * GROUP_W * D            # conv
                     + 3 * NHEAD * L_OUT * D * HEAD_DIM       # q/k/v projections
                     + 2 * NHEAD * L_OUT * L_OUT * HEAD_DIM   # scores + p@v
                     + NHEAD * L_OUT * HEAD_DIM * D           # out projection
                     + 2 * L_OUT * D * FF_HID)                # feedforward
    cost = pl.CostEstimate(
        flops=flops,
        transcendentals=B * (NHEAD * L_OUT * L_OUT + 4 * L_OUT),
        bytes_accessed=4 * (B * (N_TRIPLE * GROUP_W + L_OUT * D)
                            + N_GROUP * GROUP_W * D))

    return pl.pallas_call(
        _latent_kernel,
        out_shape=jax.ShapeDtypeStruct((B, L_OUT, D), jnp.float32),
        grid=(B,),
        in_specs=[
            pl.BlockSpec((1, N_TRIPLE, GROUP_W), lambda b: (b, 0, 0)),
            const(wc), const(bc), const(pe),
            const(wq), const(bq), const(wk), const(bk), const(wv), const(bv),
            const(woh), const(bo), const(g1), const(b1),
            const(w1f), const(bf1), const(w2f), const(bf2), const(g2), const(b2),
        ],
        out_specs=pl.BlockSpec((1, L_OUT, D), lambda b: (b, 0, 0)),
        compiler_params=pltpu.CompilerParams(
            dimension_semantics=("parallel",)),
        cost_estimate=cost,
    )(x3, wc, bc, pe, wq, bq, wk, bk, wv, bv, woh, bo,
      g1, b1, w1f, bf1, w2f, bf2, g2, b2)


def make_positional_encoding(length, d_model):
    position = jnp.arange(length, dtype=jnp.float32)[:, None]
    div_term = jnp.exp(jnp.arange(0, d_model, 2, dtype=jnp.float32)
                       * (-math.log(10000.0) / d_model))
    pe = jnp.zeros((length, d_model), jnp.float32)
    pe = pe.at[:, 0::2].set(jnp.sin(position * div_term))
    pe = pe.at[:, 1::2].set(jnp.cos(position * div_term))
    return pe


def init_params(key):
    ks = jax.random.split(key, 14)

    def u(k, shape, fan_in):
        bound = 1.0 / math.sqrt(fan_in)
        return jax.random.uniform(k, shape, jnp.float32, -bound, bound)

    conv_w = u(ks[0], (D, FEAT, KSIZE), FEAT * KSIZE)     # PyTorch Conv1d layout
    conv_b = u(ks[1], (D,), FEAT * KSIZE)
    pe = make_positional_encoding(L_OUT, D)
    wqkv = u(ks[2], (D, 3 * D), D)                        # packed q|k|v, (in, out)
    bqkv = u(ks[3], (1, 3 * D), D)
    wo = u(ks[4], (D, D), D)
    bo = u(ks[5], (1, D), D)
    # Non-trivial LayerNorm affines so the check exercises gamma/beta paths.
    g1 = 1.0 + 0.1 * jax.random.normal(ks[6], (1, D), jnp.float32)
    b1 = 0.1 * jax.random.normal(ks[7], (1, D), jnp.float32)
    w1f = u(ks[8], (D, FF_HID), D)
    bf1 = u(ks[9], (1, FF_HID), D)
    w2f = u(ks[10], (FF_HID, D), FF_HID)
    bf2 = u(ks[11], (1, D), FF_HID)
    g2 = 1.0 + 0.1 * jax.random.normal(ks[12], (1, D), jnp.float32)
    b2 = 0.1 * jax.random.normal(ks[13], (1, D), jnp.float32)
    return (conv_w, conv_b, pe, wqkv, bqkv, wo, bo,
            g1, b1, w1f, bf1, w2f, bf2, g2, b2)


def reference_jax(src, params):
    """Pure-JAX reference implementing the same forward math (for checking)."""
    (conv_w, conv_b, pe, wqkv, bqkv, wo, bo,
     g1, b1, w1f, bf1, w2f, bf2, g2, b2) = params
    B = src.shape[0]
    hp = jax.lax.Precision.HIGHEST

    # InputModel (bn/ln/relu are defined in the module but unused in forward)
    x = jnp.transpose(src, (0, 2, 1))                     # (B, FEAT, SEQ)
    y = jax.lax.conv_general_dilated(
        x, conv_w, window_strides=(STRIDE,), padding='VALID',
        dimension_numbers=('NCH', 'OIH', 'NCH'), precision=hp)
    feats = jnp.transpose(y, (0, 2, 1)) + conv_b[None, None, :]   # (B, 65, 32)

    # TransformerModel (dropout = identity in eval)
    h = feats * math.sqrt(D) + pe[None]
    qkv = jnp.einsum('bsd,de->bse', h, wqkv, precision=hp) + bqkv[None]
    q = qkv[..., :D].reshape(B, L_OUT, NHEAD, HEAD_DIM)
    k = qkv[..., D:2 * D].reshape(B, L_OUT, NHEAD, HEAD_DIM)
    v = qkv[..., 2 * D:].reshape(B, L_OUT, NHEAD, HEAD_DIM)
    s = jnp.einsum('bqhd,bkhd->bhqk', q, k, precision=hp) / math.sqrt(HEAD_DIM)
    p = jax.nn.softmax(s, axis=-1)
    o = jnp.einsum('bhqk,bkhd->bqhd', p, v, precision=hp).reshape(B, L_OUT, D)
    attn = jnp.einsum('bsd,de->bse', o, wo, precision=hp) + bo[None]

    def ln(xx, g, bb):
        mu = xx.mean(-1, keepdims=True)
        var = ((xx - mu) ** 2).mean(-1, keepdims=True)
        return (xx - mu) / jnp.sqrt(var + LN_EPS) * g + bb

    x1 = ln(h + attn, g1, b1)
    ff = jnp.maximum(jnp.einsum('bsd,dh->bsh', x1, w1f, precision=hp) + bf1[None], 0.0)
    ff = jnp.einsum('bsh,hd->bsd', ff, w2f, precision=hp) + bf2[None]
    x2 = ln(x1 + ff, g2, b2)
    return jnp.maximum(x2, 0.0)    # LatentModule final relu; the transposes cancel


if __name__ == "__main__":
    key = jax.random.PRNGKey(0)
    k_params, k_x = jax.random.split(key)

    B = 2
    params = init_params(k_params)
    src = jax.random.normal(k_x, (B, SEQ_LEN, FEAT), jnp.float32)

    out = latent_module_forward(src, params)
    out = jax.block_until_ready(out)

    ref = reference_jax(src, params)
    assert out.shape == (B, L_OUT, D), out.shape
    err = float(jnp.max(jnp.abs(out - ref)))
    # Tolerance allows for MXU f32 matmul pass differences vs HIGHEST-precision ref.
    assert err < 2e-2, f"max abs err {err}"

    print("KERNEL_OK")
</pallas_src>

<mosaic_0001>
module attributes {stable_mosaic.version = 11 : i64} {
  func.func @_latent_kernel(%arg0: i32, %arg1: memref<1x74x219xf32, #tpu.memory_space<vmem>>, %arg2: memref<10x219x32xf32, #tpu.memory_space<vmem>>, %arg3: memref<1x32xf32, #tpu.memory_space<vmem>>, %arg4: memref<65x32xf32, #tpu.memory_space<vmem>>, %arg5: memref<4x32x8xf32, #tpu.memory_space<vmem>>, %arg6: memref<4x1x8xf32, #tpu.memory_space<vmem>>, %arg7: memref<4x32x8xf32, #tpu.memory_space<vmem>>, %arg8: memref<4x1x8xf32, #tpu.memory_space<vmem>>, %arg9: memref<4x32x8xf32, #tpu.memory_space<vmem>>, %arg10: memref<4x1x8xf32, #tpu.memory_space<vmem>>, %arg11: memref<4x8x32xf32, #tpu.memory_space<vmem>>, %arg12: memref<1x32xf32, #tpu.memory_space<vmem>>, %arg13: memref<1x32xf32, #tpu.memory_space<vmem>>, %arg14: memref<1x32xf32, #tpu.memory_space<vmem>>, %arg15: memref<32x16xf32, #tpu.memory_space<vmem>>, %arg16: memref<1x16xf32, #tpu.memory_space<vmem>>, %arg17: memref<16x32xf32, #tpu.memory_space<vmem>>, %arg18: memref<1x32xf32, #tpu.memory_space<vmem>>, %arg19: memref<1x32xf32, #tpu.memory_space<vmem>>, %arg20: memref<1x32xf32, #tpu.memory_space<vmem>>, %arg21: memref<1x65x32xf32, #tpu.memory_space<vmem>>) attributes {dimension_semantics = [#tpu.dimension_semantics<parallel>], iteration_bounds = array<i64: 2>, scalar_prefetch = 0 : i64, scratch_operands = 0 : i64, tpu.core_type = #tpu.core_type<tc>, window_params = [{transform_indices = @transform_0, window_bounds = array<i64: 1, 74, 219>}, {pipeline_mode = #tpu.pipeline_mode<synchronous>, transform_indices = @transform_1, window_bounds = array<i64: 10, 219, 32>}, {pipeline_mode = #tpu.pipeline_mode<synchronous>, transform_indices = @transform_2, window_bounds = array<i64: 1, 32>}, {pipeline_mode = #tpu.pipeline_mode<synchronous>, transform_indices = @transform_3, window_bounds = array<i64: 65, 32>}, {pipeline_mode = #tpu.pipeline_mode<synchronous>, transform_indices = @transform_4, window_bounds = array<i64: 4, 32, 8>}, {pipeline_mode = #tpu.pipeline_mode<synchronous>, transform_indices = @transform_5, window_bounds = array<i64: 4, 1, 8>}, {pipeline_mode = #tpu.pipeline_mode<synchronous>, transform_indices = @transform_6, window_bounds = array<i64: 4, 32, 8>}, {pipeline_mode = #tpu.pipeline_mode<synchronous>, transform_indices = @transform_7, window_bounds = array<i64: 4, 1, 8>}, {pipeline_mode = #tpu.pipeline_mode<synchronous>, transform_indices = @transform_8, window_bounds = array<i64: 4, 32, 8>}, {pipeline_mode = #tpu.pipeline_mode<synchronous>, transform_indices = @transform_9, window_bounds = array<i64: 4, 1, 8>}, {pipeline_mode = #tpu.pipeline_mode<synchronous>, transform_indices = @transform_10, window_bounds = array<i64: 4, 8, 32>}, {pipeline_mode = #tpu.pipeline_mode<synchronous>, transform_indices = @transform_11, window_bounds = array<i64: 1, 32>}, {pipeline_mode = #tpu.pipeline_mode<synchronous>, transform_indices = @transform_12, window_bounds = array<i64: 1, 32>}, {pipeline_mode = #tpu.pipeline_mode<synchronous>, transform_indices = @transform_13, window_bounds = array<i64: 1, 32>}, {pipeline_mode = #tpu.pipeline_mode<synchronous>, transform_indices = @transform_14, window_bounds = array<i64: 32, 16>}, {pipeline_mode = #tpu.pipeline_mode<synchronous>, transform_indices = @transform_15, window_bounds = array<i64: 1, 16>}, {pipeline_mode = #tpu.pipeline_mode<synchronous>, transform_indices = @transform_16, window_bounds = array<i64: 16, 32>}, {pipeline_mode = #tpu.pipeline_mode<synchronous>, transform_indices = @transform_17, window_bounds = array<i64: 1, 32>}, {pipeline_mode = #tpu.pipeline_mode<synchronous>, transform_indices = @transform_18, window_bounds = array<i64: 1, 32>}, {pipeline_mode = #tpu.pipeline_mode<synchronous>, transform_indices = @transform_19, window_bounds = array<i64: 1, 32>}, {transform_indices = @transform_20, window_bounds = array<i64: 1, 65, 32>}]} {
    %c0 = arith.constant 0 : index
    %c0_0 = arith.constant 0 : index
    %c0_1 = arith.constant 0 : index
    %0 = vector.load %arg1[%c0, %c0_0, %c0_1] : memref<1x74x219xf32, #tpu.memory_space<vmem>>, vector<1x74x219xf32>
    %1 = vector.shape_cast %0 : vector<1x74x219xf32> to vector<74x219xf32>
    %cst = arith.constant 0.000000e+00 : f32
    %2 = vector.broadcast %cst : f32 to vector<65x32xf32>
    %3 = vector.extract_strided_slice %1 {offsets = [0, 0], sizes = [65, 219], strides = [1, 1]} : vector<74x219xf32> to vector<65x219xf32>
    %c0_2 = arith.constant 0 : index
    %c0_3 = arith.constant 0 : index
    %c0_4 = arith.constant 0 : index
    %4 = vector.load %arg2[%c0_2, %c0_3, %c0_4] : memref<10x219x32xf32, #tpu.memory_space<vmem>>, vector<1x219x32xf32>
    %5 = vector.shape_cast %4 : vector<1x219x32xf32> to vector<219x32xf32>
    %cst_5 = arith.constant dense<0.000000e+00> : vector<65x32xf32>
    %6 = tpu.matmul %3, %5, %cst_5 {dimension_numbers = #tpu.dot_dimension_numbers<[1], [0], [0], [1], [0, 0, 1, 1], [], []>} : vector<65x219xf32>, vector<219x32xf32>, vector<65x32xf32> -> vector<65x32xf32>
    %7 = arith.addf %2, %6 : vector<65x32xf32>
    %8 = vector.extract_strided_slice %1 {offsets = [1, 0], sizes = [65, 219], strides = [1, 1]} : vector<74x219xf32> to vector<65x219xf32>
    %c1 = arith.constant 1 : index
    %c0_6 = arith.constant 0 : index
    %c0_7 = arith.constant 0 : index
    %9 = vector.load %arg2[%c1, %c0_6, %c0_7] : memref<10x219x32xf32, #tpu.memory_space<vmem>>, vector<1x219x32xf32>
    %10 = vector.shape_cast %9 : vector<1x219x32xf32> to vector<219x32xf32>
    %cst_8 = arith.constant dense<0.000000e+00> : vector<65x32xf32>
    %11 = tpu.matmul %8, %10, %cst_8 {dimension_numbers = #tpu.dot_dimension_numbers<[1], [0], [0], [1], [0, 0, 1, 1], [], []>} : vector<65x219xf32>, vector<219x32xf32>, vector<65x32xf32> -> vector<65x32xf32>
    %12 = arith.addf %7, %11 : vector<65x32xf32>
    %13 = vector.extract_strided_slice %1 {offsets = [2, 0], sizes = [65, 219], strides = [1, 1]} : vector<74x219xf32> to vector<65x219xf32>
    %c2 = arith.constant 2 : index
    %c0_9 = arith.constant 0 : index
    %c0_10 = arith.constant 0 : index
    %14 = vector.load %arg2[%c2, %c0_9, %c0_10] : memref<10x219x32xf32, #tpu.memory_space<vmem>>, vector<1x219x32xf32>
    %15 = vector.shape_cast %14 : vector<1x219x32xf32> to vector<219x32xf32>
    %cst_11 = arith.constant dense<0.000000e+00> : vector<65x32xf32>
    %16 = tpu.matmul %13, %15, %cst_11 {dimension_numbers = #tpu.dot_dimension_numbers<[1], [0], [0], [1], [0, 0, 1, 1], [], []>} : vector<65x219xf32>, vector<219x32xf32>, vector<65x32xf32> -> vector<65x32xf32>
    %17 = arith.addf %12, %16 : vector<65x32xf32>
    %18 = vector.extract_strided_slice %1 {offsets = [3, 0], sizes = [65, 219], strides = [1, 1]} : vector<74x219xf32> to vector<65x219xf32>
    %c3 = arith.constant 3 : index
    %c0_12 = arith.constant 0 : index
    %c0_13 = arith.constant 0 : index
    %19 = vector.load %arg2[%c3, %c0_12, %c0_13] : memref<10x219x32xf32, #tpu.memory_space<vmem>>, vector<1x219x32xf32>
    %20 = vector.shape_cast %19 : vector<1x219x32xf32> to vector<219x32xf32>
    %cst_14 = arith.constant dense<0.000000e+00> : vector<65x32xf32>
    %21 = tpu.matmul %18, %20, %cst_14 {dimension_numbers = #tpu.dot_dimension_numbers<[1], [0], [0], [1], [0, 0, 1, 1], [], []>} : vector<65x219xf32>, vector<219x32xf32>, vector<65x32xf32> -> vector<65x32xf32>
    %22 = arith.addf %17, %21 : vector<65x32xf32>
    %23 = vector.extract_strided_slice %1 {offsets = [4, 0], sizes = [65, 219], strides = [1, 1]} : vector<74x219xf32> to vector<65x219xf32>
    %c4 = arith.constant 4 : index
    %c0_15 = arith.constant 0 : index
    %c0_16 = arith.constant 0 : index
    %24 = vector.load %arg2[%c4, %c0_15, %c0_16] : memref<10x219x32xf32, #tpu.memory_space<vmem>>, vector<1x219x32xf32>
    %25 = vector.shape_cast %24 : vector<1x219x32xf32> to vector<219x32xf32>
    %cst_17 = arith.constant dense<0.000000e+00> : vector<65x32xf32>
    %26 = tpu.matmul %23, %25, %cst_17 {dimension_numbers = #tpu.dot_dimension_numbers<[1], [0], [0], [1], [0, 0, 1, 1], [], []>} : vector<65x219xf32>, vector<219x32xf32>, vector<65x32xf32> -> vector<65x32xf32>
    %27 = arith.addf %22, %26 : vector<65x32xf32>
    %28 = vector.extract_strided_slice %1 {offsets = [5, 0], sizes = [65, 219], strides = [1, 1]} : vector<74x219xf32> to vector<65x219xf32>
    %c5 = arith.constant 5 : index
    %c0_18 = arith.constant 0 : index
    %c0_19 = arith.constant 0 : index
    %29 = vector.load %arg2[%c5, %c0_18, %c0_19] : memref<10x219x32xf32, #tpu.memory_space<vmem>>, vector<1x219x32xf32>
    %30 = vector.shape_cast %29 : vector<1x219x32xf32> to vector<219x32xf32>
    %cst_20 = arith.constant dense<0.000000e+00> : vector<65x32xf32>
    %31 = tpu.matmul %28, %30, %cst_20 {dimension_numbers = #tpu.dot_dimension_numbers<[1], [0], [0], [1], [0, 0, 1, 1], [], []>} : vector<65x219xf32>, vector<219x32xf32>, vector<65x32xf32> -> vector<65x32xf32>
    %32 = arith.addf %27, %31 : vector<65x32xf32>
    %33 = vector.extract_strided_slice %1 {offsets = [6, 0], sizes = [65, 219], strides = [1, 1]} : vector<74x219xf32> to vector<65x219xf32>
    %c6 = arith.constant 6 : index
    %c0_21 = arith.constant 0 : index
    %c0_22 = arith.constant 0 : index
    %34 = vector.load %arg2[%c6, %c0_21, %c0_22] : memref<10x219x32xf32, #tpu.memory_space<vmem>>, vector<1x219x32xf32>
    %35 = vector.shape_cast %34 : vector<1x219x32xf32> to vector<219x32xf32>
    %cst_23 = arith.constant dense<0.000000e+00> : vector<65x32xf32>
    %36 = tpu.matmul %33, %35, %cst_23 {dimension_numbers = #tpu.dot_dimension_numbers<[1], [0], [0], [1], [0, 0, 1, 1], [], []>} : vector<65x219xf32>, vector<219x32xf32>, vector<65x32xf32> -> vector<65x32xf32>
    %37 = arith.addf %32, %36 : vector<65x32xf32>
    %38 = vector.extract_strided_slice %1 {offsets = [7, 0], sizes = [65, 219], strides = [1, 1]} : vector<74x219xf32> to vector<65x219xf32>
    %c7 = arith.constant 7 : index
    %c0_24 = arith.constant 0 : index
    %c0_25 = arith.constant 0 : index
    %39 = vector.load %arg2[%c7, %c0_24, %c0_25] : memref<10x219x32xf32, #tpu.memory_space<vmem>>, vector<1x219x32xf32>
    %40 = vector.shape_cast %39 : vector<1x219x32xf32> to vector<219x32xf32>
    %cst_26 = arith.constant dense<0.000000e+00> : vector<65x32xf32>
    %41 = tpu.matmul %38, %40, %cst_26 {dimension_numbers = #tpu.dot_dimension_numbers<[1], [0], [0], [1], [0, 0, 1, 1], [], []>} : vector<65x219xf32>, vector<219x32xf32>, vector<65x32xf32> -> vector<65x32xf32>
    %42 = arith.addf %37, %41 : vector<65x32xf32>
    %43 = vector.extract_strided_slice %1 {offsets = [8, 0], sizes = [65, 219], strides = [1, 1]} : vector<74x219xf32> to vector<65x219xf32>
    %c8 = arith.constant 8 : index
    %c0_27 = arith.constant 0 : index
    %c0_28 = arith.constant 0 : index
    %44 = vector.load %arg2[%c8, %c0_27, %c0_28] : memref<10x219x32xf32, #tpu.memory_space<vmem>>, vector<1x219x32xf32>
    %45 = vector.shape_cast %44 : vector<1x219x32xf32> to vector<219x32xf32>
    %cst_29 = arith.constant dense<0.000000e+00> : vector<65x32xf32>
    %46 = tpu.matmul %43, %45, %cst_29 {dimension_numbers = #tpu.dot_dimension_numbers<[1], [0], [0], [1], [0, 0, 1, 1], [], []>} : vector<65x219xf32>, vector<219x32xf32>, vector<65x32xf32> -> vector<65x32xf32>
    %47 = arith.addf %42, %46 : vector<65x32xf32>
    %48 = vector.extract_strided_slice %1 {offsets = [9, 0], sizes = [65, 219], strides = [1, 1]} : vector<74x219xf32> to vector<65x219xf32>
    %c9 = arith.constant 9 : index
    %c0_30 = arith.constant 0 : index
    %c0_31 = arith.constant 0 : index
    %49 = vector.load %arg2[%c9, %c0_30, %c0_31] : memref<10x219x32xf32, #tpu.memory_space<vmem>>, vector<1x219x32xf32>
    %50 = vector.shape_cast %49 : vector<1x219x32xf32> to vector<219x32xf32>
    %cst_32 = arith.constant dense<0.000000e+00> : vector<65x32xf32>
    %51 = tpu.matmul %48, %50, %cst_32 {dimension_numbers = #tpu.dot_dimension_numbers<[1], [0], [0], [1], [0, 0, 1, 1], [], []>} : vector<65x219xf32>, vector<219x32xf32>, vector<65x32xf32> -> vector<65x32xf32>
    %52 = arith.addf %47, %51 : vector<65x32xf32>
    %c0_33 = arith.constant 0 : index
    %c0_34 = arith.constant 0 : index
    %53 = vector.load %arg3[%c0_33, %c0_34] : memref<1x32xf32, #tpu.memory_space<vmem>>, vector<1x32xf32>
    %54 = vector.broadcast %53 : vector<1x32xf32> to vector<65x32xf32>
    %55 = arith.addf %52, %54 : vector<65x32xf32>
    %cst_35 = arith.constant 5.65685415 : f32
    %56 = vector.broadcast %cst_35 : f32 to vector<65x32xf32>
    %57 = arith.mulf %55, %56 : vector<65x32xf32>
    %c0_36 = arith.constant 0 : index
    %c0_37 = arith.constant 0 : index
    %58 = vector.load %arg4[%c0_36, %c0_37] : memref<65x32xf32, #tpu.memory_space<vmem>>, vector<65x32xf32>
    %59 = arith.addf %57, %58 : vector<65x32xf32>
    %cst_38 = arith.constant 0.000000e+00 : f32
    %60 = vector.broadcast %cst_38 : f32 to vector<65x32xf32>
    %c0_39 = arith.constant 0 : index
    %c0_40 = arith.constant 0 : index
    %c0_41 = arith.constant 0 : index
    %61 = vector.load %arg5[%c0_39, %c0_40, %c0_41] : memref<4x32x8xf32, #tpu.memory_space<vmem>>, vector<1x32x8xf32>
    %62 = vector.shape_cast %61 : vector<1x32x8xf32> to vector<32x8xf32>
    %cst_42 = arith.constant dense<0.000000e+00> : vector<65x8xf32>
    %63 = tpu.matmul %59, %62, %cst_42 {dimension_numbers = #tpu.dot_dimension_numbers<[1], [0], [0], [1], [0, 0, 1, 1], [], []>} : vector<65x32xf32>, vector<32x8xf32>, vector<65x8xf32> -> vector<65x8xf32>
    %c0_43 = arith.constant 0 : index
    %c0_44 = arith.constant 0 : index
    %c0_45 = arith.constant 0 : index
    %64 = vector.load %arg6[%c0_43, %c0_44, %c0_45] : memref<4x1x8xf32, #tpu.memory_space<vmem>>, vector<1x1x8xf32>
    %65 = vector.shape_cast %64 : vector<1x1x8xf32> to vector<1x8xf32>
    %66 = vector.broadcast %65 : vector<1x8xf32> to vector<65x8xf32>
    %67 = arith.addf %63, %66 : vector<65x8xf32>
    %c0_46 = arith.constant 0 : index
    %c0_47 = arith.constant 0 : index
    %c0_48 = arith.constant 0 : index
    %68 = vector.load %arg7[%c0_46, %c0_47, %c0_48] : memref<4x32x8xf32, #tpu.memory_space<vmem>>, vector<1x32x8xf32>
    %69 = vector.shape_cast %68 : vector<1x32x8xf32> to vector<32x8xf32>
    %cst_49 = arith.constant dense<0.000000e+00> : vector<65x8xf32>
    %70 = tpu.matmul %59, %69, %cst_49 {dimension_numbers = #tpu.dot_dimension_numbers<[1], [0], [0], [1], [0, 0, 1, 1], [], []>} : vector<65x32xf32>, vector<32x8xf32>, vector<65x8xf32> -> vector<65x8xf32>
    %c0_50 = arith.constant 0 : index
    %c0_51 = arith.constant 0 : index
    %c0_52 = arith.constant 0 : index
    %71 = vector.load %arg8[%c0_50, %c0_51, %c0_52] : memref<4x1x8xf32, #tpu.memory_space<vmem>>, vector<1x1x8xf32>
    %72 = vector.shape_cast %71 : vector<1x1x8xf32> to vector<1x8xf32>
    %73 = vector.broadcast %72 : vector<1x8xf32> to vector<65x8xf32>
    %74 = arith.addf %70, %73 : vector<65x8xf32>
    %c0_53 = arith.constant 0 : index
    %c0_54 = arith.constant 0 : index
    %c0_55 = arith.constant 0 : index
    %75 = vector.load %arg9[%c0_53, %c0_54, %c0_55] : memref<4x32x8xf32, #tpu.memory_space<vmem>>, vector<1x32x8xf32>
    %76 = vector.shape_cast %75 : vector<1x32x8xf32> to vector<32x8xf32>
    %cst_56 = arith.constant dense<0.000000e+00> : vector<65x8xf32>
    %77 = tpu.matmul %59, %76, %cst_56 {dimension_numbers = #tpu.dot_dimension_numbers<[1], [0], [0], [1], [0, 0, 1, 1], [], []>} : vector<65x32xf32>, vector<32x8xf32>, vector<65x8xf32> -> vector<65x8xf32>
    %c0_57 = arith.constant 0 : index
    %c0_58 = arith.constant 0 : index
    %c0_59 = arith.constant 0 : index
    %78 = vector.load %arg10[%c0_57, %c0_58, %c0_59] : memref<4x1x8xf32, #tpu.memory_space<vmem>>, vector<1x1x8xf32>
    %79 = vector.shape_cast %78 : vector<1x1x8xf32> to vector<1x8xf32>
    %80 = vector.broadcast %79 : vector<1x8xf32> to vector<65x8xf32>
    %81 = arith.addf %77, %80 : vector<65x8xf32>
    %82 = tpu.transpose %74, [1, 0] : vector<65x8xf32> -> vector<8x65xf32>
    %cst_60 = arith.constant dense<0.000000e+00> : vector<65x65xf32>
    %83 = tpu.matmul %67, %82, %cst_60 {dimension_numbers = #tpu.dot_dimension_numbers<[1], [0], [0], [1], [0, 0, 1, 1], [], []>} : vector<65x8xf32>, vector<8x65xf32>, vector<65x65xf32> -> vector<65x65xf32>
    %cst_61 = arith.constant 0.353553385 : f32
    %84 = vector.broadcast %cst_61 : f32 to vector<65x65xf32>
    %85 = arith.mulf %83, %84 : vector<65x65xf32>
    %cst_62 = arith.constant dense<0xFF800000> : vector<65xf32>
    %86 = vector.multi_reduction <maximumf>, %85, %cst_62 [1] : vector<65x65xf32> to vector<65xf32>
    %87 = vector.shape_cast %86 : vector<65xf32> to vector<65x1xf32>
    %88 = vector.broadcast %87 : vector<65x1xf32> to vector<65x65xf32>
    %89 = arith.subf %85, %88 : vector<65x65xf32>
    %90 = math.exp %89 : vector<65x65xf32>
    %cst_63 = arith.constant dense<0.000000e+00> : vector<65xf32>
    %91 = vector.multi_reduction <add>, %90, %cst_63 [1] : vector<65x65xf32> to vector<65xf32>
    %92 = vector.shape_cast %91 : vector<65xf32> to vector<65x1xf32>
    %93 = vector.broadcast %92 : vector<65x1xf32> to vector<65x65xf32>
    %94 = arith.divf %90, %93 : vector<65x65xf32>
    %cst_64 = arith.constant dense<0.000000e+00> : vector<65x8xf32>
    %95 = tpu.matmul %94, %81, %cst_64 {dimension_numbers = #tpu.dot_dimension_numbers<[1], [0], [0], [1], [0, 0, 1, 1], [], []>} : vector<65x65xf32>, vector<65x8xf32>, vector<65x8xf32> -> vector<65x8xf32>
    %c0_65 = arith.constant 0 : index
    %c0_66 = arith.constant 0 : index
    %c0_67 = arith.constant 0 : index
    %96 = vector.load %arg11[%c0_65, %c0_66, %c0_67] : memref<4x8x32xf32, #tpu.memory_space<vmem>>, vector<1x8x32xf32>
    %97 = vector.shape_cast %96 : vector<1x8x32xf32> to vector<8x32xf32>
    %cst_68 = arith.constant dense<0.000000e+00> : vector<65x32xf32>
    %98 = tpu.matmul %95, %97, %cst_68 {dimension_numbers = #tpu.dot_dimension_numbers<[1], [0], [0], [1], [0, 0, 1, 1], [], []>} : vector<65x8xf32>, vector<8x32xf32>, vector<65x32xf32> -> vector<65x32xf32>
    %99 = arith.addf %60, %98 : vector<65x32xf32>
    %c1_69 = arith.constant 1 : index
    %c0_70 = arith.constant 0 : index
    %c0_71 = arith.constant 0 : index
    %100 = vector.load %arg5[%c1_69, %c0_70, %c0_71] : memref<4x32x8xf32, #tpu.memory_space<vmem>>, vector<1x32x8xf32>
    %101 = vector.shape_cast %100 : vector<1x32x8xf32> to vector<32x8xf32>
    %cst_72 = arith.constant dense<0.000000e+00> : vector<65x8xf32>
    %102 = tpu.matmul %59, %101, %cst_72 {dimension_numbers = #tpu.dot_dimension_numbers<[1], [0], [0], [1], [0, 0, 1, 1], [], []>} : vector<65x32xf32>, vector<32x8xf32>, vector<65x8xf32> -> vector<65x8xf32>
    %c1_73 = arith.constant 1 : index
    %c0_74 = arith.constant 0 : index
    %c0_75 = arith.constant 0 : index
    %103 = vector.load %arg6[%c1_73, %c0_74, %c0_75] : memref<4x1x8xf32, #tpu.memory_space<vmem>>, vector<1x1x8xf32>
    %104 = vector.shape_cast %103 : vector<1x1x8xf32> to vector<1x8xf32>
    %105 = vector.broadcast %104 : vector<1x8xf32> to vector<65x8xf32>
    %106 = arith.addf %102, %105 : vector<65x8xf32>
    %c1_76 = arith.constant 1 : index
    %c0_77 = arith.constant 0 : index
    %c0_78 = arith.constant 0 : index
    %107 = vector.load %arg7[%c1_76, %c0_77, %c0_78] : memref<4x32x8xf32, #tpu.memory_space<vmem>>, vector<1x32x8xf32>
    %108 = vector.shape_cast %107 : vector<1x32x8xf32> to vector<32x8xf32>
    %cst_79 = arith.constant dense<0.000000e+00> : vector<65x8xf32>
    %109 = tpu.matmul %59, %108, %cst_79 {dimension_numbers = #tpu.dot_dimension_numbers<[1], [0], [0], [1], [0, 0, 1, 1], [], []>} : vector<65x32xf32>, vector<32x8xf32>, vector<65x8xf32> -> vector<65x8xf32>
    %c1_80 = arith.constant 1 : index
    %c0_81 = arith.constant 0 : index
    %c0_82 = arith.constant 0 : index
    %110 = vector.load %arg8[%c1_80, %c0_81, %c0_82] : memref<4x1x8xf32, #tpu.memory_space<vmem>>, vector<1x1x8xf32>
    %111 = vector.shape_cast %110 : vector<1x1x8xf32> to vector<1x8xf32>
    %112 = vector.broadcast %111 : vector<1x8xf32> to vector<65x8xf32>
    %113 = arith.addf %109, %112 : vector<65x8xf32>
    %c1_83 = arith.constant 1 : index
    %c0_84 = arith.constant 0 : index
    %c0_85 = arith.constant 0 : index
    %114 = vector.load %arg9[%c1_83, %c0_84, %c0_85] : memref<4x32x8xf32, #tpu.memory_space<vmem>>, vector<1x32x8xf32>
    %115 = vector.shape_cast %114 : vector<1x32x8xf32> to vector<32x8xf32>
    %cst_86 = arith.constant dense<0.000000e+00> : vector<65x8xf32>
    %116 = tpu.matmul %59, %115, %cst_86 {dimension_numbers = #tpu.dot_dimension_numbers<[1], [0], [0], [1], [0, 0, 1, 1], [], []>} : vector<65x32xf32>, vector<32x8xf32>, vector<65x8xf32> -> vector<65x8xf32>
    %c1_87 = arith.constant 1 : index
    %c0_88 = arith.constant 0 : index
    %c0_89 = arith.constant 0 : index
    %117 = vector.load %arg10[%c1_87, %c0_88, %c0_89] : memref<4x1x8xf32, #tpu.memory_space<vmem>>, vector<1x1x8xf32>
    %118 = vector.shape_cast %117 : vector<1x1x8xf32> to vector<1x8xf32>
    %119 = vector.broadcast %118 : vector<1x8xf32> to vector<65x8xf32>
    %120 = arith.addf %116, %119 : vector<65x8xf32>
    %121 = tpu.transpose %113, [1, 0] : vector<65x8xf32> -> vector<8x65xf32>
    %cst_90 = arith.constant dense<0.000000e+00> : vector<65x65xf32>
    %122 = tpu.matmul %106, %121, %cst_90 {dimension_numbers = #tpu.dot_dimension_numbers<[1], [0], [0], [1], [0, 0, 1, 1], [], []>} : vector<65x8xf32>, vector<8x65xf32>, vector<65x65xf32> -> vector<65x65xf32>
    %cst_91 = arith.constant 0.353553385 : f32
    %123 = vector.broadcast %cst_91 : f32 to vector<65x65xf32>
    %124 = arith.mulf %122, %123 : vector<65x65xf32>
    %cst_92 = arith.constant dense<0xFF800000> : vector<65xf32>
    %125 = vector.multi_reduction <maximumf>, %124, %cst_92 [1] : vector<65x65xf32> to vector<65xf32>
    %126 = vector.shape_cast %125 : vector<65xf32> to vector<65x1xf32>
    %127 = vector.broadcast %126 : vector<65x1xf32> to vector<65x65xf32>
    %128 = arith.subf %124, %127 : vector<65x65xf32>
    %129 = math.exp %128 : vector<65x65xf32>
    %cst_93 = arith.constant dense<0.000000e+00> : vector<65xf32>
    %130 = vector.multi_reduction <add>, %129, %cst_93 [1] : vector<65x65xf32> to vector<65xf32>
    %131 = vector.shape_cast %130 : vector<65xf32> to vector<65x1xf32>
    %132 = vector.broadcast %131 : vector<65x1xf32> to vector<65x65xf32>
    %133 = arith.divf %129, %132 : vector<65x65xf32>
    %cst_94 = arith.constant dense<0.000000e+00> : vector<65x8xf32>
    %134 = tpu.matmul %133, %120, %cst_94 {dimension_numbers = #tpu.dot_dimension_numbers<[1], [0], [0], [1], [0, 0, 1, 1], [], []>} : vector<65x65xf32>, vector<65x8xf32>, vector<65x8xf32> -> vector<65x8xf32>
    %c1_95 = arith.constant 1 : index
    %c0_96 = arith.constant 0 : index
    %c0_97 = arith.constant 0 : index
    %135 = vector.load %arg11[%c1_95, %c0_96, %c0_97] : memref<4x8x32xf32, #tpu.memory_space<vmem>>, vector<1x8x32xf32>
    %136 = vector.shape_cast %135 : vector<1x8x32xf32> to vector<8x32xf32>
    %cst_98 = arith.constant dense<0.000000e+00> : vector<65x32xf32>
    %137 = tpu.matmul %134, %136, %cst_98 {dimension_numbers = #tpu.dot_dimension_numbers<[1], [0], [0], [1], [0, 0, 1, 1], [], []>} : vector<65x8xf32>, vector<8x32xf32>, vector<65x32xf32> -> vector<65x32xf32>
    %138 = arith.addf %99, %137 : vector<65x32xf32>
    %c2_99 = arith.constant 2 : index
    %c0_100 = arith.constant 0 : index
    %c0_101 = arith.constant 0 : index
    %139 = vector.load %arg5[%c2_99, %c0_100, %c0_101] : memref<4x32x8xf32, #tpu.memory_space<vmem>>, vector<1x32x8xf32>
    %140 = vector.shape_cast %139 : vector<1x32x8xf32> to vector<32x8xf32>
    %cst_102 = arith.constant dense<0.000000e+00> : vector<65x8xf32>
    %141 = tpu.matmul %59, %140, %cst_102 {dimension_numbers = #tpu.dot_dimension_numbers<[1], [0], [0], [1], [0, 0, 1, 1], [], []>} : vector<65x32xf32>, vector<32x8xf32>, vector<65x8xf32> -> vector<65x8xf32>
    %c2_103 = arith.constant 2 : index
    %c0_104 = arith.constant 0 : index
    %c0_105 = arith.constant 0 : index
    %142 = vector.load %arg6[%c2_103, %c0_104, %c0_105] : memref<4x1x8xf32, #tpu.memory_space<vmem>>, vector<1x1x8xf32>
    %143 = vector.shape_cast %142 : vector<1x1x8xf32> to vector<1x8xf32>
    %144 = vector.broadcast %143 : vector<1x8xf32> to vector<65x8xf32>
    %145 = arith.addf %141, %144 : vector<65x8xf32>
    %c2_106 = arith.constant 2 : index
    %c0_107 = arith.constant 0 : index
    %c0_108 = arith.constant 0 : index
    %146 = vector.load %arg7[%c2_106, %c0_107, %c0_108] : memref<4x32x8xf32, #tpu.memory_space<vmem>>, vector<1x32x8xf32>
    %147 = vector.shape_cast %146 : vector<1x32x8xf32> to vector<32x8xf32>
    %cst_109 = arith.constant dense<0.000000e+00> : vector<65x8xf32>
    %148 = tpu.matmul %59, %147, %cst_109 {dimension_numbers = #tpu.dot_dimension_numbers<[1], [0], [0], [1], [0, 0, 1, 1], [], []>} : vector<65x32xf32>, vector<32x8xf32>, vector<65x8xf32> -> vector<65x8xf32>
    %c2_110 = arith.constant 2 : index
    %c0_111 = arith.constant 0 : index
    %c0_112 = arith.constant 0 : index
    %149 = vector.load %arg8[%c2_110, %c0_111, %c0_112] : memref<4x1x8xf32, #tpu.memory_space<vmem>>, vector<1x1x8xf32>
    %150 = vector.shape_cast %149 : vector<1x1x8xf32> to vector<1x8xf32>
    %151 = vector.broadcast %150 : vector<1x8xf32> to vector<65x8xf32>
    %152 = arith.addf %148, %151 : vector<65x8xf32>
    %c2_113 = arith.constant 2 : index
    %c0_114 = arith.constant 0 : index
    %c0_115 = arith.constant 0 : index
    %153 = vector.load %arg9[%c2_113, %c0_114, %c0_115] : memref<4x32x8xf32, #tpu.memory_space<vmem>>, vector<1x32x8xf32>
    %154 = vector.shape_cast %153 : vector<1x32x8xf32> to vector<32x8xf32>
    %cst_116 = arith.constant dense<0.000000e+00> : vector<65x8xf32>
    %155 = tpu.matmul %59, %154, %cst_116 {dimension_numbers = #tpu.dot_dimension_numbers<[1], [0], [0], [1], [0, 0, 1, 1], [], []>} : vector<65x32xf32>, vector<32x8xf32>, vector<65x8xf32> -> vector<65x8xf32>
    %c2_117 = arith.constant 2 : index
    %c0_118 = arith.constant 0 : index
    %c0_119 = arith.constant 0 : index
    %156 = vector.load %arg10[%c2_117, %c0_118, %c0_119] : memref<4x1x8xf32, #tpu.memory_space<vmem>>, vector<1x1x8xf32>
    %157 = vector.shape_cast %156 : vector<1x1x8xf32> to vector<1x8xf32>
    %158 = vector.broadcast %157 : vector<1x8xf32> to vector<65x8xf32>
    %159 = arith.addf %155, %158 : vector<65x8xf32>
    %160 = tpu.transpose %152, [1, 0] : vector<65x8xf32> -> vector<8x65xf32>
    %cst_120 = arith.constant dense<0.000000e+00> : vector<65x65xf32>
    %161 = tpu.matmul %145, %160, %cst_120 {dimension_numbers = #tpu.dot_dimension_numbers<[1], [0], [0], [1], [0, 0, 1, 1], [], []>} : vector<65x8xf32>, vector<8x65xf32>, vector<65x65xf32> -> vector<65x65xf32>
    %cst_121 = arith.constant 0.353553385 : f32
    %162 = vector.broadcast %cst_121 : f32 to vector<65x65xf32>
    %163 = arith.mulf %161, %162 : vector<65x65xf32>
    %cst_122 = arith.constant dense<0xFF800000> : vector<65xf32>
    %164 = vector.multi_reduction <maximumf>, %163, %cst_122 [1] : vector<65x65xf32> to vector<65xf32>
    %165 = vector.shape_cast %164 : vector<65xf32> to vector<65x1xf32>
    %166 = vector.broadcast %165 : vector<65x1xf32> to vector<65x65xf32>
    %167 = arith.subf %163, %166 : vector<65x65xf32>
    %168 = math.exp %167 : vector<65x65xf32>
    %cst_123 = arith.constant dense<0.000000e+00> : vector<65xf32>
    %169 = vector.multi_reduction <add>, %168, %cst_123 [1] : vector<65x65xf32> to vector<65xf32>
    %170 = vector.shape_cast %169 : vector<65xf32> to vector<65x1xf32>
    %171 = vector.broadcast %170 : vector<65x1xf32> to vector<65x65xf32>
    %172 = arith.divf %168, %171 : vector<65x65xf32>
    %cst_124 = arith.constant dense<0.000000e+00> : vector<65x8xf32>
    %173 = tpu.matmul %172, %159, %cst_124 {dimension_numbers = #tpu.dot_dimension_numbers<[1], [0], [0], [1], [0, 0, 1, 1], [], []>} : vector<65x65xf32>, vector<65x8xf32>, vector<65x8xf32> -> vector<65x8xf32>
    %c2_125 = arith.constant 2 : index
    %c0_126 = arith.constant 0 : index
    %c0_127 = arith.constant 0 : index
    %174 = vector.load %arg11[%c2_125, %c0_126, %c0_127] : memref<4x8x32xf32, #tpu.memory_space<vmem>>, vector<1x8x32xf32>
    %175 = vector.shape_cast %174 : vector<1x8x32xf32> to vector<8x32xf32>
    %cst_128 = arith.constant dense<0.000000e+00> : vector<65x32xf32>
    %176 = tpu.matmul %173, %175, %cst_128 {dimension_numbers = #tpu.dot_dimension_numbers<[1], [0], [0], [1], [0, 0, 1, 1], [], []>} : vector<65x8xf32>, vector<8x32xf32>, vector<65x32xf32> -> vector<65x32xf32>
    %177 = arith.addf %138, %176 : vector<65x32xf32>
    %c3_129 = arith.constant 3 : index
    %c0_130 = arith.constant 0 : index
    %c0_131 = arith.constant 0 : index
    %178 = vector.load %arg5[%c3_129, %c0_130, %c0_131] : memref<4x32x8xf32, #tpu.memory_space<vmem>>, vector<1x32x8xf32>
    %179 = vector.shape_cast %178 : vector<1x32x8xf32> to vector<32x8xf32>
    %cst_132 = arith.constant dense<0.000000e+00> : vector<65x8xf32>
    %180 = tpu.matmul %59, %179, %cst_132 {dimension_numbers = #tpu.dot_dimension_numbers<[1], [0], [0], [1], [0, 0, 1, 1], [], []>} : vector<65x32xf32>, vector<32x8xf32>, vector<65x8xf32> -> vector<65x8xf32>
    %c3_133 = arith.constant 3 : index
    %c0_134 = arith.constant 0 : index
    %c0_135 = arith.constant 0 : index
    %181 = vector.load %arg6[%c3_133, %c0_134, %c0_135] : memref<4x1x8xf32, #tpu.memory_space<vmem>>, vector<1x1x8xf32>
    %182 = vector.shape_cast %181 : vector<1x1x8xf32> to vector<1x8xf32>
    %183 = vector.broadcast %182 : vector<1x8xf32> to vector<65x8xf32>
    %184 = arith.addf %180, %183 : vector<65x8xf32>
    %c3_136 = arith.constant 3 : index
    %c0_137 = arith.constant 0 : index
    %c0_138 = arith.constant 0 : index
    %185 = vector.load %arg7[%c3_136, %c0_137, %c0_138] : memref<4x32x8xf32, #tpu.memory_space<vmem>>, vector<1x32x8xf32>
    %186 = vector.shape_cast %185 : vector<1x32x8xf32> to vector<32x8xf32>
    %cst_139 = arith.constant dense<0.000000e+00> : vector<65x8xf32>
    %187 = tpu.matmul %59, %186, %cst_139 {dimension_numbers = #tpu.dot_dimension_numbers<[1], [0], [0], [1], [0, 0, 1, 1], [], []>} : vector<65x32xf32>, vector<32x8xf32>, vector<65x8xf32> -> vector<65x8xf32>
    %c3_140 = arith.constant 3 : index
    %c0_141 = arith.constant 0 : index
    %c0_142 = arith.constant 0 : index
    %188 = vector.load %arg8[%c3_140, %c0_141, %c0_142] : memref<4x1x8xf32, #tpu.memory_space<vmem>>, vector<1x1x8xf32>
    %189 = vector.shape_cast %188 : vector<1x1x8xf32> to vector<1x8xf32>
    %190 = vector.broadcast %189 : vector<1x8xf32> to vector<65x8xf32>
    %191 = arith.addf %187, %190 : vector<65x8xf32>
    %c3_143 = arith.constant 3 : index
    %c0_144 = arith.constant 0 : index
    %c0_145 = arith.constant 0 : index
    %192 = vector.load %arg9[%c3_143, %c0_144, %c0_145] : memref<4x32x8xf32, #tpu.memory_space<vmem>>, vector<1x32x8xf32>
    %193 = vector.shape_cast %192 : vector<1x32x8xf32> to vector<32x8xf32>
    %cst_146 = arith.constant dense<0.000000e+00> : vector<65x8xf32>
    %194 = tpu.matmul %59, %193, %cst_146 {dimension_numbers = #tpu.dot_dimension_numbers<[1], [0], [0], [1], [0, 0, 1, 1], [], []>} : vector<65x32xf32>, vector<32x8xf32>, vector<65x8xf32> -> vector<65x8xf32>
    %c3_147 = arith.constant 3 : index
    %c0_148 = arith.constant 0 : index
    %c0_149 = arith.constant 0 : index
    %195 = vector.load %arg10[%c3_147, %c0_148, %c0_149] : memref<4x1x8xf32, #tpu.memory_space<vmem>>, vector<1x1x8xf32>
    %196 = vector.shape_cast %195 : vector<1x1x8xf32> to vector<1x8xf32>
    %197 = vector.broadcast %196 : vector<1x8xf32> to vector<65x8xf32>
    %198 = arith.addf %194, %197 : vector<65x8xf32>
    %199 = tpu.transpose %191, [1, 0] : vector<65x8xf32> -> vector<8x65xf32>
    %cst_150 = arith.constant dense<0.000000e+00> : vector<65x65xf32>
    %200 = tpu.matmul %184, %199, %cst_150 {dimension_numbers = #tpu.dot_dimension_numbers<[1], [0], [0], [1], [0, 0, 1, 1], [], []>} : vector<65x8xf32>, vector<8x65xf32>, vector<65x65xf32> -> vector<65x65xf32>
    %cst_151 = arith.constant 0.353553385 : f32
    %201 = vector.broadcast %cst_151 : f32 to vector<65x65xf32>
    %202 = arith.mulf %200, %201 : vector<65x65xf32>
    %cst_152 = arith.constant dense<0xFF800000> : vector<65xf32>
    %203 = vector.multi_reduction <maximumf>, %202, %cst_152 [1] : vector<65x65xf32> to vector<65xf32>
    %204 = vector.shape_cast %203 : vector<65xf32> to vector<65x1xf32>
    %205 = vector.broadcast %204 : vector<65x1xf32> to vector<65x65xf32>
    %206 = arith.subf %202, %205 : vector<65x65xf32>
    %207 = math.exp %206 : vector<65x65xf32>
    %cst_153 = arith.constant dense<0.000000e+00> : vector<65xf32>
    %208 = vector.multi_reduction <add>, %207, %cst_153 [1] : vector<65x65xf32> to vector<65xf32>
    %209 = vector.shape_cast %208 : vector<65xf32> to vector<65x1xf32>
    %210 = vector.broadcast %209 : vector<65x1xf32> to vector<65x65xf32>
    %211 = arith.divf %207, %210 : vector<65x65xf32>
    %cst_154 = arith.constant dense<0.000000e+00> : vector<65x8xf32>
    %212 = tpu.matmul %211, %198, %cst_154 {dimension_numbers = #tpu.dot_dimension_numbers<[1], [0], [0], [1], [0, 0, 1, 1], [], []>} : vector<65x65xf32>, vector<65x8xf32>, vector<65x8xf32> -> vector<65x8xf32>
    %c3_155 = arith.constant 3 : index
    %c0_156 = arith.constant 0 : index
    %c0_157 = arith.constant 0 : index
    %213 = vector.load %arg11[%c3_155, %c0_156, %c0_157] : memref<4x8x32xf32, #tpu.memory_space<vmem>>, vector<1x8x32xf32>
    %214 = vector.shape_cast %213 : vector<1x8x32xf32> to vector<8x32xf32>
    %cst_158 = arith.constant dense<0.000000e+00> : vector<65x32xf32>
    %215 = tpu.matmul %212, %214, %cst_158 {dimension_numbers = #tpu.dot_dimension_numbers<[1], [0], [0], [1], [0, 0, 1, 1], [], []>} : vector<65x8xf32>, vector<8x32xf32>, vector<65x32xf32> -> vector<65x32xf32>
    %216 = arith.addf %177, %215 : vector<65x32xf32>
    %c0_159 = arith.constant 0 : index
    %c0_160 = arith.constant 0 : index
    %217 = vector.load %arg12[%c0_159, %c0_160] : memref<1x32xf32, #tpu.memory_space<vmem>>, vector<1x32xf32>
    %218 = vector.broadcast %217 : vector<1x32xf32> to vector<65x32xf32>
    %219 = arith.addf %216, %218 : vector<65x32xf32>
    %220 = arith.addf %59, %219 : vector<65x32xf32>
    %c0_161 = arith.constant 0 : index
    %c0_162 = arith.constant 0 : index
    %221 = vector.load %arg13[%c0_161, %c0_162] : memref<1x32xf32, #tpu.memory_space<vmem>>, vector<1x32xf32>
    %c0_163 = arith.constant 0 : index
    %c0_164 = arith.constant 0 : index
    %222 = vector.load %arg14[%c0_163, %c0_164] : memref<1x32xf32, #tpu.memory_space<vmem>>, vector<1x32xf32>
    %cst_165 = arith.constant dense<0.000000e+00> : vector<65xf32>
    %223 = vector.multi_reduction <add>, %220, %cst_165 [1] : vector<65x32xf32> to vector<65xf32>
    %224 = vector.shape_cast %223 : vector<65xf32> to vector<65x1xf32>
    %cst_166 = arith.constant 3.200000e+01 : f32
    %225 = vector.broadcast %cst_166 : f32 to vector<65x1xf32>
    %226 = arith.divf %224, %225 : vector<65x1xf32>
    %227 = vector.broadcast %226 : vector<65x1xf32> to vector<65x32xf32>
    %228 = arith.subf %220, %227 : vector<65x32xf32>
    %229 = arith.mulf %228, %228 : vector<65x32xf32>
    %cst_167 = arith.constant dense<0.000000e+00> : vector<65xf32>
    %230 = vector.multi_reduction <add>, %229, %cst_167 [1] : vector<65x32xf32> to vector<65xf32>
    %231 = vector.shape_cast %230 : vector<65xf32> to vector<65x1xf32>
    %cst_168 = arith.constant 3.200000e+01 : f32
    %232 = vector.broadcast %cst_168 : f32 to vector<65x1xf32>
    %233 = arith.divf %231, %232 : vector<65x1xf32>
    %cst_169 = arith.constant 9.99999974E-6 : f32
    %234 = vector.broadcast %cst_169 : f32 to vector<65x1xf32>
    %235 = arith.addf %233, %234 : vector<65x1xf32>
    %236 = math.rsqrt %235 : vector<65x1xf32>
    %237 = vector.broadcast %236 : vector<65x1xf32> to vector<65x32xf32>
    %238 = arith.mulf %228, %237 : vector<65x32xf32>
    %239 = vector.broadcast %221 : vector<1x32xf32> to vector<65x32xf32>
    %240 = arith.mulf %238, %239 : vector<65x32xf32>
    %241 = vector.broadcast %222 : vector<1x32xf32> to vector<65x32xf32>
    %242 = arith.addf %240, %241 : vector<65x32xf32>
    %c0_170 = arith.constant 0 : index
    %c0_171 = arith.constant 0 : index
    %243 = vector.load %arg15[%c0_170, %c0_171] : memref<32x16xf32, #tpu.memory_space<vmem>>, vector<32x16xf32>
    %cst_172 = arith.constant dense<0.000000e+00> : vector<65x16xf32>
    %244 = tpu.matmul %242, %243, %cst_172 {dimension_numbers = #tpu.dot_dimension_numbers<[1], [0], [0], [1], [0, 0, 1, 1], [], []>} : vector<65x32xf32>, vector<32x16xf32>, vector<65x16xf32> -> vector<65x16xf32>
    %c0_173 = arith.constant 0 : index
    %c0_174 = arith.constant 0 : index
    %245 = vector.load %arg16[%c0_173, %c0_174] : memref<1x16xf32, #tpu.memory_space<vmem>>, vector<1x16xf32>
    %246 = vector.broadcast %245 : vector<1x16xf32> to vector<65x16xf32>
    %247 = arith.addf %244, %246 : vector<65x16xf32>
    %cst_175 = arith.constant 0.000000e+00 : f32
    %248 = vector.broadcast %cst_175 : f32 to vector<65x16xf32>
    %249 = arith.maximumf %247, %248 : vector<65x16xf32>
    %c0_176 = arith.constant 0 : index
    %c0_177 = arith.constant 0 : index
    %250 = vector.load %arg17[%c0_176, %c0_177] : memref<16x32xf32, #tpu.memory_space<vmem>>, vector<16x32xf32>
    %cst_178 = arith.constant dense<0.000000e+00> : vector<65x32xf32>
    %251 = tpu.matmul %249, %250, %cst_178 {dimension_numbers = #tpu.dot_dimension_numbers<[1], [0], [0], [1], [0, 0, 1, 1], [], []>} : vector<65x16xf32>, vector<16x32xf32>, vector<65x32xf32> -> vector<65x32xf32>
    %c0_179 = arith.constant 0 : index
    %c0_180 = arith.constant 0 : index
    %252 = vector.load %arg18[%c0_179, %c0_180] : memref<1x32xf32, #tpu.memory_space<vmem>>, vector<1x32xf32>
    %253 = vector.broadcast %252 : vector<1x32xf32> to vector<65x32xf32>
    %254 = arith.addf %251, %253 : vector<65x32xf32>
    %255 = arith.addf %242, %254 : vector<65x32xf32>
    %c0_181 = arith.constant 0 : index
    %c0_182 = arith.constant 0 : index
    %256 = vector.load %arg19[%c0_181, %c0_182] : memref<1x32xf32, #tpu.memory_space<vmem>>, vector<1x32xf32>
    %c0_183 = arith.constant 0 : index
    %c0_184 = arith.constant 0 : index
    %257 = vector.load %arg20[%c0_183, %c0_184] : memref<1x32xf32, #tpu.memory_space<vmem>>, vector<1x32xf32>
    %cst_185 = arith.constant dense<0.000000e+00> : vector<65xf32>
    %258 = vector.multi_reduction <add>, %255, %cst_185 [1] : vector<65x32xf32> to vector<65xf32>
    %259 = vector.shape_cast %258 : vector<65xf32> to vector<65x1xf32>
    %cst_186 = arith.constant 3.200000e+01 : f32
    %260 = vector.broadcast %cst_186 : f32 to vector<65x1xf32>
    %261 = arith.divf %259, %260 : vector<65x1xf32>
    %262 = vector.broadcast %261 : vector<65x1xf32> to vector<65x32xf32>
    %263 = arith.subf %255, %262 : vector<65x32xf32>
    %264 = arith.mulf %263, %263 : vector<65x32xf32>
    %cst_187 = arith.constant dense<0.000000e+00> : vector<65xf32>
    %265 = vector.multi_reduction <add>, %264, %cst_187 [1] : vector<65x32xf32> to vector<65xf32>
    %266 = vector.shape_cast %265 : vector<65xf32> to vector<65x1xf32>
    %cst_188 = arith.constant 3.200000e+01 : f32
    %267 = vector.broadcast %cst_188 : f32 to vector<65x1xf32>
    %268 = arith.divf %266, %267 : vector<65x1xf32>
    %cst_189 = arith.constant 9.99999974E-6 : f32
    %269 = vector.broadcast %cst_189 : f32 to vector<65x1xf32>
    %270 = arith.addf %268, %269 : vector<65x1xf32>
    %271 = math.rsqrt %270 : vector<65x1xf32>
    %272 = vector.broadcast %271 : vector<65x1xf32> to vector<65x32xf32>
    %273 = arith.mulf %263, %272 : vector<65x32xf32>
    %274 = vector.broadcast %256 : vector<1x32xf32> to vector<65x32xf32>
    %275 = arith.mulf %273, %274 : vector<65x32xf32>
    %276 = vector.broadcast %257 : vector<1x32xf32> to vector<65x32xf32>
    %277 = arith.addf %275, %276 : vector<65x32xf32>
    %cst_190 = arith.constant 0.000000e+00 : f32
    %278 = vector.broadcast %cst_190 : f32 to vector<65x32xf32>
    %279 = arith.maximumf %277, %278 : vector<65x32xf32>
    %c0_191 = arith.constant 0 : index
    %c0_192 = arith.constant 0 : index
    %c0_193 = arith.constant 0 : index
    %280 = vector.load %arg21[%c0_191, %c0_192, %c0_193] : memref<1x65x32xf32, #tpu.memory_space<vmem>>, vector<1x65x32xf32>
    %281 = vector.shape_cast %280 : vector<1x65x32xf32> to vector<65x32xf32>
    %282 = vector.shape_cast %279 : vector<65x32xf32> to vector<1x65x32xf32>
    tpu.vector_store %arg21[%c0_191, %c0_192, %c0_193], %282 {strides = array<i32>} : memref<1x65x32xf32, #tpu.memory_space<vmem>>, vector<1x65x32xf32>,
    return
  }
  func.func @transform_0(%arg0: i32) -> (i32, i32, i32) {
    %c0_i32 = arith.constant 0 : i32
    %c0_i32_0 = arith.constant 0 : i32
    %c0_i32_1 = arith.constant 0 : i32
    return %arg0, %c0_i32, %c0_i32_0 : i32, i32, i32
  }
  func.func @transform_1(%arg0: i32) -> (i32, i32, i32) {
    %c0_i32 = arith.constant 0 : i32
    %c0_i32_0 = arith.constant 0 : i32
    %c0_i32_1 = arith.constant 0 : i32
    %c0_i32_2 = arith.constant 0 : i32
    return %c0_i32, %c0_i32_0, %c0_i32_1 : i32, i32, i32
  }
  func.func @transform_2(%arg0: i32) -> (i32, i32) {
    %c0_i32 = arith.constant 0 : i32
    %c0_i32_0 = arith.constant 0 : i32
    %c0_i32_1 = arith.constant 0 : i32
    return %c0_i32, %c0_i32_0 : i32, i32
  }
  func.func @transform_3(%arg0: i32) -> (i32, i32) {
    %c0_i32 = arith.constant 0 : i32
    %c0_i32_0 = arith.constant 0 : i32
    %c0_i32_1 = arith.constant 0 : i32
    return %c0_i32, %c0_i32_0 : i32, i32
  }
  func.func @transform_4(%arg0: i32) -> (i32, i32, i32) {
    %c0_i32 = arith.constant 0 : i32
    %c0_i32_0 = arith.constant 0 : i32
    %c0_i32_1 = arith.constant 0 : i32
    %c0_i32_2 = arith.constant 0 : i32
    return %c0_i32, %c0_i32_0, %c0_i32_1 : i32, i32, i32
  }
  func.func @transform_5(%arg0: i32) -> (i32, i32, i32) {
    %c0_i32 = arith.constant 0 : i32
    %c0_i32_0 = arith.constant 0 : i32
    %c0_i32_1 = arith.constant 0 : i32
    %c0_i32_2 = arith.constant 0 : i32
    return %c0_i32, %c0_i32_0, %c0_i32_1 : i32, i32, i32
  }
  func.func @transform_6(%arg0: i32) -> (i32, i32, i32) {
    %c0_i32 = arith.constant 0 : i32
    %c0_i32_0 = arith.constant 0 : i32
    %c0_i32_1 = arith.constant 0 : i32
    %c0_i32_2 = arith.constant 0 : i32
    return %c0_i32, %c0_i32_0, %c0_i32_1 : i32, i32, i32
  }
  func.func @transform_7(%arg0: i32) -> (i32, i32, i32) {
    %c0_i32 = arith.constant 0 : i32
    %c0_i32_0 = arith.constant 0 : i32
    %c0_i32_1 = arith.constant 0 : i32
    %c0_i32_2 = arith.constant 0 : i32
    return %c0_i32, %c0_i32_0, %c0_i32_1 : i32, i32, i32
  }
  func.func @transform_8(%arg0: i32) -> (i32, i32, i32) {
    %c0_i32 = arith.constant 0 : i32
    %c0_i32_0 = arith.constant 0 : i32
    %c0_i32_1 = arith.constant 0 : i32
    %c0_i32_2 = arith.constant 0 : i32
    return %c0_i32, %c0_i32_0, %c0_i32_1 : i32, i32, i32
  }
  func.func @transform_9(%arg0: i32) -> (i32, i32, i32) {
    %c0_i32 = arith.constant 0 : i32
    %c0_i32_0 = arith.constant 0 : i32
    %c0_i32_1 = arith.constant 0 : i32
    %c0_i32_2 = arith.constant 0 : i32
    return %c0_i32, %c0_i32_0, %c0_i32_1 : i32, i32, i32
  }
  func.func @transform_10(%arg0: i32) -> (i32, i32, i32) {
    %c0_i32 = arith.constant 0 : i32
    %c0_i32_0 = arith.constant 0 : i32
    %c0_i32_1 = arith.constant 0 : i32
    %c0_i32_2 = arith.constant 0 : i32
    return %c0_i32, %c0_i32_0, %c0_i32_1 : i32, i32, i32
  }
  func.func @transform_11(%arg0: i32) -> (i32, i32) {
    %c0_i32 = arith.constant 0 : i32
    %c0_i32_0 = arith.constant 0 : i32
    %c0_i32_1 = arith.constant 0 : i32
    return %c0_i32, %c0_i32_0 : i32, i32
  }
  func.func @transform_12(%arg0: i32) -> (i32, i32) {
    %c0_i32 = arith.constant 0 : i32
    %c0_i32_0 = arith.constant 0 : i32
    %c0_i32_1 = arith.constant 0 : i32
    return %c0_i32, %c0_i32_0 : i32, i32
  }
  func.func @transform_13(%arg0: i32) -> (i32, i32) {
    %c0_i32 = arith.constant 0 : i32
    %c0_i32_0 = arith.constant 0 : i32
    %c0_i32_1 = arith.constant 0 : i32
    return %c0_i32, %c0_i32_0 : i32, i32
  }
  func.func @transform_14(%arg0: i32) -> (i32, i32) {
    %c0_i32 = arith.constant 0 : i32
    %c0_i32_0 = arith.constant 0 : i32
    %c0_i32_1 = arith.constant 0 : i32
    return %c0_i32, %c0_i32_0 : i32, i32
  }
  func.func @transform_15(%arg0: i32) -> (i32, i32) {
    %c0_i32 = arith.constant 0 : i32
    %c0_i32_0 = arith.constant 0 : i32
    %c0_i32_1 = arith.constant 0 : i32
    return %c0_i32, %c0_i32_0 : i32, i32
  }
  func.func @transform_16(%arg0: i32) -> (i32, i32) {
    %c0_i32 = arith.constant 0 : i32
    %c0_i32_0 = arith.constant 0 : i32
    %c0_i32_1 = arith.constant 0 : i32
    return %c0_i32, %c0_i32_0 : i32, i32
  }
  func.func @transform_17(%arg0: i32) -> (i32, i32) {
    %c0_i32 = arith.constant 0 : i32
    %c0_i32_0 = arith.constant 0 : i32
    %c0_i32_1 = arith.constant 0 : i32
    return %c0_i32, %c0_i32_0 : i32, i32
  }
  func.func @transform_18(%arg0: i32) -> (i32, i32) {
    %c0_i32 = arith.constant 0 : i32
    %c0_i32_0 = arith.constant 0 : i32
    %c0_i32_1 = arith.constant 0 : i32
    return %c0_i32, %c0_i32_0 : i32, i32
  }
  func.func @transform_19(%arg0: i32) -> (i32, i32) {
    %c0_i32 = arith.constant 0 : i32
    %c0_i32_0 = arith.constant 0 : i32
    %c0_i32_1 = arith.constant 0 : i32
    return %c0_i32, %c0_i32_0 : i32, i32
  }
  func.func @transform_20(%arg0: i32) -> (i32, i32, i32) {
    %c0_i32 = arith.constant 0 : i32
    %c0_i32_0 = arith.constant 0 : i32
    %c0_i32_1 = arith.constant 0 : i32
    return %arg0, %c0_i32, %c0_i32_0 : i32, i32, i32
  }
}

</mosaic_0001>

<llo_original>
// kernel: tpu_custom_call.1
$region0: #{tpu_custom_call.1}
  #allocation0 [shape = 'u32[]', space=smem, size = 0x4, offset = 0x4, fixed_abs, tag = 'smem constant byte address 0x4 - core index']
  #allocation1 [shape = 'u32[144,128]{1,0:T(1,128)}', space=vmem, size = 0x12000, scoped, tag = 'internal scratch']
  %s0 = inlined_call_operand.vmem [shape: f32[2,74,219], index: 0, kind: input, shape index: {}]
  %s1 = inlined_call_operand.vmem [shape: f32[10,219,32], index: 1, kind: input, shape index: {}]
  %s2 = inlined_call_operand.vmem [shape: f32[1,32], index: 2, kind: input, shape index: {}]
  %s3 = inlined_call_operand.vmem [shape: f32[65,32], index: 3, kind: input, shape index: {}]
  %s4 = inlined_call_operand.vmem [shape: f32[4,32,8], index: 4, kind: input, shape index: {}]
  %s5 = inlined_call_operand.vmem [shape: f32[4,1,8], index: 5, kind: input, shape index: {}]
  %s6 = inlined_call_operand.vmem [shape: f32[4,32,8], index: 6, kind: input, shape index: {}]
  %s7 = inlined_call_operand.vmem [shape: f32[4,1,8], index: 7, kind: input, shape index: {}]
  %s8 = inlined_call_operand.vmem [shape: f32[4,32,8], index: 8, kind: input, shape index: {}]
  %s9 = inlined_call_operand.vmem [shape: f32[4,1,8], index: 9, kind: input, shape index: {}]
  %s10 = inlined_call_operand.vmem [shape: f32[4,8,32], index: 10, kind: input, shape index: {}]
  %s11 = inlined_call_operand.vmem [shape: f32[1,32], index: 11, kind: input, shape index: {}]
  %s12 = inlined_call_operand.vmem [shape: f32[1,32], index: 12, kind: input, shape index: {}]
  %s13 = inlined_call_operand.vmem [shape: f32[1,32], index: 13, kind: input, shape index: {}]
  %s14 = inlined_call_operand.vmem [shape: f32[32,16], index: 14, kind: input, shape index: {}]
  %s15 = inlined_call_operand.vmem [shape: f32[1,16], index: 15, kind: input, shape index: {}]
  %s16 = inlined_call_operand.vmem [shape: f32[16,32], index: 16, kind: input, shape index: {}]
  %s17 = inlined_call_operand.vmem [shape: f32[1,32], index: 17, kind: input, shape index: {}]
  %s18 = inlined_call_operand.vmem [shape: f32[1,32], index: 18, kind: input, shape index: {}]
  %s19 = inlined_call_operand.vmem [shape: f32[1,32], index: 19, kind: input, shape index: {}]
  %s20 = inlined_call_operand.vmem [shape: f32[2,65,32], index: 20, kind: output, shape index: {}]
  %s21 = sld [smem:[#allocation0]]
  $region113: #{tpu_custom_call.1} parent=0
    _
  %s23 = ssub.s32 1, %s21
  %s24 = scalar_select 0, %s23, %s21
  loop: start=0, step=1, limit=4
  $region2: #{tpu_custom_call.1} parent=0 // loop_pre_header
    _
  $region3: #{tpu_custom_call.1} parent=0 // loop_header
    %s26 = sphi 0, %s30
    %p27 = scmp.ge.s32.totalorder %s26, 4
    %s36 = sphi 0, %s38
    %s39 = sphi 0, %s36
    %s40 = sphi 0, %s39
    %s56 = sphi 0, %s40
    %s60 = sphi 0, %s60
    %s62 = sphi 0, %s60
    %s63 = sphi 0, %s62
    %s77 = sphi 0, %s63
    %s81 = sphi 0, %s81
    %s83 = sphi 0, %s81
    %s84 = sphi 0, %s83
    %s98 = sphi 0, %s84
    %s102 = sphi 0, %s102
    %s104 = sphi 0, %s102
    %s105 = sphi 0, %s104
    %s119 = sphi 0, %s105
    %s123 = sphi 0, %s123
    %s125 = sphi 0, %s123
    %s126 = sphi 0, %s125
    %s140 = sphi 0, %s126
    %s144 = sphi 0, %s144
    %s146 = sphi 0, %s144
    %s147 = sphi 0, %s146
    %s161 = sphi 0, %s147
    %s165 = sphi 0, %s165
    %s167 = sphi 0, %s165
    %s168 = sphi 0, %s167
    %s182 = sphi 0, %s168
    %s186 = sphi 0, %s186
    %s188 = sphi 0, %s186
    %s189 = sphi 0, %s188
    %s203 = sphi 0, %s189
    %s207 = sphi 0, %s207
    %s209 = sphi 0, %s207
    %s210 = sphi 0, %s209
    %s224 = sphi 0, %s210
    %s228 = sphi 0, %s228
    %s230 = sphi 0, %s228
    %s231 = sphi 0, %s230
    %s245 = sphi 0, %s231
    %s249 = sphi 0, %s249
    %s251 = sphi 0, %s249
    %s252 = sphi 0, %s251
    %s266 = sphi 0, %s252
    %s270 = sphi 0, %s270
    %s272 = sphi 0, %s270
    %s273 = sphi 0, %s272
    %s287 = sphi 0, %s273
    %s291 = sphi 0, %s291
    %s293 = sphi 0, %s291
    %s294 = sphi 0, %s293
    %s308 = sphi 0, %s294
    %s312 = sphi 0, %s312
    %s314 = sphi 0, %s312
    %s315 = sphi 0, %s314
    %s329 = sphi 0, %s315
    %s333 = sphi 0, %s333
    %s335 = sphi 0, %s333
    %s336 = sphi 0, %s335
    %s350 = sphi 0, %s336
    %s354 = sphi 0, %s354
    %s356 = sphi 0, %s354
    %s357 = sphi 0, %s356
    %s371 = sphi 0, %s357
    %s375 = sphi 0, %s375
    %s377 = sphi 0, %s375
    %s378 = sphi 0, %s377
    %s392 = sphi 0, %s378
    %s396 = sphi 0, %s396
    %s398 = sphi 0, %s396
    %s399 = sphi 0, %s398
    %s413 = sphi 0, %s399
    %s417 = sphi 0, %s417
    %s419 = sphi 0, %s417
    %s420 = sphi 0, %s419
    %s434 = sphi 0, %s420
    %s438 = sphi 0, %s438
    %s440 = sphi 0, %s438
    %s441 = sphi 0, %s440
    %s455 = sphi 0, %s441
    %s461 = sphi 0, %s463
    %s464 = sphi 0, %s461
    %s465 = sphi 0, %s464
    %s481 = sphi 0, %s465
  $region4: #{tpu_custom_call.1} parent=0 // loop_header_branch
    %29 = sbr.rel (%p27) target = $region8
  $region5: #{tpu_custom_call.1} parent=0 // loop_body
    %s31 = ssub.s32 %s26, 1
    %s32 = ssub.s32 %s26, 2
    %s33 = sadd.s32 %s26, 1
    %s34 = ssub.s32 %s26, %s33
    %p35 = scmp.eq.s32.totalorder %s34, 0
    %s37 = sadd.s32 %s36, 1
    %s38 = scalar_select %p35, %s36, %s37
    %p41 = pneg %p35
    %p42 = scmp.eq.s32.totalorder %s26, 1
    %p43 = por %p41, %p42
    %p44 = scmp.ne.s32.totalorder %s36, %s39
    %p45 = scmp.eq.s32.totalorder %s26, 0
    %p46 = por %p44, %p45
    %p47 = scmp.ne.s32.totalorder %s36, %s39
    %p48 = scmp.eq.s32.totalorder %s31, 1
    %p49 = por %p47, %p48
    %p50 = scmp.ne.s32.totalorder %s39, %s40
    %p51 = scmp.eq.s32.totalorder %s31, 0
    %p52 = por %p50, %p51
    %p53 = scmp.ne.s32.totalorder %s39, %s40
    %p54 = scmp.eq.s32.totalorder %s32, 1
    %p55 = por %p53, %p54
    %p57 = scmp.ne.s32.totalorder %s40, %s56
    %p58 = scmp.eq.s32.totalorder %s32, 0
    %p59 = por %p57, %p58
    %s61 = sadd.s32 %s60, 1
    %p64 = scmp.eq.s32.totalorder %s26, 1
    %p65 = scmp.ne.s32.totalorder %s60, %s62
    %p66 = scmp.eq.s32.totalorder %s26, 0
    %p67 = por %p65, %p66
    %p68 = scmp.ne.s32.totalorder %s60, %s62
    %p69 = scmp.eq.s32.totalorder %s31, 1
    %p70 = por %p68, %p69
    %p71 = scmp.ne.s32.totalorder %s62, %s63
    %p72 = scmp.eq.s32.totalorder %s31, 0
    %p73 = por %p71, %p72
    %p74 = scmp.ne.s32.totalorder %s62, %s63
    %p75 = scmp.eq.s32.totalorder %s32, 1
    %p76 = por %p74, %p75
    %p78 = scmp.ne.s32.totalorder %s63, %s77
    %p79 = scmp.eq.s32.totalorder %s32, 0
    %p80 = por %p78, %p79
    %s82 = sadd.s32 %s81, 1
    %p85 = scmp.eq.s32.totalorder %s26, 1
    %p86 = scmp.ne.s32.totalorder %s81, %s83
    %p87 = scmp.eq.s32.totalorder %s26, 0
    %p88 = por %p86, %p87
    %p89 = scmp.ne.s32.totalorder %s81, %s83
    %p90 = scmp.eq.s32.totalorder %s31, 1
    %p91 = por %p89, %p90
    %p92 = scmp.ne.s32.totalorder %s83, %s84
    %p93 = scmp.eq.s32.totalorder %s31, 0
    %p94 = por %p92, %p93
    %p95 = scmp.ne.s32.totalorder %s83, %s84
    %p96 = scmp.eq.s32.totalorder %s32, 1
    %p97 = por %p95, %p96
    %p99 = scmp.ne.s32.totalorder %s84, %s98
    %p100 = scmp.eq.s32.totalorder %s32, 0
    %p101 = por %p99, %p100
    %s103 = sadd.s32 %s102, 1
    %p106 = scmp.eq.s32.totalorder %s26, 1
    %p107 = scmp.ne.s32.totalorder %s102, %s104
    %p108 = scmp.eq.s32.totalorder %s26, 0
    %p109 = por %p107, %p108
    %p110 = scmp.ne.s32.totalorder %s102, %s104
    %p111 = scmp.eq.s32.totalorder %s31, 1
    %p112 = por %p110, %p111
    %p113 = scmp.ne.s32.totalorder %s104, %s105
    %p114 = scmp.eq.s32.totalorder %s31, 0
    %p115 = por %p113, %p114
    %p116 = scmp.ne.s32.totalorder %s104, %s105
    %p117 = scmp.eq.s32.totalorder %s32, 1
    %p118 = por %p116, %p117
    %p120 = scmp.ne.s32.totalorder %s105, %s119
    %p121 = scmp.eq.s32.totalorder %s32, 0
    %p122 = por %p120, %p121
    %s124 = sadd.s32 %s123, 1
    %p127 = scmp.eq.s32.totalorder %s26, 1
    %p128 = scmp.ne.s32.totalorder %s123, %s125
    %p129 = scmp.eq.s32.totalorder %s26, 0
    %p130 = por %p128, %p129
    %p131 = scmp.ne.s32.totalorder %s123, %s125
    %p132 = scmp.eq.s32.totalorder %s31, 1
    %p133 = por %p131, %p132
    %p134 = scmp.ne.s32.totalorder %s125, %s126
    %p135 = scmp.eq.s32.totalorder %s31, 0
    %p136 = por %p134, %p135
    %p137 = scmp.ne.s32.totalorder %s125, %s126
    %p138 = scmp.eq.s32.totalorder %s32, 1
    %p139 = por %p137, %p138
    %p141 = scmp.ne.s32.totalorder %s126, %s140
    %p142 = scmp.eq.s32.totalorder %s32, 0
    %p143 = por %p141, %p142
    %s145 = sadd.s32 %s144, 1
    %p148 = scmp.eq.s32.totalorder %s26, 1
    %p149 = scmp.ne.s32.totalorder %s144, %s146
    %p150 = scmp.eq.s32.totalorder %s26, 0
    %p151 = por %p149, %p150
    %p152 = scmp.ne.s32.totalorder %s144, %s146
    %p153 = scmp.eq.s32.totalorder %s31, 1
    %p154 = por %p152, %p153
    %p155 = scmp.ne.s32.totalorder %s146, %s147
    %p156 = scmp.eq.s32.totalorder %s31, 0
    %p157 = por %p155, %p156
    %p158 = scmp.ne.s32.totalorder %s146, %s147
    %p159 = scmp.eq.s32.totalorder %s32, 1
    %p160 = por %p158, %p159
    %p162 = scmp.ne.s32.totalorder %s147, %s161
    %p163 = scmp.eq.s32.totalorder %s32, 0
    %p164 = por %p162, %p163
    %s166 = sadd.s32 %s165, 1
    %p169 = scmp.eq.s32.totalorder %s26, 1
    %p170 = scmp.ne.s32.totalorder %s165, %s167
    %p171 = scmp.eq.s32.totalorder %s26, 0
    %p172 = por %p170, %p171
    %p173 = scmp.ne.s32.totalorder %s165, %s167
    %p174 = scmp.eq.s32.totalorder %s31, 1
    %p175 = por %p173, %p174
    %p176 = scmp.ne.s32.totalorder %s167, %s168
    %p177 = scmp.eq.s32.totalorder %s31, 0
    %p178 = por %p176, %p177
    %p179 = scmp.ne.s32.totalorder %s167, %s168
    %p180 = scmp.eq.s32.totalorder %s32, 1
    %p181 = por %p179, %p180
    %p183 = scmp.ne.s32.totalorder %s168, %s182
    %p184 = scmp.eq.s32.totalorder %s32, 0
    %p185 = por %p183, %p184
    %s187 = sadd.s32 %s186, 1
    %p190 = scmp.eq.s32.totalorder %s26, 1
    %p191 = scmp.ne.s32.totalorder %s186, %s188
    %p192 = scmp.eq.s32.totalorder %s26, 0
    %p193 = por %p191, %p192
    %p194 = scmp.ne.s32.totalorder %s186, %s188
    %p195 = scmp.eq.s32.totalorder %s31, 1
    %p196 = por %p194, %p195
    %p197 = scmp.ne.s32.totalorder %s188, %s189
    %p198 = scmp.eq.s32.totalorder %s31, 0
    %p199 = por %p197, %p198
    %p200 = scmp.ne.s32.totalorder %s188, %s189
    %p201 = scmp.eq.s32.totalorder %s32, 1
    %p202 = por %p200, %p201
    %p204 = scmp.ne.s32.totalorder %s189, %s203
    %p205 = scmp.eq.s32.totalorder %s32, 0
    %p206 = por %p204, %p205
    %s208 = sadd.s32 %s207, 1
    %p211 = scmp.eq.s32.totalorder %s26, 1
    %p212 = scmp.ne.s32.totalorder %s207, %s209
    %p213 = scmp.eq.s32.totalorder %s26, 0
    %p214 = por %p212, %p213
    %p215 = scmp.ne.s32.totalorder %s207, %s209
    %p216 = scmp.eq.s32.totalorder %s31, 1
    %p217 = por %p215, %p216
    %p218 = scmp.ne.s32.totalorder %s209, %s210
    %p219 = scmp.eq.s32.totalorder %s31, 0
    %p220 = por %p218, %p219
    %p221 = scmp.ne.s32.totalorder %s209, %s210
    %p222 = scmp.eq.s32.totalorder %s32, 1
    %p223 = por %p221, %p222
    %p225 = scmp.ne.s32.totalorder %s210, %s224
    %p226 = scmp.eq.s32.totalorder %s32, 0
    %p227 = por %p225, %p226
    %s229 = sadd.s32 %s228, 1
    %p232 = scmp.eq.s32.totalorder %s26, 1
    %p233 = scmp.ne.s32.totalorder %s228, %s230
    %p234 = scmp.eq.s32.totalorder %s26, 0
    %p235 = por %p233, %p234
    %p236 = scmp.ne.s32.totalorder %s228, %s230
    %p237 = scmp.eq.s32.totalorder %s31, 1
    %p238 = por %p236, %p237
    %p239 = scmp.ne.s32.totalorder %s230, %s231
    %p240 = scmp.eq.s32.totalorder %s31, 0
    %p241 = por %p239, %p240
    %p242 = scmp.ne.s32.totalorder %s230, %s231
    %p243 = scmp.eq.s32.totalorder %s32, 1
    %p244 = por %p242, %p243
    %p246 = scmp.ne.s32.totalorder %s231, %s245
    %p247 = scmp.eq.s32.totalorder %s32, 0
    %p248 = por %p246, %p247
    %s250 = sadd.s32 %s249, 1
    %p253 = scmp.eq.s32.totalorder %s26, 1
    %p254 = scmp.ne.s32.totalorder %s249, %s251
    %p255 = scmp.eq.s32.totalorder %s26, 0
    %p256 = por %p254, %p255
    %p257 = scmp.ne.s32.totalorder %s249, %s251
    %p258 = scmp.eq.s32.totalorder %s31, 1
    %p259 = por %p257, %p258
    %p260 = scmp.ne.s32.totalorder %s251, %s252
    %p261 = scmp.eq.s32.totalorder %s31, 0
    %p262 = por %p260, %p261
    %p263 = scmp.ne.s32.totalorder %s251, %s252
    %p264 = scmp.eq.s32.totalorder %s32, 1
    %p265 = por %p263, %p264
    %p267 = scmp.ne.s32.totalorder %s252, %s266
    %p268 = scmp.eq.s32.totalorder %s32, 0
    %p269 = por %p267, %p268
    %s271 = sadd.s32 %s270, 1
    %p274 = scmp.eq.s32.totalorder %s26, 1
    %p275 = scmp.ne.s32.totalorder %s270, %s272
    %p276 = scmp.eq.s32.totalorder %s26, 0
    %p277 = por %p275, %p276
    %p278 = scmp.ne.s32.totalorder %s270, %s272
    %p279 = scmp.eq.s32.totalorder %s31, 1
    %p280 = por %p278, %p279
    %p281 = scmp.ne.s32.totalorder %s272, %s273
    %p282 = scmp.eq.s32.totalorder %s31, 0
    %p283 = por %p281, %p282
    %p284 = scmp.ne.s32.totalorder %s272, %s273
    %p285 = scmp.eq.s32.totalorder %s32, 1
    %p286 = por %p284, %p285
    %p288 = scmp.ne.s32.totalorder %s273, %s287
    %p289 = scmp.eq.s32.totalorder %s32, 0
    %p290 = por %p288, %p289
    %s292 = sadd.s32 %s291, 1
    %p295 = scmp.eq.s32.totalorder %s26, 1
    %p296 = scmp.ne.s32.totalorder %s291, %s293
    %p297 = scmp.eq.s32.totalorder %s26, 0
    %p298 = por %p296, %p297
    %p299 = scmp.ne.s32.totalorder %s291, %s293
    %p300 = scmp.eq.s32.totalorder %s31, 1
    %p301 = por %p299, %p300
    %p302 = scmp.ne.s32.totalorder %s293, %s294
    %p303 = scmp.eq.s32.totalorder %s31, 0
    %p304 = por %p302, %p303
    %p305 = scmp.ne.s32.totalorder %s293, %s294
    %p306 = scmp.eq.s32.totalorder %s32, 1
    %p307 = por %p305, %p306
    %p309 = scmp.ne.s32.totalorder %s294, %s308
    %p310 = scmp.eq.s32.totalorder %s32, 0
    %p311 = por %p309, %p310
    %s313 = sadd.s32 %s312, 1
    %p316 = scmp.eq.s32.totalorder %s26, 1
    %p317 = scmp.ne.s32.totalorder %s312, %s314
    %p318 = scmp.eq.s32.totalorder %s26, 0
    %p319 = por %p317, %p318
    %p320 = scmp.ne.s32.totalorder %s312, %s314
    %p321 = scmp.eq.s32.totalorder %s31, 1
    %p322 = por %p320, %p321
    %p323 = scmp.ne.s32.totalorder %s314, %s315
    %p324 = scmp.eq.s32.totalorder %s31, 0
    %p325 = por %p323, %p324
    %p326 = scmp.ne.s32.totalorder %s314, %s315
    %p327 = scmp.eq.s32.totalorder %s32, 1
    %p328 = por %p326, %p327
    %p330 = scmp.ne.s32.totalorder %s315, %s329
    %p331 = scmp.eq.s32.totalorder %s32, 0
    %p332 = por %p330, %p331
    %s334 = sadd.s32 %s333, 1
    %p337 = scmp.eq.s32.totalorder %s26, 1
    %p338 = scmp.ne.s32.totalorder %s333, %s335
    %p339 = scmp.eq.s32.totalorder %s26, 0
    %p340 = por %p338, %p339
    %p341 = scmp.ne.s32.totalorder %s333, %s335
    %p342 = scmp.eq.s32.totalorder %s31, 1
    %p343 = por %p341, %p342
    %p344 = scmp.ne.s32.totalorder %s335, %s336
    %p345 = scmp.eq.s32.totalorder %s31, 0
    %p346 = por %p344, %p345
    %p347 = scmp.ne.s32.totalorder %s335, %s336
    %p348 = scmp.eq.s32.totalorder %s32, 1
    %p349 = por %p347, %p348
    %p351 = scmp.ne.s32.totalorder %s336, %s350
    %p352 = scmp.eq.s32.totalorder %s32, 0
    %p353 = por %p351, %p352
    %s355 = sadd.s32 %s354, 1
    %p358 = scmp.eq.s32.totalorder %s26, 1
    %p359 = scmp.ne.s32.totalorder %s354, %s356
    %p360 = scmp.eq.s32.totalorder %s26, 0
    %p361 = por %p359, %p360
    %p362 = scmp.ne.s32.totalorder %s354, %s356
    %p363 = scmp.eq.s32.totalorder %s31, 1
    %p364 = por %p362, %p363
    %p365 = scmp.ne.s32.totalorder %s356, %s357
    %p366 = scmp.eq.s32.totalorder %s31, 0
    %p367 = por %p365, %p366
    %p368 = scmp.ne.s32.totalorder %s356, %s357
    %p369 = scmp.eq.s32.totalorder %s32, 1
    %p370 = por %p368, %p369
    %p372 = scmp.ne.s32.totalorder %s357, %s371
    %p373 = scmp.eq.s32.totalorder %s32, 0
    %p374 = por %p372, %p373
    %s376 = sadd.s32 %s375, 1
    %p379 = scmp.eq.s32.totalorder %s26, 1
    %p380 = scmp.ne.s32.totalorder %s375, %s377
    %p381 = scmp.eq.s32.totalorder %s26, 0
    %p382 = por %p380, %p381
    %p383 = scmp.ne.s32.totalorder %s375, %s377
    %p384 = scmp.eq.s32.totalorder %s31, 1
    %p385 = por %p383, %p384
    %p386 = scmp.ne.s32.totalorder %s377, %s378
    %p387 = scmp.eq.s32.totalorder %s31, 0
    %p388 = por %p386, %p387
    %p389 = scmp.ne.s32.totalorder %s377, %s378
    %p390 = scmp.eq.s32.totalorder %s32, 1
    %p391 = por %p389, %p390
    %p393 = scmp.ne.s32.totalorder %s378, %s392
    %p394 = scmp.eq.s32.totalorder %s32, 0
    %p395 = por %p393, %p394
    %s397 = sadd.s32 %s396, 1
    %p400 = scmp.eq.s32.totalorder %s26, 1
    %p401 = scmp.ne.s32.totalorder %s396, %s398
    %p402 = scmp.eq.s32.totalorder %s26, 0
    %p403 = por %p401, %p402
    %p404 = scmp.ne.s32.totalorder %s396, %s398
    %p405 = scmp.eq.s32.totalorder %s31, 1
    %p406 = por %p404, %p405
    %p407 = scmp.ne.s32.totalorder %s398, %s399
    %p408 = scmp.eq.s32.totalorder %s31, 0
    %p409 = por %p407, %p408
    %p410 = scmp.ne.s32.totalorder %s398, %s399
    %p411 = scmp.eq.s32.totalorder %s32, 1
    %p412 = por %p410, %p411
    %p414 = scmp.ne.s32.totalorder %s399, %s413
    %p415 = scmp.eq.s32.totalorder %s32, 0
    %p416 = por %p414, %p415
    %s418 = sadd.s32 %s417, 1
    %p421 = scmp.eq.s32.totalorder %s26, 1
    %p422 = scmp.ne.s32.totalorder %s417, %s419
    %p423 = scmp.eq.s32.totalorder %s26, 0
    %p424 = por %p422, %p423
    %p425 = scmp.ne.s32.totalorder %s417, %s419
    %p426 = scmp.eq.s32.totalorder %s31, 1
    %p427 = por %p425, %p426
    %p428 = scmp.ne.s32.totalorder %s419, %s420
    %p429 = scmp.eq.s32.totalorder %s31, 0
    %p430 = por %p428, %p429
    %p431 = scmp.ne.s32.totalorder %s419, %s420
    %p432 = scmp.eq.s32.totalorder %s32, 1
    %p433 = por %p431, %p432
    %p435 = scmp.ne.s32.totalorder %s420, %s434
    %p436 = scmp.eq.s32.totalorder %s32, 0
    %p437 = por %p435, %p436
    %s439 = sadd.s32 %s438, 1
    %p442 = scmp.eq.s32.totalorder %s26, 1
    %p443 = scmp.ne.s32.totalorder %s438, %s440
    %p444 = scmp.eq.s32.totalorder %s26, 0
    %p445 = por %p443, %p444
    %p446 = scmp.ne.s32.totalorder %s438, %s440
    %p447 = scmp.eq.s32.totalorder %s31, 1
    %p448 = por %p446, %p447
    %p449 = scmp.ne.s32.totalorder %s440, %s441
    %p450 = scmp.eq.s32.totalorder %s31, 0
    %p451 = por %p449, %p450
    %p452 = scmp.ne.s32.totalorder %s440, %s441
    %p453 = scmp.eq.s32.totalorder %s32, 1
    %p454 = por %p452, %p453
    %p456 = scmp.ne.s32.totalorder %s441, %s455
    %p457 = scmp.eq.s32.totalorder %s32, 0
    %p458 = por %p456, %p457
    %s459 = ssub.s32 %s26, %s33
    %p460 = scmp.eq.s32.totalorder %s459, 0
    %s462 = sadd.s32 %s461, 1
    %s463 = scalar_select %p460, %s461, %s462
    %p466 = pneg %p460
    %p467 = scmp.eq.s32.totalorder %s26, 1
    %p468 = por %p466, %p467
    %p469 = scmp.ne.s32.totalorder %s461, %s464
    %p470 = scmp.eq.s32.totalorder %s26, 0
    %p471 = por %p469, %p470
    %p472 = scmp.ne.s32.totalorder %s461, %s464
    %p473 = scmp.eq.s32.totalorder %s31, 1
    %p474 = por %p472, %p473
    %p475 = scmp.ne.s32.totalorder %s464, %s465
    %p476 = scmp.eq.s32.totalorder %s31, 0
    %p477 = por %p475, %p476
    %p478 = scmp.ne.s32.totalorder %s464, %s465
    %p479 = scmp.eq.s32.totalorder %s32, 1
    %p480 = por %p478, %p479
    %p482 = scmp.ne.s32.totalorder %s465, %s481
    %p483 = scmp.eq.s32.totalorder %s32, 0
    %p484 = por %p482, %p483
    %p485 = scmp.le.s32.totalorder 1, %s26
    %p486 = scmp.lt.s32.totalorder %s26, 3
    %p487 = pnand %p485, %p486
    %p488 = pneg %p487
    // Predicated region
    $region9: #{tpu_custom_call.1} parent=5 // pred_check
      _
    $region10: #{tpu_custom_call.1} parent=5 // pred_check_branch
      %490 = sbr.rel (%p487) target = $region12
    $region11: #{tpu_custom_call.1} parent=5 // pred_region
      %s491 = ssub.s32 %s26, 1
      // Predicated region
      $region13: #{tpu_custom_call.1} parent=11 // pred_check
        %p492 = pneg %p73
      $region14: #{tpu_custom_call.1} parent=11 // pred_check_branch
        %494 = sbr.rel (%p492) target = $region16
      $region15: #{tpu_custom_call.1} parent=11 // pred_region
        _
      $region16: #{tpu_custom_call.1} parent=11 // pred_fallthru
        _
      // Predicated region
      $region17: #{tpu_custom_call.1} parent=11 // pred_check
        %p495 = pneg %p94
      $region18: #{tpu_custom_call.1} parent=11 // pred_check_branch
        %497 = sbr.rel (%p495) target = $region20
      $region19: #{tpu_custom_call.1} parent=11 // pred_region
        _
      $region20: #{tpu_custom_call.1} parent=11 // pred_fallthru
        _
      // Predicated region
      $region21: #{tpu_custom_call.1} parent=11 // pred_check
        %p498 = pneg %p115
      $region22: #{tpu_custom_call.1} parent=11 // pred_check_branch
        %500 = sbr.rel (%p498) target = $region24
      $region23: #{tpu_custom_call.1} parent=11 // pred_region
        _
      $region24: #{tpu_custom_call.1} parent=11 // pred_fallthru
        _
      // Predicated region
      $region25: #{tpu_custom_call.1} parent=11 // pred_check
        %p501 = pneg %p136
      $region26: #{tpu_custom_call.1} parent=11 // pred_check_branch
        %503 = sbr.rel (%p501) target = $region28
      $region27: #{tpu_custom_call.1} parent=11 // pred_region
        _
      $region28: #{tpu_custom_call.1} parent=11 // pred_fallthru
        _
      // Predicated region
      $region29: #{tpu_custom_call.1} parent=11 // pred_check
        %p504 = pneg %p157
      $region30: #{tpu_custom_call.1} parent=11 // pred_check_branch
        %506 = sbr.rel (%p504) target = $region32
      $region31: #{tpu_custom_call.1} parent=11 // pred_region
        _
      $region32: #{tpu_custom_call.1} parent=11 // pred_fallthru
        _
      // Predicated region
      $region33: #{tpu_custom_call.1} parent=11 // pred_check
        %p507 = pneg %p178
      $region34: #{tpu_custom_call.1} parent=11 // pred_check_branch
        %509 = sbr.rel (%p507) target = $region36
      $region35: #{tpu_custom_call.1} parent=11 // pred_region
        _
      $region36: #{tpu_custom_call.1} parent=11 // pred_fallthru
        _
      // Predicated region
      $region37: #{tpu_custom_call.1} parent=11 // pred_check
        %p510 = pneg %p199
      $region38: #{tpu_custom_call.1} parent=11 // pred_check_branch
        %512 = sbr.rel (%p510) target = $region40
      $region39: #{tpu_custom_call.1} parent=11 // pred_region
        _
      $region40: #{tpu_custom_call.1} parent=11 // pred_fallthru
        _
      // Predicated region
      $region41: #{tpu_custom_call.1} parent=11 // pred_check
        %p513 = pneg %p220
      $region42: #{tpu_custom_call.1} parent=11 // pred_check_branch
        %515 = sbr.rel (%p513) target = $region44
      $region43: #{tpu_custom_call.1} parent=11 // pred_region
        _
      $region44: #{tpu_custom_call.1} parent=11 // pred_fallthru
        _
      // Predicated region
      $region45: #{tpu_custom_call.1} parent=11 // pred_check
        %p516 = pneg %p241
      $region46: #{tpu_custom_call.1} parent=11 // pred_check_branch
        %518 = sbr.rel (%p516) target = $region48
      $region47: #{tpu_custom_call.1} parent=11 // pred_region
        _
      $region48: #{tpu_custom_call.1} parent=11 // pred_fallthru
        _
      // Predicated region
      $region49: #{tpu_custom_call.1} parent=11 // pred_check
        %p519 = pneg %p262
      $region50: #{tpu_custom_call.1} parent=11 // pred_check_branch
        %521 = sbr.rel (%p519) target = $region52
      $region51: #{tpu_custom_call.1} parent=11 // pred_region
        _
      $region52: #{tpu_custom_call.1} parent=11 // pred_fallthru
        _
      // Predicated region
      $region53: #{tpu_custom_call.1} parent=11 // pred_check
        %p522 = pneg %p283
      $region54: #{tpu_custom_call.1} parent=11 // pred_check_branch
        %524 = sbr.rel (%p522) target = $region56
      $region55: #{tpu_custom_call.1} parent=11 // pred_region
        _
      $region56: #{tpu_custom_call.1} parent=11 // pred_fallthru
        _
      // Predicated region
      $region57: #{tpu_custom_call.1} parent=11 // pred_check
        %p525 = pneg %p304
      $region58: #{tpu_custom_call.1} parent=11 // pred_check_branch
        %527 = sbr.rel (%p525) target = $region60
      $region59: #{tpu_custom_call.1} parent=11 // pred_region
        _
      $region60: #{tpu_custom_call.1} parent=11 // pred_fallthru
        _
      // Predicated region
      $region61: #{tpu_custom_call.1} parent=11 // pred_check
        %p528 = pneg %p325
      $region62: #{tpu_custom_call.1} parent=11 // pred_check_branch
        %530 = sbr.rel (%p528) target = $region64
      $region63: #{tpu_custom_call.1} parent=11 // pred_region
        _
      $region64: #{tpu_custom_call.1} parent=11 // pred_fallthru
        _
      // Predicated region
      $region65: #{tpu_custom_call.1} parent=11 // pred_check
        %p531 = pneg %p346
      $region66: #{tpu_custom_call.1} parent=11 // pred_check_branch
        %533 = sbr.rel (%p531) target = $region68
      $region67: #{tpu_custom_call.1} parent=11 // pred_region
        _
      $region68: #{tpu_custom_call.1} parent=11 // pred_fallthru
        _
      // Predicated region
      $region69: #{tpu_custom_call.1} parent=11 // pred_check
        %p534 = pneg %p367
      $region70: #{tpu_custom_call.1} parent=11 // pred_check_branch
        %536 = sbr.rel (%p534) target = $region72
      $region71: #{tpu_custom_call.1} parent=11 // pred_region
        _
      $region72: #{tpu_custom_call.1} parent=11 // pred_fallthru
        _
      // Predicated region
      $region73: #{tpu_custom_call.1} parent=11 // pred_check
        %p537 = pneg %p388
      $region74: #{tpu_custom_call.1} parent=11 // pred_check_branch
        %539 = sbr.rel (%p537) target = $region76
      $region75: #{tpu_custom_call.1} parent=11 // pred_region
        _
      $region76: #{tpu_custom_call.1} parent=11 // pred_fallthru
        _
      // Predicated region
      $region77: #{tpu_custom_call.1} parent=11 // pred_check
        %p540 = pneg %p409
      $region78: #{tpu_custom_call.1} parent=11 // pred_check_branch
        %542 = sbr.rel (%p540) target = $region80
      $region79: #{tpu_custom_call.1} parent=11 // pred_region
        _
      $region80: #{tpu_custom_call.1} parent=11 // pred_fallthru
        _
      // Predicated region
      $region81: #{tpu_custom_call.1} parent=11 // pred_check
        %p543 = pneg %p430
      $region82: #{tpu_custom_call.1} parent=11 // pred_check_branch
        %545 = sbr.rel (%p543) target = $region84
      $region83: #{tpu_custom_call.1} parent=11 // pred_region
        _
      $region84: #{tpu_custom_call.1} parent=11 // pred_fallthru
        _
      // Predicated region
      $region85: #{tpu_custom_call.1} parent=11 // pred_check
        %p546 = pneg %p451
      $region86: #{tpu_custom_call.1} parent=11 // pred_check_branch
        %548 = sbr.rel (%p546) target = $region88
      $region87: #{tpu_custom_call.1} parent=11 // pred_region
        _
      $region88: #{tpu_custom_call.1} parent=11 // pred_fallthru
        _
    $region12: #{tpu_custom_call.1} parent=5 // pred_fallthru
      _
    %p549 = scmp.lt.s32.totalorder %s26, 2
    // Predicated region
    $region89: #{tpu_custom_call.1} parent=5 // pred_check
      %p550 = pneg %p549
    $region90: #{tpu_custom_call.1} parent=5 // pred_check_branch
      %552 = sbr.rel (%p550) target = $region92
    $region91: #{tpu_custom_call.1} parent=5 // pred_region
      // Predicated region
      $region93: #{tpu_custom_call.1} parent=91 // pred_check
        %p553 = pneg %p46
      $region94: #{tpu_custom_call.1} parent=91 // pred_check_branch
        %555 = sbr.rel (%p553) target = $region96
      $region95: #{tpu_custom_call.1} parent=91 // pred_region
        %p556 = scmp.lt.s32.totalorder %s26, 1
        %s557 = scalar_select %p556, %s26, 1
        %s558 = smul.addr %s557, 20
        %s559 = smul.addr %s558, 8
        %s560 = scalar_lea.vmem %s0, %s559
      $region96: #{tpu_custom_call.1} parent=91 // pred_fallthru
        _
    $region92: #{tpu_custom_call.1} parent=5 // pred_fallthru
      _
    %p561 = scmp.le.s32.totalorder 1, %s26
    %p562 = scmp.lt.s32.totalorder %s26, 3
    %p563 = pnand %p561, %p562
    %p564 = pneg %p563
    // Predicated region
    $region97: #{tpu_custom_call.1} parent=5 // pred_check
      _
    $region98: #{tpu_custom_call.1} parent=5 // pred_check_branch
      %566 = sbr.rel (%p563) target = $region100
    $region99: #{tpu_custom_call.1} parent=5 // pred_region
      %s567 = ssub.s32 %s26, 1
      %p568 = scmp.lt.s32.totalorder %s31, 1
      %s569 = scalar_select %p568, %s31, 1
      %s570 = smul.addr %s569, 20
      %s571 = smul.addr %s570, 8
      %s572 = scalar_lea.vmem %s0, %s571
      %p573 = pneg %p52
      %p574 = pneg %p49
      %p575 = pneg %p73
      %p576 = pneg %p70
      %p577 = pneg %p94
      %p578 = pneg %p91
      %p579 = pneg %p115
      %p580 = pneg %p112
      %p581 = pneg %p136
      %p582 = pneg %p133
      %p583 = pneg %p157
      %p584 = pneg %p154
      %p585 = pneg %p178
      %p586 = pneg %p175
      %p587 = pneg %p199
      %p588 = pneg %p196
      %p589 = pneg %p220
      %p590 = pneg %p217
      %p591 = pneg %p241
      %p592 = pneg %p238
      %p593 = pneg %p262
      %p594 = pneg %p259
      %p595 = pneg %p283
      %p596 = pneg %p280
      %p597 = pneg %p304
      %p598 = pneg %p301
      %p599 = pneg %p325
      %p600 = pneg %p322
      %p601 = pneg %p346
      %p602 = pneg %p343
      %p603 = pneg %p367
      %p604 = pneg %p364
      %p605 = pneg %p388
      %p606 = pneg %p385
      %p607 = pneg %p409
      %p608 = pneg %p406
      %p609 = pneg %p430
      %p610 = pneg %p427
      %p611 = pneg %p451
      %p612 = pneg %p448
      %p613 = pneg %p477
      %p614 = pneg %p474
      %p615 = scmp.lt.s32.totalorder %s31, 1
      %s616 = scalar_select %p615, %s31, 1
      %s617 = smul.addr %s616, 9
      %s618 = smul.addr %s617, 8
      %s619 = scalar_lea.vmem %s20, %s618
      %p620 = scmp.lt.s32.totalorder %s31, 1
      %s621 = scalar_select %p620, %s31, 1
      %s622 = smul.addr %s621, 20
      %s623 = smul.addr %s622, 8
      %s624 = scalar_lea.vmem %s0, %s623
      %p625 = scmp.lt.s32.totalorder %s31, 1
      %s626 = scalar_select %p625, %s31, 1
      %s627 = smul.addr %s626, 9
      %s628 = smul.addr %s627, 8
      %s629 = scalar_lea.vmem %s20, %s628
      %v630 = vld [vmem:[%s624] sm:$0xff]
      %v631 = vld [vmem:[%s624 + $0x8] sm:$0xff]
      %v632 = vld [vmem:[%s624 + $0x10] sm:$0xff]
      %v633 = vld [vmem:[%s624 + $0x18] sm:$0xff]
      %v634 = vld [vmem:[%s624 + $0x20] sm:$0xff]
      %v635 = vld [vmem:[%s624 + $0x28] sm:$0xff]
      %v636 = vld [vmem:[%s624 + $0x30] sm:$0xff]
      %v637 = vld [vmem:[%s624 + $0x38] sm:$0xff]
      %v638 = vld [vmem:[%s624 + $0x40] sm:$0xff]
      %v639 = vld [vmem:[%s624 + $0x48] sm:$0xff]
      %v640 = vld [vmem:[%s624 + $0x50] sm:$0xff]
      %v641 = vld [vmem:[%s624 + $0x58] sm:$0xff]
      %v642 = vld [vmem:[%s624 + $0x60] sm:$0xff]
      %v643 = vld [vmem:[%s624 + $0x68] sm:$0xff]
      %v644 = vld [vmem:[%s624 + $0x70] sm:$0xff]
      %v645 = vld [vmem:[%s624 + $0x78] sm:$0xff]
      %v646 = vld [vmem:[%s624 + $0x80] sm:$0xff]
      %v647 = vld [vmem:[%s624 + $0x88] sm:$0xff]
      %v648 = vld [vmem:[%s624 + $0x90] sm:$0x3]
      %v649 = vld [vmem:[%s624 + $0x98] sm:$0x3]
      %v650 = vld [vmem:[%s1] sm:$0xff]
      %v651 = vld [vmem:[%s1 + $0x8] sm:$0xff]
      %v652 = vld [vmem:[%s1 + $0x10] sm:$0xff]
      %v653 = vld [vmem:[%s1 + $0x18] sm:$0xff]
      %v654 = vld [vmem:[%s1 + $0x20] sm:$0xff]
      %v655 = vld [vmem:[%s1 + $0x28] sm:$0xff]
      %v656 = vld [vmem:[%s1 + $0x30] sm:$0xff]
      %v657 = vld [vmem:[%s1 + $0x38] sm:$0xff]
      %v658 = vld [vmem:[%s1 + $0x40] sm:$0xff]
      %v659 = vld [vmem:[%s1 + $0x48] sm:$0xff]
      %v660 = vld [vmem:[%s1 + $0x50] sm:$0xff]
      %v661 = vld [vmem:[%s1 + $0x58] sm:$0xff]
      %v662 = vld [vmem:[%s1 + $0x60] sm:$0xff]
      %v663 = vld [vmem:[%s1 + $0x68] sm:$0xff]
      %v664 = vld [vmem:[%s1 + $0x70] sm:$0xff]
      %v665 = vld [vmem:[%s1 + $0x78] sm:$0xff]
      %v666 = vld [vmem:[%s1 + $0x80] sm:$0xff]
      %v667 = vld [vmem:[%s1 + $0x88] sm:$0xff]
      %v668 = vld [vmem:[%s1 + $0x90] sm:$0xff]
      %v669 = vld [vmem:[%s1 + $0x98] sm:$0xff]
      %v670 = vld [vmem:[%s1 + $0xa0] sm:$0xff]
      %v671 = vld [vmem:[%s1 + $0xa8] sm:$0xff]
      %v672 = vld [vmem:[%s1 + $0xb0] sm:$0xff]
      %v673 = vld [vmem:[%s1 + $0xb8] sm:$0xff]
      %v674 = vld [vmem:[%s1 + $0xc0] sm:$0xff]
      %v675 = vld [vmem:[%s1 + $0xc8] sm:$0xff]
      %v676 = vld [vmem:[%s1 + $0xd0] sm:$0xff]
      %v677 = vld [vmem:[%s1 + $0xd8] sm:$0x7]
      %s678 = scalar_lea.vmem %s1, 224
      %v679 = vld [vmem:[%s678] sm:$0xff]
      %v680 = vld [vmem:[%s678 + $0x8] sm:$0xff]
      %v681 = vld [vmem:[%s678 + $0x10] sm:$0xff]
      %v682 = vld [vmem:[%s678 + $0x18] sm:$0xff]
      %v683 = vld [vmem:[%s678 + $0x20] sm:$0xff]
      %v684 = vld [vmem:[%s678 + $0x28] sm:$0xff]
      %v685 = vld [vmem:[%s678 + $0x30] sm:$0xff]
      %v686 = vld [vmem:[%s678 + $0x38] sm:$0xff]
      %v687 = vld [vmem:[%s678 + $0x40] sm:$0xff]
      %v688 = vld [vmem:[%s678 + $0x48] sm:$0xff]
      %v689 = vld [vmem:[%s678 + $0x50] sm:$0xff]
      %v690 = vld [vmem:[%s678 + $0x58] sm:$0xff]
      %v691 = vld [vmem:[%s678 + $0x60] sm:$0xff]
      %v692 = vld [vmem:[%s678 + $0x68] sm:$0xff]
      %v693 = vld [vmem:[%s678 + $0x70] sm:$0xff]
      %v694 = vld [vmem:[%s678 + $0x78] sm:$0xff]
      %v695 = vld [vmem:[%s678 + $0x80] sm:$0xff]
      %v696 = vld [vmem:[%s678 + $0x88] sm:$0xff]
      %v697 = vld [vmem:[%s678 + $0x90] sm:$0xff]
      %v698 = vld [vmem:[%s678 + $0x98] sm:$0xff]
      %v699 = vld [vmem:[%s678 + $0xa0] sm:$0xff]
      %v700 = vld [vmem:[%s678 + $0xa8] sm:$0xff]
      %v701 = vld [vmem:[%s678 + $0xb0] sm:$0xff]
      %v702 = vld [vmem:[%s678 + $0xb8] sm:$0xff]
      %v703 = vld [vmem:[%s678 + $0xc0] sm:$0xff]
      %v704 = vld [vmem:[%s678 + $0xc8] sm:$0xff]
      %v705 = vld [vmem:[%s678 + $0xd0] sm:$0xff]
      %v706 = vld [vmem:[%s678 + $0xd8] sm:$0x7]
      %vm725 = vcmask 1046528
      %v726 = vrot.slane %v630, 1
      %v727 = vrot.slane %v632, 1
      %v728 = vsel %vm725, %v726, %v727
      %v729 = vrot.slane %v631, 1
      %v730 = vrot.slane %v633, 1
      %v731 = vsel %vm725, %v729, %v730
      %v732 = vrot.slane %v634, 1
      %v733 = vsel %vm725, %v727, %v732
      %v734 = vrot.slane %v635, 1
      %v735 = vsel %vm725, %v730, %v734
      %v736 = vrot.slane %v636, 1
      %v737 = vsel %vm725, %v732, %v736
      %v738 = vrot.slane %v637, 1
      %v739 = vsel %vm725, %v734, %v738
      %v740 = vrot.slane %v638, 1
      %v741 = vsel %vm725, %v736, %v740
      %v742 = vrot.slane %v639, 1
      %v743 = vsel %vm725, %v738, %v742
      %v744 = vrot.slane %v640, 1
      %v745 = vsel %vm725, %v740, %v744
      %v746 = vrot.slane %v641, 1
      %v747 = vsel %vm725, %v742, %v746
      %v748 = vrot.slane %v642, 1
      %v749 = vsel %vm725, %v744, %v748
      %v750 = vrot.slane %v643, 1
      %v751 = vsel %vm725, %v746, %v750
      %v752 = vrot.slane %v644, 1
      %v753 = vsel %vm725, %v748, %v752
      %v754 = vrot.slane %v645, 1
      %v755 = vsel %vm725, %v750, %v754
      %v756 = vrot.slane %v646, 1
      %v757 = vsel %vm725, %v752, %v756
      %v758 = vrot.slane %v647, 1
      %v759 = vsel %vm725, %v754, %v758
      %vm769 = vcmask 744448
      %v770 = vsel %vm769, %v731, 0
      %v772 = vsel %vm769, %v735, 0
      %v774 = vsel %vm769, %v739, 0
      %v776 = vsel %vm769, %v743, 0
      %v778 = vsel %vm769, %v747, 0
      %v780 = vsel %vm769, %v751, 0
      %v782 = vsel %vm769, %v755, 0
      %v784 = vsel %vm769, %v759, 0
      %v786 = vsel %vm769, %v758, 0
      %vm788 = vcmask 1042432
      %v790 = vsel %vm788, %v706, 0
      %792 = vmatprep.subr.mxu0 0.0
      %793 = vmatpush1.msra.mxu0 %v679
      %794 = vmatprep.subr.mxu0 0.0
      %795 = vmatpush1.msra.mxu0 %v680
      %796 = vmatprep.subr.mxu0 0.0
      %797 = vmatpush1.msra.mxu0 %v681
      %798 = vmatprep.subr.mxu0 0.0
      %799 = vmatpush1.msra.mxu0 %v682
      %800 = vmatprep.subr.mxu0 0.0
      %801 = vmatpush1.msra.mxu0 %v683
      %802 = vmatprep.subr.mxu0 0.0
      %803 = vmatpush1.msra.mxu0 %v684
      %804 = vmatprep.subr.mxu0 0.0
      %805 = vmatpush1.msra.mxu0 %v685
      %806 = vmatprep.subr.mxu0 0.0
      %807 = vmatpush1.msra.mxu0 %v686
      %808 = vmatprep.subr.mxu0 0.0
      %809 = vmatpush1.msra.mxu0 %v687
      %810 = vmatprep.subr.mxu0 0.0
      %811 = vmatpush1.msra.mxu0 %v688
      %812 = vmatprep.subr.mxu0 0.0
      %813 = vmatpush1.msra.mxu0 %v689
      %814 = vmatprep.subr.mxu0 0.0
      %815 = vmatpush1.msra.mxu0 %v690
      %816 = vmatprep.subr.mxu0 0.0
      %817 = vmatpush1.msra.mxu0 %v691
      %818 = vmatprep.subr.mxu0 0.0
      %819 = vmatpush1.msra.mxu0 %v692
      %820 = vmatprep.subr.mxu0 0.0
      %821 = vmatpush1.msra.mxu0 %v693
      %822 = vmatprep.subr.mxu0 0.0
      %823 = vmatpush1.msra.mxu0 %v694
      %824 = vmatprep.subr.mxu0 0.0
      %825 = vmatpush1.msra.mxu0 %v695
      %826 = vmatprep.subr.mxu0 0.0
      %827 = vmatpush1.msra.mxu0 %v696
      %828 = vmatprep.subr.mxu0 0.0
      %829 = vmatpush1.msra.mxu0 %v697
      %830 = vmatprep.subr.mxu0 0.0
      %831 = vmatpush1.msra.mxu0 %v698
      %832 = vmatprep.subr.mxu0 0.0
      %833 = vmatpush1.msra.mxu0 %v699
      %834 = vmatprep.subr.mxu0 0.0
      %835 = vmatpush1.msra.mxu0 %v700
      %836 = vmatprep.subr.mxu0 0.0
      %837 = vmatpush1.msra.mxu0 %v701
      %838 = vmatprep.subr.mxu0 0.0
      %839 = vmatpush1.msra.mxu0 %v702
      %840 = vmatprep.subr.mxu0 0.0
      %841 = vmatpush1.msra.mxu0 %v703
      %842 = vmatprep.subr.mxu0 0.0
      %843 = vmatpush1.msra.mxu0 %v704
      %844 = vmatprep.subr.mxu0 0.0
      %845 = vmatpush1.msra.mxu0 %v705
      %846 = vmatprep.subr.mxu0 0.0
      %847 = vmatpush1.msra.mxu0 %v790
      %848 = vmatprep.subr.mxu0 0.0
      %849 = vmatpush1.msra.mxu0 0.0
      %850 = vmatprep.subr.mxu0 0.0
      %851 = vmatpush1.msra.mxu0 0.0
      %852 = vmatprep.subr.mxu0 0.0
      %853 = vmatpush1.msra.mxu0 0.0
      %854 = vmatprep.subr.mxu0 0.0
      %855 = vmatpush1.msra.mxu0 0.0
      %856 = vmatprep.mubr.f32.mxu0 %v770
      %857 = vmatmul.mubr.f32.gmra.mrb[0].mxu0 %v728
      %v858 = vpop.f32.mrb[0].mxu0
      %v859 = vadd.f32 0.0, %v858
      %v860 = vpop.f32.mrb[0].mxu0
      %861 = vmatprep.mubr.f32.mxu0 %v772
      %862 = vmatmul.mubr.f32.gmra.mrb[0].mxu0 %v733
      %v863 = vpop.f32.mrb[0].mxu0
      %v864 = vadd.f32 0.0, %v863
      %v865 = vpop.f32.mrb[0].mxu0
      %866 = vmatprep.mubr.f32.mxu0 %v774
      %867 = vmatmul.mubr.f32.gmra.mrb[0].mxu0 %v737
      %v868 = vpop.f32.mrb[0].mxu0
      %v869 = vadd.f32 0.0, %v868
      %v870 = vpop.f32.mrb[0].mxu0
      %871 = vmatprep.mubr.f32.mxu0 %v776
      %872 = vmatmul.mubr.f32.gmra.mrb[0].mxu0 %v741
      %v873 = vpop.f32.mrb[0].mxu0
      %v874 = vadd.f32 0.0, %v873
      %v875 = vpop.f32.mrb[0].mxu0
      %876 = vmatprep.mubr.f32.mxu0 %v778
      %877 = vmatmul.mubr.f32.gmra.mrb[0].mxu0 %v745
      %v878 = vpop.f32.mrb[0].mxu0
      %v879 = vadd.f32 0.0, %v878
      %v880 = vpop.f32.mrb[0].mxu0
      %881 = vmatprep.mubr.f32.mxu0 %v780
      %882 = vmatmul.mubr.f32.gmra.mrb[0].mxu0 %v749
      %v883 = vpop.f32.mrb[0].mxu0
      %v884 = vadd.f32 0.0, %v883
      %v885 = vpop.f32.mrb[0].mxu0
      %886 = vmatprep.mubr.f32.mxu0 %v782
      %887 = vmatmul.mubr.f32.gmra.mrb[0].mxu0 %v753
      %v888 = vpop.f32.mrb[0].mxu0
      %v889 = vadd.f32 0.0, %v888
      %v890 = vpop.f32.mrb[0].mxu0
      %891 = vmatprep.mubr.f32.mxu0 %v784
      %892 = vmatmul.mubr.f32.gmra.mrb[0].mxu0 %v757
      %v893 = vpop.f32.mrb[0].mxu0
      %v894 = vadd.f32 0.0, %v893
      %v895 = vpop.f32.mrb[0].mxu0
      %896 = vmatprep.mubr.f32.mxu0 %v786
      %897 = vmatmul.mubr.f32.gmra.mrb[0].mxu0 %v756
      %v898 = vpop.f32.mrb[0].mxu0
      %v899 = vadd.f32 0.0, %v898
      %v900 = vpop.f32.mrb[0].mxu0
      %901 = vdwg.mxu0
      %v902 = vsel %vm769, %v631, 0
      %v904 = vsel %vm769, %v633, 0
      %v906 = vsel %vm769, %v635, 0
      %v908 = vsel %vm769, %v637, 0
      %v910 = vsel %vm769, %v639, 0
      %v912 = vsel %vm769, %v641, 0
      %v914 = vsel %vm769, %v643, 0
      %v916 = vsel %vm769, %v645, 0
      %v918 = vsel %vm769, %v647, 0
      %v921 = vsel %vm788, %v677, 0
      %923 = vmatprep.subr.mxu0 0.0
      %924 = vmatpush1.msra.mxu0 %v650
      %925 = vmatprep.subr.mxu0 0.0
      %926 = vmatpush1.msra.mxu0 %v651
      %927 = vmatprep.subr.mxu0 0.0
      %928 = vmatpush1.msra.mxu0 %v652
      %929 = vmatprep.subr.mxu0 0.0
      %930 = vmatpush1.msra.mxu0 %v653
      %931 = vmatprep.subr.mxu0 0.0
      %932 = vmatpush1.msra.mxu0 %v654
      %933 = vmatprep.subr.mxu0 0.0
      %934 = vmatpush1.msra.mxu0 %v655
      %935 = vmatprep.subr.mxu0 0.0
      %936 = vmatpush1.msra.mxu0 %v656
      %937 = vmatprep.subr.mxu0 0.0
      %938 = vmatpush1.msra.mxu0 %v657
      %939 = vmatprep.subr.mxu0 0.0
      %940 = vmatpush1.msra.mxu0 %v658
      %941 = vmatprep.subr.mxu0 0.0
      %942 = vmatpush1.msra.mxu0 %v659
      %943 = vmatprep.subr.mxu0 0.0
      %944 = vmatpush1.msra.mxu0 %v660
      %945 = vmatprep.subr.mxu0 0.0
      %946 = vmatpush1.msra.mxu0 %v661
      %947 = vmatprep.subr.mxu0 0.0
      %948 = vmatpush1.msra.mxu0 %v662
      %949 = vmatprep.subr.mxu0 0.0
      %950 = vmatpush1.msra.mxu0 %v663
      %951 = vmatprep.subr.mxu0 0.0
      %952 = vmatpush1.msra.mxu0 %v664
      %953 = vmatprep.subr.mxu0 0.0
      %954 = vmatpush1.msra.mxu0 %v665
      %955 = vmatprep.subr.mxu0 0.0
      %956 = vmatpush1.msra.mxu0 %v666
      %957 = vmatprep.subr.mxu0 0.0
      %958 = vmatpush1.msra.mxu0 %v667
      %959 = vmatprep.subr.mxu0 0.0
      %960 = vmatpush1.msra.mxu0 %v668
      %961 = vmatprep.subr.mxu0 0.0
      %962 = vmatpush1.msra.mxu0 %v669
      %963 = vmatprep.subr.mxu0 0.0
      %964 = vmatpush1.msra.mxu0 %v670
      %965 = vmatprep.subr.mxu0 0.0
      %966 = vmatpush1.msra.mxu0 %v671
      %967 = vmatprep.subr.mxu0 0.0
      %968 = vmatpush1.msra.mxu0 %v672
      %969 = vmatprep.subr.mxu0 0.0
      %970 = vmatpush1.msra.mxu0 %v673
      %971 = vmatprep.subr.mxu0 0.0
      %972 = vmatpush1.msra.mxu0 %v674
      %973 = vmatprep.subr.mxu0 0.0
      %974 = vmatpush1.msra.mxu0 %v675
      %975 = vmatprep.subr.mxu0 0.0
      %976 = vmatpush1.msra.mxu0 %v676
      %977 = vmatprep.subr.mxu0 0.0
      %978 = vmatpush1.msra.mxu0 %v921
      %979 = vmatprep.subr.mxu0 0.0
      %980 = vmatpush1.msra.mxu0 0.0
      %981 = vmatprep.subr.mxu0 0.0
      %982 = vmatpush1.msra.mxu0 0.0
      %983 = vmatprep.subr.mxu0 0.0
      %984 = vmatpush1.msra.mxu0 0.0
      %985 = vmatprep.subr.mxu0 0.0
      %986 = vmatpush1.msra.mxu0 0.0
      %987 = vmatprep.mubr.f32.mxu0 %v902
      %988 = vmatmul.mubr.f32.gmra.mrb[0].mxu0 %v630
      %v989 = vpop.f32.mrb[0].mxu0
      %v990 = vadd.f32 %v859, %v989
      %v991 = vpop.f32.mrb[0].mxu0
      %992 = vmatprep.mubr.f32.mxu0 %v904
      %993 = vmatmul.mubr.f32.gmra.mrb[0].mxu0 %v632
      %v994 = vpop.f32.mrb[0].mxu0
      %v995 = vadd.f32 %v864, %v994
      %v996 = vpop.f32.mrb[0].mxu0
      %997 = vmatprep.mubr.f32.mxu0 %v906
      %998 = vmatmul.mubr.f32.gmra.mrb[0].mxu0 %v634
      %v999 = vpop.f32.mrb[0].mxu0
      %v1000 = vadd.f32 %v869, %v999
      %v1001 = vpop.f32.mrb[0].mxu0
      %1002 = vmatprep.mubr.f32.mxu0 %v908
      %1003 = vmatmul.mubr.f32.gmra.mrb[0].mxu0 %v636
      %v1004 = vpop.f32.mrb[0].mxu0
      %v1005 = vadd.f32 %v874, %v1004
      %v1006 = vpop.f32.mrb[0].mxu0
      %1007 = vmatprep.mubr.f32.mxu0 %v910
      %1008 = vmatmul.mubr.f32.gmra.mrb[0].mxu0 %v638
      %v1009 = vpop.f32.mrb[0].mxu0
      %v1010 = vadd.f32 %v879, %v1009
      %v1011 = vpop.f32.mrb[0].mxu0
      %1012 = vmatprep.mubr.f32.mxu0 %v912
      %1013 = vmatmul.mubr.f32.gmra.mrb[0].mxu0 %v640
      %v1014 = vpop.f32.mrb[0].mxu0
      %v1015 = vadd.f32 %v884, %v1014
      %v1016 = vpop.f32.mrb[0].mxu0
      %1017 = vmatprep.mubr.f32.mxu0 %v914
      %1018 = vmatmul.mubr.f32.gmra.mrb[0].mxu0 %v642
      %v1019 = vpop.f32.mrb[0].mxu0
      %v1020 = vadd.f32 %v889, %v1019
      %v1021 = vpop.f32.mrb[0].mxu0
      %1022 = vmatprep.mubr.f32.mxu0 %v916
      %1023 = vmatmul.mubr.f32.gmra.mrb[0].mxu0 %v644
      %v1024 = vpop.f32.mrb[0].mxu0
      %v1025 = vadd.f32 %v894, %v1024
      %v1026 = vpop.f32.mrb[0].mxu0
      %1027 = vmatprep.mubr.f32.mxu0 %v918
      %1028 = vmatmul.mubr.f32.gmra.mrb[0].mxu0 %v646
      %v1029 = vpop.f32.mrb[0].mxu0
      %v1030 = vadd.f32 %v899, %v1029
      %v1031 = vpop.f32.mrb[0].mxu0
      %1032 = vdwg.mxu0
      %s1033 = scalar_lea.vmem %s1, 448
      %v1034 = vld [vmem:[%s1033] sm:$0xff]
      %v1035 = vld [vmem:[%s1033 + $0x8] sm:$0xff]
      %v1036 = vld [vmem:[%s1033 + $0x10] sm:$0xff]
      %v1037 = vld [vmem:[%s1033 + $0x18] sm:$0xff]
      %v1038 = vld [vmem:[%s1033 + $0x20] sm:$0xff]
      %v1039 = vld [vmem:[%s1033 + $0x28] sm:$0xff]
      %v1040 = vld [vmem:[%s1033 + $0x30] sm:$0xff]
      %v1041 = vld [vmem:[%s1033 + $0x38] sm:$0xff]
      %v1042 = vld [vmem:[%s1033 + $0x40] sm:$0xff]
      %v1043 = vld [vmem:[%s1033 + $0x48] sm:$0xff]
      %v1044 = vld [vmem:[%s1033 + $0x50] sm:$0xff]
      %v1045 = vld [vmem:[%s1033 + $0x58] sm:$0xff]
      %v1046 = vld [vmem:[%s1033 + $0x60] sm:$0xff]
      %v1047 = vld [vmem:[%s1033 + $0x68] sm:$0xff]
      %v1048 = vld [vmem:[%s1033 + $0x70] sm:$0xff]
      %v1049 = vld [vmem:[%s1033 + $0x78] sm:$0xff]
      %v1050 = vld [vmem:[%s1033 + $0x80] sm:$0xff]
      %v1051 = vld [vmem:[%s1033 + $0x88] sm:$0xff]
      %v1052 = vld [vmem:[%s1033 + $0x90] sm:$0xff]
      %v1053 = vld [vmem:[%s1033 + $0x98] sm:$0xff]
      %v1054 = vld [vmem:[%s1033 + $0xa0] sm:$0xff]
      %v1055 = vld [vmem:[%s1033 + $0xa8] sm:$0xff]
      %v1056 = vld [vmem:[%s1033 + $0xb0] sm:$0xff]
      %v1057 = vld [vmem:[%s1033 + $0xb8] sm:$0xff]
      %v1058 = vld [vmem:[%s1033 + $0xc0] sm:$0xff]
      %v1059 = vld [vmem:[%s1033 + $0xc8] sm:$0xff]
      %v1060 = vld [vmem:[%s1033 + $0xd0] sm:$0xff]
      %v1061 = vld [vmem:[%s1033 + $0xd8] sm:$0x7]
      %vm1062 = vcmask 1045504
      %v1063 = vrot.slane %v630, 2
      %v1064 = vrot.slane %v632, 2
      %v1065 = vsel %vm1062, %v1063, %v1064
      %v1066 = vrot.slane %v631, 2
      %v1067 = vrot.slane %v633, 2
      %v1068 = vsel %vm1062, %v1066, %v1067
      %v1069 = vrot.slane %v634, 2
      %v1070 = vsel %vm1062, %v1064, %v1069
      %v1071 = vrot.slane %v635, 2
      %v1072 = vsel %vm1062, %v1067, %v1071
      %v1073 = vrot.slane %v636, 2
      %v1074 = vsel %vm1062, %v1069, %v1073
      %v1075 = vrot.slane %v637, 2
      %v1076 = vsel %vm1062, %v1071, %v1075
      %v1077 = vrot.slane %v638, 2
      %v1078 = vsel %vm1062, %v1073, %v1077
      %v1079 = vrot.slane %v639, 2
      %v1080 = vsel %vm1062, %v1075, %v1079
      %v1081 = vrot.slane %v640, 2
      %v1082 = vsel %vm1062, %v1077, %v1081
      %v1083 = vrot.slane %v641, 2
      %v1084 = vsel %vm1062, %v1079, %v1083
      %v1085 = vrot.slane %v642, 2
      %v1086 = vsel %vm1062, %v1081, %v1085
      %v1087 = vrot.slane %v643, 2
      %v1088 = vsel %vm1062, %v1083, %v1087
      %v1089 = vrot.slane %v644, 2
      %v1090 = vsel %vm1062, %v1085, %v1089
      %v1091 = vrot.slane %v645, 2
      %v1092 = vsel %vm1062, %v1087, %v1091
      %v1093 = vrot.slane %v646, 2
      %v1094 = vsel %vm1062, %v1089, %v1093
      %v1095 = vrot.slane %v647, 2
      %v1096 = vsel %vm1062, %v1091, %v1095
      %v1106 = vsel %vm769, %v1068, 0
      %v1108 = vsel %vm769, %v1072, 0
      %v1110 = vsel %vm769, %v1076, 0
      %v1112 = vsel %vm769, %v1080, 0
      %v1114 = vsel %vm769, %v1084, 0
      %v1116 = vsel %vm769, %v1088, 0
      %v1118 = vsel %vm769, %v1092, 0
      %v1120 = vsel %vm769, %v1096, 0
      %v1122 = vsel %vm769, %v1095, 0
      %v1125 = vsel %vm788, %v1061, 0
      %1127 = vmatprep.subr.mxu0 0.0
      %1128 = vmatpush1.msra.mxu0 %v1034
      %1129 = vmatprep.subr.mxu0 0.0
      %1130 = vmatpush1.msra.mxu0 %v1035
      %1131 = vmatprep.subr.mxu0 0.0
      %1132 = vmatpush1.msra.mxu0 %v1036
      %1133 = vmatprep.subr.mxu0 0.0
      %1134 = vmatpush1.msra.mxu0 %v1037
      %1135 = vmatprep.subr.mxu0 0.0
      %1136 = vmatpush1.msra.mxu0 %v1038
      %1137 = vmatprep.subr.mxu0 0.0
      %1138 = vmatpush1.msra.mxu0 %v1039
      %1139 = vmatprep.subr.mxu0 0.0
      %1140 = vmatpush1.msra.mxu0 %v1040
      %1141 = vmatprep.subr.mxu0 0.0
      %1142 = vmatpush1.msra.mxu0 %v1041
      %1143 = vmatprep.subr.mxu0 0.0
      %1144 = vmatpush1.msra.mxu0 %v1042
      %1145 = vmatprep.subr.mxu0 0.0
      %1146 = vmatpush1.msra.mxu0 %v1043
      %1147 = vmatprep.subr.mxu0 0.0
      %1148 = vmatpush1.msra.mxu0 %v1044
      %1149 = vmatprep.subr.mxu0 0.0
      %1150 = vmatpush1.msra.mxu0 %v1045
      %1151 = vmatprep.subr.mxu0 0.0
      %1152 = vmatpush1.msra.mxu0 %v1046
      %1153 = vmatprep.subr.mxu0 0.0
      %1154 = vmatpush1.msra.mxu0 %v1047
      %1155 = vmatprep.subr.mxu0 0.0
      %1156 = vmatpush1.msra.mxu0 %v1048
      %1157 = vmatprep.subr.mxu0 0.0
      %1158 = vmatpush1.msra.mxu0 %v1049
      %1159 = vmatprep.subr.mxu0 0.0
      %1160 = vmatpush1.msra.mxu0 %v1050
      %1161 = vmatprep.subr.mxu0 0.0
      %1162 = vmatpush1.msra.mxu0 %v1051
      %1163 = vmatprep.subr.mxu0 0.0
      %1164 = vmatpush1.msra.mxu0 %v1052
      %1165 = vmatprep.subr.mxu0 0.0
      %1166 = vmatpush1.msra.mxu0 %v1053
      %1167 = vmatprep.subr.mxu0 0.0
      %1168 = vmatpush1.msra.mxu0 %v1054
      %1169 = vmatprep.subr.mxu0 0.0
      %1170 = vmatpush1.msra.mxu0 %v1055
      %1171 = vmatprep.subr.mxu0 0.0
      %1172 = vmatpush1.msra.mxu0 %v1056
      %1173 = vmatprep.subr.mxu0 0.0
      %1174 = vmatpush1.msra.mxu0 %v1057
      %1175 = vmatprep.subr.mxu0 0.0
      %1176 = vmatpush1.msra.mxu0 %v1058
      %1177 = vmatprep.subr.mxu0 0.0
      %1178 = vmatpush1.msra.mxu0 %v1059
      %1179 = vmatprep.subr.mxu0 0.0
      %1180 = vmatpush1.msra.mxu0 %v1060
      %1181 = vmatprep.subr.mxu0 0.0
      %1182 = vmatpush1.msra.mxu0 %v1125
      %1183 = vmatprep.subr.mxu0 0.0
      %1184 = vmatpush1.msra.mxu0 0.0
      %1185 = vmatprep.subr.mxu0 0.0
      %1186 = vmatpush1.msra.mxu0 0.0
      %1187 = vmatprep.subr.mxu0 0.0
      %1188 = vmatpush1.msra.mxu0 0.0
      %1189 = vmatprep.subr.mxu0 0.0
      %1190 = vmatpush1.msra.mxu0 0.0
      %1191 = vmatprep.mubr.f32.mxu0 %v1106
      %1192 = vmatmul.mubr.f32.gmra.mrb[0].mxu0 %v1065
      %v1193 = vpop.f32.mrb[0].mxu0
      %v1194 = vadd.f32 0.0, %v1193
      %v1195 = vpop.f32.mrb[0].mxu0
      %1196 = vmatprep.mubr.f32.mxu0 %v1108
      %1197 = vmatmul.mubr.f32.gmra.mrb[0].mxu0 %v1070
      %v1198 = vpop.f32.mrb[0].mxu0
      %v1199 = vadd.f32 0.0, %v1198
      %v1200 = vpop.f32.mrb[0].mxu0
      %1201 = vmatprep.mubr.f32.mxu0 %v1110
      %1202 = vmatmul.mubr.f32.gmra.mrb[0].mxu0 %v1074
      %v1203 = vpop.f32.mrb[0].mxu0
      %v1204 = vadd.f32 0.0, %v1203
      %v1205 = vpop.f32.mrb[0].mxu0
      %1206 = vmatprep.mubr.f32.mxu0 %v1112
      %1207 = vmatmul.mubr.f32.gmra.mrb[0].mxu0 %v1078
      %v1208 = vpop.f32.mrb[0].mxu0
      %v1209 = vadd.f32 0.0, %v1208
      %v1210 = vpop.f32.mrb[0].mxu0
      %1211 = vmatprep.mubr.f32.mxu0 %v1114
      %1212 = vmatmul.mubr.f32.gmra.mrb[0].mxu0 %v1082
      %v1213 = vpop.f32.mrb[0].mxu0
      %v1214 = vadd.f32 0.0, %v1213
      %v1215 = vpop.f32.mrb[0].mxu0
      %1216 = vmatprep.mubr.f32.mxu0 %v1116
      %1217 = vmatmul.mubr.f32.gmra.mrb[0].mxu0 %v1086
      %v1218 = vpop.f32.mrb[0].mxu0
      %v1219 = vadd.f32 0.0, %v1218
      %v1220 = vpop.f32.mrb[0].mxu0
      %1221 = vmatprep.mubr.f32.mxu0 %v1118
      %1222 = vmatmul.mubr.f32.gmra.mrb[0].mxu0 %v1090
      %v1223 = vpop.f32.mrb[0].mxu0
      %v1224 = vadd.f32 0.0, %v1223
      %v1225 = vpop.f32.mrb[0].mxu0
      %1226 = vmatprep.mubr.f32.mxu0 %v1120
      %1227 = vmatmul.mubr.f32.gmra.mrb[0].mxu0 %v1094
      %v1228 = vpop.f32.mrb[0].mxu0
      %v1229 = vadd.f32 0.0, %v1228
      %v1230 = vpop.f32.mrb[0].mxu0
      %1231 = vmatprep.mubr.f32.mxu0 %v1122
      %1232 = vmatmul.mubr.f32.gmra.mrb[0].mxu0 %v1093
      %v1233 = vpop.f32.mrb[0].mxu0
      %v1234 = vadd.f32 0.0, %v1233
      %v1235 = vpop.f32.mrb[0].mxu0
      %1236 = vdwg.mxu0
      %v1237 = vadd.f32 %v990, %v1194
      %v1238 = vadd.f32 %v995, %v1199
      %v1239 = vadd.f32 %v1000, %v1204
      %v1240 = vadd.f32 %v1005, %v1209
      %v1241 = vadd.f32 %v1010, %v1214
      %v1242 = vadd.f32 %v1015, %v1219
      %v1243 = vadd.f32 %v1020, %v1224
      %v1244 = vadd.f32 %v1025, %v1229
      %v1245 = vadd.f32 %v1030, %v1234
      %s1246 = scalar_lea.vmem %s1, 672
      %v1247 = vld [vmem:[%s1246] sm:$0xff]
      %v1248 = vld [vmem:[%s1246 + $0x8] sm:$0xff]
      %v1249 = vld [vmem:[%s1246 + $0x10] sm:$0xff]
      %v1250 = vld [vmem:[%s1246 + $0x18] sm:$0xff]
      %v1251 = vld [vmem:[%s1246 + $0x20] sm:$0xff]
      %v1252 = vld [vmem:[%s1246 + $0x28] sm:$0xff]
      %v1253 = vld [vmem:[%s1246 + $0x30] sm:$0xff]
      %v1254 = vld [vmem:[%s1246 + $0x38] sm:$0xff]
      %v1255 = vld [vmem:[%s1246 + $0x40] sm:$0xff]
      %v1256 = vld [vmem:[%s1246 + $0x48] sm:$0xff]
      %v1257 = vld [vmem:[%s1246 + $0x50] sm:$0xff]
      %v1258 = vld [vmem:[%s1246 + $0x58] sm:$0xff]
      %v1259 = vld [vmem:[%s1246 + $0x60] sm:$0xff]
      %v1260 = vld [vmem:[%s1246 + $0x68] sm:$0xff]
      %v1261 = vld [vmem:[%s1246 + $0x70] sm:$0xff]
      %v1262 = vld [vmem:[%s1246 + $0x78] sm:$0xff]
      %v1263 = vld [vmem:[%s1246 + $0x80] sm:$0xff]
      %v1264 = vld [vmem:[%s1246 + $0x88] sm:$0xff]
      %v1265 = vld [vmem:[%s1246 + $0x90] sm:$0xff]
      %v1266 = vld [vmem:[%s1246 + $0x98] sm:$0xff]
      %v1267 = vld [vmem:[%s1246 + $0xa0] sm:$0xff]
      %v1268 = vld [vmem:[%s1246 + $0xa8] sm:$0xff]
      %v1269 = vld [vmem:[%s1246 + $0xb0] sm:$0xff]
      %v1270 = vld [vmem:[%s1246 + $0xb8] sm:$0xff]
      %v1271 = vld [vmem:[%s1246 + $0xc0] sm:$0xff]
      %v1272 = vld [vmem:[%s1246 + $0xc8] sm:$0xff]
      %v1273 = vld [vmem:[%s1246 + $0xd0] sm:$0xff]
      %v1274 = vld [vmem:[%s1246 + $0xd8] sm:$0x7]
      %vm1275 = vcmask 1044480
      %v1276 = vrot.slane %v630, 3
      %v1277 = vrot.slane %v632, 3
      %v1278 = vsel %vm1275, %v1276, %v1277
      %v1279 = vrot.slane %v631, 3
      %v1280 = vrot.slane %v633, 3
      %v1281 = vsel %vm1275, %v1279, %v1280
      %v1282 = vrot.slane %v634, 3
      %v1283 = vsel %vm1275, %v1277, %v1282
      %v1284 = vrot.slane %v635, 3
      %v1285 = vsel %vm1275, %v1280, %v1284
      %v1286 = vrot.slane %v636, 3
      %v1287 = vsel %vm1275, %v1282, %v1286
      %v1288 = vrot.slane %v637, 3
      %v1289 = vsel %vm1275, %v1284, %v1288
      %v1290 = vrot.slane %v638, 3
      %v1291 = vsel %vm1275, %v1286, %v1290
      %v1292 = vrot.slane %v639, 3
      %v1293 = vsel %vm1275, %v1288, %v1292
      %v1294 = vrot.slane %v640, 3
      %v1295 = vsel %vm1275, %v1290, %v1294
      %v1296 = vrot.slane %v641, 3
      %v1297 = vsel %vm1275, %v1292, %v1296
      %v1298 = vrot.slane %v642, 3
      %v1299 = vsel %vm1275, %v1294, %v1298
      %v1300 = vrot.slane %v643, 3
      %v1301 = vsel %vm1275, %v1296, %v1300
      %v1302 = vrot.slane %v644, 3
      %v1303 = vsel %vm1275, %v1298, %v1302
      %v1304 = vrot.slane %v645, 3
      %v1305 = vsel %vm1275, %v1300, %v1304
      %v1306 = vrot.slane %v646, 3
      %v1307 = vsel %vm1275, %v1302, %v1306
      %v1308 = vrot.slane %v647, 3
      %v1309 = vsel %vm1275, %v1304, %v1308
      %v1319 = vsel %vm769, %v1281, 0
      %v1321 = vsel %vm769, %v1285, 0
      %v1323 = vsel %vm769, %v1289, 0
      %v1325 = vsel %vm769, %v1293, 0
      %v1327 = vsel %vm769, %v1297, 0
      %v1329 = vsel %vm769, %v1301, 0
      %v1331 = vsel %vm769, %v1305, 0
      %v1333 = vsel %vm769, %v1309, 0
      %v1335 = vsel %vm769, %v1308, 0
      %v1338 = vsel %vm788, %v1274, 0
      %1340 = vmatprep.subr.mxu0 0.0
      %1341 = vmatpush1.msra.mxu0 %v1247
      %1342 = vmatprep.subr.mxu0 0.0
      %1343 = vmatpush1.msra.mxu0 %v1248
      %1344 = vmatprep.subr.mxu0 0.0
      %1345 = vmatpush1.msra.mxu0 %v1249
      %1346 = vmatprep.subr.mxu0 0.0
      %1347 = vmatpush1.msra.mxu0 %v1250
      %1348 = vmatprep.subr.mxu0 0.0
      %1349 = vmatpush1.msra.mxu0 %v1251
      %1350 = vmatprep.subr.mxu0 0.0
      %1351 = vmatpush1.msra.mxu0 %v1252
      %1352 = vmatprep.subr.mxu0 0.0
      %1353 = vmatpush1.msra.mxu0 %v1253
      %1354 = vmatprep.subr.mxu0 0.0
      %1355 = vmatpush1.msra.mxu0 %v1254
      %1356 = vmatprep.subr.mxu0 0.0
      %1357 = vmatpush1.msra.mxu0 %v1255
      %1358 = vmatprep.subr.mxu0 0.0
      %1359 = vmatpush1.msra.mxu0 %v1256
      %1360 = vmatprep.subr.mxu0 0.0
      %1361 = vmatpush1.msra.mxu0 %v1257
      %1362 = vmatprep.subr.mxu0 0.0
      %1363 = vmatpush1.msra.mxu0 %v1258
      %1364 = vmatprep.subr.mxu0 0.0
      %1365 = vmatpush1.msra.mxu0 %v1259
      %1366 = vmatprep.subr.mxu0 0.0
      %1367 = vmatpush1.msra.mxu0 %v1260
      %1368 = vmatprep.subr.mxu0 0.0
      %1369 = vmatpush1.msra.mxu0 %v1261
      %1370 = vmatprep.subr.mxu0 0.0
      %1371 = vmatpush1.msra.mxu0 %v1262
      %1372 = vmatprep.subr.mxu0 0.0
      %1373 = vmatpush1.msra.mxu0 %v1263
      %1374 = vmatprep.subr.mxu0 0.0
      %1375 = vmatpush1.msra.mxu0 %v1264
      %1376 = vmatprep.subr.mxu0 0.0
      %1377 = vmatpush1.msra.mxu0 %v1265
      %1378 = vmatprep.subr.mxu0 0.0
      %1379 = vmatpush1.msra.mxu0 %v1266
      %1380 = vmatprep.subr.mxu0 0.0
      %1381 = vmatpush1.msra.mxu0 %v1267
      %1382 = vmatprep.subr.mxu0 0.0
      %1383 = vmatpush1.msra.mxu0 %v1268
      %1384 = vmatprep.subr.mxu0 0.0
      %1385 = vmatpush1.msra.mxu0 %v1269
      %1386 = vmatprep.subr.mxu0 0.0
      %1387 = vmatpush1.msra.mxu0 %v1270
      %1388 = vmatprep.subr.mxu0 0.0
      %1389 = vmatpush1.msra.mxu0 %v1271
      %1390 = vmatprep.subr.mxu0 0.0
      %1391 = vmatpush1.msra.mxu0 %v1272
      %1392 = vmatprep.subr.mxu0 0.0
      %1393 = vmatpush1.msra.mxu0 %v1273
      %1394 = vmatprep.subr.mxu0 0.0
      %1395 = vmatpush1.msra.mxu0 %v1338
      %1396 = vmatprep.subr.mxu0 0.0
      %1397 = vmatpush1.msra.mxu0 0.0
      %1398 = vmatprep.subr.mxu0 0.0
      %1399 = vmatpush1.msra.mxu0 0.0
      %1400 = vmatprep.subr.mxu0 0.0
      %1401 = vmatpush1.msra.mxu0 0.0
      %1402 = vmatprep.subr.mxu0 0.0
      %1403 = vmatpush1.msra.mxu0 0.0
      %1404 = vmatprep.mubr.f32.mxu0 %v1319
      %1405 = vmatmul.mubr.f32.gmra.mrb[0].mxu0 %v1278
      %v1406 = vpop.f32.mrb[0].mxu0
      %v1407 = vadd.f32 0.0, %v1406
      %v1408 = vpop.f32.mrb[0].mxu0
      %1409 = vmatprep.mubr.f32.mxu0 %v1321
      %1410 = vmatmul.mubr.f32.gmra.mrb[0].mxu0 %v1283
      %v1411 = vpop.f32.mrb[0].mxu0
      %v1412 = vadd.f32 0.0, %v1411
      %v1413 = vpop.f32.mrb[0].mxu0
      %1414 = vmatprep.mubr.f32.mxu0 %v1323
      %1415 = vmatmul.mubr.f32.gmra.mrb[0].mxu0 %v1287
      %v1416 = vpop.f32.mrb[0].mxu0
      %v1417 = vadd.f32 0.0, %v1416
      %v1418 = vpop.f32.mrb[0].mxu0
      %1419 = vmatprep.mubr.f32.mxu0 %v1325
      %1420 = vmatmul.mubr.f32.gmra.mrb[0].mxu0 %v1291
      %v1421 = vpop.f32.mrb[0].mxu0
      %v1422 = vadd.f32 0.0, %v1421
      %v1423 = vpop.f32.mrb[0].mxu0
      %1424 = vmatprep.mubr.f32.mxu0 %v1327
      %1425 = vmatmul.mubr.f32.gmra.mrb[0].mxu0 %v1295
      %v1426 = vpop.f32.mrb[0].mxu0
      %v1427 = vadd.f32 0.0, %v1426
      %v1428 = vpop.f32.mrb[0].mxu0
      %1429 = vmatprep.mubr.f32.mxu0 %v1329
      %1430 = vmatmul.mubr.f32.gmra.mrb[0].mxu0 %v1299
      %v1431 = vpop.f32.mrb[0].mxu0
      %v1432 = vadd.f32 0.0, %v1431
      %v1433 = vpop.f32.mrb[0].mxu0
      %1434 = vmatprep.mubr.f32.mxu0 %v1331
      %1435 = vmatmul.mubr.f32.gmra.mrb[0].mxu0 %v1303
      %v1436 = vpop.f32.mrb[0].mxu0
      %v1437 = vadd.f32 0.0, %v1436
      %v1438 = vpop.f32.mrb[0].mxu0
      %1439 = vmatprep.mubr.f32.mxu0 %v1333
      %1440 = vmatmul.mubr.f32.gmra.mrb[0].mxu0 %v1307
      %v1441 = vpop.f32.mrb[0].mxu0
      %v1442 = vadd.f32 0.0, %v1441
      %v1443 = vpop.f32.mrb[0].mxu0
      %1444 = vmatprep.mubr.f32.mxu0 %v1335
      %1445 = vmatmul.mubr.f32.gmra.mrb[0].mxu0 %v1306
      %v1446 = vpop.f32.mrb[0].mxu0
      %v1447 = vadd.f32 0.0, %v1446
      %v1448 = vpop.f32.mrb[0].mxu0
      %1449 = vdwg.mxu0
      %v1450 = vadd.f32 %v1237, %v1407
      %v1451 = vadd.f32 %v1238, %v1412
      %v1452 = vadd.f32 %v1239, %v1417
      %v1453 = vadd.f32 %v1240, %v1422
      %v1454 = vadd.f32 %v1241, %v1427
      %v1455 = vadd.f32 %v1242, %v1432
      %v1456 = vadd.f32 %v1243, %v1437
      %v1457 = vadd.f32 %v1244, %v1442
      %v1458 = vadd.f32 %v1245, %v1447
      %s1459 = scalar_lea.vmem %s1, 896
      %v1460 = vld [vmem:[%s1459] sm:$0xff]
      %v1461 = vld [vmem:[%s1459 + $0x8] sm:$0xff]
      %v1462 = vld [vmem:[%s1459 + $0x10] sm:$0xff]
      %v1463 = vld [vmem:[%s1459 + $0x18] sm:$0xff]
      %v1464 = vld [vmem:[%s1459 + $0x20] sm:$0xff]
      %v1465 = vld [vmem:[%s1459 + $0x28] sm:$0xff]
      %v1466 = vld [vmem:[%s1459 + $0x30] sm:$0xff]
      %v1467 = vld [vmem:[%s1459 + $0x38] sm:$0xff]
      %v1468 = vld [vmem:[%s1459 + $0x40] sm:$0xff]
      %v1469 = vld [vmem:[%s1459 + $0x48] sm:$0xff]
      %v1470 = vld [vmem:[%s1459 + $0x50] sm:$0xff]
      %v1471 = vld [vmem:[%s1459 + $0x58] sm:$0xff]
      %v1472 = vld [vmem:[%s1459 + $0x60] sm:$0xff]
      %v1473 = vld [vmem:[%s1459 + $0x68] sm:$0xff]
      %v1474 = vld [vmem:[%s1459 + $0x70] sm:$0xff]
      %v1475 = vld [vmem:[%s1459 + $0x78] sm:$0xff]
      %v1476 = vld [vmem:[%s1459 + $0x80] sm:$0xff]
      %v1477 = vld [vmem:[%s1459 + $0x88] sm:$0xff]
      %v1478 = vld [vmem:[%s1459 + $0x90] sm:$0xff]
      %v1479 = vld [vmem:[%s1459 + $0x98] sm:$0xff]
      %v1480 = vld [vmem:[%s1459 + $0xa0] sm:$0xff]
      %v1481 = vld [vmem:[%s1459 + $0xa8] sm:$0xff]
      %v1482 = vld [vmem:[%s1459 + $0xb0] sm:$0xff]
      %v1483 = vld [vmem:[%s1459 + $0xb8] sm:$0xff]
      %v1484 = vld [vmem:[%s1459 + $0xc0] sm:$0xff]
      %v1485 = vld [vmem:[%s1459 + $0xc8] sm:$0xff]
      %v1486 = vld [vmem:[%s1459 + $0xd0] sm:$0xff]
      %v1487 = vld [vmem:[%s1459 + $0xd8] sm:$0x7]
      %vm1488 = vcmask 1043456
      %v1489 = vrot.slane %v630, 4
      %v1490 = vrot.slane %v632, 4
      %v1491 = vsel %vm1488, %v1489, %v1490
      %v1492 = vrot.slane %v631, 4
      %v1493 = vrot.slane %v633, 4
      %v1494 = vsel %vm1488, %v1492, %v1493
      %v1495 = vrot.slane %v634, 4
      %v1496 = vsel %vm1488, %v1490, %v1495
      %v1497 = vrot.slane %v635, 4
      %v1498 = vsel %vm1488, %v1493, %v1497
      %v1499 = vrot.slane %v636, 4
      %v1500 = vsel %vm1488, %v1495, %v1499
      %v1501 = vrot.slane %v637, 4
      %v1502 = vsel %vm1488, %v1497, %v1501
      %v1503 = vrot.slane %v638, 4
      %v1504 = vsel %vm1488, %v1499, %v1503
      %v1505 = vrot.slane %v639, 4
      %v1506 = vsel %vm1488, %v1501, %v1505
      %v1507 = vrot.slane %v640, 4
      %v1508 = vsel %vm1488, %v1503, %v1507
      %v1509 = vrot.slane %v641, 4
      %v1510 = vsel %vm1488, %v1505, %v1509
      %v1511 = vrot.slane %v642, 4
      %v1512 = vsel %vm1488, %v1507, %v1511
      %v1513 = vrot.slane %v643, 4
      %v1514 = vsel %vm1488, %v1509, %v1513
      %v1515 = vrot.slane %v644, 4
      %v1516 = vsel %vm1488, %v1511, %v1515
      %v1517 = vrot.slane %v645, 4
      %v1518 = vsel %vm1488, %v1513, %v1517
      %v1519 = vrot.slane %v646, 4
      %v1520 = vsel %vm1488, %v1515, %v1519
      %v1521 = vrot.slane %v647, 4
      %v1522 = vsel %vm1488, %v1517, %v1521
      %v1532 = vsel %vm769, %v1494, 0
      %v1534 = vsel %vm769, %v1498, 0
      %v1536 = vsel %vm769, %v1502, 0
      %v1538 = vsel %vm769, %v1506, 0
      %v1540 = vsel %vm769, %v1510, 0
      %v1542 = vsel %vm769, %v1514, 0
      %v1544 = vsel %vm769, %v1518, 0
      %v1546 = vsel %vm769, %v1522, 0
      %v1548 = vsel %vm769, %v1521, 0
      %v1551 = vsel %vm788, %v1487, 0
      %1553 = vmatprep.subr.mxu0 0.0
      %1554 = vmatpush1.msra.mxu0 %v1460
      %1555 = vmatprep.subr.mxu0 0.0
      %1556 = vmatpush1.msra.mxu0 %v1461
      %1557 = vmatprep.subr.mxu0 0.0
      %1558 = vmatpush1.msra.mxu0 %v1462
      %1559 = vmatprep.subr.mxu0 0.0
      %1560 = vmatpush1.msra.mxu0 %v1463
      %1561 = vmatprep.subr.mxu0 0.0
      %1562 = vmatpush1.msra.mxu0 %v1464
      %1563 = vmatprep.subr.mxu0 0.0
      %1564 = vmatpush1.msra.mxu0 %v1465
      %1565 = vmatprep.subr.mxu0 0.0
      %1566 = vmatpush1.msra.mxu0 %v1466
      %1567 = vmatprep.subr.mxu0 0.0
      %1568 = vmatpush1.msra.mxu0 %v1467
      %1569 = vmatprep.subr.mxu0 0.0
      %1570 = vmatpush1.msra.mxu0 %v1468
      %1571 = vmatprep.subr.mxu0 0.0
      %1572 = vmatpush1.msra.mxu0 %v1469
      %1573 = vmatprep.subr.mxu0 0.0
      %1574 = vmatpush1.msra.mxu0 %v1470
      %1575 = vmatprep.subr.mxu0 0.0
      %1576 = vmatpush1.msra.mxu0 %v1471
      %1577 = vmatprep.subr.mxu0 0.0
      %1578 = vmatpush1.msra.mxu0 %v1472
      %1579 = vmatprep.subr.mxu0 0.0
      %1580 = vmatpush1.msra.mxu0 %v1473
      %1581 = vmatprep.subr.mxu0 0.0
      %1582 = vmatpush1.msra.mxu0 %v1474
      %1583 = vmatprep.subr.mxu0 0.0
      %1584 = vmatpush1.msra.mxu0 %v1475
      %1585 = vmatprep.subr.mxu0 0.0
      %1586 = vmatpush1.msra.mxu0 %v1476
      %1587 = vmatprep.subr.mxu0 0.0
      %1588 = vmatpush1.msra.mxu0 %v1477
      %1589 = vmatprep.subr.mxu0 0.0
      %1590 = vmatpush1.msra.mxu0 %v1478
      %1591 = vmatprep.subr.mxu0 0.0
      %1592 = vmatpush1.msra.mxu0 %v1479
      %1593 = vmatprep.subr.mxu0 0.0
      %1594 = vmatpush1.msra.mxu0 %v1480
      %1595 = vmatprep.subr.mxu0 0.0
      %1596 = vmatpush1.msra.mxu0 %v1481
      %1597 = vmatprep.subr.mxu0 0.0
      %1598 = vmatpush1.msra.mxu0 %v1482
      %1599 = vmatprep.subr.mxu0 0.0
      %1600 = vmatpush1.msra.mxu0 %v1483
      %1601 = vmatprep.subr.mxu0 0.0
      %1602 = vmatpush1.msra.mxu0 %v1484
      %1603 = vmatprep.subr.mxu0 0.0
      %1604 = vmatpush1.msra.mxu0 %v1485
      %1605 = vmatprep.subr.mxu0 0.0
      %1606 = vmatpush1.msra.mxu0 %v1486
      %1607 = vmatprep.subr.mxu0 0.0
      %1608 = vmatpush1.msra.mxu0 %v1551
      %1609 = vmatprep.subr.mxu0 0.0
      %1610 = vmatpush1.msra.mxu0 0.0
      %1611 = vmatprep.subr.mxu0 0.0
      %1612 = vmatpush1.msra.mxu0 0.0
      %1613 = vmatprep.subr.mxu0 0.0
      %1614 = vmatpush1.msra.mxu0 0.0
      %1615 = vmatprep.subr.mxu0 0.0
      %1616 = vmatpush1.msra.mxu0 0.0
      %1617 = vmatprep.mubr.f32.mxu0 %v1532
      %1618 = vmatmul.mubr.f32.gmra.mrb[0].mxu0 %v1491
      %v1619 = vpop.f32.mrb[0].mxu0
      %v1620 = vadd.f32 0.0, %v1619
      %v1621 = vpop.f32.mrb[0].mxu0
      %1622 = vmatprep.mubr.f32.mxu0 %v1534
      %1623 = vmatmul.mubr.f32.gmra.mrb[0].mxu0 %v1496
      %v1624 = vpop.f32.mrb[0].mxu0
      %v1625 = vadd.f32 0.0, %v1624
      %v1626 = vpop.f32.mrb[0].mxu0
      %1627 = vmatprep.mubr.f32.mxu0 %v1536
      %1628 = vmatmul.mubr.f32.gmra.mrb[0].mxu0 %v1500
      %v1629 = vpop.f32.mrb[0].mxu0
      %v1630 = vadd.f32 0.0, %v1629
      %v1631 = vpop.f32.mrb[0].mxu0
      %1632 = vmatprep.mubr.f32.mxu0 %v1538
      %1633 = vmatmul.mubr.f32.gmra.mrb[0].mxu0 %v1504
      %v1634 = vpop.f32.mrb[0].mxu0
      %v1635 = vadd.f32 0.0, %v1634
      %v1636 = vpop.f32.mrb[0].mxu0
      %1637 = vmatprep.mubr.f32.mxu0 %v1540
      %1638 = vmatmul.mubr.f32.gmra.mrb[0].mxu0 %v1508
      %v1639 = vpop.f32.mrb[0].mxu0
      %v1640 = vadd.f32 0.0, %v1639
      %v1641 = vpop.f32.mrb[0].mxu0
      %1642 = vmatprep.mubr.f32.mxu0 %v1542
      %1643 = vmatmul.mubr.f32.gmra.mrb[0].mxu0 %v1512
      %v1644 = vpop.f32.mrb[0].mxu0
      %v1645 = vadd.f32 0.0, %v1644
      %v1646 = vpop.f32.mrb[0].mxu0
      %1647 = vmatprep.mubr.f32.mxu0 %v1544
      %1648 = vmatmul.mubr.f32.gmra.mrb[0].mxu0 %v1516
      %v1649 = vpop.f32.mrb[0].mxu0
      %v1650 = vadd.f32 0.0, %v1649
      %v1651 = vpop.f32.mrb[0].mxu0
      %1652 = vmatprep.mubr.f32.mxu0 %v1546
      %1653 = vmatmul.mubr.f32.gmra.mrb[0].mxu0 %v1520
      %v1654 = vpop.f32.mrb[0].mxu0
      %v1655 = vadd.f32 0.0, %v1654
      %v1656 = vpop.f32.mrb[0].mxu0
      %1657 = vmatprep.mubr.f32.mxu0 %v1548
      %1658 = vmatmul.mubr.f32.gmra.mrb[0].mxu0 %v1519
      %v1659 = vpop.f32.mrb[0].mxu0
      %v1660 = vadd.f32 0.0, %v1659
      %v1661 = vpop.f32.mrb[0].mxu0
      %1662 = vdwg.mxu0
      %v1663 = vadd.f32 %v1450, %v1620
      %v1664 = vadd.f32 %v1451, %v1625
      %v1665 = vadd.f32 %v1452, %v1630
      %v1666 = vadd.f32 %v1453, %v1635
      %v1667 = vadd.f32 %v1454, %v1640
      %v1668 = vadd.f32 %v1455, %v1645
      %v1669 = vadd.f32 %v1456, %v1650
      %v1670 = vadd.f32 %v1457, %v1655
      %v1671 = vadd.f32 %v1458, %v1660
      %s1672 = scalar_lea.vmem %s1, 1120
      %v1673 = vld [vmem:[%s1672] sm:$0xff]
      %v1674 = vld [vmem:[%s1672 + $0x8] sm:$0xff]
      %v1675 = vld [vmem:[%s1672 + $0x10] sm:$0xff]
      %v1676 = vld [vmem:[%s1672 + $0x18] sm:$0xff]
      %v1677 = vld [vmem:[%s1672 + $0x20] sm:$0xff]
      %v1678 = vld [vmem:[%s1672 + $0x28] sm:$0xff]
      %v1679 = vld [vmem:[%s1672 + $0x30] sm:$0xff]
      %v1680 = vld [vmem:[%s1672 + $0x38] sm:$0xff]
      %v1681 = vld [vmem:[%s1672 + $0x40] sm:$0xff]
      %v1682 = vld [vmem:[%s1672 + $0x48] sm:$0xff]
      %v1683 = vld [vmem:[%s1672 + $0x50] sm:$0xff]
      %v1684 = vld [vmem:[%s1672 + $0x58] sm:$0xff]
      %v1685 = vld [vmem:[%s1672 + $0x60] sm:$0xff]
      %v1686 = vld [vmem:[%s1672 + $0x68] sm:$0xff]
      %v1687 = vld [vmem:[%s1672 + $0x70] sm:$0xff]
      %v1688 = vld [vmem:[%s1672 + $0x78] sm:$0xff]
      %v1689 = vld [vmem:[%s1672 + $0x80] sm:$0xff]
      %v1690 = vld [vmem:[%s1672 + $0x88] sm:$0xff]
      %v1691 = vld [vmem:[%s1672 + $0x90] sm:$0xff]
      %v1692 = vld [vmem:[%s1672 + $0x98] sm:$0xff]
      %v1693 = vld [vmem:[%s1672 + $0xa0] sm:$0xff]
      %v1694 = vld [vmem:[%s1672 + $0xa8] sm:$0xff]
      %v1695 = vld [vmem:[%s1672 + $0xb0] sm:$0xff]
      %v1696 = vld [vmem:[%s1672 + $0xb8] sm:$0xff]
      %v1697 = vld [vmem:[%s1672 + $0xc0] sm:$0xff]
      %v1698 = vld [vmem:[%s1672 + $0xc8] sm:$0xff]
      %v1699 = vld [vmem:[%s1672 + $0xd0] sm:$0xff]
      %v1700 = vld [vmem:[%s1672 + $0xd8] sm:$0x7]
      %v1701 = vrot.slane %v630, 5
      %v1702 = vrot.slane %v632, 5
      %v1703 = vsel %vm788, %v1701, %v1702
      %v1704 = vrot.slane %v631, 5
      %v1705 = vrot.slane %v633, 5
      %v1706 = vsel %vm788, %v1704, %v1705
      %v1707 = vrot.slane %v634, 5
      %v1708 = vsel %vm788, %v1702, %v1707
      %v1709 = vrot.slane %v635, 5
      %v1710 = vsel %vm788, %v1705, %v1709
      %v1711 = vrot.slane %v636, 5
      %v1712 = vsel %vm788, %v1707, %v1711
      %v1713 = vrot.slane %v637, 5
      %v1714 = vsel %vm788, %v1709, %v1713
      %v1715 = vrot.slane %v638, 5
      %v1716 = vsel %vm788, %v1711, %v1715
      %v1717 = vrot.slane %v639, 5
      %v1718 = vsel %vm788, %v1713, %v1717
      %v1719 = vrot.slane %v640, 5
      %v1720 = vsel %vm788, %v1715, %v1719
      %v1721 = vrot.slane %v641, 5
      %v1722 = vsel %vm788, %v1717, %v1721
      %v1723 = vrot.slane %v642, 5
      %v1724 = vsel %vm788, %v1719, %v1723
      %v1725 = vrot.slane %v643, 5
      %v1726 = vsel %vm788, %v1721, %v1725
      %v1727 = vrot.slane %v644, 5
      %v1728 = vsel %vm788, %v1723, %v1727
      %v1729 = vrot.slane %v645, 5
      %v1730 = vsel %vm788, %v1725, %v1729
      %v1731 = vrot.slane %v646, 5
      %v1732 = vsel %vm788, %v1727, %v1731
      %v1733 = vrot.slane %v647, 5
      %v1734 = vsel %vm788, %v1729, %v1733
      %v1744 = vsel %vm769, %v1706, 0
      %v1746 = vsel %vm769, %v1710, 0
      %v1748 = vsel %vm769, %v1714, 0
      %v1750 = vsel %vm769, %v1718, 0
      %v1752 = vsel %vm769, %v1722, 0
      %v1754 = vsel %vm769, %v1726, 0
      %v1756 = vsel %vm769, %v1730, 0
      %v1758 = vsel %vm769, %v1734, 0
      %v1760 = vsel %vm769, %v1733, 0
      %v1763 = vsel %vm788, %v1700, 0
      %1765 = vmatprep.subr.mxu0 0.0
      %1766 = vmatpush1.msra.mxu0 %v1673
      %1767 = vmatprep.subr.mxu0 0.0
      %1768 = vmatpush1.msra.mxu0 %v1674
      %1769 = vmatprep.subr.mxu0 0.0
      %1770 = vmatpush1.msra.mxu0 %v1675
      %1771 = vmatprep.subr.mxu0 0.0
      %1772 = vmatpush1.msra.mxu0 %v1676
      %1773 = vmatprep.subr.mxu0 0.0
      %1774 = vmatpush1.msra.mxu0 %v1677
      %1775 = vmatprep.subr.mxu0 0.0
      %1776 = vmatpush1.msra.mxu0 %v1678
      %1777 = vmatprep.subr.mxu0 0.0
      %1778 = vmatpush1.msra.mxu0 %v1679
      %1779 = vmatprep.subr.mxu0 0.0
      %1780 = vmatpush1.msra.mxu0 %v1680
      %1781 = vmatprep.subr.mxu0 0.0
      %1782 = vmatpush1.msra.mxu0 %v1681
      %1783 = vmatprep.subr.mxu0 0.0
      %1784 = vmatpush1.msra.mxu0 %v1682
      %1785 = vmatprep.subr.mxu0 0.0
      %1786 = vmatpush1.msra.mxu0 %v1683
      %1787 = vmatprep.subr.mxu0 0.0
      %1788 = vmatpush1.msra.mxu0 %v1684
      %1789 = vmatprep.subr.mxu0 0.0
      %1790 = vmatpush1.msra.mxu0 %v1685
      %1791 = vmatprep.subr.mxu0 0.0
      %1792 = vmatpush1.msra.mxu0 %v1686
      %1793 = vmatprep.subr.mxu0 0.0
      %1794 = vmatpush1.msra.mxu0 %v1687
      %1795 = vmatprep.subr.mxu0 0.0
      %1796 = vmatpush1.msra.mxu0 %v1688
      %1797 = vmatprep.subr.mxu0 0.0
      %1798 = vmatpush1.msra.mxu0 %v1689
      %1799 = vmatprep.subr.mxu0 0.0
      %1800 = vmatpush1.msra.mxu0 %v1690
      %1801 = vmatprep.subr.mxu0 0.0
      %1802 = vmatpush1.msra.mxu0 %v1691
      %1803 = vmatprep.subr.mxu0 0.0
      %1804 = vmatpush1.msra.mxu0 %v1692
      %1805 = vmatprep.subr.mxu0 0.0
      %1806 = vmatpush1.msra.mxu0 %v1693
      %1807 = vmatprep.subr.mxu0 0.0
      %1808 = vmatpush1.msra.mxu0 %v1694
      %1809 = vmatprep.subr.mxu0 0.0
      %1810 = vmatpush1.msra.mxu0 %v1695
      %1811 = vmatprep.subr.mxu0 0.0
      %1812 = vmatpush1.msra.mxu0 %v1696
      %1813 = vmatprep.subr.mxu0 0.0
      %1814 = vmatpush1.msra.mxu0 %v1697
      %1815 = vmatprep.subr.mxu0 0.0
      %1816 = vmatpush1.msra.mxu0 %v1698
      %1817 = vmatprep.subr.mxu0 0.0
      %1818 = vmatpush1.msra.mxu0 %v1699
      %1819 = vmatprep.subr.mxu0 0.0
      %1820 = vmatpush1.msra.mxu0 %v1763
      %1821 = vmatprep.subr.mxu0 0.0
      %1822 = vmatpush1.msra.mxu0 0.0
      %1823 = vmatprep.subr.mxu0 0.0
      %1824 = vmatpush1.msra.mxu0 0.0
      %1825 = vmatprep.subr.mxu0 0.0
      %1826 = vmatpush1.msra.mxu0 0.0
      %1827 = vmatprep.subr.mxu0 0.0
      %1828 = vmatpush1.msra.mxu0 0.0
      %1829 = vmatprep.mubr.f32.mxu0 %v1744
      %1830 = vmatmul.mubr.f32.gmra.mrb[0].mxu0 %v1703
      %v1831 = vpop.f32.mrb[0].mxu0
      %v1832 = vadd.f32 0.0, %v1831
      %v1833 = vpop.f32.mrb[0].mxu0
      %1834 = vmatprep.mubr.f32.mxu0 %v1746
      %1835 = vmatmul.mubr.f32.gmra.mrb[0].mxu0 %v1708
      %v1836 = vpop.f32.mrb[0].mxu0
      %v1837 = vadd.f32 0.0, %v1836
      %v1838 = vpop.f32.mrb[0].mxu0
      %1839 = vmatprep.mubr.f32.mxu0 %v1748
      %1840 = vmatmul.mubr.f32.gmra.mrb[0].mxu0 %v1712
      %v1841 = vpop.f32.mrb[0].mxu0
      %v1842 = vadd.f32 0.0, %v1841
      %v1843 = vpop.f32.mrb[0].mxu0
      %1844 = vmatprep.mubr.f32.mxu0 %v1750
      %1845 = vmatmul.mubr.f32.gmra.mrb[0].mxu0 %v1716
      %v1846 = vpop.f32.mrb[0].mxu0
      %v1847 = vadd.f32 0.0, %v1846
      %v1848 = vpop.f32.mrb[0].mxu0
      %1849 = vmatprep.mubr.f32.mxu0 %v1752
      %1850 = vmatmul.mubr.f32.gmra.mrb[0].mxu0 %v1720
      %v1851 = vpop.f32.mrb[0].mxu0
      %v1852 = vadd.f32 0.0, %v1851
      %v1853 = vpop.f32.mrb[0].mxu0
      %1854 = vmatprep.mubr.f32.mxu0 %v1754
      %1855 = vmatmul.mubr.f32.gmra.mrb[0].mxu0 %v1724
      %v1856 = vpop.f32.mrb[0].mxu0
      %v1857 = vadd.f32 0.0, %v1856
      %v1858 = vpop.f32.mrb[0].mxu0
      %1859 = vmatprep.mubr.f32.mxu0 %v1756
      %1860 = vmatmul.mubr.f32.gmra.mrb[0].mxu0 %v1728
      %v1861 = vpop.f32.mrb[0].mxu0
      %v1862 = vadd.f32 0.0, %v1861
      %v1863 = vpop.f32.mrb[0].mxu0
      %1864 = vmatprep.mubr.f32.mxu0 %v1758
      %1865 = vmatmul.mubr.f32.gmra.mrb[0].mxu0 %v1732
      %v1866 = vpop.f32.mrb[0].mxu0
      %v1867 = vadd.f32 0.0, %v1866
      %v1868 = vpop.f32.mrb[0].mxu0
      %1869 = vmatprep.mubr.f32.mxu0 %v1760
      %1870 = vmatmul.mubr.f32.gmra.mrb[0].mxu0 %v1731
      %v1871 = vpop.f32.mrb[0].mxu0
      %v1872 = vadd.f32 0.0, %v1871
      %v1873 = vpop.f32.mrb[0].mxu0
      %1874 = vdwg.mxu0
      %v1875 = vadd.f32 %v1663, %v1832
      %v1876 = vadd.f32 %v1664, %v1837
      %v1877 = vadd.f32 %v1665, %v1842
      %v1878 = vadd.f32 %v1666, %v1847
      %v1879 = vadd.f32 %v1667, %v1852
      %v1880 = vadd.f32 %v1668, %v1857
      %v1881 = vadd.f32 %v1669, %v1862
      %v1882 = vadd.f32 %v1670, %v1867
      %v1883 = vadd.f32 %v1671, %v1872
      %s1884 = scalar_lea.vmem %s1, 1344
      %v1885 = vld [vmem:[%s1884] sm:$0xff]
      %v1886 = vld [vmem:[%s1884 + $0x8] sm:$0xff]
      %v1887 = vld [vmem:[%s1884 + $0x10] sm:$0xff]
      %v1888 = vld [vmem:[%s1884 + $0x18] sm:$0xff]
      %v1889 = vld [vmem:[%s1884 + $0x20] sm:$0xff]
      %v1890 = vld [vmem:[%s1884 + $0x28] sm:$0xff]
      %v1891 = vld [vmem:[%s1884 + $0x30] sm:$0xff]
      %v1892 = vld [vmem:[%s1884 + $0x38] sm:$0xff]
      %v1893 = vld [vmem:[%s1884 + $0x40] sm:$0xff]
      %v1894 = vld [vmem:[%s1884 + $0x48] sm:$0xff]
      %v1895 = vld [vmem:[%s1884 + $0x50] sm:$0xff]
      %v1896 = vld [vmem:[%s1884 + $0x58] sm:$0xff]
      %v1897 = vld [vmem:[%s1884 + $0x60] sm:$0xff]
      %v1898 = vld [vmem:[%s1884 + $0x68] sm:$0xff]
      %v1899 = vld [vmem:[%s1884 + $0x70] sm:$0xff]
      %v1900 = vld [vmem:[%s1884 + $0x78] sm:$0xff]
      %v1901 = vld [vmem:[%s1884 + $0x80] sm:$0xff]
      %v1902 = vld [vmem:[%s1884 + $0x88] sm:$0xff]
      %v1903 = vld [vmem:[%s1884 + $0x90] sm:$0xff]
      %v1904 = vld [vmem:[%s1884 + $0x98] sm:$0xff]
      %v1905 = vld [vmem:[%s1884 + $0xa0] sm:$0xff]
      %v1906 = vld [vmem:[%s1884 + $0xa8] sm:$0xff]
      %v1907 = vld [vmem:[%s1884 + $0xb0] sm:$0xff]
      %v1908 = vld [vmem:[%s1884 + $0xb8] sm:$0xff]
      %v1909 = vld [vmem:[%s1884 + $0xc0] sm:$0xff]
      %v1910 = vld [vmem:[%s1884 + $0xc8] sm:$0xff]
      %v1911 = vld [vmem:[%s1884 + $0xd0] sm:$0xff]
      %v1912 = vld [vmem:[%s1884 + $0xd8] sm:$0x7]
      %vm1913 = vcmask 1041408
      %v1914 = vrot.slane %v630, 6
      %v1915 = vrot.slane %v632, 6
      %v1916 = vsel %vm1913, %v1914, %v1915
      %v1917 = vrot.slane %v631, 6
      %v1918 = vrot.slane %v633, 6
      %v1919 = vsel %vm1913, %v1917, %v1918
      %v1920 = vrot.slane %v634, 6
      %v1921 = vsel %vm1913, %v1915, %v1920
      %v1922 = vrot.slane %v635, 6
      %v1923 = vsel %vm1913, %v1918, %v1922
      %v1924 = vrot.slane %v636, 6
      %v1925 = vsel %vm1913, %v1920, %v1924
      %v1926 = vrot.slane %v637, 6
      %v1927 = vsel %vm1913, %v1922, %v1926
      %v1928 = vrot.slane %v638, 6
      %v1929 = vsel %vm1913, %v1924, %v1928
      %v1930 = vrot.slane %v639, 6
      %v1931 = vsel %vm1913, %v1926, %v1930
      %v1932 = vrot.slane %v640, 6
      %v1933 = vsel %vm1913, %v1928, %v1932
      %v1934 = vrot.slane %v641, 6
      %v1935 = vsel %vm1913, %v1930, %v1934
      %v1936 = vrot.slane %v642, 6
      %v1937 = vsel %vm1913, %v1932, %v1936
      %v1938 = vrot.slane %v643, 6
      %v1939 = vsel %vm1913, %v1934, %v1938
      %v1940 = vrot.slane %v644, 6
      %v1941 = vsel %vm1913, %v1936, %v1940
      %v1942 = vrot.slane %v645, 6
      %v1943 = vsel %vm1913, %v1938, %v1942
      %v1944 = vrot.slane %v646, 6
      %v1945 = vsel %vm1913, %v1940, %v1944
      %v1946 = vrot.slane %v647, 6
      %v1947 = vsel %vm1913, %v1942, %v1946
      %v1957 = vsel %vm769, %v1919, 0
      %v1959 = vsel %vm769, %v1923, 0
      %v1961 = vsel %vm769, %v1927, 0
      %v1963 = vsel %vm769, %v1931, 0
      %v1965 = vsel %vm769, %v1935, 0
      %v1967 = vsel %vm769, %v1939, 0
      %v1969 = vsel %vm769, %v1943, 0
      %v1971 = vsel %vm769, %v1947, 0
      %v1973 = vsel %vm769, %v1946, 0
      %v1976 = vsel %vm788, %v1912, 0
      %1978 = vmatprep.subr.mxu0 0.0
      %1979 = vmatpush1.msra.mxu0 %v1885
      %1980 = vmatprep.subr.mxu0 0.0
      %1981 = vmatpush1.msra.mxu0 %v1886
      %1982 = vmatprep.subr.mxu0 0.0
      %1983 = vmatpush1.msra.mxu0 %v1887
      %1984 = vmatprep.subr.mxu0 0.0
      %1985 = vmatpush1.msra.mxu0 %v1888
      %1986 = vmatprep.subr.mxu0 0.0
      %1987 = vmatpush1.msra.mxu0 %v1889
      %1988 = vmatprep.subr.mxu0 0.0
      %1989 = vmatpush1.msra.mxu0 %v1890
      %1990 = vmatprep.subr.mxu0 0.0
      %1991 = vmatpush1.msra.mxu0 %v1891
      %1992 = vmatprep.subr.mxu0 0.0
      %1993 = vmatpush1.msra.mxu0 %v1892
      %1994 = vmatprep.subr.mxu0 0.0
      %1995 = vmatpush1.msra.mxu0 %v1893
      %1996 = vmatprep.subr.mxu0 0.0
      %1997 = vmatpush1.msra.mxu0 %v1894
      %1998 = vmatprep.subr.mxu0 0.0
      %1999 = vmatpush1.msra.mxu0 %v1895
      %2000 = vmatprep.subr.mxu0 0.0
      %2001 = vmatpush1.msra.mxu0 %v1896
      %2002 = vmatprep.subr.mxu0 0.0
      %2003 = vmatpush1.msra.mxu0 %v1897
      %2004 = vmatprep.subr.mxu0 0.0
      %2005 = vmatpush1.msra.mxu0 %v1898
      %2006 = vmatprep.subr.mxu0 0.0
      %2007 = vmatpush1.msra.mxu0 %v1899
      %2008 = vmatprep.subr.mxu0 0.0
      %2009 = vmatpush1.msra.mxu0 %v1900
      %2010 = vmatprep.subr.mxu0 0.0
      %2011 = vmatpush1.msra.mxu0 %v1901
      %2012 = vmatprep.subr.mxu0 0.0
      %2013 = vmatpush1.msra.mxu0 %v1902
      %2014 = vmatprep.subr.mxu0 0.0
      %2015 = vmatpush1.msra.mxu0 %v1903
      %2016 = vmatprep.subr.mxu0 0.0
      %2017 = vmatpush1.msra.mxu0 %v1904
      %2018 = vmatprep.subr.mxu0 0.0
      %2019 = vmatpush1.msra.mxu0 %v1905
      %2020 = vmatprep.subr.mxu0 0.0
      %2021 = vmatpush1.msra.mxu0 %v1906
      %2022 = vmatprep.subr.mxu0 0.0
      %2023 = vmatpush1.msra.mxu0 %v1907
      %2024 = vmatprep.subr.mxu0 0.0
      %2025 = vmatpush1.msra.mxu0 %v1908
      %2026 = vmatprep.subr.mxu0 0.0
      %2027 = vmatpush1.msra.mxu0 %v1909
      %2028 = vmatprep.subr.mxu0 0.0
      %2029 = vmatpush1.msra.mxu0 %v1910
      %2030 = vmatprep.subr.mxu0 0.0
      %2031 = vmatpush1.msra.mxu0 %v1911
      %2032 = vmatprep.subr.mxu0 0.0
      %2033 = vmatpush1.msra.mxu0 %v1976
      %2034 = vmatprep.subr.mxu0 0.0
      %2035 = vmatpush1.msra.mxu0 0.0
      %2036 = vmatprep.subr.mxu0 0.0
      %2037 = vmatpush1.msra.mxu0 0.0
      %2038 = vmatprep.subr.mxu0 0.0
      %2039 = vmatpush1.msra.mxu0 0.0
      %2040 = vmatprep.subr.mxu0 0.0
      %2041 = vmatpush1.msra.mxu0 0.0
      %2042 = vmatprep.mubr.f32.mxu0 %v1957
      %2043 = vmatmul.mubr.f32.gmra.mrb[0].mxu0 %v1916
      %v2044 = vpop.f32.mrb[0].mxu0
      %v2045 = vadd.f32 0.0, %v2044
      %v2046 = vpop.f32.mrb[0].mxu0
      %2047 = vmatprep.mubr.f32.mxu0 %v1959
      %2048 = vmatmul.mubr.f32.gmra.mrb[0].mxu0 %v1921
      %v2049 = vpop.f32.mrb[0].mxu0
      %v2050 = vadd.f32 0.0, %v2049
      %v2051 = vpop.f32.mrb[0].mxu0
      %2052 = vmatprep.mubr.f32.mxu0 %v1961
      %2053 = vmatmul.mubr.f32.gmra.mrb[0].mxu0 %v1925
      %v2054 = vpop.f32.mrb[0].mxu0
      %v2055 = vadd.f32 0.0, %v2054
      %v2056 = vpop.f32.mrb[0].mxu0
      %2057 = vmatprep.mubr.f32.mxu0 %v1963
      %2058 = vmatmul.mubr.f32.gmra.mrb[0].mxu0 %v1929
      %v2059 = vpop.f32.mrb[0].mxu0
      %v2060 = vadd.f32 0.0, %v2059
      %v2061 = vpop.f32.mrb[0].mxu0
      %2062 = vmatprep.mubr.f32.mxu0 %v1965
      %2063 = vmatmul.mubr.f32.gmra.mrb[0].mxu0 %v1933
      %v2064 = vpop.f32.mrb[0].mxu0
      %v2065 = vadd.f32 0.0, %v2064
      %v2066 = vpop.f32.mrb[0].mxu0
      %2067 = vmatprep.mubr.f32.mxu0 %v1967
      %2068 = vmatmul.mubr.f32.gmra.mrb[0].mxu0 %v1937
      %v2069 = vpop.f32.mrb[0].mxu0
      %v2070 = vadd.f32 0.0, %v2069
      %v2071 = vpop.f32.mrb[0].mxu0
      %2072 = vmatprep.mubr.f32.mxu0 %v1969
      %2073 = vmatmul.mubr.f32.gmra.mrb[0].mxu0 %v1941
      %v2074 = vpop.f32.mrb[0].mxu0
      %v2075 = vadd.f32 0.0, %v2074
      %v2076 = vpop.f32.mrb[0].mxu0
      %2077 = vmatprep.mubr.f32.mxu0 %v1971
      %2078 = vmatmul.mubr.f32.gmra.mrb[0].mxu0 %v1945
      %v2079 = vpop.f32.mrb[0].mxu0
      %v2080 = vadd.f32 0.0, %v2079
      %v2081 = vpop.f32.mrb[0].mxu0
      %2082 = vmatprep.mubr.f32.mxu0 %v1973
      %2083 = vmatmul.mubr.f32.gmra.mrb[0].mxu0 %v1944
      %v2084 = vpop.f32.mrb[0].mxu0
      %v2085 = vadd.f32 0.0, %v2084
      %v2086 = vpop.f32.mrb[0].mxu0
      %2087 = vdwg.mxu0
      %v2088 = vadd.f32 %v1875, %v2045
      %v2089 = vadd.f32 %v1876, %v2050
      %v2090 = vadd.f32 %v1877, %v2055
      %v2091 = vadd.f32 %v1878, %v2060
      %v2092 = vadd.f32 %v1879, %v2065
      %v2093 = vadd.f32 %v1880, %v2070
      %v2094 = vadd.f32 %v1881, %v2075
      %v2095 = vadd.f32 %v1882, %v2080
      %v2096 = vadd.f32 %v1883, %v2085
      %s2097 = scalar_lea.vmem %s1, 1568
      %v2098 = vld [vmem:[%s2097] sm:$0xff]
      %v2099 = vld [vmem:[%s2097 + $0x8] sm:$0xff]
      %v2100 = vld [vmem:[%s2097 + $0x10] sm:$0xff]
      %v2101 = vld [vmem:[%s2097 + $0x18] sm:$0xff]
      %v2102 = vld [vmem:[%s2097 + $0x20] sm:$0xff]
      %v2103 = vld [vmem:[%s2097 + $0x28] sm:$0xff]
      %v2104 = vld [vmem:[%s2097 + $0x30] sm:$0xff]
      %v2105 = vld [vmem:[%s2097 + $0x38] sm:$0xff]
      %v2106 = vld [vmem:[%s2097 + $0x40] sm:$0xff]
      %v2107 = vld [vmem:[%s2097 + $0x48] sm:$0xff]
      %v2108 = vld [vmem:[%s2097 + $0x50] sm:$0xff]
      %v2109 = vld [vmem:[%s2097 + $0x58] sm:$0xff]
      %v2110 = vld [vmem:[%s2097 + $0x60] sm:$0xff]
      %v2111 = vld [vmem:[%s2097 + $0x68] sm:$0xff]
      %v2112 = vld [vmem:[%s2097 + $0x70] sm:$0xff]
      %v2113 = vld [vmem:[%s2097 + $0x78] sm:$0xff]
      %v2114 = vld [vmem:[%s2097 + $0x80] sm:$0xff]
      %v2115 = vld [vmem:[%s2097 + $0x88] sm:$0xff]
      %v2116 = vld [vmem:[%s2097 + $0x90] sm:$0xff]
      %v2117 = vld [vmem:[%s2097 + $0x98] sm:$0xff]
      %v2118 = vld [vmem:[%s2097 + $0xa0] sm:$0xff]
      %v2119 = vld [vmem:[%s2097 + $0xa8] sm:$0xff]
      %v2120 = vld [vmem:[%s2097 + $0xb0] sm:$0xff]
      %v2121 = vld [vmem:[%s2097 + $0xb8] sm:$0xff]
      %v2122 = vld [vmem:[%s2097 + $0xc0] sm:$0xff]
      %v2123 = vld [vmem:[%s2097 + $0xc8] sm:$0xff]
      %v2124 = vld [vmem:[%s2097 + $0xd0] sm:$0xff]
      %v2125 = vld [vmem:[%s2097 + $0xd8] sm:$0x7]
      %vm2126 = vcmask 1040384
      %v2127 = vrot.slane %v630, 7
      %v2128 = vrot.slane %v632, 7
      %v2129 = vsel %vm2126, %v2127, %v2128
      %v2130 = vrot.slane %v631, 7
      %v2131 = vrot.slane %v633, 7
      %v2132 = vsel %vm2126, %v2130, %v2131
      %v2133 = vrot.slane %v634, 7
      %v2134 = vsel %vm2126, %v2128, %v2133
      %v2135 = vrot.slane %v635, 7
      %v2136 = vsel %vm2126, %v2131, %v2135
      %v2137 = vrot.slane %v636, 7
      %v2138 = vsel %vm2126, %v2133, %v2137
      %v2139 = vrot.slane %v637, 7
      %v2140 = vsel %vm2126, %v2135, %v2139
      %v2141 = vrot.slane %v638, 7
      %v2142 = vsel %vm2126, %v2137, %v2141
      %v2143 = vrot.slane %v639, 7
      %v2144 = vsel %vm2126, %v2139, %v2143
      %v2145 = vrot.slane %v640, 7
      %v2146 = vsel %vm2126, %v2141, %v2145
      %v2147 = vrot.slane %v641, 7
      %v2148 = vsel %vm2126, %v2143, %v2147
      %v2149 = vrot.slane %v642, 7
      %v2150 = vsel %vm2126, %v2145, %v2149
      %v2151 = vrot.slane %v643, 7
      %v2152 = vsel %vm2126, %v2147, %v2151
      %v2153 = vrot.slane %v644, 7
      %v2154 = vsel %vm2126, %v2149, %v2153
      %v2155 = vrot.slane %v645, 7
      %v2156 = vsel %vm2126, %v2151, %v2155
      %v2157 = vrot.slane %v646, 7
      %v2158 = vsel %vm2126, %v2153, %v2157
      %v2159 = vrot.slane %v647, 7
      %v2160 = vsel %vm2126, %v2155, %v2159
      %v2170 = vsel %vm769, %v2132, 0
      %v2172 = vsel %vm769, %v2136, 0
      %v2174 = vsel %vm769, %v2140, 0
      %v2176 = vsel %vm769, %v2144, 0
      %v2178 = vsel %vm769, %v2148, 0
      %v2180 = vsel %vm769, %v2152, 0
      %v2182 = vsel %vm769, %v2156, 0
      %v2184 = vsel %vm769, %v2160, 0
      %v2186 = vsel %vm769, %v2159, 0
      %v2189 = vsel %vm788, %v2125, 0
      %2191 = vmatprep.subr.mxu0 0.0
      %2192 = vmatpush1.msra.mxu0 %v2098
      %2193 = vmatprep.subr.mxu0 0.0
      %2194 = vmatpush1.msra.mxu0 %v2099
      %2195 = vmatprep.subr.mxu0 0.0
      %2196 = vmatpush1.msra.mxu0 %v2100
      %2197 = vmatprep.subr.mxu0 0.0
      %2198 = vmatpush1.msra.mxu0 %v2101
      %2199 = vmatprep.subr.mxu0 0.0
      %2200 = vmatpush1.msra.mxu0 %v2102
      %2201 = vmatprep.subr.mxu0 0.0
      %2202 = vmatpush1.msra.mxu0 %v2103
      %2203 = vmatprep.subr.mxu0 0.0
      %2204 = vmatpush1.msra.mxu0 %v2104
      %2205 = vmatprep.subr.mxu0 0.0
      %2206 = vmatpush1.msra.mxu0 %v2105
      %2207 = vmatprep.subr.mxu0 0.0
      %2208 = vmatpush1.msra.mxu0 %v2106
      %2209 = vmatprep.subr.mxu0 0.0
      %2210 = vmatpush1.msra.mxu0 %v2107
      %2211 = vmatprep.subr.mxu0 0.0
      %2212 = vmatpush1.msra.mxu0 %v2108
      %2213 = vmatprep.subr.mxu0 0.0
      %2214 = vmatpush1.msra.mxu0 %v2109
      %2215 = vmatprep.subr.mxu0 0.0
      %2216 = vmatpush1.msra.mxu0 %v2110
      %2217 = vmatprep.subr.mxu0 0.0
      %2218 = vmatpush1.msra.mxu0 %v2111
      %2219 = vmatprep.subr.mxu0 0.0
      %2220 = vmatpush1.msra.mxu0 %v2112
      %2221 = vmatprep.subr.mxu0 0.0
      %2222 = vmatpush1.msra.mxu0 %v2113
      %2223 = vmatprep.subr.mxu0 0.0
      %2224 = vmatpush1.msra.mxu0 %v2114
      %2225 = vmatprep.subr.mxu0 0.0
      %2226 = vmatpush1.msra.mxu0 %v2115
      %2227 = vmatprep.subr.mxu0 0.0
      %2228 = vmatpush1.msra.mxu0 %v2116
      %2229 = vmatprep.subr.mxu0 0.0
      %2230 = vmatpush1.msra.mxu0 %v2117
      %2231 = vmatprep.subr.mxu0 0.0
      %2232 = vmatpush1.msra.mxu0 %v2118
      %2233 = vmatprep.subr.mxu0 0.0
      %2234 = vmatpush1.msra.mxu0 %v2119
      %2235 = vmatprep.subr.mxu0 0.0
      %2236 = vmatpush1.msra.mxu0 %v2120
      %2237 = vmatprep.subr.mxu0 0.0
      %2238 = vmatpush1.msra.mxu0 %v2121
      %2239 = vmatprep.subr.mxu0 0.0
      %2240 = vmatpush1.msra.mxu0 %v2122
      %2241 = vmatprep.subr.mxu0 0.0
      %2242 = vmatpush1.msra.mxu0 %v2123
      %2243 = vmatprep.subr.mxu0 0.0
      %2244 = vmatpush1.msra.mxu0 %v2124
      %2245 = vmatprep.subr.mxu0 0.0
      %2246 = vmatpush1.msra.mxu0 %v2189
      %2247 = vmatprep.subr.mxu0 0.0
      %2248 = vmatpush1.msra.mxu0 0.0
      %2249 = vmatprep.subr.mxu0 0.0
      %2250 = vmatpush1.msra.mxu0 0.0
      %2251 = vmatprep.subr.mxu0 0.0
      %2252 = vmatpush1.msra.mxu0 0.0
      %2253 = vmatprep.subr.mxu0 0.0
      %2254 = vmatpush1.msra.mxu0 0.0
      %2255 = vmatprep.mubr.f32.mxu0 %v2170
      %2256 = vmatmul.mubr.f32.gmra.mrb[0].mxu0 %v2129
      %v2257 = vpop.f32.mrb[0].mxu0
      %v2258 = vadd.f32 0.0, %v2257
      %v2259 = vpop.f32.mrb[0].mxu0
      %2260 = vmatprep.mubr.f32.mxu0 %v2172
      %2261 = vmatmul.mubr.f32.gmra.mrb[0].mxu0 %v2134
      %v2262 = vpop.f32.mrb[0].mxu0
      %v2263 = vadd.f32 0.0, %v2262
      %v2264 = vpop.f32.mrb[0].mxu0
      %2265 = vmatprep.mubr.f32.mxu0 %v2174
      %2266 = vmatmul.mubr.f32.gmra.mrb[0].mxu0 %v2138
      %v2267 = vpop.f32.mrb[0].mxu0
      %v2268 = vadd.f32 0.0, %v2267
      %v2269 = vpop.f32.mrb[0].mxu0
      %2270 = vmatprep.mubr.f32.mxu0 %v2176
      %2271 = vmatmul.mubr.f32.gmra.mrb[0].mxu0 %v2142
      %v2272 = vpop.f32.mrb[0].mxu0
      %v2273 = vadd.f32 0.0, %v2272
      %v2274 = vpop.f32.mrb[0].mxu0
      %2275 = vmatprep.mubr.f32.mxu0 %v2178
      %2276 = vmatmul.mubr.f32.gmra.mrb[0].mxu0 %v2146
      %v2277 = vpop.f32.mrb[0].mxu0
      %v2278 = vadd.f32 0.0, %v2277
      %v2279 = vpop.f32.mrb[0].mxu0
      %2280 = vmatprep.mubr.f32.mxu0 %v2180
      %2281 = vmatmul.mubr.f32.gmra.mrb[0].mxu0 %v2150
      %v2282 = vpop.f32.mrb[0].mxu0
      %v2283 = vadd.f32 0.0, %v2282
      %v2284 = vpop.f32.mrb[0].mxu0
      %2285 = vmatprep.mubr.f32.mxu0 %v2182
      %2286 = vmatmul.mubr.f32.gmra.mrb[0].mxu0 %v2154
      %v2287 = vpop.f32.mrb[0].mxu0
      %v2288 = vadd.f32 0.0, %v2287
      %v2289 = vpop.f32.mrb[0].mxu0
      %2290 = vmatprep.mubr.f32.mxu0 %v2184
      %2291 = vmatmul.mubr.f32.gmra.mrb[0].mxu0 %v2158
      %v2292 = vpop.f32.mrb[0].mxu0
      %v2293 = vadd.f32 0.0, %v2292
      %v2294 = vpop.f32.mrb[0].mxu0
      %2295 = vmatprep.mubr.f32.mxu0 %v2186
      %2296 = vmatmul.mubr.f32.gmra.mrb[0].mxu0 %v2157
      %v2297 = vpop.f32.mrb[0].mxu0
      %v2298 = vadd.f32 0.0, %v2297
      %v2299 = vpop.f32.mrb[0].mxu0
      %2300 = vdwg.mxu0
      %v2301 = vadd.f32 %v2088, %v2258
      %v2302 = vadd.f32 %v2089, %v2263
      %v2303 = vadd.f32 %v2090, %v2268
      %v2304 = vadd.f32 %v2091, %v2273
      %v2305 = vadd.f32 %v2092, %v2278
      %v2306 = vadd.f32 %v2093, %v2283
      %v2307 = vadd.f32 %v2094, %v2288
      %v2308 = vadd.f32 %v2095, %v2293
      %v2309 = vadd.f32 %v2096, %v2298
      %s2310 = scalar_lea.vmem %s1, 1792
      %v2311 = vld [vmem:[%s2310] sm:$0xff]
      %v2312 = vld [vmem:[%s2310 + $0x8] sm:$0xff]
      %v2313 = vld [vmem:[%s2310 + $0x10] sm:$0xff]
      %v2314 = vld [vmem:[%s2310 + $0x18] sm:$0xff]
      %v2315 = vld [vmem:[%s2310 + $0x20] sm:$0xff]
      %v2316 = vld [vmem:[%s2310 + $0x28] sm:$0xff]
      %v2317 = vld [vmem:[%s2310 + $0x30] sm:$0xff]
      %v2318 = vld [vmem:[%s2310 + $0x38] sm:$0xff]
      %v2319 = vld [vmem:[%s2310 + $0x40] sm:$0xff]
      %v2320 = vld [vmem:[%s2310 + $0x48] sm:$0xff]
      %v2321 = vld [vmem:[%s2310 + $0x50] sm:$0xff]
      %v2322 = vld [vmem:[%s2310 + $0x58] sm:$0xff]
      %v2323 = vld [vmem:[%s2310 + $0x60] sm:$0xff]
      %v2324 = vld [vmem:[%s2310 + $0x68] sm:$0xff]
      %v2325 = vld [vmem:[%s2310 + $0x70] sm:$0xff]
      %v2326 = vld [vmem:[%s2310 + $0x78] sm:$0xff]
      %v2327 = vld [vmem:[%s2310 + $0x80] sm:$0xff]
      %v2328 = vld [vmem:[%s2310 + $0x88] sm:$0xff]
      %v2329 = vld [vmem:[%s2310 + $0x90] sm:$0xff]
      %v2330 = vld [vmem:[%s2310 + $0x98] sm:$0xff]
      %v2331 = vld [vmem:[%s2310 + $0xa0] sm:$0xff]
      %v2332 = vld [vmem:[%s2310 + $0xa8] sm:$0xff]
      %v2333 = vld [vmem:[%s2310 + $0xb0] sm:$0xff]
      %v2334 = vld [vmem:[%s2310 + $0xb8] sm:$0xff]
      %v2335 = vld [vmem:[%s2310 + $0xc0] sm:$0xff]
      %v2336 = vld [vmem:[%s2310 + $0xc8] sm:$0xff]
      %v2337 = vld [vmem:[%s2310 + $0xd0] sm:$0xff]
      %v2338 = vld [vmem:[%s2310 + $0xd8] sm:$0x7]
      %v2340 = vsel %vm769, %v649, 0
      %v2343 = vsel %vm788, %v2338, 0
      %2345 = vmatprep.subr.mxu0 0.0
      %2346 = vmatpush1.msra.mxu0 %v2311
      %2347 = vmatprep.subr.mxu0 0.0
      %2348 = vmatpush1.msra.mxu0 %v2312
      %2349 = vmatprep.subr.mxu0 0.0
      %2350 = vmatpush1.msra.mxu0 %v2313
      %2351 = vmatprep.subr.mxu0 0.0
      %2352 = vmatpush1.msra.mxu0 %v2314
      %2353 = vmatprep.subr.mxu0 0.0
      %2354 = vmatpush1.msra.mxu0 %v2315
      %2355 = vmatprep.subr.mxu0 0.0
      %2356 = vmatpush1.msra.mxu0 %v2316
      %2357 = vmatprep.subr.mxu0 0.0
      %2358 = vmatpush1.msra.mxu0 %v2317
      %2359 = vmatprep.subr.mxu0 0.0
      %2360 = vmatpush1.msra.mxu0 %v2318
      %2361 = vmatprep.subr.mxu0 0.0
      %2362 = vmatpush1.msra.mxu0 %v2319
      %2363 = vmatprep.subr.mxu0 0.0
      %2364 = vmatpush1.msra.mxu0 %v2320
      %2365 = vmatprep.subr.mxu0 0.0
      %2366 = vmatpush1.msra.mxu0 %v2321
      %2367 = vmatprep.subr.mxu0 0.0
      %2368 = vmatpush1.msra.mxu0 %v2322
      %2369 = vmatprep.subr.mxu0 0.0
      %2370 = vmatpush1.msra.mxu0 %v2323
      %2371 = vmatprep.subr.mxu0 0.0
      %2372 = vmatpush1.msra.mxu0 %v2324
      %2373 = vmatprep.subr.mxu0 0.0
      %2374 = vmatpush1.msra.mxu0 %v2325
      %2375 = vmatprep.subr.mxu0 0.0
      %2376 = vmatpush1.msra.mxu0 %v2326
      %2377 = vmatprep.subr.mxu0 0.0
      %2378 = vmatpush1.msra.mxu0 %v2327
      %2379 = vmatprep.subr.mxu0 0.0
      %2380 = vmatpush1.msra.mxu0 %v2328
      %2381 = vmatprep.subr.mxu0 0.0
      %2382 = vmatpush1.msra.mxu0 %v2329
      %2383 = vmatprep.subr.mxu0 0.0
      %2384 = vmatpush1.msra.mxu0 %v2330
      %2385 = vmatprep.subr.mxu0 0.0
      %2386 = vmatpush1.msra.mxu0 %v2331
      %2387 = vmatprep.subr.mxu0 0.0
      %2388 = vmatpush1.msra.mxu0 %v2332
      %2389 = vmatprep.subr.mxu0 0.0
      %2390 = vmatpush1.msra.mxu0 %v2333
      %2391 = vmatprep.subr.mxu0 0.0
      %2392 = vmatpush1.msra.mxu0 %v2334
      %2393 = vmatprep.subr.mxu0 0.0
      %2394 = vmatpush1.msra.mxu0 %v2335
      %2395 = vmatprep.subr.mxu0 0.0
      %2396 = vmatpush1.msra.mxu0 %v2336
      %2397 = vmatprep.subr.mxu0 0.0
      %2398 = vmatpush1.msra.mxu0 %v2337
      %2399 = vmatprep.subr.mxu0 0.0
      %2400 = vmatpush1.msra.mxu0 %v2343
      %2401 = vmatprep.subr.mxu0 0.0
      %2402 = vmatpush1.msra.mxu0 0.0
      %2403 = vmatprep.subr.mxu0 0.0
      %2404 = vmatpush1.msra.mxu0 0.0
      %2405 = vmatprep.subr.mxu0 0.0
      %2406 = vmatpush1.msra.mxu0 0.0
      %2407 = vmatprep.subr.mxu0 0.0
      %2408 = vmatpush1.msra.mxu0 0.0
      %2409 = vmatprep.mubr.f32.mxu0 %v904
      %2410 = vmatmul.mubr.f32.gmra.mrb[0].mxu0 %v632
      %v2411 = vpop.f32.mrb[0].mxu0
      %v2412 = vadd.f32 0.0, %v2411
      %v2413 = vpop.f32.mrb[0].mxu0
      %2414 = vmatprep.mubr.f32.mxu0 %v906
      %2415 = vmatmul.mubr.f32.gmra.mrb[0].mxu0 %v634
      %v2416 = vpop.f32.mrb[0].mxu0
      %v2417 = vadd.f32 0.0, %v2416
      %v2418 = vpop.f32.mrb[0].mxu0
      %2419 = vmatprep.mubr.f32.mxu0 %v908
      %2420 = vmatmul.mubr.f32.gmra.mrb[0].mxu0 %v636
      %v2421 = vpop.f32.mrb[0].mxu0
      %v2422 = vadd.f32 0.0, %v2421
      %v2423 = vpop.f32.mrb[0].mxu0
      %2424 = vmatprep.mubr.f32.mxu0 %v910
      %2425 = vmatmul.mubr.f32.gmra.mrb[0].mxu0 %v638
      %v2426 = vpop.f32.mrb[0].mxu0
      %v2427 = vadd.f32 0.0, %v2426
      %v2428 = vpop.f32.mrb[0].mxu0
      %2429 = vmatprep.mubr.f32.mxu0 %v912
      %2430 = vmatmul.mubr.f32.gmra.mrb[0].mxu0 %v640
      %v2431 = vpop.f32.mrb[0].mxu0
      %v2432 = vadd.f32 0.0, %v2431
      %v2433 = vpop.f32.mrb[0].mxu0
      %2434 = vmatprep.mubr.f32.mxu0 %v914
      %2435 = vmatmul.mubr.f32.gmra.mrb[0].mxu0 %v642
      %v2436 = vpop.f32.mrb[0].mxu0
      %v2437 = vadd.f32 0.0, %v2436
      %v2438 = vpop.f32.mrb[0].mxu0
      %2439 = vmatprep.mubr.f32.mxu0 %v916
      %2440 = vmatmul.mubr.f32.gmra.mrb[0].mxu0 %v644
      %v2441 = vpop.f32.mrb[0].mxu0
      %v2442 = vadd.f32 0.0, %v2441
      %v2443 = vpop.f32.mrb[0].mxu0
      %2444 = vmatprep.mubr.f32.mxu0 %v918
      %2445 = vmatmul.mubr.f32.gmra.mrb[0].mxu0 %v646
      %v2446 = vpop.f32.mrb[0].mxu0
      %v2447 = vadd.f32 0.0, %v2446
      %v2448 = vpop.f32.mrb[0].mxu0
      %2449 = vmatprep.mubr.f32.mxu0 %v2340
      %2450 = vmatmul.mubr.f32.gmra.mrb[0].mxu0 %v648
      %v2451 = vpop.f32.mrb[0].mxu0
      %v2452 = vadd.f32 0.0, %v2451
      %v2453 = vpop.f32.mrb[0].mxu0
      %2454 = vdwg.mxu0
      %v2455 = vadd.f32 %v2301, %v2412
      %v2456 = vadd.f32 %v2302, %v2417
      %v2457 = vadd.f32 %v2303, %v2422
      %v2458 = vadd.f32 %v2304, %v2427
      %v2459 = vadd.f32 %v2305, %v2432
      %v2460 = vadd.f32 %v2306, %v2437
      %v2461 = vadd.f32 %v2307, %v2442
      %v2462 = vadd.f32 %v2308, %v2447
      %v2463 = vadd.f32 %v2309, %v2452
      %s2464 = scalar_lea.vmem %s1, 2016
      %v2465 = vld [vmem:[%s2464] sm:$0xff]
      %v2466 = vld [vmem:[%s2464 + $0x8] sm:$0xff]
      %v2467 = vld [vmem:[%s2464 + $0x10] sm:$0xff]
      %v2468 = vld [vmem:[%s2464 + $0x18] sm:$0xff]
      %v2469 = vld [vmem:[%s2464 + $0x20] sm:$0xff]
      %v2470 = vld [vmem:[%s2464 + $0x28] sm:$0xff]
      %v2471 = vld [vmem:[%s2464 + $0x30] sm:$0xff]
      %v2472 = vld [vmem:[%s2464 + $0x38] sm:$0xff]
      %v2473 = vld [vmem:[%s2464 + $0x40] sm:$0xff]
      %v2474 = vld [vmem:[%s2464 + $0x48] sm:$0xff]
      %v2475 = vld [vmem:[%s2464 + $0x50] sm:$0xff]
      %v2476 = vld [vmem:[%s2464 + $0x58] sm:$0xff]
      %v2477 = vld [vmem:[%s2464 + $0x60] sm:$0xff]
      %v2478 = vld [vmem:[%s2464 + $0x68] sm:$0xff]
      %v2479 = vld [vmem:[%s2464 + $0x70] sm:$0xff]
      %v2480 = vld [vmem:[%s2464 + $0x78] sm:$0xff]
      %v2481 = vld [vmem:[%s2464 + $0x80] sm:$0xff]
      %v2482 = vld [vmem:[%s2464 + $0x88] sm:$0xff]
      %v2483 = vld [vmem:[%s2464 + $0x90] sm:$0xff]
      %v2484 = vld [vmem:[%s2464 + $0x98] sm:$0xff]
      %v2485 = vld [vmem:[%s2464 + $0xa0] sm:$0xff]
      %v2486 = vld [vmem:[%s2464 + $0xa8] sm:$0xff]
      %v2487 = vld [vmem:[%s2464 + $0xb0] sm:$0xff]
      %v2488 = vld [vmem:[%s2464 + $0xb8] sm:$0xff]
      %v2489 = vld [vmem:[%s2464 + $0xc0] sm:$0xff]
      %v2490 = vld [vmem:[%s2464 + $0xc8] sm:$0xff]
      %v2491 = vld [vmem:[%s2464 + $0xd0] sm:$0xff]
      %v2492 = vld [vmem:[%s2464 + $0xd8] sm:$0x7]
      %v2494 = vrot.slane %v648, 1
      %v2495 = vsel %vm725, %v756, %v2494
      %v2496 = vrot.slane %v649, 1
      %v2497 = vsel %vm725, %v758, %v2496
      %v2500 = vsel %vm769, %v2497, 0
      %v2502 = vsel %vm769, %v2496, 0
      %v2505 = vsel %vm788, %v2492, 0
      %2507 = vmatprep.subr.mxu0 0.0
      %2508 = vmatpush1.msra.mxu0 %v2465
      %2509 = vmatprep.subr.mxu0 0.0
      %2510 = vmatpush1.msra.mxu0 %v2466
      %2511 = vmatprep.subr.mxu0 0.0
      %2512 = vmatpush1.msra.mxu0 %v2467
      %2513 = vmatprep.subr.mxu0 0.0
      %2514 = vmatpush1.msra.mxu0 %v2468
      %2515 = vmatprep.subr.mxu0 0.0
      %2516 = vmatpush1.msra.mxu0 %v2469
      %2517 = vmatprep.subr.mxu0 0.0
      %2518 = vmatpush1.msra.mxu0 %v2470
      %2519 = vmatprep.subr.mxu0 0.0
      %2520 = vmatpush1.msra.mxu0 %v2471
      %2521 = vmatprep.subr.mxu0 0.0
      %2522 = vmatpush1.msra.mxu0 %v2472
      %2523 = vmatprep.subr.mxu0 0.0
      %2524 = vmatpush1.msra.mxu0 %v2473
      %2525 = vmatprep.subr.mxu0 0.0
      %2526 = vmatpush1.msra.mxu0 %v2474
      %2527 = vmatprep.subr.mxu0 0.0
      %2528 = vmatpush1.msra.mxu0 %v2475
      %2529 = vmatprep.subr.mxu0 0.0
      %2530 = vmatpush1.msra.mxu0 %v2476
      %2531 = vmatprep.subr.mxu0 0.0
      %2532 = vmatpush1.msra.mxu0 %v2477
      %2533 = vmatprep.subr.mxu0 0.0
      %2534 = vmatpush1.msra.mxu0 %v2478
      %2535 = vmatprep.subr.mxu0 0.0
      %2536 = vmatpush1.msra.mxu0 %v2479
      %2537 = vmatprep.subr.mxu0 0.0
      %2538 = vmatpush1.msra.mxu0 %v2480
      %2539 = vmatprep.subr.mxu0 0.0
      %2540 = vmatpush1.msra.mxu0 %v2481
      %2541 = vmatprep.subr.mxu0 0.0
      %2542 = vmatpush1.msra.mxu0 %v2482
      %2543 = vmatprep.subr.mxu0 0.0
      %2544 = vmatpush1.msra.mxu0 %v2483
      %2545 = vmatprep.subr.mxu0 0.0
      %2546 = vmatpush1.msra.mxu0 %v2484
      %2547 = vmatprep.subr.mxu0 0.0
      %2548 = vmatpush1.msra.mxu0 %v2485
      %2549 = vmatprep.subr.mxu0 0.0
      %2550 = vmatpush1.msra.mxu0 %v2486
      %2551 = vmatprep.subr.mxu0 0.0
      %2552 = vmatpush1.msra.mxu0 %v2487
      %2553 = vmatprep.subr.mxu0 0.0
      %2554 = vmatpush1.msra.mxu0 %v2488
      %2555 = vmatprep.subr.mxu0 0.0
      %2556 = vmatpush1.msra.mxu0 %v2489
      %2557 = vmatprep.subr.mxu0 0.0
      %2558 = vmatpush1.msra.mxu0 %v2490
      %2559 = vmatprep.subr.mxu0 0.0
      %2560 = vmatpush1.msra.mxu0 %v2491
      %2561 = vmatprep.subr.mxu0 0.0
      %2562 = vmatpush1.msra.mxu0 %v2505
      %2563 = vmatprep.subr.mxu0 0.0
      %2564 = vmatpush1.msra.mxu0 0.0
      %2565 = vmatprep.subr.mxu0 0.0
      %2566 = vmatpush1.msra.mxu0 0.0
      %2567 = vmatprep.subr.mxu0 0.0
      %2568 = vmatpush1.msra.mxu0 0.0
      %2569 = vmatprep.subr.mxu0 0.0
      %2570 = vmatpush1.msra.mxu0 0.0
      %2571 = vmatprep.mubr.f32.mxu0 %v772
      %2572 = vmatmul.mubr.f32.gmra.mrb[0].mxu0 %v733
      %v2573 = vpop.f32.mrb[0].mxu0
      %v2574 = vadd.f32 0.0, %v2573
      %v2575 = vpop.f32.mrb[0].mxu0
      %2576 = vmatprep.mubr.f32.mxu0 %v774
      %2577 = vmatmul.mubr.f32.gmra.mrb[0].mxu0 %v737
      %v2578 = vpop.f32.mrb[0].mxu0
      %v2579 = vadd.f32 0.0, %v2578
      %v2580 = vpop.f32.mrb[0].mxu0
      %2581 = vmatprep.mubr.f32.mxu0 %v776
      %2582 = vmatmul.mubr.f32.gmra.mrb[0].mxu0 %v741
      %v2583 = vpop.f32.mrb[0].mxu0
      %v2584 = vadd.f32 0.0, %v2583
      %v2585 = vpop.f32.mrb[0].mxu0
      %2586 = vmatprep.mubr.f32.mxu0 %v778
      %2587 = vmatmul.mubr.f32.gmra.mrb[0].mxu0 %v745
      %v2588 = vpop.f32.mrb[0].mxu0
      %v2589 = vadd.f32 0.0, %v2588
      %v2590 = vpop.f32.mrb[0].mxu0
      %2591 = vmatprep.mubr.f32.mxu0 %v780
      %2592 = vmatmul.mubr.f32.gmra.mrb[0].mxu0 %v749
      %v2593 = vpop.f32.mrb[0].mxu0
      %v2594 = vadd.f32 0.0, %v2593
      %v2595 = vpop.f32.mrb[0].mxu0
      %2596 = vmatprep.mubr.f32.mxu0 %v782
      %2597 = vmatmul.mubr.f32.gmra.mrb[0].mxu0 %v753
      %v2598 = vpop.f32.mrb[0].mxu0
      %v2599 = vadd.f32 0.0, %v2598
      %v2600 = vpop.f32.mrb[0].mxu0
      %2601 = vmatprep.mubr.f32.mxu0 %v784
      %2602 = vmatmul.mubr.f32.gmra.mrb[0].mxu0 %v757
      %v2603 = vpop.f32.mrb[0].mxu0
      %v2604 = vadd.f32 0.0, %v2603
      %v2605 = vpop.f32.mrb[0].mxu0
      %2606 = vmatprep.mubr.f32.mxu0 %v2500
      %2607 = vmatmul.mubr.f32.gmra.mrb[0].mxu0 %v2495
      %v2608 = vpop.f32.mrb[0].mxu0
      %v2609 = vadd.f32 0.0, %v2608
      %v2610 = vpop.f32.mrb[0].mxu0
      %2611 = vmatprep.mubr.f32.mxu0 %v2502
      %2612 = vmatmul.mubr.f32.gmra.mrb[0].mxu0 %v2494
      %v2613 = vpop.f32.mrb[0].mxu0
      %v2614 = vadd.f32 0.0, %v2613
      %v2615 = vpop.f32.mrb[0].mxu0
      %2616 = vdwg.mxu0
      %v2617 = vadd.f32 %v2455, %v2574
      %v2618 = vadd.f32 %v2456, %v2579
      %v2619 = vadd.f32 %v2457, %v2584
      %v2620 = vadd.f32 %v2458, %v2589
      %v2621 = vadd.f32 %v2459, %v2594
      %v2622 = vadd.f32 %v2460, %v2599
      %v2623 = vadd.f32 %v2461, %v2604
      %v2624 = vadd.f32 %v2462, %v2609
      %v2625 = vadd.f32 %v2463, %v2614
      %v2626 = vld [vmem:[%s2] sm:$0x1]
      %v2628 = vlaneseq
      %v2629 = vshrl.u32 %v2628, 7
      %v2630 = vsub.s32 0, %v2629
      %v2631 = vrot.slane %v2626, %v2630
      %v2633 = vadd.f32 %v2617, %v2631
      %v2634 = vadd.f32 %v2618, %v2631
      %v2635 = vadd.f32 %v2619, %v2631
      %v2636 = vadd.f32 %v2620, %v2631
      %v2637 = vadd.f32 %v2621, %v2631
      %v2638 = vadd.f32 %v2622, %v2631
      %v2639 = vadd.f32 %v2623, %v2631
      %v2640 = vadd.f32 %v2624, %v2631
      %v2641 = vadd.f32 %v2625, %v2631
      %v2642 = vmul.f32 %v2633, 5.656854
      %v2643 = vmul.f32 %v2634, 5.656854
      %v2644 = vmul.f32 %v2635, 5.656854
      %v2645 = vmul.f32 %v2636, 5.656854
      %v2646 = vmul.f32 %v2637, 5.656854
      %v2647 = vmul.f32 %v2638, 5.656854
      %v2648 = vmul.f32 %v2639, 5.656854
      %v2649 = vmul.f32 %v2640, 5.656854
      %v2650 = vmul.f32 %v2641, 5.656854
      %v2651 = vld [vmem:[%s3] sm:$0xff]
      %v2652 = vld [vmem:[%s3 + $0x8] sm:$0xff]
      %v2653 = vld [vmem:[%s3 + $0x10] sm:$0xff]
      %v2654 = vld [vmem:[%s3 + $0x18] sm:$0xff]
      %v2655 = vld [vmem:[%s3 + $0x20] sm:$0xff]
      %v2656 = vld [vmem:[%s3 + $0x28] sm:$0xff]
      %v2657 = vld [vmem:[%s3 + $0x30] sm:$0xff]
      %v2658 = vld [vmem:[%s3 + $0x38] sm:$0xff]
      %v2659 = vld [vmem:[%s3 + $0x40] sm:$0x1]
      %v2660 = vadd.f32 %v2642, %v2651
      %v2661 = vadd.f32 %v2643, %v2652
      %v2662 = vadd.f32 %v2644, %v2653
      %v2663 = vadd.f32 %v2645, %v2654
      %v2664 = vadd.f32 %v2646, %v2655
      %v2665 = vadd.f32 %v2647, %v2656
      %v2666 = vadd.f32 %v2648, %v2657
      %v2667 = vadd.f32 %v2649, %v2658
      %v2668 = vadd.f32 %v2650, %v2659
      %v2669 = vld [vmem:[%s4] sm:$0xff]
      %v2670 = vld [vmem:[%s4 + $0x8] sm:$0xff]
      %v2671 = vld [vmem:[%s4 + $0x10] sm:$0xff]
      %v2672 = vld [vmem:[%s4 + $0x18] sm:$0xff]
      %v2673 = vld [vmem:[%s5] sm:$0x1]
      %v2675 = vlaneseq
      %v2676 = vshrl.u32 %v2675, 7
      %v2677 = vsub.s32 0, %v2676
      %v2678 = vrot.slane %v2673, %v2677
      %vm2680 = vcmask 261120
      %v2682 = vsel %vm2680, %v2660, 0
      %v2685 = vsel %vm2680, %v2661, 0
      %v2688 = vsel %vm2680, %v2662, 0
      %v2691 = vsel %vm2680, %v2663, 0
      %v2694 = vsel %vm2680, %v2664, 0
      %v2697 = vsel %vm2680, %v2665, 0
      %v2700 = vsel %vm2680, %v2666, 0
      %v2703 = vsel %vm2680, %v2667, 0
      %v2706 = vsel %vm2680, %v2668, 0
      %2708 = vmatprep.subr.mxu0 0.0
      %2709 = vmatpush1.msra.mxu0 %v2669
      %2710 = vmatprep.subr.mxu0 0.0
      %2711 = vmatpush1.msra.mxu0 %v2670
      %2712 = vmatprep.subr.mxu0 0.0
      %2713 = vmatpush1.msra.mxu0 %v2671
      %2714 = vmatprep.subr.mxu0 0.0
      %2715 = vmatpush1.msra.mxu0 %v2672
      %2716 = vmatprep.subr.mxu0 0.0
      %2717 = vmatpush1.msra.mxu0 0.0
      %2718 = vmatprep.subr.mxu0 0.0
      %2719 = vmatpush1.msra.mxu0 0.0
      %2720 = vmatprep.subr.mxu0 0.0
      %2721 = vmatpush1.msra.mxu0 0.0
      %2722 = vmatprep.subr.mxu0 0.0
      %2723 = vmatpush1.msra.mxu0 0.0
      %2724 = vmatprep.subr.mxu0 0.0
      %2725 = vmatpush1.msra.mxu0 0.0
      %2726 = vmatprep.subr.mxu0 0.0
      %2727 = vmatpush1.msra.mxu0 0.0
      %2728 = vmatprep.subr.mxu0 0.0
      %2729 = vmatpush1.msra.mxu0 0.0
      %2730 = vmatprep.subr.mxu0 0.0
      %2731 = vmatpush1.msra.mxu0 0.0
      %2732 = vmatprep.subr.mxu0 0.0
      %2733 = vmatpush1.msra.mxu0 0.0
      %2734 = vmatprep.subr.mxu0 0.0
      %2735 = vmatpush1.msra.mxu0 0.0
      %2736 = vmatprep.subr.mxu0 0.0
      %2737 = vmatpush1.msra.mxu0 0.0
      %2738 = vmatprep.subr.mxu0 0.0
      %2739 = vmatpush1.msra.mxu0 0.0
      %2740 = vmatprep.subr.mxu0 0.0
      %2741 = vmatpush1.msra.mxu0 0.0
      %2742 = vmatprep.subr.mxu0 0.0
      %2743 = vmatpush1.msra.mxu0 0.0
      %2744 = vmatprep.subr.mxu0 0.0
      %2745 = vmatpush1.msra.mxu0 0.0
      %2746 = vmatprep.subr.mxu0 0.0
      %2747 = vmatpush1.msra.mxu0 0.0
      %2748 = vmatprep.subr.mxu0 0.0
      %2749 = vmatpush1.msra.mxu0 0.0
      %2750 = vmatprep.subr.mxu0 0.0
      %2751 = vmatpush1.msra.mxu0 0.0
      %2752 = vmatprep.subr.mxu0 0.0
      %2753 = vmatpush1.msra.mxu0 0.0
      %2754 = vmatprep.subr.mxu0 0.0
      %2755 = vmatpush1.msra.mxu0 0.0
      %2756 = vmatprep.subr.mxu0 0.0
      %2757 = vmatpush1.msra.mxu0 0.0
      %2758 = vmatprep.subr.mxu0 0.0
      %2759 = vmatpush1.msra.mxu0 0.0
      %2760 = vmatprep.subr.mxu0 0.0
      %2761 = vmatpush1.msra.mxu0 0.0
      %2762 = vmatprep.subr.mxu0 0.0
      %2763 = vmatpush1.msra.mxu0 0.0
      %2764 = vmatprep.subr.mxu0 0.0
      %2765 = vmatpush1.msra.mxu0 0.0
      %2766 = vmatprep.subr.mxu0 0.0
      %2767 = vmatpush1.msra.mxu0 0.0
      %2768 = vmatprep.subr.mxu0 0.0
      %2769 = vmatpush1.msra.mxu0 0.0
      %2770 = vmatprep.subr.mxu0 0.0
      %2771 = vmatpush1.msra.mxu0 0.0
      %2772 = vmatprep.mubr.f32.mxu0 0.0
      %2773 = vmatmul.mubr.f32.gmra.mrb[0].mxu0 %v2682
      %v2774 = vpop.f32.mrb[0].mxu0
      %v2775 = vadd.f32 %v2678, %v2774
      %v2776 = vpop.f32.mrb[0].mxu0
      %2777 = vmatprep.mubr.f32.mxu0 0.0
      %2778 = vmatmul.mubr.f32.gmra.mrb[0].mxu0 %v2685
      %v2779 = vpop.f32.mrb[0].mxu0
      %v2780 = vadd.f32 %v2678, %v2779
      %v2781 = vpop.f32.mrb[0].mxu0
      %2782 = vmatprep.mubr.f32.mxu0 0.0
      %2783 = vmatmul.mubr.f32.gmra.mrb[0].mxu0 %v2688
      %v2784 = vpop.f32.mrb[0].mxu0
      %v2785 = vadd.f32 %v2678, %v2784
      %v2786 = vpop.f32.mrb[0].mxu0
      %2787 = vmatprep.mubr.f32.mxu0 0.0
      %2788 = vmatmul.mubr.f32.gmra.mrb[0].mxu0 %v2691
      %v2789 = vpop.f32.mrb[0].mxu0
      %v2790 = vadd.f32 %v2678, %v2789
      %v2791 = vpop.f32.mrb[0].mxu0
      %2792 = vmatprep.mubr.f32.mxu0 0.0
      %2793 = vmatmul.mubr.f32.gmra.mrb[0].mxu0 %v2694
      %v2794 = vpop.f32.mrb[0].mxu0
      %v2795 = vadd.f32 %v2678, %v2794
      %v2796 = vpop.f32.mrb[0].mxu0
      %2797 = vmatprep.mubr.f32.mxu0 0.0
      %2798 = vmatmul.mubr.f32.gmra.mrb[0].mxu0 %v2697
      %v2799 = vpop.f32.mrb[0].mxu0
      %v2800 = vadd.f32 %v2678, %v2799
      %v2801 = vpop.f32.mrb[0].mxu0
      %2802 = vmatprep.mubr.f32.mxu0 0.0
      %2803 = vmatmul.mubr.f32.gmra.mrb[0].mxu0 %v2700
      %v2804 = vpop.f32.mrb[0].mxu0
      %v2805 = vadd.f32 %v2678, %v2804
      %v2806 = vpop.f32.mrb[0].mxu0
      %2807 = vmatprep.mubr.f32.mxu0 0.0
      %2808 = vmatmul.mubr.f32.gmra.mrb[0].mxu0 %v2703
      %v2809 = vpop.f32.mrb[0].mxu0
      %v2810 = vadd.f32 %v2678, %v2809
      %v2811 = vpop.f32.mrb[0].mxu0
      %2812 = vmatprep.mubr.f32.mxu0 0.0
      %2813 = vmatmul.mubr.f32.gmra.mrb[0].mxu0 %v2706
      %v2814 = vpop.f32.mrb[0].mxu0
      %v2815 = vadd.f32 %v2678, %v2814
      %v2816 = vpop.f32.mrb[0].mxu0
      %2817 = vdwg.mxu0
      %v2818 = vld [vmem:[%s6] sm:$0xff]
      %v2819 = vld [vmem:[%s6 + $0x8] sm:$0xff]
      %v2820 = vld [vmem:[%s6 + $0x10] sm:$0xff]
      %v2821 = vld [vmem:[%s6 + $0x18] sm:$0xff]
      %v2822 = vld [vmem:[%s7] sm:$0x1]
      %v2824 = vlaneseq
      %v2825 = vshrl.u32 %v2824, 7
      %v2826 = vsub.s32 0, %v2825
      %v2827 = vrot.slane %v2822, %v2826
      %2829 = vmatprep.subr.mxu0 0.0
      %2830 = vmatpush1.msra.mxu0 %v2818
      %2831 = vmatprep.subr.mxu0 0.0
      %2832 = vmatpush1.msra.mxu0 %v2819
      %2833 = vmatprep.subr.mxu0 0.0
      %2834 = vmatpush1.msra.mxu0 %v2820
      %2835 = vmatprep.subr.mxu0 0.0
      %2836 = vmatpush1.msra.mxu0 %v2821
      %2837 = vmatprep.subr.mxu0 0.0
      %2838 = vmatpush1.msra.mxu0 0.0
      %2839 = vmatprep.subr.mxu0 0.0
      %2840 = vmatpush1.msra.mxu0 0.0
      %2841 = vmatprep.subr.mxu0 0.0
      %2842 = vmatpush1.msra.mxu0 0.0
      %2843 = vmatprep.subr.mxu0 0.0
      %2844 = vmatpush1.msra.mxu0 0.0
      %2845 = vmatprep.subr.mxu0 0.0
      %2846 = vmatpush1.msra.mxu0 0.0
      %2847 = vmatprep.subr.mxu0 0.0
      %2848 = vmatpush1.msra.mxu0 0.0
      %2849 = vmatprep.subr.mxu0 0.0
      %2850 = vmatpush1.msra.mxu0 0.0
      %2851 = vmatprep.subr.mxu0 0.0
      %2852 = vmatpush1.msra.mxu0 0.0
      %2853 = vmatprep.subr.mxu0 0.0
      %2854 = vmatpush1.msra.mxu0 0.0
      %2855 = vmatprep.subr.mxu0 0.0
      %2856 = vmatpush1.msra.mxu0 0.0
      %2857 = vmatprep.subr.mxu0 0.0
      %2858 = vmatpush1.msra.mxu0 0.0
      %2859 = vmatprep.subr.mxu0 0.0
      %2860 = vmatpush1.msra.mxu0 0.0
      %2861 = vmatprep.subr.mxu0 0.0
      %2862 = vmatpush1.msra.mxu0 0.0
      %2863 = vmatprep.subr.mxu0 0.0
      %2864 = vmatpush1.msra.mxu0 0.0
      %2865 = vmatprep.subr.mxu0 0.0
      %2866 = vmatpush1.msra.mxu0 0.0
      %2867 = vmatprep.subr.mxu0 0.0
      %2868 = vmatpush1.msra.mxu0 0.0
      %2869 = vmatprep.subr.mxu0 0.0
      %2870 = vmatpush1.msra.mxu0 0.0
      %2871 = vmatprep.subr.mxu0 0.0
      %2872 = vmatpush1.msra.mxu0 0.0
      %2873 = vmatprep.subr.mxu0 0.0
      %2874 = vmatpush1.msra.mxu0 0.0
      %2875 = vmatprep.subr.mxu0 0.0
      %2876 = vmatpush1.msra.mxu0 0.0
      %2877 = vmatprep.subr.mxu0 0.0
      %2878 = vmatpush1.msra.mxu0 0.0
      %2879 = vmatprep.subr.mxu0 0.0
      %2880 = vmatpush1.msra.mxu0 0.0
      %2881 = vmatprep.subr.mxu0 0.0
      %2882 = vmatpush1.msra.mxu0 0.0
      %2883 = vmatprep.subr.mxu0 0.0
      %2884 = vmatpush1.msra.mxu0 0.0
      %2885 = vmatprep.subr.mxu0 0.0
      %2886 = vmatpush1.msra.mxu0 0.0
      %2887 = vmatprep.subr.mxu0 0.0
      %2888 = vmatpush1.msra.mxu0 0.0
      %2889 = vmatprep.subr.mxu0 0.0
      %2890 = vmatpush1.msra.mxu0 0.0
      %2891 = vmatprep.subr.mxu0 0.0
      %2892 = vmatpush1.msra.mxu0 0.0
      %2893 = vmatprep.mubr.f32.mxu0 0.0
      %2894 = vmatmul.mubr.f32.gmra.mrb[0].mxu0 %v2682
      %v2895 = vpop.f32.mrb[0].mxu0
      %v2896 = vadd.f32 %v2827, %v2895
      %v2897 = vpop.f32.mrb[0].mxu0
      %2898 = vmatprep.mubr.f32.mxu0 0.0
      %2899 = vmatmul.mubr.f32.gmra.mrb[0].mxu0 %v2685
      %v2900 = vpop.f32.mrb[0].mxu0
      %v2901 = vadd.f32 %v2827, %v2900
      %v2902 = vpop.f32.mrb[0].mxu0
      %2903 = vmatprep.mubr.f32.mxu0 0.0
      %2904 = vmatmul.mubr.f32.gmra.mrb[0].mxu0 %v2688
      %v2905 = vpop.f32.mrb[0].mxu0
      %v2906 = vadd.f32 %v2827, %v2905
      %v2907 = vpop.f32.mrb[0].mxu0
      %2908 = vmatprep.mubr.f32.mxu0 0.0
      %2909 = vmatmul.mubr.f32.gmra.mrb[0].mxu0 %v2691
      %v2910 = vpop.f32.mrb[0].mxu0
      %v2911 = vadd.f32 %v2827, %v2910
      %v2912 = vpop.f32.mrb[0].mxu0
      %2913 = vmatprep.mubr.f32.mxu0 0.0
      %2914 = vmatmul.mubr.f32.gmra.mrb[0].mxu0 %v2694
      %v2915 = vpop.f32.mrb[0].mxu0
      %v2916 = vadd.f32 %v2827, %v2915
      %v2917 = vpop.f32.mrb[0].mxu0
      %2918 = vmatprep.mubr.f32.mxu0 0.0
      %2919 = vmatmul.mubr.f32.gmra.mrb[0].mxu0 %v2697
      %v2920 = vpop.f32.mrb[0].mxu0
      %v2921 = vadd.f32 %v2827, %v2920
      %v2922 = vpop.f32.mrb[0].mxu0
      %2923 = vmatprep.mubr.f32.mxu0 0.0
      %2924 = vmatmul.mubr.f32.gmra.mrb[0].mxu0 %v2700
      %v2925 = vpop.f32.mrb[0].mxu0
      %v2926 = vadd.f32 %v2827, %v2925
      %v2927 = vpop.f32.mrb[0].mxu0
      %2928 = vmatprep.mubr.f32.mxu0 0.0
      %2929 = vmatmul.mubr.f32.gmra.mrb[0].mxu0 %v2703
      %v2930 = vpop.f32.mrb[0].mxu0
      %v2931 = vadd.f32 %v2827, %v2930
      %v2932 = vpop.f32.mrb[0].mxu0
      %2933 = vmatprep.mubr.f32.mxu0 0.0
      %2934 = vmatmul.mubr.f32.gmra.mrb[0].mxu0 %v2706
      %v2935 = vpop.f32.mrb[0].mxu0
      %v2936 = vadd.f32 %v2827, %v2935
      %v2937 = vpop.f32.mrb[0].mxu0
      %2938 = vdwg.mxu0
      %v2939 = vld [vmem:[%s8] sm:$0xff]
      %v2940 = vld [vmem:[%s8 + $0x8] sm:$0xff]
      %v2941 = vld [vmem:[%s8 + $0x10] sm:$0xff]
      %v2942 = vld [vmem:[%s8 + $0x18] sm:$0xff]
      %v2943 = vld [vmem:[%s9] sm:$0x1]
      %v2945 = vlaneseq
      %v2946 = vshrl.u32 %v2945, 7
      %v2947 = vsub.s32 0, %v2946
      %v2948 = vrot.slane %v2943, %v2947
      %2950 = vmatprep.subr.mxu0 0.0
      %2951 = vmatpush1.msra.mxu0 %v2939
      %2952 = vmatprep.subr.mxu0 0.0
      %2953 = vmatpush1.msra.mxu0 %v2940
      %2954 = vmatprep.subr.mxu0 0.0
      %2955 = vmatpush1.msra.mxu0 %v2941
      %2956 = vmatprep.subr.mxu0 0.0
      %2957 = vmatpush1.msra.mxu0 %v2942
      %2958 = vmatprep.subr.mxu0 0.0
      %2959 = vmatpush1.msra.mxu0 0.0
      %2960 = vmatprep.subr.mxu0 0.0
      %2961 = vmatpush1.msra.mxu0 0.0
      %2962 = vmatprep.subr.mxu0 0.0
      %2963 = vmatpush1.msra.mxu0 0.0
      %2964 = vmatprep.subr.mxu0 0.0
      %2965 = vmatpush1.msra.mxu0 0.0
      %2966 = vmatprep.subr.mxu0 0.0
      %2967 = vmatpush1.msra.mxu0 0.0
      %2968 = vmatprep.subr.mxu0 0.0
      %2969 = vmatpush1.msra.mxu0 0.0
      %2970 = vmatprep.subr.mxu0 0.0
      %2971 = vmatpush1.msra.mxu0 0.0
      %2972 = vmatprep.subr.mxu0 0.0
      %2973 = vmatpush1.msra.mxu0 0.0
      %2974 = vmatprep.subr.mxu0 0.0
      %2975 = vmatpush1.msra.mxu0 0.0
      %2976 = vmatprep.subr.mxu0 0.0
      %2977 = vmatpush1.msra.mxu0 0.0
      %2978 = vmatprep.subr.mxu0 0.0
      %2979 = vmatpush1.msra.mxu0 0.0
      %2980 = vmatprep.subr.mxu0 0.0
      %2981 = vmatpush1.msra.mxu0 0.0
      %2982 = vmatprep.subr.mxu0 0.0
      %2983 = vmatpush1.msra.mxu0 0.0
      %2984 = vmatprep.subr.mxu0 0.0
      %2985 = vmatpush1.msra.mxu0 0.0
      %2986 = vmatprep.subr.mxu0 0.0
      %2987 = vmatpush1.msra.mxu0 0.0
      %2988 = vmatprep.subr.mxu0 0.0
      %2989 = vmatpush1.msra.mxu0 0.0
      %2990 = vmatprep.subr.mxu0 0.0
      %2991 = vmatpush1.msra.mxu0 0.0
      %2992 = vmatprep.subr.mxu0 0.0
      %2993 = vmatpush1.msra.mxu0 0.0
      %2994 = vmatprep.subr.mxu0 0.0
      %2995 = vmatpush1.msra.mxu0 0.0
      %2996 = vmatprep.subr.mxu0 0.0
      %2997 = vmatpush1.msra.mxu0 0.0
      %2998 = vmatprep.subr.mxu0 0.0
      %2999 = vmatpush1.msra.mxu0 0.0
      %3000 = vmatprep.subr.mxu0 0.0
      %3001 = vmatpush1.msra.mxu0 0.0
      %3002 = vmatprep.subr.mxu0 0.0
      %3003 = vmatpush1.msra.mxu0 0.0
      %3004 = vmatprep.subr.mxu0 0.0
      %3005 = vmatpush1.msra.mxu0 0.0
      %3006 = vmatprep.subr.mxu0 0.0
      %3007 = vmatpush1.msra.mxu0 0.0
      %3008 = vmatprep.subr.mxu0 0.0
      %3009 = vmatpush1.msra.mxu0 0.0
      %3010 = vmatprep.subr.mxu0 0.0
      %3011 = vmatpush1.msra.mxu0 0.0
      %3012 = vmatprep.subr.mxu0 0.0
      %3013 = vmatpush1.msra.mxu0 0.0
      %3014 = vmatprep.mubr.f32.mxu0 0.0
      %3015 = vmatmul.mubr.f32.gmra.mrb[0].mxu0 %v2682
      %v3016 = vpop.f32.mrb[0].mxu0
      %v3017 = vadd.f32 %v2948, %v3016
      %v3018 = vpop.f32.mrb[0].mxu0
      %3019 = vmatprep.mubr.f32.mxu0 0.0
      %3020 = vmatmul.mubr.f32.gmra.mrb[0].mxu0 %v2685
      %v3021 = vpop.f32.mrb[0].mxu0
      %v3022 = vadd.f32 %v2948, %v3021
      %v3023 = vpop.f32.mrb[0].mxu0
      %3024 = vmatprep.mubr.f32.mxu0 0.0
      %3025 = vmatmul.mubr.f32.gmra.mrb[0].mxu0 %v2688
      %v3026 = vpop.f32.mrb[0].mxu0
      %v3027 = vadd.f32 %v2948, %v3026
      %v3028 = vpop.f32.mrb[0].mxu0
      %3029 = vmatprep.mubr.f32.mxu0 0.0
      %3030 = vmatmul.mubr.f32.gmra.mrb[0].mxu0 %v2691
      %v3031 = vpop.f32.mrb[0].mxu0
      %v3032 = vadd.f32 %v2948, %v3031
      %v3033 = vpop.f32.mrb[0].mxu0
      %3034 = vmatprep.mubr.f32.mxu0 0.0
      %3035 = vmatmul.mubr.f32.gmra.mrb[0].mxu0 %v2694
      %v3036 = vpop.f32.mrb[0].mxu0
      %v3037 = vadd.f32 %v2948, %v3036
      %v3038 = vpop.f32.mrb[0].mxu0
      %3039 = vmatprep.mubr.f32.mxu0 0.0
      %3040 = vmatmul.mubr.f32.gmra.mrb[0].mxu0 %v2697
      %v3041 = vpop.f32.mrb[0].mxu0
      %v3042 = vadd.f32 %v2948, %v3041
      %v3043 = vpop.f32.mrb[0].mxu0
      %3044 = vmatprep.mubr.f32.mxu0 0.0
      %3045 = vmatmul.mubr.f32.gmra.mrb[0].mxu0 %v2700
      %v3046 = vpop.f32.mrb[0].mxu0
      %v3047 = vadd.f32 %v2948, %v3046
      %v3048 = vpop.f32.mrb[0].mxu0
      %3049 = vmatprep.mubr.f32.mxu0 0.0
      %3050 = vmatmul.mubr.f32.gmra.mrb[0].mxu0 %v2703
      %v3051 = vpop.f32.mrb[0].mxu0
      %v3052 = vadd.f32 %v2948, %v3051
      %v3053 = vpop.f32.mrb[0].mxu0
      %3054 = vmatprep.mubr.f32.mxu0 0.0
      %3055 = vmatmul.mubr.f32.gmra.mrb[0].mxu0 %v2706
      %v3056 = vpop.f32.mrb[0].mxu0
      %v3057 = vadd.f32 %v2948, %v3056
      %v3058 = vpop.f32.mrb[0].mxu0
      %3059 = vdwg.mxu0
      %vm3060 = vcmask 64512
      %v3062 = vsel %vm3060, %v2775, 0
      %v3065 = vsel %vm3060, %v2780, 0
      %v3068 = vsel %vm3060, %v2785, 0
      %v3071 = vsel %vm3060, %v2790, 0
      %v3074 = vsel %vm3060, %v2795, 0
      %v3077 = vsel %vm3060, %v2800, 0
      %v3080 = vsel %vm3060, %v2805, 0
      %v3083 = vsel %vm3060, %v2810, 0
      %v3086 = vsel %vm3060, %v2815, 0
      %v3089 = vsel %vm3060, %v2896, 0
      %v3092 = vsel %vm3060, %v2901, 0
      %v3095 = vsel %vm3060, %v2906, 0
      %v3098 = vsel %vm3060, %v2911, 0
      %v3101 = vsel %vm3060, %v2916, 0
      %v3104 = vsel %vm3060, %v2921, 0
      %v3107 = vsel %vm3060, %v2926, 0
      %v3110 = vsel %vm3060, %v2931, 0
      %v3113 = vsel %vm3060, %v2936, 0
      %3115 = vmatprep.subr.mxu0 0.0
      %3116 = vmatpush1.xpose.msra.mxu0 %v3089
      %3117 = vmatprep.subr.mxu0 0.0
      %3118 = vmatpush1.xpose.msra.mxu0 %v3092
      %3119 = vmatprep.subr.mxu0 0.0
      %3120 = vmatpush1.xpose.msra.mxu0 %v3095
      %3121 = vmatprep.subr.mxu0 0.0
      %3122 = vmatpush1.xpose.msra.mxu0 %v3098
      %3123 = vmatprep.subr.mxu0 0.0
      %3124 = vmatpush1.xpose.msra.mxu0 %v3101
      %3125 = vmatprep.subr.mxu0 0.0
      %3126 = vmatpush1.xpose.msra.mxu0 %v3104
      %3127 = vmatprep.subr.mxu0 0.0
      %3128 = vmatpush1.xpose.msra.mxu0 %v3107
      %3129 = vmatprep.subr.mxu0 0.0
      %3130 = vmatpush1.xpose.msra.mxu0 %v3110
      %3131 = vmatprep.subr.mxu0 0.0
      %3132 = vmatpush1.xpose.msra.mxu0 %v3113
      %3133 = vmatprep.subr.mxu0 0.0
      %3134 = vmatpush1.xpose.msra.mxu0 0.0
      %3135 = vmatprep.subr.mxu0 0.0
      %3136 = vmatpush1.xpose.msra.mxu0 0.0
      %3137 = vmatprep.subr.mxu0 0.0
      %3138 = vmatpush1.xpose.msra.mxu0 0.0
      %3139 = vmatprep.subr.mxu0 0.0
      %3140 = vmatpush1.xpose.msra.mxu0 0.0
      %3141 = vmatprep.subr.mxu0 0.0
      %3142 = vmatpush1.xpose.msra.mxu0 0.0
      %3143 = vmatprep.subr.mxu0 0.0
      %3144 = vmatpush1.xpose.msra.mxu0 0.0
      %3145 = vmatprep.subr.mxu0 0.0
      %3146 = vmatpush1.xpose.msra.mxu0 0.0
      %3147 = vmatprep.subr.mxu0 0.0
      %3148 = vmatpush1.xpose.msra.mxu0 0.0
      %3149 = vmatprep.subr.mxu0 0.0
      %3150 = vmatpush1.xpose.msra.mxu0 0.0
      %3151 = vmatprep.subr.mxu0 0.0
      %3152 = vmatpush1.xpose.msra.mxu0 0.0
      %3153 = vmatprep.subr.mxu0 0.0
      %3154 = vmatpush1.xpose.msra.mxu0 0.0
      %3155 = vmatprep.subr.mxu0 0.0
      %3156 = vmatpush1.xpose.msra.mxu0 0.0
      %3157 = vmatprep.subr.mxu0 0.0
      %3158 = vmatpush1.xpose.msra.mxu0 0.0
      %3159 = vmatprep.subr.mxu0 0.0
      %3160 = vmatpush1.xpose.msra.mxu0 0.0
      %3161 = vmatprep.subr.mxu0 0.0
      %3162 = vmatpush1.xpose.msra.mxu0 0.0
      %3163 = vmatprep.subr.mxu0 0.0
      %3164 = vmatpush1.xpose.msra.mxu0 0.0
      %3165 = vmatprep.subr.mxu0 0.0
      %3166 = vmatpush1.xpose.msra.mxu0 0.0
      %3167 = vmatprep.subr.mxu0 0.0
      %3168 = vmatpush1.xpose.msra.mxu0 0.0
      %3169 = vmatprep.subr.mxu0 0.0
      %3170 = vmatpush1.xpose.msra.mxu0 0.0
      %3171 = vmatprep.subr.mxu0 0.0
      %3172 = vmatpush1.xpose.msra.mxu0 0.0
      %3173 = vmatprep.subr.mxu0 0.0
      %3174 = vmatpush1.xpose.msra.mxu0 0.0
      %3175 = vmatprep.subr.mxu0 0.0
      %3176 = vmatpush1.xpose.msra.mxu0 0.0
      %3177 = vmatprep.subr.mxu0 0.0
      %3178 = vmatpush1.xpose.msra.mxu0 0.0
      %3179 = vmatprep.mubr.f32.mxu0 0.0
      %3180 = vmatmul.mubr.f32.gmra.mrb[0].mxu0 %v3062
      %v3181 = vpop.f32.mrb[0].mxu0
      %v3182 = vadd.f32 0.0, %v3181
      %v3183 = vpop.f32.mrb[0].mxu0
      %3184 = vmatprep.mubr.f32.mxu0 0.0
      %3185 = vmatmul.mubr.f32.gmra.mrb[0].mxu0 %v3065
      %v3186 = vpop.f32.mrb[0].mxu0
      %v3187 = vadd.f32 0.0, %v3186
      %v3188 = vpop.f32.mrb[0].mxu0
      %3189 = vmatprep.mubr.f32.mxu0 0.0
      %3190 = vmatmul.mubr.f32.gmra.mrb[0].mxu0 %v3068
      %v3191 = vpop.f32.mrb[0].mxu0
      %v3192 = vadd.f32 0.0, %v3191
      %v3193 = vpop.f32.mrb[0].mxu0
      %3194 = vmatprep.mubr.f32.mxu0 0.0
      %3195 = vmatmul.mubr.f32.gmra.mrb[0].mxu0 %v3071
      %v3196 = vpop.f32.mrb[0].mxu0
      %v3197 = vadd.f32 0.0, %v3196
      %v3198 = vpop.f32.mrb[0].mxu0
      %3199 = vmatprep.mubr.f32.mxu0 0.0
      %3200 = vmatmul.mubr.f32.gmra.mrb[0].mxu0 %v3074
      %v3201 = vpop.f32.mrb[0].mxu0
      %v3202 = vadd.f32 0.0, %v3201
      %v3203 = vpop.f32.mrb[0].mxu0
      %3204 = vmatprep.mubr.f32.mxu0 0.0
      %3205 = vmatmul.mubr.f32.gmra.mrb[0].mxu0 %v3077
      %v3206 = vpop.f32.mrb[0].mxu0
      %v3207 = vadd.f32 0.0, %v3206
      %v3208 = vpop.f32.mrb[0].mxu0
      %3209 = vmatprep.mubr.f32.mxu0 0.0
      %3210 = vmatmul.mubr.f32.gmra.mrb[0].mxu0 %v3080
      %v3211 = vpop.f32.mrb[0].mxu0
      %v3212 = vadd.f32 0.0, %v3211
      %v3213 = vpop.f32.mrb[0].mxu0
      %3214 = vmatprep.mubr.f32.mxu0 0.0
      %3215 = vmatmul.mubr.f32.gmra.mrb[0].mxu0 %v3083
      %v3216 = vpop.f32.mrb[0].mxu0
      %v3217 = vadd.f32 0.0, %v3216
      %v3218 = vpop.f32.mrb[0].mxu0
      %3219 = vmatprep.mubr.f32.mxu0 0.0
      %3220 = vmatmul.mubr.f32.gmra.mrb[0].mxu0 %v3086
      %v3221 = vpop.f32.mrb[0].mxu0
      %v3222 = vadd.f32 0.0, %v3221
      %v3223 = vpop.f32.mrb[0].mxu0
      %3224 = vdwg.mxu0
      %v3225 = vmul.f32 %v3182, 0.35355338
      %v3226 = vmul.f32 %v3187, 0.35355338
      %v3227 = vmul.f32 %v3192, 0.35355338
      %v3228 = vmul.f32 %v3197, 0.35355338
      %v3229 = vmul.f32 %v3202, 0.35355338
      %v3230 = vmul.f32 %v3207, 0.35355338
      %v3231 = vmul.f32 %v3212, 0.35355338
      %v3232 = vmul.f32 %v3217, 0.35355338
      %v3233 = vmul.f32 %v3222, 0.35355338
      %vm3234 = vcmask 531456
      %v3235 = vsel %vm3234, %v3225, -inf
      %3236 = vmax.xlane.f32.xlu0 %v3235
      %v3237 = vpop.xlane.xlu0 %3236
      %v3238 = vsel %vm3234, %v3226, -inf
      %3239 = vmax.xlane.f32.xlu0 %v3238
      %v3240 = vpop.xlane.xlu0 %3239
      %v3241 = vsel %vm3234, %v3227, -inf
      %3242 = vmax.xlane.f32.xlu0 %v3241
      %v3243 = vpop.xlane.xlu0 %3242
      %v3244 = vsel %vm3234, %v3228, -inf
      %3245 = vmax.xlane.f32.xlu0 %v3244
      %v3246 = vpop.xlane.xlu0 %3245
      %v3247 = vsel %vm3234, %v3229, -inf
      %3248 = vmax.xlane.f32.xlu0 %v3247
      %v3249 = vpop.xlane.xlu0 %3248
      %v3250 = vsel %vm3234, %v3230, -inf
      %3251 = vmax.xlane.f32.xlu0 %v3250
      %v3252 = vpop.xlane.xlu0 %3251
      %v3253 = vsel %vm3234, %v3231, -inf
      %3254 = vmax.xlane.f32.xlu0 %v3253
      %v3255 = vpop.xlane.xlu0 %3254
      %v3256 = vsel %vm3234, %v3232, -inf
      %3257 = vmax.xlane.f32.xlu0 %v3256
      %v3258 = vpop.xlane.xlu0 %3257
      %vm3259 = vcmask 524288
      %v3260 = vsel %vm3259, %v3233, -inf
      %3261 = vmax.xlane.f32.xlu0 %v3260
      %v3262 = vpop.xlane.xlu0 %3261
      %v3263 = vsub.f32 %v3225, %v3237
      %v3264 = vsub.f32 %v3226, %v3240
      %v3265 = vsub.f32 %v3227, %v3243
      %v3266 = vsub.f32 %v3228, %v3246
      %v3267 = vsub.f32 %v3229, %v3249
      %v3268 = vsub.f32 %v3230, %v3252
      %v3269 = vsub.f32 %v3231, %v3255
      %v3270 = vsub.f32 %v3232, %v3258
      %v3271 = vsub.f32 %v3233, %v3262
      %v3272 = vmul.f32 %v3263, 1.442695
      %v3273 = vpow.pop %v3272
      %v3274 = vmul.f32 %v3264, 1.442695
      %v3275 = vpow.pop %v3274
      %v3276 = vmul.f32 %v3265, 1.442695
      %v3277 = vpow.pop %v3276
      %v3278 = vmul.f32 %v3266, 1.442695
      %v3279 = vpow.pop %v3278
      %v3280 = vmul.f32 %v3267, 1.442695
      %v3281 = vpow.pop %v3280
      %v3282 = vmul.f32 %v3268, 1.442695
      %v3283 = vpow.pop %v3282
      %v3284 = vmul.f32 %v3269, 1.442695
      %v3285 = vpow.pop %v3284
      %v3286 = vmul.f32 %v3270, 1.442695
      %v3287 = vpow.pop %v3286
      %v3288 = vmul.f32 %v3271, 1.442695
      %v3289 = vpow.pop %v3288
      %v3290 = vsel %vm3234, %v3273, 0.0
      %3291 = vadd.xlane.f32.xlu0 %v3290
      %v3292 = vpop.xlane.xlu0 %3291
      %v3293 = vsel %vm3234, %v3275, 0.0
      %3294 = vadd.xlane.f32.xlu0 %v3293
      %v3295 = vpop.xlane.xlu0 %3294
      %v3296 = vsel %vm3234, %v3277, 0.0
      %3297 = vadd.xlane.f32.xlu0 %v3296
      %v3298 = vpop.xlane.xlu0 %3297
      %v3299 = vsel %vm3234, %v3279, 0.0
      %3300 = vadd.xlane.f32.xlu0 %v3299
      %v3301 = vpop.xlane.xlu0 %3300
      %v3302 = vsel %vm3234, %v3281, 0.0
      %3303 = vadd.xlane.f32.xlu0 %v3302
      %v3304 = vpop.xlane.xlu0 %3303
      %v3305 = vsel %vm3234, %v3283, 0.0
      %3306 = vadd.xlane.f32.xlu0 %v3305
      %v3307 = vpop.xlane.xlu0 %3306
      %v3308 = vsel %vm3234, %v3285, 0.0
      %3309 = vadd.xlane.f32.xlu0 %v3308
      %v3310 = vpop.xlane.xlu0 %3309
      %v3311 = vsel %vm3234, %v3287, 0.0
      %3312 = vadd.xlane.f32.xlu0 %v3311
      %v3313 = vpop.xlane.xlu0 %3312
      %v3314 = vsel %vm3259, %v3289, 0.0
      %3315 = vadd.xlane.f32.xlu0 %v3314
      %v3316 = vpop.xlane.xlu0 %3315
      %v3317 = vrcp.pop %v3292
      %v3318 = vmul.f32 %v3273, %v3317
      %v3319 = vrcp.pop %v3295
      %v3320 = vmul.f32 %v3275, %v3319
      %v3321 = vrcp.pop %v3298
      %v3322 = vmul.f32 %v3277, %v3321
      %v3323 = vrcp.pop %v3301
      %v3324 = vmul.f32 %v3279, %v3323
      %v3325 = vrcp.pop %v3304
      %v3326 = vmul.f32 %v3281, %v3325
      %v3327 = vrcp.pop %v3307
      %v3328 = vmul.f32 %v3283, %v3327
      %v3329 = vrcp.pop %v3310
      %v3330 = vmul.f32 %v3285, %v3329
      %v3331 = vrcp.pop %v3313
      %v3332 = vmul.f32 %v3287, %v3331
      %v3333 = vrcp.pop %v3316
      %v3334 = vmul.f32 %v3289, %v3333
      %v3336 = vsel %vm3234, %v3318, 0
      %v3339 = vsel %vm3234, %v3320, 0
      %v3342 = vsel %vm3234, %v3322, 0
      %v3345 = vsel %vm3234, %v3324, 0
      %v3348 = vsel %vm3234, %v3326, 0
      %v3351 = vsel %vm3234, %v3328, 0
      %v3354 = vsel %vm3234, %v3330, 0
      %v3357 = vsel %vm3234, %v3332, 0
      %v3360 = vsel %vm3234, %v3334, 0
      %v3363 = vsel %vm2126, %v3057, 0
      %3365 = vmatprep.subr.mxu0 0.0
      %3366 = vmatpush1.msra.mxu0 %v3017
      %3367 = vmatprep.subr.mxu0 0.0
      %3368 = vmatpush1.msra.mxu0 %v3022
      %3369 = vmatprep.subr.mxu0 0.0
      %3370 = vmatpush1.msra.mxu0 %v3027
      %3371 = vmatprep.subr.mxu0 0.0
      %3372 = vmatpush1.msra.mxu0 %v3032
      %3373 = vmatprep.subr.mxu0 0.0
      %3374 = vmatpush1.msra.mxu0 %v3037
      %3375 = vmatprep.subr.mxu0 0.0
      %3376 = vmatpush1.msra.mxu0 %v3042
      %3377 = vmatprep.subr.mxu0 0.0
      %3378 = vmatpush1.msra.mxu0 %v3047
      %3379 = vmatprep.subr.mxu0 0.0
      %3380 = vmatpush1.msra.mxu0 %v3052
      %3381 = vmatprep.subr.mxu0 0.0
      %3382 = vmatpush1.msra.mxu0 %v3363
      %3383 = vmatprep.subr.mxu0 0.0
      %3384 = vmatpush1.msra.mxu0 0.0
      %3385 = vmatprep.subr.mxu0 0.0
      %3386 = vmatpush1.msra.mxu0 0.0
      %3387 = vmatprep.subr.mxu0 0.0
      %3388 = vmatpush1.msra.mxu0 0.0
      %3389 = vmatprep.subr.mxu0 0.0
      %3390 = vmatpush1.msra.mxu0 0.0
      %3391 = vmatprep.subr.mxu0 0.0
      %3392 = vmatpush1.msra.mxu0 0.0
      %3393 = vmatprep.subr.mxu0 0.0
      %3394 = vmatpush1.msra.mxu0 0.0
      %3395 = vmatprep.subr.mxu0 0.0
      %3396 = vmatpush1.msra.mxu0 0.0
      %3397 = vmatprep.subr.mxu0 0.0
      %3398 = vmatpush1.msra.mxu0 0.0
      %3399 = vmatprep.subr.mxu0 0.0
      %3400 = vmatpush1.msra.mxu0 0.0
      %3401 = vmatprep.subr.mxu0 0.0
      %3402 = vmatpush1.msra.mxu0 0.0
      %3403 = vmatprep.subr.mxu0 0.0
      %3404 = vmatpush1.msra.mxu0 0.0
      %3405 = vmatprep.subr.mxu0 0.0
      %3406 = vmatpush1.msra.mxu0 0.0
      %3407 = vmatprep.subr.mxu0 0.0
      %3408 = vmatpush1.msra.mxu0 0.0
      %3409 = vmatprep.subr.mxu0 0.0
      %3410 = vmatpush1.msra.mxu0 0.0
      %3411 = vmatprep.subr.mxu0 0.0
      %3412 = vmatpush1.msra.mxu0 0.0
      %3413 = vmatprep.subr.mxu0 0.0
      %3414 = vmatpush1.msra.mxu0 0.0
      %3415 = vmatprep.subr.mxu0 0.0
      %3416 = vmatpush1.msra.mxu0 0.0
      %3417 = vmatprep.subr.mxu0 0.0
      %3418 = vmatpush1.msra.mxu0 0.0
      %3419 = vmatprep.subr.mxu0 0.0
      %3420 = vmatpush1.msra.mxu0 0.0
      %3421 = vmatprep.subr.mxu0 0.0
      %3422 = vmatpush1.msra.mxu0 0.0
      %3423 = vmatprep.subr.mxu0 0.0
      %3424 = vmatpush1.msra.mxu0 0.0
      %3425 = vmatprep.subr.mxu0 0.0
      %3426 = vmatpush1.msra.mxu0 0.0
      %3427 = vmatprep.subr.mxu0 0.0
      %3428 = vmatpush1.msra.mxu0 0.0
      %3429 = vmatprep.mubr.f32.mxu0 0.0
      %3430 = vmatmul.mubr.f32.gmra.mrb[0].mxu0 %v3336
      %v3431 = vpop.f32.mrb[0].mxu0
      %v3432 = vadd.f32 0.0, %v3431
      %v3433 = vpop.f32.mrb[0].mxu0
      %3434 = vmatprep.mubr.f32.mxu0 0.0
      %3435 = vmatmul.mubr.f32.gmra.mrb[0].mxu0 %v3339
      %v3436 = vpop.f32.mrb[0].mxu0
      %v3437 = vadd.f32 0.0, %v3436
      %v3438 = vpop.f32.mrb[0].mxu0
      %3439 = vmatprep.mubr.f32.mxu0 0.0
      %3440 = vmatmul.mubr.f32.gmra.mrb[0].mxu0 %v3342
      %v3441 = vpop.f32.mrb[0].mxu0
      %v3442 = vadd.f32 0.0, %v3441
      %v3443 = vpop.f32.mrb[0].mxu0
      %3444 = vmatprep.mubr.f32.mxu0 0.0
      %3445 = vmatmul.mubr.f32.gmra.mrb[0].mxu0 %v3345
      %v3446 = vpop.f32.mrb[0].mxu0
      %v3447 = vadd.f32 0.0, %v3446
      %v3448 = vpop.f32.mrb[0].mxu0
      %3449 = vmatprep.mubr.f32.mxu0 0.0
      %3450 = vmatmul.mubr.f32.gmra.mrb[0].mxu0 %v3348
      %v3451 = vpop.f32.mrb[0].mxu0
      %v3452 = vadd.f32 0.0, %v3451
      %v3453 = vpop.f32.mrb[0].mxu0
      %3454 = vmatprep.mubr.f32.mxu0 0.0
      %3455 = vmatmul.mubr.f32.gmra.mrb[0].mxu0 %v3351
      %v3456 = vpop.f32.mrb[0].mxu0
      %v3457 = vadd.f32 0.0, %v3456
      %v3458 = vpop.f32.mrb[0].mxu0
      %3459 = vmatprep.mubr.f32.mxu0 0.0
      %3460 = vmatmul.mubr.f32.gmra.mrb[0].mxu0 %v3354
      %v3461 = vpop.f32.mrb[0].mxu0
      %v3462 = vadd.f32 0.0, %v3461
      %v3463 = vpop.f32.mrb[0].mxu0
      %3464 = vmatprep.mubr.f32.mxu0 0.0
      %3465 = vmatmul.mubr.f32.gmra.mrb[0].mxu0 %v3357
      %v3466 = vpop.f32.mrb[0].mxu0
      %v3467 = vadd.f32 0.0, %v3466
      %v3468 = vpop.f32.mrb[0].mxu0
      %3469 = vmatprep.mubr.f32.mxu0 0.0
      %3470 = vmatmul.mubr.f32.gmra.mrb[0].mxu0 %v3360
      %v3471 = vpop.f32.mrb[0].mxu0
      %v3472 = vadd.f32 0.0, %v3471
      %v3473 = vpop.f32.mrb[0].mxu0
      %3474 = vdwg.mxu0
      %v3475 = vld [vmem:[%s10] sm:$0xff]
      %s3476 = scalar_lea.vmem %s4, 32
      %v3477 = vld [vmem:[%s3476] sm:$0xff]
      %v3478 = vld [vmem:[%s3476 + $0x8] sm:$0xff]
      %v3479 = vld [vmem:[%s3476 + $0x10] sm:$0xff]
      %v3480 = vld [vmem:[%s3476 + $0x18] sm:$0xff]
      %s3481 = scalar_lea.vmem %s5, 1
      %v3482 = vld [vmem:[%s3481] sm:$0x1]
      %v3484 = vlaneseq
      %v3485 = vshrl.u32 %v3484, 7
      %v3486 = vsub.s32 0, %v3485
      %v3487 = vrot.slane %v3482, %v3486
      %3489 = vmatprep.subr.mxu0 0.0
      %3490 = vmatpush1.msra.mxu0 %v3477
      %3491 = vmatprep.subr.mxu0 0.0
      %3492 = vmatpush1.msra.mxu0 %v3478
      %3493 = vmatprep.subr.mxu0 0.0
      %3494 = vmatpush1.msra.mxu0 %v3479
      %3495 = vmatprep.subr.mxu0 0.0
      %3496 = vmatpush1.msra.mxu0 %v3480
      %3497 = vmatprep.subr.mxu0 0.0
      %3498 = vmatpush1.msra.mxu0 0.0
      %3499 = vmatprep.subr.mxu0 0.0
      %3500 = vmatpush1.msra.mxu0 0.0
      %3501 = vmatprep.subr.mxu0 0.0
      %3502 = vmatpush1.msra.mxu0 0.0
      %3503 = vmatprep.subr.mxu0 0.0
      %3504 = vmatpush1.msra.mxu0 0.0
      %3505 = vmatprep.subr.mxu0 0.0
      %3506 = vmatpush1.msra.mxu0 0.0
      %3507 = vmatprep.subr.mxu0 0.0
      %3508 = vmatpush1.msra.mxu0 0.0
      %3509 = vmatprep.subr.mxu0 0.0
      %3510 = vmatpush1.msra.mxu0 0.0
      %3511 = vmatprep.subr.mxu0 0.0
      %3512 = vmatpush1.msra.mxu0 0.0
      %3513 = vmatprep.subr.mxu0 0.0
      %3514 = vmatpush1.msra.mxu0 0.0
      %3515 = vmatprep.subr.mxu0 0.0
      %3516 = vmatpush1.msra.mxu0 0.0
      %3517 = vmatprep.subr.mxu0 0.0
      %3518 = vmatpush1.msra.mxu0 0.0
      %3519 = vmatprep.subr.mxu0 0.0
      %3520 = vmatpush1.msra.mxu0 0.0
      %3521 = vmatprep.subr.mxu0 0.0
      %3522 = vmatpush1.msra.mxu0 0.0
      %3523 = vmatprep.subr.mxu0 0.0
      %3524 = vmatpush1.msra.mxu0 0.0
      %3525 = vmatprep.subr.mxu0 0.0
      %3526 = vmatpush1.msra.mxu0 0.0
      %3527 = vmatprep.subr.mxu0 0.0
      %3528 = vmatpush1.msra.mxu0 0.0
      %3529 = vmatprep.subr.mxu0 0.0
      %3530 = vmatpush1.msra.mxu0 0.0
      %3531 = vmatprep.subr.mxu0 0.0
      %3532 = vmatpush1.msra.mxu0 0.0
      %3533 = vmatprep.subr.mxu0 0.0
      %3534 = vmatpush1.msra.mxu0 0.0
      %3535 = vmatprep.subr.mxu0 0.0
      %3536 = vmatpush1.msra.mxu0 0.0
      %3537 = vmatprep.subr.mxu0 0.0
      %3538 = vmatpush1.msra.mxu0 0.0
      %3539 = vmatprep.subr.mxu0 0.0
      %3540 = vmatpush1.msra.mxu0 0.0
      %3541 = vmatprep.subr.mxu0 0.0
      %3542 = vmatpush1.msra.mxu0 0.0
      %3543 = vmatprep.subr.mxu0 0.0
      %3544 = vmatpush1.msra.mxu0 0.0
      %3545 = vmatprep.subr.mxu0 0.0
      %3546 = vmatpush1.msra.mxu0 0.0
      %3547 = vmatprep.subr.mxu0 0.0
      %3548 = vmatpush1.msra.mxu0 0.0
      %3549 = vmatprep.subr.mxu0 0.0
      %3550 = vmatpush1.msra.mxu0 0.0
      %3551 = vmatprep.subr.mxu0 0.0
      %3552 = vmatpush1.msra.mxu0 0.0
      %3553 = vmatprep.mubr.f32.mxu0 0.0
      %3554 = vmatmul.mubr.f32.gmra.mrb[0].mxu0 %v2682
      %v3555 = vpop.f32.mrb[0].mxu0
      %v3556 = vadd.f32 %v3487, %v3555
      %v3557 = vpop.f32.mrb[0].mxu0
      %3558 = vmatprep.mubr.f32.mxu0 0.0
      %3559 = vmatmul.mubr.f32.gmra.mrb[0].mxu0 %v2685
      %v3560 = vpop.f32.mrb[0].mxu0
      %v3561 = vadd.f32 %v3487, %v3560
      %v3562 = vpop.f32.mrb[0].mxu0
      %3563 = vmatprep.mubr.f32.mxu0 0.0
      %3564 = vmatmul.mubr.f32.gmra.mrb[0].mxu0 %v2688
      %v3565 = vpop.f32.mrb[0].mxu0
      %v3566 = vadd.f32 %v3487, %v3565
      %v3567 = vpop.f32.mrb[0].mxu0
      %3568 = vmatprep.mubr.f32.mxu0 0.0
      %3569 = vmatmul.mubr.f32.gmra.mrb[0].mxu0 %v2691
      %v3570 = vpop.f32.mrb[0].mxu0
      %v3571 = vadd.f32 %v3487, %v3570
      %v3572 = vpop.f32.mrb[0].mxu0
      %3573 = vmatprep.mubr.f32.mxu0 0.0
      %3574 = vmatmul.mubr.f32.gmra.mrb[0].mxu0 %v2694
      %v3575 = vpop.f32.mrb[0].mxu0
      %v3576 = vadd.f32 %v3487, %v3575
      %v3577 = vpop.f32.mrb[0].mxu0
      %3578 = vmatprep.mubr.f32.mxu0 0.0
      %3579 = vmatmul.mubr.f32.gmra.mrb[0].mxu0 %v2697
      %v3580 = vpop.f32.mrb[0].mxu0
      %v3581 = vadd.f32 %v3487, %v3580
      %v3582 = vpop.f32.mrb[0].mxu0
      %3583 = vmatprep.mubr.f32.mxu0 0.0
      %3584 = vmatmul.mubr.f32.gmra.mrb[0].mxu0 %v2700
      %v3585 = vpop.f32.mrb[0].mxu0
      %v3586 = vadd.f32 %v3487, %v3585
      %v3587 = vpop.f32.mrb[0].mxu0
      %3588 = vmatprep.mubr.f32.mxu0 0.0
      %3589 = vmatmul.mubr.f32.gmra.mrb[0].mxu0 %v2703
      %v3590 = vpop.f32.mrb[0].mxu0
      %v3591 = vadd.f32 %v3487, %v3590
      %v3592 = vpop.f32.mrb[0].mxu0
      %3593 = vmatprep.mubr.f32.mxu0 0.0
      %3594 = vmatmul.mubr.f32.gmra.mrb[0].mxu0 %v2706
      %v3595 = vpop.f32.mrb[0].mxu0
      %v3596 = vadd.f32 %v3487, %v3595
      %v3597 = vpop.f32.mrb[0].mxu0
      %3598 = vdwg.mxu0
      %s3599 = scalar_lea.vmem %s6, 32
      %v3600 = vld [vmem:[%s3599] sm:$0xff]
      %v3601 = vld [vmem:[%s3599 + $0x8] sm:$0xff]
      %v3602 = vld [vmem:[%s3599 + $0x10] sm:$0xff]
      %v3603 = vld [vmem:[%s3599 + $0x18] sm:$0xff]
      %s3604 = scalar_lea.vmem %s7, 1
      %v3605 = vld [vmem:[%s3604] sm:$0x1]
      %v3607 = vlaneseq
      %v3608 = vshrl.u32 %v3607, 7
      %v3609 = vsub.s32 0, %v3608
      %v3610 = vrot.slane %v3605, %v3609
      %3612 = vmatprep.subr.mxu0 0.0
      %3613 = vmatpush1.msra.mxu0 %v3600
      %3614 = vmatprep.subr.mxu0 0.0
      %3615 = vmatpush1.msra.mxu0 %v3601
      %3616 = vmatprep.subr.mxu0 0.0
      %3617 = vmatpush1.msra.mxu0 %v3602
      %3618 = vmatprep.subr.mxu0 0.0
      %3619 = vmatpush1.msra.mxu0 %v3603
      %3620 = vmatprep.subr.mxu0 0.0
      %3621 = vmatpush1.msra.mxu0 0.0
      %3622 = vmatprep.subr.mxu0 0.0
      %3623 = vmatpush1.msra.mxu0 0.0
      %3624 = vmatprep.subr.mxu0 0.0
      %3625 = vmatpush1.msra.mxu0 0.0
      %3626 = vmatprep.subr.mxu0 0.0
      %3627 = vmatpush1.msra.mxu0 0.0
      %3628 = vmatprep.subr.mxu0 0.0
      %3629 = vmatpush1.msra.mxu0 0.0
      %3630 = vmatprep.subr.mxu0 0.0
      %3631 = vmatpush1.msra.mxu0 0.0
      %3632 = vmatprep.subr.mxu0 0.0
      %3633 = vmatpush1.msra.mxu0 0.0
      %3634 = vmatprep.subr.mxu0 0.0
      %3635 = vmatpush1.msra.mxu0 0.0
      %3636 = vmatprep.subr.mxu0 0.0
      %3637 = vmatpush1.msra.mxu0 0.0
      %3638 = vmatprep.subr.mxu0 0.0
      %3639 = vmatpush1.msra.mxu0 0.0
      %3640 = vmatprep.subr.mxu0 0.0
      %3641 = vmatpush1.msra.mxu0 0.0
      %3642 = vmatprep.subr.mxu0 0.0
      %3643 = vmatpush1.msra.mxu0 0.0
      %3644 = vmatprep.subr.mxu0 0.0
      %3645 = vmatpush1.msra.mxu0 0.0
      %3646 = vmatprep.subr.mxu0 0.0
      %3647 = vmatpush1.msra.mxu0 0.0
      %3648 = vmatprep.subr.mxu0 0.0
      %3649 = vmatpush1.msra.mxu0 0.0
      %3650 = vmatprep.subr.mxu0 0.0
      %3651 = vmatpush1.msra.mxu0 0.0
      %3652 = vmatprep.subr.mxu0 0.0
      %3653 = vmatpush1.msra.mxu0 0.0
      %3654 = vmatprep.subr.mxu0 0.0
      %3655 = vmatpush1.msra.mxu0 0.0
      %3656 = vmatprep.subr.mxu0 0.0
      %3657 = vmatpush1.msra.mxu0 0.0
      %3658 = vmatprep.subr.mxu0 0.0
      %3659 = vmatpush1.msra.mxu0 0.0
      %3660 = vmatprep.subr.mxu0 0.0
      %3661 = vmatpush1.msra.mxu0 0.0
      %3662 = vmatprep.subr.mxu0 0.0
      %3663 = vmatpush1.msra.mxu0 0.0
      %3664 = vmatprep.subr.mxu0 0.0
      %3665 = vmatpush1.msra.mxu0 0.0
      %3666 = vmatprep.subr.mxu0 0.0
      %3667 = vmatpush1.msra.mxu0 0.0
      %3668 = vmatprep.subr.mxu0 0.0
      %3669 = vmatpush1.msra.mxu0 0.0
      %3670 = vmatprep.subr.mxu0 0.0
      %3671 = vmatpush1.msra.mxu0 0.0
      %3672 = vmatprep.subr.mxu0 0.0
      %3673 = vmatpush1.msra.mxu0 0.0
      %3674 = vmatprep.subr.mxu0 0.0
      %3675 = vmatpush1.msra.mxu0 0.0
      %3676 = vmatprep.mubr.f32.mxu0 0.0
      %3677 = vmatmul.mubr.f32.gmra.mrb[0].mxu0 %v2682
      %v3678 = vpop.f32.mrb[0].mxu0
      %v3679 = vadd.f32 %v3610, %v3678
      %v3680 = vpop.f32.mrb[0].mxu0
      %3681 = vmatprep.mubr.f32.mxu0 0.0
      %3682 = vmatmul.mubr.f32.gmra.mrb[0].mxu0 %v2685
      %v3683 = vpop.f32.mrb[0].mxu0
      %v3684 = vadd.f32 %v3610, %v3683
      %v3685 = vpop.f32.mrb[0].mxu0
      %3686 = vmatprep.mubr.f32.mxu0 0.0
      %3687 = vmatmul.mubr.f32.gmra.mrb[0].mxu0 %v2688
      %v3688 = vpop.f32.mrb[0].mxu0
      %v3689 = vadd.f32 %v3610, %v3688
      %v3690 = vpop.f32.mrb[0].mxu0
      %3691 = vmatprep.mubr.f32.mxu0 0.0
      %3692 = vmatmul.mubr.f32.gmra.mrb[0].mxu0 %v2691
      %v3693 = vpop.f32.mrb[0].mxu0
      %v3694 = vadd.f32 %v3610, %v3693
      %v3695 = vpop.f32.mrb[0].mxu0
      %3696 = vmatprep.mubr.f32.mxu0 0.0
      %3697 = vmatmul.mubr.f32.gmra.mrb[0].mxu0 %v2694
      %v3698 = vpop.f32.mrb[0].mxu0
      %v3699 = vadd.f32 %v3610, %v3698
      %v3700 = vpop.f32.mrb[0].mxu0
      %3701 = vmatprep.mubr.f32.mxu0 0.0
      %3702 = vmatmul.mubr.f32.gmra.mrb[0].mxu0 %v2697
      %v3703 = vpop.f32.mrb[0].mxu0
      %v3704 = vadd.f32 %v3610, %v3703
      %v3705 = vpop.f32.mrb[0].mxu0
      %3706 = vmatprep.mubr.f32.mxu0 0.0
      %3707 = vmatmul.mubr.f32.gmra.mrb[0].mxu0 %v2700
      %v3708 = vpop.f32.mrb[0].mxu0
      %v3709 = vadd.f32 %v3610, %v3708
      %v3710 = vpop.f32.mrb[0].mxu0
      %3711 = vmatprep.mubr.f32.mxu0 0.0
      %3712 = vmatmul.mubr.f32.gmra.mrb[0].mxu0 %v2703
      %v3713 = vpop.f32.mrb[0].mxu0
      %v3714 = vadd.f32 %v3610, %v3713
      %v3715 = vpop.f32.mrb[0].mxu0
      %3716 = vmatprep.mubr.f32.mxu0 0.0
      %3717 = vmatmul.mubr.f32.gmra.mrb[0].mxu0 %v2706
      %v3718 = vpop.f32.mrb[0].mxu0
      %v3719 = vadd.f32 %v3610, %v3718
      %v3720 = vpop.f32.mrb[0].mxu0
      %3721 = vdwg.mxu0
      %s3722 = scalar_lea.vmem %s8, 32
      %v3723 = vld [vmem:[%s3722] sm:$0xff]
      %v3724 = vld [vmem:[%s3722 + $0x8] sm:$0xff]
      %v3725 = vld [vmem:[%s3722 + $0x10] sm:$0xff]
      %v3726 = vld [vmem:[%s3722 + $0x18] sm:$0xff]
      %s3727 = scalar_lea.vmem %s9, 1
      %v3728 = vld [vmem:[%s3727] sm:$0x1]
      %v3730 = vlaneseq
      %v3731 = vshrl.u32 %v3730, 7
      %v3732 = vsub.s32 0, %v3731
      %v3733 = vrot.slane %v3728, %v3732
      %3735 = vmatprep.subr.mxu0 0.0
      %3736 = vmatpush1.msra.mxu0 %v3723
      %3737 = vmatprep.subr.mxu0 0.0
      %3738 = vmatpush1.msra.mxu0 %v3724
      %3739 = vmatprep.subr.mxu0 0.0
      %3740 = vmatpush1.msra.mxu0 %v3725
      %3741 = vmatprep.subr.mxu0 0.0
      %3742 = vmatpush1.msra.mxu0 %v3726
      %3743 = vmatprep.subr.mxu0 0.0
      %3744 = vmatpush1.msra.mxu0 0.0
      %3745 = vmatprep.subr.mxu0 0.0
      %3746 = vmatpush1.msra.mxu0 0.0
      %3747 = vmatprep.subr.mxu0 0.0
      %3748 = vmatpush1.msra.mxu0 0.0
      %3749 = vmatprep.subr.mxu0 0.0
      %3750 = vmatpush1.msra.mxu0 0.0
      %3751 = vmatprep.subr.mxu0 0.0
      %3752 = vmatpush1.msra.mxu0 0.0
      %3753 = vmatprep.subr.mxu0 0.0
      %3754 = vmatpush1.msra.mxu0 0.0
      %3755 = vmatprep.subr.mxu0 0.0
      %3756 = vmatpush1.msra.mxu0 0.0
      %3757 = vmatprep.subr.mxu0 0.0
      %3758 = vmatpush1.msra.mxu0 0.0
      %3759 = vmatprep.subr.mxu0 0.0
      %3760 = vmatpush1.msra.mxu0 0.0
      %3761 = vmatprep.subr.mxu0 0.0
      %3762 = vmatpush1.msra.mxu0 0.0
      %3763 = vmatprep.subr.mxu0 0.0
      %3764 = vmatpush1.msra.mxu0 0.0
      %3765 = vmatprep.subr.mxu0 0.0
      %3766 = vmatpush1.msra.mxu0 0.0
      %3767 = vmatprep.subr.mxu0 0.0
      %3768 = vmatpush1.msra.mxu0 0.0
      %3769 = vmatprep.subr.mxu0 0.0
      %3770 = vmatpush1.msra.mxu0 0.0
      %3771 = vmatprep.subr.mxu0 0.0
      %3772 = vmatpush1.msra.mxu0 0.0
      %3773 = vmatprep.subr.mxu0 0.0
      %3774 = vmatpush1.msra.mxu0 0.0
      %3775 = vmatprep.subr.mxu0 0.0
      %3776 = vmatpush1.msra.mxu0 0.0
      %3777 = vmatprep.subr.mxu0 0.0
      %3778 = vmatpush1.msra.mxu0 0.0
      %3779 = vmatprep.subr.mxu0 0.0
      %3780 = vmatpush1.msra.mxu0 0.0
      %3781 = vmatprep.subr.mxu0 0.0
      %3782 = vmatpush1.msra.mxu0 0.0
      %3783 = vmatprep.subr.mxu0 0.0
      %3784 = vmatpush1.msra.mxu0 0.0
      %3785 = vmatprep.subr.mxu0 0.0
      %3786 = vmatpush1.msra.mxu0 0.0
      %3787 = vmatprep.subr.mxu0 0.0
      %3788 = vmatpush1.msra.mxu0 0.0
      %3789 = vmatprep.subr.mxu0 0.0
      %3790 = vmatpush1.msra.mxu0 0.0
      %3791 = vmatprep.subr.mxu0 0.0
      %3792 = vmatpush1.msra.mxu0 0.0
      %3793 = vmatprep.subr.mxu0 0.0
      %3794 = vmatpush1.msra.mxu0 0.0
      %3795 = vmatprep.subr.mxu0 0.0
      %3796 = vmatpush1.msra.mxu0 0.0
      %3797 = vmatprep.subr.mxu0 0.0
      %3798 = vmatpush1.msra.mxu0 0.0
      %3799 = vmatprep.mubr.f32.mxu0 0.0
      %3800 = vmatmul.mubr.f32.gmra.mrb[0].mxu0 %v2682
      %v3801 = vpop.f32.mrb[0].mxu0
      %v3802 = vadd.f32 %v3733, %v3801
      %v3803 = vpop.f32.mrb[0].mxu0
      %3804 = vmatprep.mubr.f32.mxu0 0.0
      %3805 = vmatmul.mubr.f32.gmra.mrb[0].mxu0 %v2685
      %v3806 = vpop.f32.mrb[0].mxu0
      %v3807 = vadd.f32 %v3733, %v3806
      %v3808 = vpop.f32.mrb[0].mxu0
      %3809 = vmatprep.mubr.f32.mxu0 0.0
      %3810 = vmatmul.mubr.f32.gmra.mrb[0].mxu0 %v2688
      %v3811 = vpop.f32.mrb[0].mxu0
      %v3812 = vadd.f32 %v3733, %v3811
      %v3813 = vpop.f32.mrb[0].mxu0
      %3814 = vmatprep.mubr.f32.mxu0 0.0
      %3815 = vmatmul.mubr.f32.gmra.mrb[0].mxu0 %v2691
      %v3816 = vpop.f32.mrb[0].mxu0
      %v3817 = vadd.f32 %v3733, %v3816
      %v3818 = vpop.f32.mrb[0].mxu0
      %3819 = vmatprep.mubr.f32.mxu0 0.0
      %3820 = vmatmul.mubr.f32.gmra.mrb[0].mxu0 %v2694
      %v3821 = vpop.f32.mrb[0].mxu0
      %v3822 = vadd.f32 %v3733, %v3821
      %v3823 = vpop.f32.mrb[0].mxu0
      %3824 = vmatprep.mubr.f32.mxu0 0.0
      %3825 = vmatmul.mubr.f32.gmra.mrb[0].mxu0 %v2697
      %v3826 = vpop.f32.mrb[0].mxu0
      %v3827 = vadd.f32 %v3733, %v3826
      %v3828 = vpop.f32.mrb[0].mxu0
      %3829 = vmatprep.mubr.f32.mxu0 0.0
      %3830 = vmatmul.mubr.f32.gmra.mrb[0].mxu0 %v2700
      %v3831 = vpop.f32.mrb[0].mxu0
      %v3832 = vadd.f32 %v3733, %v3831
      %v3833 = vpop.f32.mrb[0].mxu0
      %3834 = vmatprep.mubr.f32.mxu0 0.0
      %3835 = vmatmul.mubr.f32.gmra.mrb[0].mxu0 %v2703
      %v3836 = vpop.f32.mrb[0].mxu0
      %v3837 = vadd.f32 %v3733, %v3836
      %v3838 = vpop.f32.mrb[0].mxu0
      %3839 = vmatprep.mubr.f32.mxu0 0.0
      %3840 = vmatmul.mubr.f32.gmra.mrb[0].mxu0 %v2706
      %v3841 = vpop.f32.mrb[0].mxu0
      %v3842 = vadd.f32 %v3733, %v3841
      %v3843 = vpop.f32.mrb[0].mxu0
      %3844 = vdwg.mxu0
      %v3846 = vsel %vm3060, %v3556, 0
      %v3849 = vsel %vm3060, %v3561, 0
      %v3852 = vsel %vm3060, %v3566, 0
      %v3855 = vsel %vm3060, %v3571, 0
      %v3858 = vsel %vm3060, %v3576, 0
      %v3861 = vsel %vm3060, %v3581, 0
      %v3864 = vsel %vm3060, %v3586, 0
      %v3867 = vsel %vm3060, %v3591, 0
      %v3870 = vsel %vm3060, %v3596, 0
      %v3873 = vsel %vm3060, %v3679, 0
      %v3876 = vsel %vm3060, %v3684, 0
      %v3879 = vsel %vm3060, %v3689, 0
      %v3882 = vsel %vm3060, %v3694, 0
      %v3885 = vsel %vm3060, %v3699, 0
      %v3888 = vsel %vm3060, %v3704, 0
      %v3891 = vsel %vm3060, %v3709, 0
      %v3894 = vsel %vm3060, %v3714, 0
      %v3897 = vsel %vm3060, %v3719, 0
      %3899 = vmatprep.subr.mxu0 0.0
      %3900 = vmatpush1.xpose.msra.mxu0 %v3873
      %3901 = vmatprep.subr.mxu0 0.0
      %3902 = vmatpush1.xpose.msra.mxu0 %v3876
      %3903 = vmatprep.subr.mxu0 0.0
      %3904 = vmatpush1.xpose.msra.mxu0 %v3879
      %3905 = vmatprep.subr.mxu0 0.0
      %3906 = vmatpush1.xpose.msra.mxu0 %v3882
      %3907 = vmatprep.subr.mxu0 0.0
      %3908 = vmatpush1.xpose.msra.mxu0 %v3885
      %3909 = vmatprep.subr.mxu0 0.0
      %3910 = vmatpush1.xpose.msra.mxu0 %v3888
      %3911 = vmatprep.subr.mxu0 0.0
      %3912 = vmatpush1.xpose.msra.mxu0 %v3891
      %3913 = vmatprep.subr.mxu0 0.0
      %3914 = vmatpush1.xpose.msra.mxu0 %v3894
      %3915 = vmatprep.subr.mxu0 0.0
      %3916 = vmatpush1.xpose.msra.mxu0 %v3897
      %3917 = vmatprep.subr.mxu0 0.0
      %3918 = vmatpush1.xpose.msra.mxu0 0.0
      %3919 = vmatprep.subr.mxu0 0.0
      %3920 = vmatpush1.xpose.msra.mxu0 0.0
      %3921 = vmatprep.subr.mxu0 0.0
      %3922 = vmatpush1.xpose.msra.mxu0 0.0
      %3923 = vmatprep.subr.mxu0 0.0
      %3924 = vmatpush1.xpose.msra.mxu0 0.0
      %3925 = vmatprep.subr.mxu0 0.0
      %3926 = vmatpush1.xpose.msra.mxu0 0.0
      %3927 = vmatprep.subr.mxu0 0.0
      %3928 = vmatpush1.xpose.msra.mxu0 0.0
      %3929 = vmatprep.subr.mxu0 0.0
      %3930 = vmatpush1.xpose.msra.mxu0 0.0
      %3931 = vmatprep.subr.mxu0 0.0
      %3932 = vmatpush1.xpose.msra.mxu0 0.0
      %3933 = vmatprep.subr.mxu0 0.0
      %3934 = vmatpush1.xpose.msra.mxu0 0.0
      %3935 = vmatprep.subr.mxu0 0.0
      %3936 = vmatpush1.xpose.msra.mxu0 0.0
      %3937 = vmatprep.subr.mxu0 0.0
      %3938 = vmatpush1.xpose.msra.mxu0 0.0
      %3939 = vmatprep.subr.mxu0 0.0
      %3940 = vmatpush1.xpose.msra.mxu0 0.0
      %3941 = vmatprep.subr.mxu0 0.0
      %3942 = vmatpush1.xpose.msra.mxu0 0.0
      %3943 = vmatprep.subr.mxu0 0.0
      %3944 = vmatpush1.xpose.msra.mxu0 0.0
      %3945 = vmatprep.subr.mxu0 0.0
      %3946 = vmatpush1.xpose.msra.mxu0 0.0
      %3947 = vmatprep.subr.mxu0 0.0
      %3948 = vmatpush1.xpose.msra.mxu0 0.0
      %3949 = vmatprep.subr.mxu0 0.0
      %3950 = vmatpush1.xpose.msra.mxu0 0.0
      %3951 = vmatprep.subr.mxu0 0.0
      %3952 = vmatpush1.xpose.msra.mxu0 0.0
      %3953 = vmatprep.subr.mxu0 0.0
      %3954 = vmatpush1.xpose.msra.mxu0 0.0
      %3955 = vmatprep.subr.mxu0 0.0
      %3956 = vmatpush1.xpose.msra.mxu0 0.0
      %3957 = vmatprep.subr.mxu0 0.0
      %3958 = vmatpush1.xpose.msra.mxu0 0.0
      %3959 = vmatprep.subr.mxu0 0.0
      %3960 = vmatpush1.xpose.msra.mxu0 0.0
      %3961 = vmatprep.subr.mxu0 0.0
      %3962 = vmatpush1.xpose.msra.mxu0 0.0
      %3963 = vmatprep.mubr.f32.mxu0 0.0
      %3964 = vmatmul.mubr.f32.gmra.mrb[0].mxu0 %v3846
      %v3965 = vpop.f32.mrb[0].mxu0
      %v3966 = vadd.f32 0.0, %v3965
      %v3967 = vpop.f32.mrb[0].mxu0
      %3968 = vmatprep.mubr.f32.mxu0 0.0
      %3969 = vmatmul.mubr.f32.gmra.mrb[0].mxu0 %v3849
      %v3970 = vpop.f32.mrb[0].mxu0
      %v3971 = vadd.f32 0.0, %v3970
      %v3972 = vpop.f32.mrb[0].mxu0
      %3973 = vmatprep.mubr.f32.mxu0 0.0
      %3974 = vmatmul.mubr.f32.gmra.mrb[0].mxu0 %v3852
      %v3975 = vpop.f32.mrb[0].mxu0
      %v3976 = vadd.f32 0.0, %v3975
      %v3977 = vpop.f32.mrb[0].mxu0
      %3978 = vmatprep.mubr.f32.mxu0 0.0
      %3979 = vmatmul.mubr.f32.gmra.mrb[0].mxu0 %v3855
      %v3980 = vpop.f32.mrb[0].mxu0
      %v3981 = vadd.f32 0.0, %v3980
      %v3982 = vpop.f32.mrb[0].mxu0
      %3983 = vmatprep.mubr.f32.mxu0 0.0
      %3984 = vmatmul.mubr.f32.gmra.mrb[0].mxu0 %v3858
      %v3985 = vpop.f32.mrb[0].mxu0
      %v3986 = vadd.f32 0.0, %v3985
      %v3987 = vpop.f32.mrb[0].mxu0
      %3988 = vmatprep.mubr.f32.mxu0 0.0
      %3989 = vmatmul.mubr.f32.gmra.mrb[0].mxu0 %v3861
      %v3990 = vpop.f32.mrb[0].mxu0
      %v3991 = vadd.f32 0.0, %v3990
      %v3992 = vpop.f32.mrb[0].mxu0
      %3993 = vmatprep.mubr.f32.mxu0 0.0
      %3994 = vmatmul.mubr.f32.gmra.mrb[0].mxu0 %v3864
      %v3995 = vpop.f32.mrb[0].mxu0
      %v3996 = vadd.f32 0.0, %v3995
      %v3997 = vpop.f32.mrb[0].mxu0
      %3998 = vmatprep.mubr.f32.mxu0 0.0
      %3999 = vmatmul.mubr.f32.gmra.mrb[0].mxu0 %v3867
      %v4000 = vpop.f32.mrb[0].mxu0
      %v4001 = vadd.f32 0.0, %v4000
      %v4002 = vpop.f32.mrb[0].mxu0
      %4003 = vmatprep.mubr.f32.mxu0 0.0
      %4004 = vmatmul.mubr.f32.gmra.mrb[0].mxu0 %v3870
      %v4005 = vpop.f32.mrb[0].mxu0
      %v4006 = vadd.f32 0.0, %v4005
      %v4007 = vpop.f32.mrb[0].mxu0
      %4008 = vdwg.mxu0
      %v4009 = vmul.f32 %v3966, 0.35355338
      %v4010 = vmul.f32 %v3971, 0.35355338
      %v4011 = vmul.f32 %v3976, 0.35355338
      %v4012 = vmul.f32 %v3981, 0.35355338
      %v4013 = vmul.f32 %v3986, 0.35355338
      %v4014 = vmul.f32 %v3991, 0.35355338
      %v4015 = vmul.f32 %v3996, 0.35355338
      %v4016 = vmul.f32 %v4001, 0.35355338
      %v4017 = vmul.f32 %v4006, 0.35355338
      %v4018 = vsel %vm3234, %v4009, -inf
      %4019 = vmax.xlane.f32.xlu0 %v4018
      %v4020 = vpop.xlane.xlu0 %4019
      %v4021 = vsel %vm3234, %v4010, -inf
      %4022 = vmax.xlane.f32.xlu0 %v4021
      %v4023 = vpop.xlane.xlu0 %4022
      %v4024 = vsel %vm3234, %v4011, -inf
      %4025 = vmax.xlane.f32.xlu0 %v4024
      %v4026 = vpop.xlane.xlu0 %4025
      %v4027 = vsel %vm3234, %v4012, -inf
      %4028 = vmax.xlane.f32.xlu0 %v4027
      %v4029 = vpop.xlane.xlu0 %4028
      %v4030 = vsel %vm3234, %v4013, -inf
      %4031 = vmax.xlane.f32.xlu0 %v4030
      %v4032 = vpop.xlane.xlu0 %4031
      %v4033 = vsel %vm3234, %v4014, -inf
      %4034 = vmax.xlane.f32.xlu0 %v4033
      %v4035 = vpop.xlane.xlu0 %4034
      %v4036 = vsel %vm3234, %v4015, -inf
      %4037 = vmax.xlane.f32.xlu0 %v4036
      %v4038 = vpop.xlane.xlu0 %4037
      %v4039 = vsel %vm3234, %v4016, -inf
      %4040 = vmax.xlane.f32.xlu0 %v4039
      %v4041 = vpop.xlane.xlu0 %4040
      %v4042 = vsel %vm3259, %v4017, -inf
      %4043 = vmax.xlane.f32.xlu0 %v4042
      %v4044 = vpop.xlane.xlu0 %4043
      %v4045 = vsub.f32 %v4009, %v4020
      %v4046 = vsub.f32 %v4010, %v4023
      %v4047 = vsub.f32 %v4011, %v4026
      %v4048 = vsub.f32 %v4012, %v4029
      %v4049 = vsub.f32 %v4013, %v4032
      %v4050 = vsub.f32 %v4014, %v4035
      %v4051 = vsub.f32 %v4015, %v4038
      %v4052 = vsub.f32 %v4016, %v4041
      %v4053 = vsub.f32 %v4017, %v4044
      %v4054 = vmul.f32 %v4045, 1.442695
      %v4055 = vpow.pop %v4054
      %v4056 = vmul.f32 %v4046, 1.442695
      %v4057 = vpow.pop %v4056
      %v4058 = vmul.f32 %v4047, 1.442695
      %v4059 = vpow.pop %v4058
      %v4060 = vmul.f32 %v4048, 1.442695
      %v4061 = vpow.pop %v4060
      %v4062 = vmul.f32 %v4049, 1.442695
      %v4063 = vpow.pop %v4062
      %v4064 = vmul.f32 %v4050, 1.442695
      %v4065 = vpow.pop %v4064
      %v4066 = vmul.f32 %v4051, 1.442695
      %v4067 = vpow.pop %v4066
      %v4068 = vmul.f32 %v4052, 1.442695
      %v4069 = vpow.pop %v4068
      %v4070 = vmul.f32 %v4053, 1.442695
      %v4071 = vpow.pop %v4070
      %v4072 = vsel %vm3234, %v4055, 0.0
      %4073 = vadd.xlane.f32.xlu0 %v4072
      %v4074 = vpop.xlane.xlu0 %4073
      %v4075 = vsel %vm3234, %v4057, 0.0
      %4076 = vadd.xlane.f32.xlu0 %v4075
      %v4077 = vpop.xlane.xlu0 %4076
      %v4078 = vsel %vm3234, %v4059, 0.0
      %4079 = vadd.xlane.f32.xlu0 %v4078
      %v4080 = vpop.xlane.xlu0 %4079
      %v4081 = vsel %vm3234, %v4061, 0.0
      %4082 = vadd.xlane.f32.xlu0 %v4081
      %v4083 = vpop.xlane.xlu0 %4082
      %v4084 = vsel %vm3234, %v4063, 0.0
      %4085 = vadd.xlane.f32.xlu0 %v4084
      %v4086 = vpop.xlane.xlu0 %4085
      %v4087 = vsel %vm3234, %v4065, 0.0
      %4088 = vadd.xlane.f32.xlu0 %v4087
      %v4089 = vpop.xlane.xlu0 %4088
      %v4090 = vsel %vm3234, %v4067, 0.0
      %4091 = vadd.xlane.f32.xlu0 %v4090
      %v4092 = vpop.xlane.xlu0 %4091
      %v4093 = vsel %vm3234, %v4069, 0.0
      %4094 = vadd.xlane.f32.xlu0 %v4093
      %v4095 = vpop.xlane.xlu0 %4094
      %v4096 = vsel %vm3259, %v4071, 0.0
      %4097 = vadd.xlane.f32.xlu0 %v4096
      %v4098 = vpop.xlane.xlu0 %4097
      %v4099 = vrcp.pop %v4074
      %v4100 = vmul.f32 %v4055, %v4099
      %v4101 = vrcp.pop %v4077
      %v4102 = vmul.f32 %v4057, %v4101
      %v4103 = vrcp.pop %v4080
      %v4104 = vmul.f32 %v4059, %v4103
      %v4105 = vrcp.pop %v4083
      %v4106 = vmul.f32 %v4061, %v4105
      %v4107 = vrcp.pop %v4086
      %v4108 = vmul.f32 %v4063, %v4107
      %v4109 = vrcp.pop %v4089
      %v4110 = vmul.f32 %v4065, %v4109
      %v4111 = vrcp.pop %v4092
      %v4112 = vmul.f32 %v4067, %v4111
      %v4113 = vrcp.pop %v4095
      %v4114 = vmul.f32 %v4069, %v4113
      %v4115 = vrcp.pop %v4098
      %v4116 = vmul.f32 %v4071, %v4115
      %v4118 = vsel %vm3234, %v4100, 0
      %v4121 = vsel %vm3234, %v4102, 0
      %v4124 = vsel %vm3234, %v4104, 0
      %v4127 = vsel %vm3234, %v4106, 0
      %v4130 = vsel %vm3234, %v4108, 0
      %v4133 = vsel %vm3234, %v4110, 0
      %v4136 = vsel %vm3234, %v4112, 0
      %v4139 = vsel %vm3234, %v4114, 0
      %v4142 = vsel %vm3234, %v4116, 0
      %v4145 = vsel %vm2126, %v3842, 0
      %4147 = vmatprep.subr.mxu0 0.0
      %4148 = vmatpush1.msra.mxu0 %v3802
      %4149 = vmatprep.subr.mxu0 0.0
      %4150 = vmatpush1.msra.mxu0 %v3807
      %4151 = vmatprep.subr.mxu0 0.0
      %4152 = vmatpush1.msra.mxu0 %v3812
      %4153 = vmatprep.subr.mxu0 0.0
      %4154 = vmatpush1.msra.mxu0 %v3817
      %4155 = vmatprep.subr.mxu0 0.0
      %4156 = vmatpush1.msra.mxu0 %v3822
      %4157 = vmatprep.subr.mxu0 0.0
      %4158 = vmatpush1.msra.mxu0 %v3827
      %4159 = vmatprep.subr.mxu0 0.0
      %4160 = vmatpush1.msra.mxu0 %v3832
      %4161 = vmatprep.subr.mxu0 0.0
      %4162 = vmatpush1.msra.mxu0 %v3837
      %4163 = vmatprep.subr.mxu0 0.0
      %4164 = vmatpush1.msra.mxu0 %v4145
      %4165 = vmatprep.subr.mxu0 0.0
      %4166 = vmatpush1.msra.mxu0 0.0
      %4167 = vmatprep.subr.mxu0 0.0
      %4168 = vmatpush1.msra.mxu0 0.0
      %4169 = vmatprep.subr.mxu0 0.0
      %4170 = vmatpush1.msra.mxu0 0.0
      %4171 = vmatprep.subr.mxu0 0.0
      %4172 = vmatpush1.msra.mxu0 0.0
      %4173 = vmatprep.subr.mxu0 0.0
      %4174 = vmatpush1.msra.mxu0 0.0
      %4175 = vmatprep.subr.mxu0 0.0
      %4176 = vmatpush1.msra.mxu0 0.0
      %4177 = vmatprep.subr.mxu0 0.0
      %4178 = vmatpush1.msra.mxu0 0.0
      %4179 = vmatprep.subr.mxu0 0.0
      %4180 = vmatpush1.msra.mxu0 0.0
      %4181 = vmatprep.subr.mxu0 0.0
      %4182 = vmatpush1.msra.mxu0 0.0
      %4183 = vmatprep.subr.mxu0 0.0
      %4184 = vmatpush1.msra.mxu0 0.0
      %4185 = vmatprep.subr.mxu0 0.0
      %4186 = vmatpush1.msra.mxu0 0.0
      %4187 = vmatprep.subr.mxu0 0.0
      %4188 = vmatpush1.msra.mxu0 0.0
      %4189 = vmatprep.subr.mxu0 0.0
      %4190 = vmatpush1.msra.mxu0 0.0
      %4191 = vmatprep.subr.mxu0 0.0
      %4192 = vmatpush1.msra.mxu0 0.0
      %4193 = vmatprep.subr.mxu0 0.0
      %4194 = vmatpush1.msra.mxu0 0.0
      %4195 = vmatprep.subr.mxu0 0.0
      %4196 = vmatpush1.msra.mxu0 0.0
      %4197 = vmatprep.subr.mxu0 0.0
      %4198 = vmatpush1.msra.mxu0 0.0
      %4199 = vmatprep.subr.mxu0 0.0
      %4200 = vmatpush1.msra.mxu0 0.0
      %4201 = vmatprep.subr.mxu0 0.0
      %4202 = vmatpush1.msra.mxu0 0.0
      %4203 = vmatprep.subr.mxu0 0.0
      %4204 = vmatpush1.msra.mxu0 0.0
      %4205 = vmatprep.subr.mxu0 0.0
      %4206 = vmatpush1.msra.mxu0 0.0
      %4207 = vmatprep.subr.mxu0 0.0
      %4208 = vmatpush1.msra.mxu0 0.0
      %4209 = vmatprep.subr.mxu0 0.0
      %4210 = vmatpush1.msra.mxu0 0.0
      %4211 = vmatprep.mubr.f32.mxu0 0.0
      %4212 = vmatmul.mubr.f32.gmra.mrb[0].mxu0 %v4118
      %v4213 = vpop.f32.mrb[0].mxu0
      %v4214 = vadd.f32 0.0, %v4213
      %v4215 = vpop.f32.mrb[0].mxu0
      %4216 = vmatprep.mubr.f32.mxu0 0.0
      %4217 = vmatmul.mubr.f32.gmra.mrb[0].mxu0 %v4121
      %v4218 = vpop.f32.mrb[0].mxu0
      %v4219 = vadd.f32 0.0, %v4218
      %v4220 = vpop.f32.mrb[0].mxu0
      %4221 = vmatprep.mubr.f32.mxu0 0.0
      %4222 = vmatmul.mubr.f32.gmra.mrb[0].mxu0 %v4124
      %v4223 = vpop.f32.mrb[0].mxu0
      %v4224 = vadd.f32 0.0, %v4223
      %v4225 = vpop.f32.mrb[0].mxu0
      %4226 = vmatprep.mubr.f32.mxu0 0.0
      %4227 = vmatmul.mubr.f32.gmra.mrb[0].mxu0 %v4127
      %v4228 = vpop.f32.mrb[0].mxu0
      %v4229 = vadd.f32 0.0, %v4228
      %v4230 = vpop.f32.mrb[0].mxu0
      %4231 = vmatprep.mubr.f32.mxu0 0.0
      %4232 = vmatmul.mubr.f32.gmra.mrb[0].mxu0 %v4130
      %v4233 = vpop.f32.mrb[0].mxu0
      %v4234 = vadd.f32 0.0, %v4233
      %v4235 = vpop.f32.mrb[0].mxu0
      %4236 = vmatprep.mubr.f32.mxu0 0.0
      %4237 = vmatmul.mubr.f32.gmra.mrb[0].mxu0 %v4133
      %v4238 = vpop.f32.mrb[0].mxu0
      %v4239 = vadd.f32 0.0, %v4238
      %v4240 = vpop.f32.mrb[0].mxu0
      %4241 = vmatprep.mubr.f32.mxu0 0.0
      %4242 = vmatmul.mubr.f32.gmra.mrb[0].mxu0 %v4136
      %v4243 = vpop.f32.mrb[0].mxu0
      %v4244 = vadd.f32 0.0, %v4243
      %v4245 = vpop.f32.mrb[0].mxu0
      %4246 = vmatprep.mubr.f32.mxu0 0.0
      %4247 = vmatmul.mubr.f32.gmra.mrb[0].mxu0 %v4139
      %v4248 = vpop.f32.mrb[0].mxu0
      %v4249 = vadd.f32 0.0, %v4248
      %v4250 = vpop.f32.mrb[0].mxu0
      %4251 = vmatprep.mubr.f32.mxu0 0.0
      %4252 = vmatmul.mubr.f32.gmra.mrb[0].mxu0 %v4142
      %v4253 = vpop.f32.mrb[0].mxu0
      %v4254 = vadd.f32 0.0, %v4253
      %v4255 = vpop.f32.mrb[0].mxu0
      %4256 = vdwg.mxu0
      %s4257 = scalar_lea.vmem %s10, 8
      %v4258 = vld [vmem:[%s4257] sm:$0xff]
      %v4260 = vsel %vm3060, %v4214, 0
      %v4263 = vsel %vm3060, %v4219, 0
      %v4266 = vsel %vm3060, %v4224, 0
      %v4269 = vsel %vm3060, %v4229, 0
      %v4272 = vsel %vm3060, %v4234, 0
      %v4275 = vsel %vm3060, %v4239, 0
      %v4278 = vsel %vm3060, %v4244, 0
      %v4281 = vsel %vm3060, %v4249, 0
      %v4284 = vsel %vm3060, %v4254, 0
      %4286 = vmatprep.subr.mxu0 0.0
      %4287 = vmatpush1.msra.mxu0 %v4258
      %4288 = vmatprep.subr.mxu0 0.0
      %4289 = vmatpush1.msra.mxu0 0.0
      %4290 = vmatprep.subr.mxu0 0.0
      %4291 = vmatpush1.msra.mxu0 0.0
      %4292 = vmatprep.subr.mxu0 0.0
      %4293 = vmatpush1.msra.mxu0 0.0
      %4294 = vmatprep.subr.mxu0 0.0
      %4295 = vmatpush1.msra.mxu0 0.0
      %4296 = vmatprep.subr.mxu0 0.0
      %4297 = vmatpush1.msra.mxu0 0.0
      %4298 = vmatprep.subr.mxu0 0.0
      %4299 = vmatpush1.msra.mxu0 0.0
      %4300 = vmatprep.subr.mxu0 0.0
      %4301 = vmatpush1.msra.mxu0 0.0
      %4302 = vmatprep.subr.mxu0 0.0
      %4303 = vmatpush1.msra.mxu0 0.0
      %4304 = vmatprep.subr.mxu0 0.0
      %4305 = vmatpush1.msra.mxu0 0.0
      %4306 = vmatprep.subr.mxu0 0.0
      %4307 = vmatpush1.msra.mxu0 0.0
      %4308 = vmatprep.subr.mxu0 0.0
      %4309 = vmatpush1.msra.mxu0 0.0
      %4310 = vmatprep.subr.mxu0 0.0
      %4311 = vmatpush1.msra.mxu0 0.0
      %4312 = vmatprep.subr.mxu0 0.0
      %4313 = vmatpush1.msra.mxu0 0.0
      %4314 = vmatprep.subr.mxu0 0.0
      %4315 = vmatpush1.msra.mxu0 0.0
      %4316 = vmatprep.subr.mxu0 0.0
      %4317 = vmatpush1.msra.mxu0 0.0
      %4318 = vmatprep.subr.mxu0 0.0
      %4319 = vmatpush1.msra.mxu0 0.0
      %4320 = vmatprep.subr.mxu0 0.0
      %4321 = vmatpush1.msra.mxu0 0.0
      %4322 = vmatprep.subr.mxu0 0.0
      %4323 = vmatpush1.msra.mxu0 0.0
      %4324 = vmatprep.subr.mxu0 0.0
      %4325 = vmatpush1.msra.mxu0 0.0
      %4326 = vmatprep.subr.mxu0 0.0
      %4327 = vmatpush1.msra.mxu0 0.0
      %4328 = vmatprep.subr.mxu0 0.0
      %4329 = vmatpush1.msra.mxu0 0.0
      %4330 = vmatprep.subr.mxu0 0.0
      %4331 = vmatpush1.msra.mxu0 0.0
      %4332 = vmatprep.subr.mxu0 0.0
      %4333 = vmatpush1.msra.mxu0 0.0
      %4334 = vmatprep.subr.mxu0 0.0
      %4335 = vmatpush1.msra.mxu0 0.0
      %4336 = vmatprep.subr.mxu0 0.0
      %4337 = vmatpush1.msra.mxu0 0.0
      %4338 = vmatprep.subr.mxu0 0.0
      %4339 = vmatpush1.msra.mxu0 0.0
      %4340 = vmatprep.subr.mxu0 0.0
      %4341 = vmatpush1.msra.mxu0 0.0
      %4342 = vmatprep.subr.mxu0 0.0
      %4343 = vmatpush1.msra.mxu0 0.0
      %4344 = vmatprep.subr.mxu0 0.0
      %4345 = vmatpush1.msra.mxu0 0.0
      %4346 = vmatprep.subr.mxu0 0.0
      %4347 = vmatpush1.msra.mxu0 0.0
      %4348 = vmatprep.subr.mxu0 0.0
      %4349 = vmatpush1.msra.mxu0 0.0
      %4350 = vmatprep.mubr.f32.mxu0 0.0
      %4351 = vmatmul.mubr.f32.gmra.mrb[0].mxu0 %v4260
      %v4352 = vpop.f32.mrb[0].mxu0
      %v4353 = vadd.f32 0.0, %v4352
      %v4354 = vpop.f32.mrb[0].mxu0
      %4355 = vmatprep.mubr.f32.mxu0 0.0
      %4356 = vmatmul.mubr.f32.gmra.mrb[0].mxu0 %v4263
      %v4357 = vpop.f32.mrb[0].mxu0
      %v4358 = vadd.f32 0.0, %v4357
      %v4359 = vpop.f32.mrb[0].mxu0
      %4360 = vmatprep.mubr.f32.mxu0 0.0
      %4361 = vmatmul.mubr.f32.gmra.mrb[0].mxu0 %v4266
      %v4362 = vpop.f32.mrb[0].mxu0
      %v4363 = vadd.f32 0.0, %v4362
      %v4364 = vpop.f32.mrb[0].mxu0
      %4365 = vmatprep.mubr.f32.mxu0 0.0
      %4366 = vmatmul.mubr.f32.gmra.mrb[0].mxu0 %v4269
      %v4367 = vpop.f32.mrb[0].mxu0
      %v4368 = vadd.f32 0.0, %v4367
      %v4369 = vpop.f32.mrb[0].mxu0
      %4370 = vmatprep.mubr.f32.mxu0 0.0
      %4371 = vmatmul.mubr.f32.gmra.mrb[0].mxu0 %v4272
      %v4372 = vpop.f32.mrb[0].mxu0
      %v4373 = vadd.f32 0.0, %v4372
      %v4374 = vpop.f32.mrb[0].mxu0
      %4375 = vmatprep.mubr.f32.mxu0 0.0
      %4376 = vmatmul.mubr.f32.gmra.mrb[0].mxu0 %v4275
      %v4377 = vpop.f32.mrb[0].mxu0
      %v4378 = vadd.f32 0.0, %v4377
      %v4379 = vpop.f32.mrb[0].mxu0
      %4380 = vmatprep.mubr.f32.mxu0 0.0
      %4381 = vmatmul.mubr.f32.gmra.mrb[0].mxu0 %v4278
      %v4382 = vpop.f32.mrb[0].mxu0
      %v4383 = vadd.f32 0.0, %v4382
      %v4384 = vpop.f32.mrb[0].mxu0
      %4385 = vmatprep.mubr.f32.mxu0 0.0
      %4386 = vmatmul.mubr.f32.gmra.mrb[0].mxu0 %v4281
      %v4387 = vpop.f32.mrb[0].mxu0
      %v4388 = vadd.f32 0.0, %v4387
      %v4389 = vpop.f32.mrb[0].mxu0
      %4390 = vmatprep.mubr.f32.mxu0 0.0
      %4391 = vmatmul.mubr.f32.gmra.mrb[0].mxu0 %v4284
      %v4392 = vpop.f32.mrb[0].mxu0
      %v4393 = vadd.f32 0.0, %v4392
      %v4394 = vpop.f32.mrb[0].mxu0
      %4395 = vdwg.mxu0
      %v4397 = vsel %vm3060, %v3432, 0
      %v4400 = vsel %vm3060, %v3437, 0
      %v4403 = vsel %vm3060, %v3442, 0
      %v4406 = vsel %vm3060, %v3447, 0
      %v4409 = vsel %vm3060, %v3452, 0
      %v4412 = vsel %vm3060, %v3457, 0
      %v4415 = vsel %vm3060, %v3462, 0
      %v4418 = vsel %vm3060, %v3467, 0
      %v4421 = vsel %vm3060, %v3472, 0
      %4423 = vmatprep.subr.mxu0 0.0
      %4424 = vmatpush1.msra.mxu0 %v3475
      %4425 = vmatprep.subr.mxu0 0.0
      %4426 = vmatpush1.msra.mxu0 0.0
      %4427 = vmatprep.subr.mxu0 0.0
      %4428 = vmatpush1.msra.mxu0 0.0
      %4429 = vmatprep.subr.mxu0 0.0
      %4430 = vmatpush1.msra.mxu0 0.0
      %4431 = vmatprep.subr.mxu0 0.0
      %4432 = vmatpush1.msra.mxu0 0.0
      %4433 = vmatprep.subr.mxu0 0.0
      %4434 = vmatpush1.msra.mxu0 0.0
      %4435 = vmatprep.subr.mxu0 0.0
      %4436 = vmatpush1.msra.mxu0 0.0
      %4437 = vmatprep.subr.mxu0 0.0
      %4438 = vmatpush1.msra.mxu0 0.0
      %4439 = vmatprep.subr.mxu0 0.0
      %4440 = vmatpush1.msra.mxu0 0.0
      %4441 = vmatprep.subr.mxu0 0.0
      %4442 = vmatpush1.msra.mxu0 0.0
      %4443 = vmatprep.subr.mxu0 0.0
      %4444 = vmatpush1.msra.mxu0 0.0
      %4445 = vmatprep.subr.mxu0 0.0
      %4446 = vmatpush1.msra.mxu0 0.0
      %4447 = vmatprep.subr.mxu0 0.0
      %4448 = vmatpush1.msra.mxu0 0.0
      %4449 = vmatprep.subr.mxu0 0.0
      %4450 = vmatpush1.msra.mxu0 0.0
      %4451 = vmatprep.subr.mxu0 0.0
      %4452 = vmatpush1.msra.mxu0 0.0
      %4453 = vmatprep.subr.mxu0 0.0
      %4454 = vmatpush1.msra.mxu0 0.0
      %4455 = vmatprep.subr.mxu0 0.0
      %4456 = vmatpush1.msra.mxu0 0.0
      %4457 = vmatprep.subr.mxu0 0.0
      %4458 = vmatpush1.msra.mxu0 0.0
      %4459 = vmatprep.subr.mxu0 0.0
      %4460 = vmatpush1.msra.mxu0 0.0
      %4461 = vmatprep.subr.mxu0 0.0
      %4462 = vmatpush1.msra.mxu0 0.0
      %4463 = vmatprep.subr.mxu0 0.0
      %4464 = vmatpush1.msra.mxu0 0.0
      %4465 = vmatprep.subr.mxu0 0.0
      %4466 = vmatpush1.msra.mxu0 0.0
      %4467 = vmatprep.subr.mxu0 0.0
      %4468 = vmatpush1.msra.mxu0 0.0
      %4469 = vmatprep.subr.mxu0 0.0
      %4470 = vmatpush1.msra.mxu0 0.0
      %4471 = vmatprep.subr.mxu0 0.0
      %4472 = vmatpush1.msra.mxu0 0.0
      %4473 = vmatprep.subr.mxu0 0.0
      %4474 = vmatpush1.msra.mxu0 0.0
      %4475 = vmatprep.subr.mxu0 0.0
      %4476 = vmatpush1.msra.mxu0 0.0
      %4477 = vmatprep.subr.mxu0 0.0
      %4478 = vmatpush1.msra.mxu0 0.0
      %4479 = vmatprep.subr.mxu0 0.0
      %4480 = vmatpush1.msra.mxu0 0.0
      %4481 = vmatprep.subr.mxu0 0.0
      %4482 = vmatpush1.msra.mxu0 0.0
      %4483 = vmatprep.subr.mxu0 0.0
      %4484 = vmatpush1.msra.mxu0 0.0
      %4485 = vmatprep.subr.mxu0 0.0
      %4486 = vmatpush1.msra.mxu0 0.0
      %4487 = vmatprep.mubr.f32.mxu0 0.0
      %4488 = vmatmul.mubr.f32.gmra.mrb[0].mxu0 %v4397
      %v4489 = vpop.f32.mrb[0].mxu0
      %v4490 = vadd.f32 %v4353, %v4489
      %v4491 = vpop.f32.mrb[0].mxu0
      %4492 = vmatprep.mubr.f32.mxu0 0.0
      %4493 = vmatmul.mubr.f32.gmra.mrb[0].mxu0 %v4400
      %v4494 = vpop.f32.mrb[0].mxu0
      %v4495 = vadd.f32 %v4358, %v4494
      %v4496 = vpop.f32.mrb[0].mxu0
      %4497 = vmatprep.mubr.f32.mxu0 0.0
      %4498 = vmatmul.mubr.f32.gmra.mrb[0].mxu0 %v4403
      %v4499 = vpop.f32.mrb[0].mxu0
      %v4500 = vadd.f32 %v4363, %v4499
      %v4501 = vpop.f32.mrb[0].mxu0
      %4502 = vmatprep.mubr.f32.mxu0 0.0
      %4503 = vmatmul.mubr.f32.gmra.mrb[0].mxu0 %v4406
      %v4504 = vpop.f32.mrb[0].mxu0
      %v4505 = vadd.f32 %v4368, %v4504
      %v4506 = vpop.f32.mrb[0].mxu0
      %4507 = vmatprep.mubr.f32.mxu0 0.0
      %4508 = vmatmul.mubr.f32.gmra.mrb[0].mxu0 %v4409
      %v4509 = vpop.f32.mrb[0].mxu0
      %v4510 = vadd.f32 %v4373, %v4509
      %v4511 = vpop.f32.mrb[0].mxu0
      %4512 = vmatprep.mubr.f32.mxu0 0.0
      %4513 = vmatmul.mubr.f32.gmra.mrb[0].mxu0 %v4412
      %v4514 = vpop.f32.mrb[0].mxu0
      %v4515 = vadd.f32 %v4378, %v4514
      %v4516 = vpop.f32.mrb[0].mxu0
      %4517 = vmatprep.mubr.f32.mxu0 0.0
      %4518 = vmatmul.mubr.f32.gmra.mrb[0].mxu0 %v4415
      %v4519 = vpop.f32.mrb[0].mxu0
      %v4520 = vadd.f32 %v4383, %v4519
      %v4521 = vpop.f32.mrb[0].mxu0
      %4522 = vmatprep.mubr.f32.mxu0 0.0
      %4523 = vmatmul.mubr.f32.gmra.mrb[0].mxu0 %v4418
      %v4524 = vpop.f32.mrb[0].mxu0
      %v4525 = vadd.f32 %v4388, %v4524
      %v4526 = vpop.f32.mrb[0].mxu0
      %4527 = vmatprep.mubr.f32.mxu0 0.0
      %4528 = vmatmul.mubr.f32.gmra.mrb[0].mxu0 %v4421
      %v4529 = vpop.f32.mrb[0].mxu0
      %v4530 = vadd.f32 %v4393, %v4529
      %v4531 = vpop.f32.mrb[0].mxu0
      %4532 = vdwg.mxu0
      %s4533 = scalar_lea.vmem %s4, 64
      %v4534 = vld [vmem:[%s4533] sm:$0xff]
      %v4535 = vld [vmem:[%s4533 + $0x8] sm:$0xff]
      %v4536 = vld [vmem:[%s4533 + $0x10] sm:$0xff]
      %v4537 = vld [vmem:[%s4533 + $0x18] sm:$0xff]
      %s4538 = scalar_lea.vmem %s5, 2
      %v4539 = vld [vmem:[%s4538] sm:$0x1]
      %v4541 = vlaneseq
      %v4542 = vshrl.u32 %v4541, 7
      %v4543 = vsub.s32 0, %v4542
      %v4544 = vrot.slane %v4539, %v4543
      %4546 = vmatprep.subr.mxu0 0.0
      %4547 = vmatpush1.msra.mxu0 %v4534
      %4548 = vmatprep.subr.mxu0 0.0
      %4549 = vmatpush1.msra.mxu0 %v4535
      %4550 = vmatprep.subr.mxu0 0.0
      %4551 = vmatpush1.msra.mxu0 %v4536
      %4552 = vmatprep.subr.mxu0 0.0
      %4553 = vmatpush1.msra.mxu0 %v4537
      %4554 = vmatprep.subr.mxu0 0.0
      %4555 = vmatpush1.msra.mxu0 0.0
      %4556 = vmatprep.subr.mxu0 0.0
      %4557 = vmatpush1.msra.mxu0 0.0
      %4558 = vmatprep.subr.mxu0 0.0
      %4559 = vmatpush1.msra.mxu0 0.0
      %4560 = vmatprep.subr.mxu0 0.0
      %4561 = vmatpush1.msra.mxu0 0.0
      %4562 = vmatprep.subr.mxu0 0.0
      %4563 = vmatpush1.msra.mxu0 0.0
      %4564 = vmatprep.subr.mxu0 0.0
      %4565 = vmatpush1.msra.mxu0 0.0
      %4566 = vmatprep.subr.mxu0 0.0
      %4567 = vmatpush1.msra.mxu0 0.0
      %4568 = vmatprep.subr.mxu0 0.0
      %4569 = vmatpush1.msra.mxu0 0.0
      %4570 = vmatprep.subr.mxu0 0.0
      %4571 = vmatpush1.msra.mxu0 0.0
      %4572 = vmatprep.subr.mxu0 0.0
      %4573 = vmatpush1.msra.mxu0 0.0
      %4574 = vmatprep.subr.mxu0 0.0
      %4575 = vmatpush1.msra.mxu0 0.0
      %4576 = vmatprep.subr.mxu0 0.0
      %4577 = vmatpush1.msra.mxu0 0.0
      %4578 = vmatprep.subr.mxu0 0.0
      %4579 = vmatpush1.msra.mxu0 0.0
      %4580 = vmatprep.subr.mxu0 0.0
      %4581 = vmatpush1.msra.mxu0 0.0
      %4582 = vmatprep.subr.mxu0 0.0
      %4583 = vmatpush1.msra.mxu0 0.0
      %4584 = vmatprep.subr.mxu0 0.0
      %4585 = vmatpush1.msra.mxu0 0.0
      %4586 = vmatprep.subr.mxu0 0.0
      %4587 = vmatpush1.msra.mxu0 0.0
      %4588 = vmatprep.subr.mxu0 0.0
      %4589 = vmatpush1.msra.mxu0 0.0
      %4590 = vmatprep.subr.mxu0 0.0
      %4591 = vmatpush1.msra.mxu0 0.0
      %4592 = vmatprep.subr.mxu0 0.0
      %4593 = vmatpush1.msra.mxu0 0.0
      %4594 = vmatprep.subr.mxu0 0.0
      %4595 = vmatpush1.msra.mxu0 0.0
      %4596 = vmatprep.subr.mxu0 0.0
      %4597 = vmatpush1.msra.mxu0 0.0
      %4598 = vmatprep.subr.mxu0 0.0
      %4599 = vmatpush1.msra.mxu0 0.0
      %4600 = vmatprep.subr.mxu0 0.0
      %4601 = vmatpush1.msra.mxu0 0.0
      %4602 = vmatprep.subr.mxu0 0.0
      %4603 = vmatpush1.msra.mxu0 0.0
      %4604 = vmatprep.subr.mxu0 0.0
      %4605 = vmatpush1.msra.mxu0 0.0
      %4606 = vmatprep.subr.mxu0 0.0
      %4607 = vmatpush1.msra.mxu0 0.0
      %4608 = vmatprep.subr.mxu0 0.0
      %4609 = vmatpush1.msra.mxu0 0.0
      %4610 = vmatprep.mubr.f32.mxu0 0.0
      %4611 = vmatmul.mubr.f32.gmra.mrb[0].mxu0 %v2682
      %v4612 = vpop.f32.mrb[0].mxu0
      %v4613 = vadd.f32 %v4544, %v4612
      %v4614 = vpop.f32.mrb[0].mxu0
      %4615 = vmatprep.mubr.f32.mxu0 0.0
      %4616 = vmatmul.mubr.f32.gmra.mrb[0].mxu0 %v2685
      %v4617 = vpop.f32.mrb[0].mxu0
      %v4618 = vadd.f32 %v4544, %v4617
      %v4619 = vpop.f32.mrb[0].mxu0
      %4620 = vmatprep.mubr.f32.mxu0 0.0
      %4621 = vmatmul.mubr.f32.gmra.mrb[0].mxu0 %v2688
      %v4622 = vpop.f32.mrb[0].mxu0
      %v4623 = vadd.f32 %v4544, %v4622
      %v4624 = vpop.f32.mrb[0].mxu0
      %4625 = vmatprep.mubr.f32.mxu0 0.0
      %4626 = vmatmul.mubr.f32.gmra.mrb[0].mxu0 %v2691
      %v4627 = vpop.f32.mrb[0].mxu0
      %v4628 = vadd.f32 %v4544, %v4627
      %v4629 = vpop.f32.mrb[0].mxu0
      %4630 = vmatprep.mubr.f32.mxu0 0.0
      %4631 = vmatmul.mubr.f32.gmra.mrb[0].mxu0 %v2694
      %v4632 = vpop.f32.mrb[0].mxu0
      %v4633 = vadd.f32 %v4544, %v4632
      %v4634 = vpop.f32.mrb[0].mxu0
      %4635 = vmatprep.mubr.f32.mxu0 0.0
      %4636 = vmatmul.mubr.f32.gmra.mrb[0].mxu0 %v2697
      %v4637 = vpop.f32.mrb[0].mxu0
      %v4638 = vadd.f32 %v4544, %v4637
      %v4639 = vpop.f32.mrb[0].mxu0
      %4640 = vmatprep.mubr.f32.mxu0 0.0
      %4641 = vmatmul.mubr.f32.gmra.mrb[0].mxu0 %v2700
      %v4642 = vpop.f32.mrb[0].mxu0
      %v4643 = vadd.f32 %v4544, %v4642
      %v4644 = vpop.f32.mrb[0].mxu0
      %4645 = vmatprep.mubr.f32.mxu0 0.0
      %4646 = vmatmul.mubr.f32.gmra.mrb[0].mxu0 %v2703
      %v4647 = vpop.f32.mrb[0].mxu0
      %v4648 = vadd.f32 %v4544, %v4647
      %v4649 = vpop.f32.mrb[0].mxu0
      %4650 = vmatprep.mubr.f32.mxu0 0.0
      %4651 = vmatmul.mubr.f32.gmra.mrb[0].mxu0 %v2706
      %v4652 = vpop.f32.mrb[0].mxu0
      %v4653 = vadd.f32 %v4544, %v4652
      %v4654 = vpop.f32.mrb[0].mxu0
      %4655 = vdwg.mxu0
      %s4656 = scalar_lea.vmem %s6, 64
      %v4657 = vld [vmem:[%s4656] sm:$0xff]
      %v4658 = vld [vmem:[%s4656 + $0x8] sm:$0xff]
      %v4659 = vld [vmem:[%s4656 + $0x10] sm:$0xff]
      %v4660 = vld [vmem:[%s4656 + $0x18] sm:$0xff]
      %s4661 = scalar_lea.vmem %s7, 2
      %v4662 = vld [vmem:[%s4661] sm:$0x1]
      %v4664 = vlaneseq
      %v4665 = vshrl.u32 %v4664, 7
      %v4666 = vsub.s32 0, %v4665
      %v4667 = vrot.slane %v4662, %v4666
      %4669 = vmatprep.subr.mxu0 0.0
      %4670 = vmatpush1.msra.mxu0 %v4657
      %4671 = vmatprep.subr.mxu0 0.0
      %4672 = vmatpush1.msra.mxu0 %v4658
      %4673 = vmatprep.subr.mxu0 0.0
      %4674 = vmatpush1.msra.mxu0 %v4659
      %4675 = vmatprep.subr.mxu0 0.0
      %4676 = vmatpush1.msra.mxu0 %v4660
      %4677 = vmatprep.subr.mxu0 0.0
      %4678 = vmatpush1.msra.mxu0 0.0
      %4679 = vmatprep.subr.mxu0 0.0
      %4680 = vmatpush1.msra.mxu0 0.0
      %4681 = vmatprep.subr.mxu0 0.0
      %4682 = vmatpush1.msra.mxu0 0.0
      %4683 = vmatprep.subr.mxu0 0.0
      %4684 = vmatpush1.msra.mxu0 0.0
      %4685 = vmatprep.subr.mxu0 0.0
      %4686 = vmatpush1.msra.mxu0 0.0
      %4687 = vmatprep.subr.mxu0 0.0
      %4688 = vmatpush1.msra.mxu0 0.0
      %4689 = vmatprep.subr.mxu0 0.0
      %4690 = vmatpush1.msra.mxu0 0.0
      %4691 = vmatprep.subr.mxu0 0.0
      %4692 = vmatpush1.msra.mxu0 0.0
      %4693 = vmatprep.subr.mxu0 0.0
      %4694 = vmatpush1.msra.mxu0 0.0
      %4695 = vmatprep.subr.mxu0 0.0
      %4696 = vmatpush1.msra.mxu0 0.0
      %4697 = vmatprep.subr.mxu0 0.0
      %4698 = vmatpush1.msra.mxu0 0.0
      %4699 = vmatprep.subr.mxu0 0.0
      %4700 = vmatpush1.msra.mxu0 0.0
      %4701 = vmatprep.subr.mxu0 0.0
      %4702 = vmatpush1.msra.mxu0 0.0
      %4703 = vmatprep.subr.mxu0 0.0
      %4704 = vmatpush1.msra.mxu0 0.0
      %4705 = vmatprep.subr.mxu0 0.0
      %4706 = vmatpush1.msra.mxu0 0.0
      %4707 = vmatprep.subr.mxu0 0.0
      %4708 = vmatpush1.msra.mxu0 0.0
      %4709 = vmatprep.subr.mxu0 0.0
      %4710 = vmatpush1.msra.mxu0 0.0
      %4711 = vmatprep.subr.mxu0 0.0
      %4712 = vmatpush1.msra.mxu0 0.0
      %4713 = vmatprep.subr.mxu0 0.0
      %4714 = vmatpush1.msra.mxu0 0.0
      %4715 = vmatprep.subr.mxu0 0.0
      %4716 = vmatpush1.msra.mxu0 0.0
      %4717 = vmatprep.subr.mxu0 0.0
      %4718 = vmatpush1.msra.mxu0 0.0
      %4719 = vmatprep.subr.mxu0 0.0
      %4720 = vmatpush1.msra.mxu0 0.0
      %4721 = vmatprep.subr.mxu0 0.0
      %4722 = vmatpush1.msra.mxu0 0.0
      %4723 = vmatprep.subr.mxu0 0.0
      %4724 = vmatpush1.msra.mxu0 0.0
      %4725 = vmatprep.subr.mxu0 0.0
      %4726 = vmatpush1.msra.mxu0 0.0
      %4727 = vmatprep.subr.mxu0 0.0
      %4728 = vmatpush1.msra.mxu0 0.0
      %4729 = vmatprep.subr.mxu0 0.0
      %4730 = vmatpush1.msra.mxu0 0.0
      %4731 = vmatprep.subr.mxu0 0.0
      %4732 = vmatpush1.msra.mxu0 0.0
      %4733 = vmatprep.mubr.f32.mxu0 0.0
      %4734 = vmatmul.mubr.f32.gmra.mrb[0].mxu0 %v2682
      %v4735 = vpop.f32.mrb[0].mxu0
      %v4736 = vadd.f32 %v4667, %v4735
      %v4737 = vpop.f32.mrb[0].mxu0
      %4738 = vmatprep.mubr.f32.mxu0 0.0
      %4739 = vmatmul.mubr.f32.gmra.mrb[0].mxu0 %v2685
      %v4740 = vpop.f32.mrb[0].mxu0
      %v4741 = vadd.f32 %v4667, %v4740
      %v4742 = vpop.f32.mrb[0].mxu0
      %4743 = vmatprep.mubr.f32.mxu0 0.0
      %4744 = vmatmul.mubr.f32.gmra.mrb[0].mxu0 %v2688
      %v4745 = vpop.f32.mrb[0].mxu0
      %v4746 = vadd.f32 %v4667, %v4745
      %v4747 = vpop.f32.mrb[0].mxu0
      %4748 = vmatprep.mubr.f32.mxu0 0.0
      %4749 = vmatmul.mubr.f32.gmra.mrb[0].mxu0 %v2691
      %v4750 = vpop.f32.mrb[0].mxu0
      %v4751 = vadd.f32 %v4667, %v4750
      %v4752 = vpop.f32.mrb[0].mxu0
      %4753 = vmatprep.mubr.f32.mxu0 0.0
      %4754 = vmatmul.mubr.f32.gmra.mrb[0].mxu0 %v2694
      %v4755 = vpop.f32.mrb[0].mxu0
      %v4756 = vadd.f32 %v4667, %v4755
      %v4757 = vpop.f32.mrb[0].mxu0
      %4758 = vmatprep.mubr.f32.mxu0 0.0
      %4759 = vmatmul.mubr.f32.gmra.mrb[0].mxu0 %v2697
      %v4760 = vpop.f32.mrb[0].mxu0
      %v4761 = vadd.f32 %v4667, %v4760
      %v4762 = vpop.f32.mrb[0].mxu0
      %4763 = vmatprep.mubr.f32.mxu0 0.0
      %4764 = vmatmul.mubr.f32.gmra.mrb[0].mxu0 %v2700
      %v4765 = vpop.f32.mrb[0].mxu0
      %v4766 = vadd.f32 %v4667, %v4765
      %v4767 = vpop.f32.mrb[0].mxu0
      %4768 = vmatprep.mubr.f32.mxu0 0.0
      %4769 = vmatmul.mubr.f32.gmra.mrb[0].mxu0 %v2703
      %v4770 = vpop.f32.mrb[0].mxu0
      %v4771 = vadd.f32 %v4667, %v4770
      %v4772 = vpop.f32.mrb[0].mxu0
      %4773 = vmatprep.mubr.f32.mxu0 0.0
      %4774 = vmatmul.mubr.f32.gmra.mrb[0].mxu0 %v2706
      %v4775 = vpop.f32.mrb[0].mxu0
      %v4776 = vadd.f32 %v4667, %v4775
      %v4777 = vpop.f32.mrb[0].mxu0
      %4778 = vdwg.mxu0
      %s4779 = scalar_lea.vmem %s8, 64
      %v4780 = vld [vmem:[%s4779] sm:$0xff]
      %v4781 = vld [vmem:[%s4779 + $0x8] sm:$0xff]
      %v4782 = vld [vmem:[%s4779 + $0x10] sm:$0xff]
      %v4783 = vld [vmem:[%s4779 + $0x18] sm:$0xff]
      %s4784 = scalar_lea.vmem %s9, 2
      %v4785 = vld [vmem:[%s4784] sm:$0x1]
      %v4787 = vlaneseq
      %v4788 = vshrl.u32 %v4787, 7
      %v4789 = vsub.s32 0, %v4788
      %v4790 = vrot.slane %v4785, %v4789
      %4792 = vmatprep.subr.mxu0 0.0
      %4793 = vmatpush1.msra.mxu0 %v4780
      %4794 = vmatprep.subr.mxu0 0.0
      %4795 = vmatpush1.msra.mxu0 %v4781
      %4796 = vmatprep.subr.mxu0 0.0
      %4797 = vmatpush1.msra.mxu0 %v4782
      %4798 = vmatprep.subr.mxu0 0.0
      %4799 = vmatpush1.msra.mxu0 %v4783
      %4800 = vmatprep.subr.mxu0 0.0
      %4801 = vmatpush1.msra.mxu0 0.0
      %4802 = vmatprep.subr.mxu0 0.0
      %4803 = vmatpush1.msra.mxu0 0.0
      %4804 = vmatprep.subr.mxu0 0.0
      %4805 = vmatpush1.msra.mxu0 0.0
      %4806 = vmatprep.subr.mxu0 0.0
      %4807 = vmatpush1.msra.mxu0 0.0
      %4808 = vmatprep.subr.mxu0 0.0
      %4809 = vmatpush1.msra.mxu0 0.0
      %4810 = vmatprep.subr.mxu0 0.0
      %4811 = vmatpush1.msra.mxu0 0.0
      %4812 = vmatprep.subr.mxu0 0.0
      %4813 = vmatpush1.msra.mxu0 0.0
      %4814 = vmatprep.subr.mxu0 0.0
      %4815 = vmatpush1.msra.mxu0 0.0
      %4816 = vmatprep.subr.mxu0 0.0
      %4817 = vmatpush1.msra.mxu0 0.0
      %4818 = vmatprep.subr.mxu0 0.0
      %4819 = vmatpush1.msra.mxu0 0.0
      %4820 = vmatprep.subr.mxu0 0.0
      %4821 = vmatpush1.msra.mxu0 0.0
      %4822 = vmatprep.subr.mxu0 0.0
      %4823 = vmatpush1.msra.mxu0 0.0
      %4824 = vmatprep.subr.mxu0 0.0
      %4825 = vmatpush1.msra.mxu0 0.0
      %4826 = vmatprep.subr.mxu0 0.0
      %4827 = vmatpush1.msra.mxu0 0.0
      %4828 = vmatprep.subr.mxu0 0.0
      %4829 = vmatpush1.msra.mxu0 0.0
      %4830 = vmatprep.subr.mxu0 0.0
      %4831 = vmatpush1.msra.mxu0 0.0
      %4832 = vmatprep.subr.mxu0 0.0
      %4833 = vmatpush1.msra.mxu0 0.0
      %4834 = vmatprep.subr.mxu0 0.0
      %4835 = vmatpush1.msra.mxu0 0.0
      %4836 = vmatprep.subr.mxu0 0.0
      %4837 = vmatpush1.msra.mxu0 0.0
      %4838 = vmatprep.subr.mxu0 0.0
      %4839 = vmatpush1.msra.mxu0 0.0
      %4840 = vmatprep.subr.mxu0 0.0
      %4841 = vmatpush1.msra.mxu0 0.0
      %4842 = vmatprep.subr.mxu0 0.0
      %4843 = vmatpush1.msra.mxu0 0.0
      %4844 = vmatprep.subr.mxu0 0.0
      %4845 = vmatpush1.msra.mxu0 0.0
      %4846 = vmatprep.subr.mxu0 0.0
      %4847 = vmatpush1.msra.mxu0 0.0
      %4848 = vmatprep.subr.mxu0 0.0
      %4849 = vmatpush1.msra.mxu0 0.0
      %4850 = vmatprep.subr.mxu0 0.0
      %4851 = vmatpush1.msra.mxu0 0.0
      %4852 = vmatprep.subr.mxu0 0.0
      %4853 = vmatpush1.msra.mxu0 0.0
      %4854 = vmatprep.subr.mxu0 0.0
      %4855 = vmatpush1.msra.mxu0 0.0
      %4856 = vmatprep.mubr.f32.mxu0 0.0
      %4857 = vmatmul.mubr.f32.gmra.mrb[0].mxu0 %v2682
      %v4858 = vpop.f32.mrb[0].mxu0
      %v4859 = vadd.f32 %v4790, %v4858
      %v4860 = vpop.f32.mrb[0].mxu0
      %4861 = vmatprep.mubr.f32.mxu0 0.0
      %4862 = vmatmul.mubr.f32.gmra.mrb[0].mxu0 %v2685
      %v4863 = vpop.f32.mrb[0].mxu0
      %v4864 = vadd.f32 %v4790, %v4863
      %v4865 = vpop.f32.mrb[0].mxu0
      %4866 = vmatprep.mubr.f32.mxu0 0.0
      %4867 = vmatmul.mubr.f32.gmra.mrb[0].mxu0 %v2688
      %v4868 = vpop.f32.mrb[0].mxu0
      %v4869 = vadd.f32 %v4790, %v4868
      %v4870 = vpop.f32.mrb[0].mxu0
      %4871 = vmatprep.mubr.f32.mxu0 0.0
      %4872 = vmatmul.mubr.f32.gmra.mrb[0].mxu0 %v2691
      %v4873 = vpop.f32.mrb[0].mxu0
      %v4874 = vadd.f32 %v4790, %v4873
      %v4875 = vpop.f32.mrb[0].mxu0
      %4876 = vmatprep.mubr.f32.mxu0 0.0
      %4877 = vmatmul.mubr.f32.gmra.mrb[0].mxu0 %v2694
      %v4878 = vpop.f32.mrb[0].mxu0
      %v4879 = vadd.f32 %v4790, %v4878
      %v4880 = vpop.f32.mrb[0].mxu0
      %4881 = vmatprep.mubr.f32.mxu0 0.0
      %4882 = vmatmul.mubr.f32.gmra.mrb[0].mxu0 %v2697
      %v4883 = vpop.f32.mrb[0].mxu0
      %v4884 = vadd.f32 %v4790, %v4883
      %v4885 = vpop.f32.mrb[0].mxu0
      %4886 = vmatprep.mubr.f32.mxu0 0.0
      %4887 = vmatmul.mubr.f32.gmra.mrb[0].mxu0 %v2700
      %v4888 = vpop.f32.mrb[0].mxu0
      %v4889 = vadd.f32 %v4790, %v4888
      %v4890 = vpop.f32.mrb[0].mxu0
      %4891 = vmatprep.mubr.f32.mxu0 0.0
      %4892 = vmatmul.mubr.f32.gmra.mrb[0].mxu0 %v2703
      %v4893 = vpop.f32.mrb[0].mxu0
      %v4894 = vadd.f32 %v4790, %v4893
      %v4895 = vpop.f32.mrb[0].mxu0
      %4896 = vmatprep.mubr.f32.mxu0 0.0
      %4897 = vmatmul.mubr.f32.gmra.mrb[0].mxu0 %v2706
      %v4898 = vpop.f32.mrb[0].mxu0
      %v4899 = vadd.f32 %v4790, %v4898
      %v4900 = vpop.f32.mrb[0].mxu0
      %4901 = vdwg.mxu0
      %v4903 = vsel %vm3060, %v4613, 0
      %v4906 = vsel %vm3060, %v4618, 0
      %v4909 = vsel %vm3060, %v4623, 0
      %v4912 = vsel %vm3060, %v4628, 0
      %v4915 = vsel %vm3060, %v4633, 0
      %v4918 = vsel %vm3060, %v4638, 0
      %v4921 = vsel %vm3060, %v4643, 0
      %v4924 = vsel %vm3060, %v4648, 0
      %v4927 = vsel %vm3060, %v4653, 0
      %v4930 = vsel %vm3060, %v4736, 0
      %v4933 = vsel %vm3060, %v4741, 0
      %v4936 = vsel %vm3060, %v4746, 0
      %v4939 = vsel %vm3060, %v4751, 0
      %v4942 = vsel %vm3060, %v4756, 0
      %v4945 = vsel %vm3060, %v4761, 0
      %v4948 = vsel %vm3060, %v4766, 0
      %v4951 = vsel %vm3060, %v4771, 0
      %v4954 = vsel %vm3060, %v4776, 0
      %4956 = vmatprep.subr.mxu0 0.0
      %4957 = vmatpush1.xpose.msra.mxu0 %v4930
      %4958 = vmatprep.subr.mxu0 0.0
      %4959 = vmatpush1.xpose.msra.mxu0 %v4933
      %4960 = vmatprep.subr.mxu0 0.0
      %4961 = vmatpush1.xpose.msra.mxu0 %v4936
      %4962 = vmatprep.subr.mxu0 0.0
      %4963 = vmatpush1.xpose.msra.mxu0 %v4939
      %4964 = vmatprep.subr.mxu0 0.0
      %4965 = vmatpush1.xpose.msra.mxu0 %v4942
      %4966 = vmatprep.subr.mxu0 0.0
      %4967 = vmatpush1.xpose.msra.mxu0 %v4945
      %4968 = vmatprep.subr.mxu0 0.0
      %4969 = vmatpush1.xpose.msra.mxu0 %v4948
      %4970 = vmatprep.subr.mxu0 0.0
      %4971 = vmatpush1.xpose.msra.mxu0 %v4951
      %4972 = vmatprep.subr.mxu0 0.0
      %4973 = vmatpush1.xpose.msra.mxu0 %v4954
      %4974 = vmatprep.subr.mxu0 0.0
      %4975 = vmatpush1.xpose.msra.mxu0 0.0
      %4976 = vmatprep.subr.mxu0 0.0
      %4977 = vmatpush1.xpose.msra.mxu0 0.0
      %4978 = vmatprep.subr.mxu0 0.0
      %4979 = vmatpush1.xpose.msra.mxu0 0.0
      %4980 = vmatprep.subr.mxu0 0.0
      %4981 = vmatpush1.xpose.msra.mxu0 0.0
      %4982 = vmatprep.subr.mxu0 0.0
      %4983 = vmatpush1.xpose.msra.mxu0 0.0
      %4984 = vmatprep.subr.mxu0 0.0
      %4985 = vmatpush1.xpose.msra.mxu0 0.0
      %4986 = vmatprep.subr.mxu0 0.0
      %4987 = vmatpush1.xpose.msra.mxu0 0.0
      %4988 = vmatprep.subr.mxu0 0.0
      %4989 = vmatpush1.xpose.msra.mxu0 0.0
      %4990 = vmatprep.subr.mxu0 0.0
      %4991 = vmatpush1.xpose.msra.mxu0 0.0
      %4992 = vmatprep.subr.mxu0 0.0
      %4993 = vmatpush1.xpose.msra.mxu0 0.0
      %4994 = vmatprep.subr.mxu0 0.0
      %4995 = vmatpush1.xpose.msra.mxu0 0.0
      %4996 = vmatprep.subr.mxu0 0.0
      %4997 = vmatpush1.xpose.msra.mxu0 0.0
      %4998 = vmatprep.subr.mxu0 0.0
      %4999 = vmatpush1.xpose.msra.mxu0 0.0
      %5000 = vmatprep.subr.mxu0 0.0
      %5001 = vmatpush1.xpose.msra.mxu0 0.0
      %5002 = vmatprep.subr.mxu0 0.0
      %5003 = vmatpush1.xpose.msra.mxu0 0.0
      %5004 = vmatprep.subr.mxu0 0.0
      %5005 = vmatpush1.xpose.msra.mxu0 0.0
      %5006 = vmatprep.subr.mxu0 0.0
      %5007 = vmatpush1.xpose.msra.mxu0 0.0
      %5008 = vmatprep.subr.mxu0 0.0
      %5009 = vmatpush1.xpose.msra.mxu0 0.0
      %5010 = vmatprep.subr.mxu0 0.0
      %5011 = vmatpush1.xpose.msra.mxu0 0.0
      %5012 = vmatprep.subr.mxu0 0.0
      %5013 = vmatpush1.xpose.msra.mxu0 0.0
      %5014 = vmatprep.subr.mxu0 0.0
      %5015 = vmatpush1.xpose.msra.mxu0 0.0
      %5016 = vmatprep.subr.mxu0 0.0
      %5017 = vmatpush1.xpose.msra.mxu0 0.0
      %5018 = vmatprep.subr.mxu0 0.0
      %5019 = vmatpush1.xpose.msra.mxu0 0.0
      %5020 = vmatprep.mubr.f32.mxu0 0.0
      %5021 = vmatmul.mubr.f32.gmra.mrb[0].mxu0 %v4903
      %v5022 = vpop.f32.mrb[0].mxu0
      %v5023 = vadd.f32 0.0, %v5022
      %v5024 = vpop.f32.mrb[0].mxu0
      %5025 = vmatprep.mubr.f32.mxu0 0.0
      %5026 = vmatmul.mubr.f32.gmra.mrb[0].mxu0 %v4906
      %v5027 = vpop.f32.mrb[0].mxu0
      %v5028 = vadd.f32 0.0, %v5027
      %v5029 = vpop.f32.mrb[0].mxu0
      %5030 = vmatprep.mubr.f32.mxu0 0.0
      %5031 = vmatmul.mubr.f32.gmra.mrb[0].mxu0 %v4909
      %v5032 = vpop.f32.mrb[0].mxu0
      %v5033 = vadd.f32 0.0, %v5032
      %v5034 = vpop.f32.mrb[0].mxu0
      %5035 = vmatprep.mubr.f32.mxu0 0.0
      %5036 = vmatmul.mubr.f32.gmra.mrb[0].mxu0 %v4912
      %v5037 = vpop.f32.mrb[0].mxu0
      %v5038 = vadd.f32 0.0, %v5037
      %v5039 = vpop.f32.mrb[0].mxu0
      %5040 = vmatprep.mubr.f32.mxu0 0.0
      %5041 = vmatmul.mubr.f32.gmra.mrb[0].mxu0 %v4915
      %v5042 = vpop.f32.mrb[0].mxu0
      %v5043 = vadd.f32 0.0, %v5042
      %v5044 = vpop.f32.mrb[0].mxu0
      %5045 = vmatprep.mubr.f32.mxu0 0.0
      %5046 = vmatmul.mubr.f32.gmra.mrb[0].mxu0 %v4918
      %v5047 = vpop.f32.mrb[0].mxu0
      %v5048 = vadd.f32 0.0, %v5047
      %v5049 = vpop.f32.mrb[0].mxu0
      %5050 = vmatprep.mubr.f32.mxu0 0.0
      %5051 = vmatmul.mubr.f32.gmra.mrb[0].mxu0 %v4921
      %v5052 = vpop.f32.mrb[0].mxu0
      %v5053 = vadd.f32 0.0, %v5052
      %v5054 = vpop.f32.mrb[0].mxu0
      %5055 = vmatprep.mubr.f32.mxu0 0.0
      %5056 = vmatmul.mubr.f32.gmra.mrb[0].mxu0 %v4924
      %v5057 = vpop.f32.mrb[0].mxu0
      %v5058 = vadd.f32 0.0, %v5057
      %v5059 = vpop.f32.mrb[0].mxu0
      %5060 = vmatprep.mubr.f32.mxu0 0.0
      %5061 = vmatmul.mubr.f32.gmra.mrb[0].mxu0 %v4927
      %v5062 = vpop.f32.mrb[0].mxu0
      %v5063 = vadd.f32 0.0, %v5062
      %v5064 = vpop.f32.mrb[0].mxu0
      %5065 = vdwg.mxu0
      %v5066 = vmul.f32 %v5023, 0.35355338
      %v5067 = vmul.f32 %v5028, 0.35355338
      %v5068 = vmul.f32 %v5033, 0.35355338
      %v5069 = vmul.f32 %v5038, 0.35355338
      %v5070 = vmul.f32 %v5043, 0.35355338
      %v5071 = vmul.f32 %v5048, 0.35355338
      %v5072 = vmul.f32 %v5053, 0.35355338
      %v5073 = vmul.f32 %v5058, 0.35355338
      %v5074 = vmul.f32 %v5063, 0.35355338
      %v5075 = vsel %vm3234, %v5066, -inf
      %5076 = vmax.xlane.f32.xlu0 %v5075
      %v5077 = vpop.xlane.xlu0 %5076
      %v5078 = vsel %vm3234, %v5067, -inf
      %5079 = vmax.xlane.f32.xlu0 %v5078
      %v5080 = vpop.xlane.xlu0 %5079
      %v5081 = vsel %vm3234, %v5068, -inf
      %5082 = vmax.xlane.f32.xlu0 %v5081
      %v5083 = vpop.xlane.xlu0 %5082
      %v5084 = vsel %vm3234, %v5069, -inf
      %5085 = vmax.xlane.f32.xlu0 %v5084
      %v5086 = vpop.xlane.xlu0 %5085
      %v5087 = vsel %vm3234, %v5070, -inf
      %5088 = vmax.xlane.f32.xlu0 %v5087
      %v5089 = vpop.xlane.xlu0 %5088
      %v5090 = vsel %vm3234, %v5071, -inf
      %5091 = vmax.xlane.f32.xlu0 %v5090
      %v5092 = vpop.xlane.xlu0 %5091
      %v5093 = vsel %vm3234, %v5072, -inf
      %5094 = vmax.xlane.f32.xlu0 %v5093
      %v5095 = vpop.xlane.xlu0 %5094
      %v5096 = vsel %vm3234, %v5073, -inf
      %5097 = vmax.xlane.f32.xlu0 %v5096
      %v5098 = vpop.xlane.xlu0 %5097
      %v5099 = vsel %vm3259, %v5074, -inf
      %5100 = vmax.xlane.f32.xlu0 %v5099
      %v5101 = vpop.xlane.xlu0 %5100
      %v5102 = vsub.f32 %v5066, %v5077
      %v5103 = vsub.f32 %v5067, %v5080
      %v5104 = vsub.f32 %v5068, %v5083
      %v5105 = vsub.f32 %v5069, %v5086
      %v5106 = vsub.f32 %v5070, %v5089
      %v5107 = vsub.f32 %v5071, %v5092
      %v5108 = vsub.f32 %v5072, %v5095
      %v5109 = vsub.f32 %v5073, %v5098
      %v5110 = vsub.f32 %v5074, %v5101
      %v5111 = vmul.f32 %v5102, 1.442695
      %v5112 = vpow.pop %v5111
      %v5113 = vmul.f32 %v5103, 1.442695
      %v5114 = vpow.pop %v5113
      %v5115 = vmul.f32 %v5104, 1.442695
      %v5116 = vpow.pop %v5115
      %v5117 = vmul.f32 %v5105, 1.442695
      %v5118 = vpow.pop %v5117
      %v5119 = vmul.f32 %v5106, 1.442695
      %v5120 = vpow.pop %v5119
      %v5121 = vmul.f32 %v5107, 1.442695
      %v5122 = vpow.pop %v5121
      %v5123 = vmul.f32 %v5108, 1.442695
      %v5124 = vpow.pop %v5123
      %v5125 = vmul.f32 %v5109, 1.442695
      %v5126 = vpow.pop %v5125
      %v5127 = vmul.f32 %v5110, 1.442695
      %v5128 = vpow.pop %v5127
      %v5129 = vsel %vm3234, %v5112, 0.0
      %5130 = vadd.xlane.f32.xlu0 %v5129
      %v5131 = vpop.xlane.xlu0 %5130
      %v5132 = vsel %vm3234, %v5114, 0.0
      %5133 = vadd.xlane.f32.xlu0 %v5132
      %v5134 = vpop.xlane.xlu0 %5133
      %v5135 = vsel %vm3234, %v5116, 0.0
      %5136 = vadd.xlane.f32.xlu0 %v5135
      %v5137 = vpop.xlane.xlu0 %5136
      %v5138 = vsel %vm3234, %v5118, 0.0
      %5139 = vadd.xlane.f32.xlu0 %v5138
      %v5140 = vpop.xlane.xlu0 %5139
      %v5141 = vsel %vm3234, %v5120, 0.0
      %5142 = vadd.xlane.f32.xlu0 %v5141
      %v5143 = vpop.xlane.xlu0 %5142
      %v5144 = vsel %vm3234, %v5122, 0.0
      %5145 = vadd.xlane.f32.xlu0 %v5144
      %v5146 = vpop.xlane.xlu0 %5145
      %v5147 = vsel %vm3234, %v5124, 0.0
      %5148 = vadd.xlane.f32.xlu0 %v5147
      %v5149 = vpop.xlane.xlu0 %5148
      %v5150 = vsel %vm3234, %v5126, 0.0
      %5151 = vadd.xlane.f32.xlu0 %v5150
      %v5152 = vpop.xlane.xlu0 %5151
      %v5153 = vsel %vm3259, %v5128, 0.0
      %5154 = vadd.xlane.f32.xlu0 %v5153
      %v5155 = vpop.xlane.xlu0 %5154
      %v5156 = vrcp.pop %v5131
      %v5157 = vmul.f32 %v5112, %v5156
      %v5158 = vrcp.pop %v5134
      %v5159 = vmul.f32 %v5114, %v5158
      %v5160 = vrcp.pop %v5137
      %v5161 = vmul.f32 %v5116, %v5160
      %v5162 = vrcp.pop %v5140
      %v5163 = vmul.f32 %v5118, %v5162
      %v5164 = vrcp.pop %v5143
      %v5165 = vmul.f32 %v5120, %v5164
      %v5166 = vrcp.pop %v5146
      %v5167 = vmul.f32 %v5122, %v5166
      %v5168 = vrcp.pop %v5149
      %v5169 = vmul.f32 %v5124, %v5168
      %v5170 = vrcp.pop %v5152
      %v5171 = vmul.f32 %v5126, %v5170
      %v5172 = vrcp.pop %v5155
      %v5173 = vmul.f32 %v5128, %v5172
      %v5175 = vsel %vm3234, %v5157, 0
      %v5178 = vsel %vm3234, %v5159, 0
      %v5181 = vsel %vm3234, %v5161, 0
      %v5184 = vsel %vm3234, %v5163, 0
      %v5187 = vsel %vm3234, %v5165, 0
      %v5190 = vsel %vm3234, %v5167, 0
      %v5193 = vsel %vm3234, %v5169, 0
      %v5196 = vsel %vm3234, %v5171, 0
      %v5199 = vsel %vm3234, %v5173, 0
      %v5202 = vsel %vm2126, %v4899, 0
      %5204 = vmatprep.subr.mxu0 0.0
      %5205 = vmatpush1.msra.mxu0 %v4859
      %5206 = vmatprep.subr.mxu0 0.0
      %5207 = vmatpush1.msra.mxu0 %v4864
      %5208 = vmatprep.subr.mxu0 0.0
      %5209 = vmatpush1.msra.mxu0 %v4869
      %5210 = vmatprep.subr.mxu0 0.0
      %5211 = vmatpush1.msra.mxu0 %v4874
      %5212 = vmatprep.subr.mxu0 0.0
      %5213 = vmatpush1.msra.mxu0 %v4879
      %5214 = vmatprep.subr.mxu0 0.0
      %5215 = vmatpush1.msra.mxu0 %v4884
      %5216 = vmatprep.subr.mxu0 0.0
      %5217 = vmatpush1.msra.mxu0 %v4889
      %5218 = vmatprep.subr.mxu0 0.0
      %5219 = vmatpush1.msra.mxu0 %v4894
      %5220 = vmatprep.subr.mxu0 0.0
      %5221 = vmatpush1.msra.mxu0 %v5202
      %5222 = vmatprep.subr.mxu0 0.0
      %5223 = vmatpush1.msra.mxu0 0.0
      %5224 = vmatprep.subr.mxu0 0.0
      %5225 = vmatpush1.msra.mxu0 0.0
      %5226 = vmatprep.subr.mxu0 0.0
      %5227 = vmatpush1.msra.mxu0 0.0
      %5228 = vmatprep.subr.mxu0 0.0
      %5229 = vmatpush1.msra.mxu0 0.0
      %5230 = vmatprep.subr.mxu0 0.0
      %5231 = vmatpush1.msra.mxu0 0.0
      %5232 = vmatprep.subr.mxu0 0.0
      %5233 = vmatpush1.msra.mxu0 0.0
      %5234 = vmatprep.subr.mxu0 0.0
      %5235 = vmatpush1.msra.mxu0 0.0
      %5236 = vmatprep.subr.mxu0 0.0
      %5237 = vmatpush1.msra.mxu0 0.0
      %5238 = vmatprep.subr.mxu0 0.0
      %5239 = vmatpush1.msra.mxu0 0.0
      %5240 = vmatprep.subr.mxu0 0.0
      %5241 = vmatpush1.msra.mxu0 0.0
      %5242 = vmatprep.subr.mxu0 0.0
      %5243 = vmatpush1.msra.mxu0 0.0
      %5244 = vmatprep.subr.mxu0 0.0
      %5245 = vmatpush1.msra.mxu0 0.0
      %5246 = vmatprep.subr.mxu0 0.0
      %5247 = vmatpush1.msra.mxu0 0.0
      %5248 = vmatprep.subr.mxu0 0.0
      %5249 = vmatpush1.msra.mxu0 0.0
      %5250 = vmatprep.subr.mxu0 0.0
      %5251 = vmatpush1.msra.mxu0 0.0
      %5252 = vmatprep.subr.mxu0 0.0
      %5253 = vmatpush1.msra.mxu0 0.0
      %5254 = vmatprep.subr.mxu0 0.0
      %5255 = vmatpush1.msra.mxu0 0.0
      %5256 = vmatprep.subr.mxu0 0.0
      %5257 = vmatpush1.msra.mxu0 0.0
      %5258 = vmatprep.subr.mxu0 0.0
      %5259 = vmatpush1.msra.mxu0 0.0
      %5260 = vmatprep.subr.mxu0 0.0
      %5261 = vmatpush1.msra.mxu0 0.0
      %5262 = vmatprep.subr.mxu0 0.0
      %5263 = vmatpush1.msra.mxu0 0.0
      %5264 = vmatprep.subr.mxu0 0.0
      %5265 = vmatpush1.msra.mxu0 0.0
      %5266 = vmatprep.subr.mxu0 0.0
      %5267 = vmatpush1.msra.mxu0 0.0
      %5268 = vmatprep.mubr.f32.mxu0 0.0
      %5269 = vmatmul.mubr.f32.gmra.mrb[0].mxu0 %v5175
      %v5270 = vpop.f32.mrb[0].mxu0
      %v5271 = vadd.f32 0.0, %v5270
      %v5272 = vpop.f32.mrb[0].mxu0
      %5273 = vmatprep.mubr.f32.mxu0 0.0
      %5274 = vmatmul.mubr.f32.gmra.mrb[0].mxu0 %v5178
      %v5275 = vpop.f32.mrb[0].mxu0
      %v5276 = vadd.f32 0.0, %v5275
      %v5277 = vpop.f32.mrb[0].mxu0
      %5278 = vmatprep.mubr.f32.mxu0 0.0
      %5279 = vmatmul.mubr.f32.gmra.mrb[0].mxu0 %v5181
      %v5280 = vpop.f32.mrb[0].mxu0
      %v5281 = vadd.f32 0.0, %v5280
      %v5282 = vpop.f32.mrb[0].mxu0
      %5283 = vmatprep.mubr.f32.mxu0 0.0
      %5284 = vmatmul.mubr.f32.gmra.mrb[0].mxu0 %v5184
      %v5285 = vpop.f32.mrb[0].mxu0
      %v5286 = vadd.f32 0.0, %v5285
      %v5287 = vpop.f32.mrb[0].mxu0
      %5288 = vmatprep.mubr.f32.mxu0 0.0
      %5289 = vmatmul.mubr.f32.gmra.mrb[0].mxu0 %v5187
      %v5290 = vpop.f32.mrb[0].mxu0
      %v5291 = vadd.f32 0.0, %v5290
      %v5292 = vpop.f32.mrb[0].mxu0
      %5293 = vmatprep.mubr.f32.mxu0 0.0
      %5294 = vmatmul.mubr.f32.gmra.mrb[0].mxu0 %v5190
      %v5295 = vpop.f32.mrb[0].mxu0
      %v5296 = vadd.f32 0.0, %v5295
      %v5297 = vpop.f32.mrb[0].mxu0
      %5298 = vmatprep.mubr.f32.mxu0 0.0
      %5299 = vmatmul.mubr.f32.gmra.mrb[0].mxu0 %v5193
      %v5300 = vpop.f32.mrb[0].mxu0
      %v5301 = vadd.f32 0.0, %v5300
      %v5302 = vpop.f32.mrb[0].mxu0
      %5303 = vmatprep.mubr.f32.mxu0 0.0
      %5304 = vmatmul.mubr.f32.gmra.mrb[0].mxu0 %v5196
      %v5305 = vpop.f32.mrb[0].mxu0
      %v5306 = vadd.f32 0.0, %v5305
      %v5307 = vpop.f32.mrb[0].mxu0
      %5308 = vmatprep.mubr.f32.mxu0 0.0
      %5309 = vmatmul.mubr.f32.gmra.mrb[0].mxu0 %v5199
      %v5310 = vpop.f32.mrb[0].mxu0
      %v5311 = vadd.f32 0.0, %v5310
      %v5312 = vpop.f32.mrb[0].mxu0
      %5313 = vdwg.mxu0
      %s5314 = scalar_lea.vmem %s10, 16
      %v5315 = vld [vmem:[%s5314] sm:$0xff]
      %v5317 = vsel %vm3060, %v5271, 0
      %v5320 = vsel %vm3060, %v5276, 0
      %v5323 = vsel %vm3060, %v5281, 0
      %v5326 = vsel %vm3060, %v5286, 0
      %v5329 = vsel %vm3060, %v5291, 0
      %v5332 = vsel %vm3060, %v5296, 0
      %v5335 = vsel %vm3060, %v5301, 0
      %v5338 = vsel %vm3060, %v5306, 0
      %v5341 = vsel %vm3060, %v5311, 0
      %5343 = vmatprep.subr.mxu0 0.0
      %5344 = vmatpush1.msra.mxu0 %v5315
      %5345 = vmatprep.subr.mxu0 0.0
      %5346 = vmatpush1.msra.mxu0 0.0
      %5347 = vmatprep.subr.mxu0 0.0
      %5348 = vmatpush1.msra.mxu0 0.0
      %5349 = vmatprep.subr.mxu0 0.0
      %5350 = vmatpush1.msra.mxu0 0.0
      %5351 = vmatprep.subr.mxu0 0.0
      %5352 = vmatpush1.msra.mxu0 0.0
      %5353 = vmatprep.subr.mxu0 0.0
      %5354 = vmatpush1.msra.mxu0 0.0
      %5355 = vmatprep.subr.mxu0 0.0
      %5356 = vmatpush1.msra.mxu0 0.0
      %5357 = vmatprep.subr.mxu0 0.0
      %5358 = vmatpush1.msra.mxu0 0.0
      %5359 = vmatprep.subr.mxu0 0.0
      %5360 = vmatpush1.msra.mxu0 0.0
      %5361 = vmatprep.subr.mxu0 0.0
      %5362 = vmatpush1.msra.mxu0 0.0
      %5363 = vmatprep.subr.mxu0 0.0
      %5364 = vmatpush1.msra.mxu0 0.0
      %5365 = vmatprep.subr.mxu0 0.0
      %5366 = vmatpush1.msra.mxu0 0.0
      %5367 = vmatprep.subr.mxu0 0.0
      %5368 = vmatpush1.msra.mxu0 0.0
      %5369 = vmatprep.subr.mxu0 0.0
      %5370 = vmatpush1.msra.mxu0 0.0
      %5371 = vmatprep.subr.mxu0 0.0
      %5372 = vmatpush1.msra.mxu0 0.0
      %5373 = vmatprep.subr.mxu0 0.0
      %5374 = vmatpush1.msra.mxu0 0.0
      %5375 = vmatprep.subr.mxu0 0.0
      %5376 = vmatpush1.msra.mxu0 0.0
      %5377 = vmatprep.subr.mxu0 0.0
      %5378 = vmatpush1.msra.mxu0 0.0
      %5379 = vmatprep.subr.mxu0 0.0
      %5380 = vmatpush1.msra.mxu0 0.0
      %5381 = vmatprep.subr.mxu0 0.0
      %5382 = vmatpush1.msra.mxu0 0.0
      %5383 = vmatprep.subr.mxu0 0.0
      %5384 = vmatpush1.msra.mxu0 0.0
      %5385 = vmatprep.subr.mxu0 0.0
      %5386 = vmatpush1.msra.mxu0 0.0
      %5387 = vmatprep.subr.mxu0 0.0
      %5388 = vmatpush1.msra.mxu0 0.0
      %5389 = vmatprep.subr.mxu0 0.0
      %5390 = vmatpush1.msra.mxu0 0.0
      %5391 = vmatprep.subr.mxu0 0.0
      %5392 = vmatpush1.msra.mxu0 0.0
      %5393 = vmatprep.subr.mxu0 0.0
      %5394 = vmatpush1.msra.mxu0 0.0
      %5395 = vmatprep.subr.mxu0 0.0
      %5396 = vmatpush1.msra.mxu0 0.0
      %5397 = vmatprep.subr.mxu0 0.0
      %5398 = vmatpush1.msra.mxu0 0.0
      %5399 = vmatprep.subr.mxu0 0.0
      %5400 = vmatpush1.msra.mxu0 0.0
      %5401 = vmatprep.subr.mxu0 0.0
      %5402 = vmatpush1.msra.mxu0 0.0
      %5403 = vmatprep.subr.mxu0 0.0
      %5404 = vmatpush1.msra.mxu0 0.0
      %5405 = vmatprep.subr.mxu0 0.0
      %5406 = vmatpush1.msra.mxu0 0.0
      %5407 = vmatprep.mubr.f32.mxu0 0.0
      %5408 = vmatmul.mubr.f32.gmra.mrb[0].mxu0 %v5317
      %v5409 = vpop.f32.mrb[0].mxu0
      %v5410 = vadd.f32 0.0, %v5409
      %v5411 = vpop.f32.mrb[0].mxu0
      %5412 = vmatprep.mubr.f32.mxu0 0.0
      %5413 = vmatmul.mubr.f32.gmra.mrb[0].mxu0 %v5320
      %v5414 = vpop.f32.mrb[0].mxu0
      %v5415 = vadd.f32 0.0, %v5414
      %v5416 = vpop.f32.mrb[0].mxu0
      %5417 = vmatprep.mubr.f32.mxu0 0.0
      %5418 = vmatmul.mubr.f32.gmra.mrb[0].mxu0 %v5323
      %v5419 = vpop.f32.mrb[0].mxu0
      %v5420 = vadd.f32 0.0, %v5419
      %v5421 = vpop.f32.mrb[0].mxu0
      %5422 = vmatprep.mubr.f32.mxu0 0.0
      %5423 = vmatmul.mubr.f32.gmra.mrb[0].mxu0 %v5326
      %v5424 = vpop.f32.mrb[0].mxu0
      %v5425 = vadd.f32 0.0, %v5424
      %v5426 = vpop.f32.mrb[0].mxu0
      %5427 = vmatprep.mubr.f32.mxu0 0.0
      %5428 = vmatmul.mubr.f32.gmra.mrb[0].mxu0 %v5329
      %v5429 = vpop.f32.mrb[0].mxu0
      %v5430 = vadd.f32 0.0, %v5429
      %v5431 = vpop.f32.mrb[0].mxu0
      %5432 = vmatprep.mubr.f32.mxu0 0.0
      %5433 = vmatmul.mubr.f32.gmra.mrb[0].mxu0 %v5332
      %v5434 = vpop.f32.mrb[0].mxu0
      %v5435 = vadd.f32 0.0, %v5434
      %v5436 = vpop.f32.mrb[0].mxu0
      %5437 = vmatprep.mubr.f32.mxu0 0.0
      %5438 = vmatmul.mubr.f32.gmra.mrb[0].mxu0 %v5335
      %v5439 = vpop.f32.mrb[0].mxu0
      %v5440 = vadd.f32 0.0, %v5439
      %v5441 = vpop.f32.mrb[0].mxu0
      %5442 = vmatprep.mubr.f32.mxu0 0.0
      %5443 = vmatmul.mubr.f32.gmra.mrb[0].mxu0 %v5338
      %v5444 = vpop.f32.mrb[0].mxu0
      %v5445 = vadd.f32 0.0, %v5444
      %v5446 = vpop.f32.mrb[0].mxu0
      %5447 = vmatprep.mubr.f32.mxu0 0.0
      %5448 = vmatmul.mubr.f32.gmra.mrb[0].mxu0 %v5341
      %v5449 = vpop.f32.mrb[0].mxu0
      %v5450 = vadd.f32 0.0, %v5449
      %v5451 = vpop.f32.mrb[0].mxu0
      %5452 = vdwg.mxu0
      %v5453 = vadd.f32 %v4490, %v5410
      %v5454 = vadd.f32 %v4495, %v5415
      %v5455 = vadd.f32 %v4500, %v5420
      %v5456 = vadd.f32 %v4505, %v5425
      %v5457 = vadd.f32 %v4510, %v5430
      %v5458 = vadd.f32 %v4515, %v5435
      %v5459 = vadd.f32 %v4520, %v5440
      %v5460 = vadd.f32 %v4525, %v5445
      %v5461 = vadd.f32 %v4530, %v5450
      %s5462 = scalar_lea.vmem %s4, 96
      %v5463 = vld [vmem:[%s5462] sm:$0xff]
      %v5464 = vld [vmem:[%s5462 + $0x8] sm:$0xff]
      %v5465 = vld [vmem:[%s5462 + $0x10] sm:$0xff]
      %v5466 = vld [vmem:[%s5462 + $0x18] sm:$0xff]
      %s5467 = scalar_lea.vmem %s5, 3
      %v5468 = vld [vmem:[%s5467] sm:$0x1]
      %v5470 = vlaneseq
      %v5471 = vshrl.u32 %v5470, 7
      %v5472 = vsub.s32 0, %v5471
      %v5473 = vrot.slane %v5468, %v5472
      %5475 = vmatprep.subr.mxu0 0.0
      %5476 = vmatpush1.msra.mxu0 %v5463
      %5477 = vmatprep.subr.mxu0 0.0
      %5478 = vmatpush1.msra.mxu0 %v5464
      %5479 = vmatprep.subr.mxu0 0.0
      %5480 = vmatpush1.msra.mxu0 %v5465
      %5481 = vmatprep.subr.mxu0 0.0
      %5482 = vmatpush1.msra.mxu0 %v5466
      %5483 = vmatprep.subr.mxu0 0.0
      %5484 = vmatpush1.msra.mxu0 0.0
      %5485 = vmatprep.subr.mxu0 0.0
      %5486 = vmatpush1.msra.mxu0 0.0
      %5487 = vmatprep.subr.mxu0 0.0
      %5488 = vmatpush1.msra.mxu0 0.0
      %5489 = vmatprep.subr.mxu0 0.0
      %5490 = vmatpush1.msra.mxu0 0.0
      %5491 = vmatprep.subr.mxu0 0.0
      %5492 = vmatpush1.msra.mxu0 0.0
      %5493 = vmatprep.subr.mxu0 0.0
      %5494 = vmatpush1.msra.mxu0 0.0
      %5495 = vmatprep.subr.mxu0 0.0
      %5496 = vmatpush1.msra.mxu0 0.0
      %5497 = vmatprep.subr.mxu0 0.0
      %5498 = vmatpush1.msra.mxu0 0.0
      %5499 = vmatprep.subr.mxu0 0.0
      %5500 = vmatpush1.msra.mxu0 0.0
      %5501 = vmatprep.subr.mxu0 0.0
      %5502 = vmatpush1.msra.mxu0 0.0
      %5503 = vmatprep.subr.mxu0 0.0
      %5504 = vmatpush1.msra.mxu0 0.0
      %5505 = vmatprep.subr.mxu0 0.0
      %5506 = vmatpush1.msra.mxu0 0.0
      %5507 = vmatprep.subr.mxu0 0.0
      %5508 = vmatpush1.msra.mxu0 0.0
      %5509 = vmatprep.subr.mxu0 0.0
      %5510 = vmatpush1.msra.mxu0 0.0
      %5511 = vmatprep.subr.mxu0 0.0
      %5512 = vmatpush1.msra.mxu0 0.0
      %5513 = vmatprep.subr.mxu0 0.0
      %5514 = vmatpush1.msra.mxu0 0.0
      %5515 = vmatprep.subr.mxu0 0.0
      %5516 = vmatpush1.msra.mxu0 0.0
      %5517 = vmatprep.subr.mxu0 0.0
      %5518 = vmatpush1.msra.mxu0 0.0
      %5519 = vmatprep.subr.mxu0 0.0
      %5520 = vmatpush1.msra.mxu0 0.0
      %5521 = vmatprep.subr.mxu0 0.0
      %5522 = vmatpush1.msra.mxu0 0.0
      %5523 = vmatprep.subr.mxu0 0.0
      %5524 = vmatpush1.msra.mxu0 0.0
      %5525 = vmatprep.subr.mxu0 0.0
      %5526 = vmatpush1.msra.mxu0 0.0
      %5527 = vmatprep.subr.mxu0 0.0
      %5528 = vmatpush1.msra.mxu0 0.0
      %5529 = vmatprep.subr.mxu0 0.0
      %5530 = vmatpush1.msra.mxu0 0.0
      %5531 = vmatprep.subr.mxu0 0.0
      %5532 = vmatpush1.msra.mxu0 0.0
      %5533 = vmatprep.subr.mxu0 0.0
      %5534 = vmatpush1.msra.mxu0 0.0
      %5535 = vmatprep.subr.mxu0 0.0
      %5536 = vmatpush1.msra.mxu0 0.0
      %5537 = vmatprep.subr.mxu0 0.0
      %5538 = vmatpush1.msra.mxu0 0.0
      %5539 = vmatprep.mubr.f32.mxu0 0.0
      %5540 = vmatmul.mubr.f32.gmra.mrb[0].mxu0 %v2682
      %v5541 = vpop.f32.mrb[0].mxu0
      %v5542 = vadd.f32 %v5473, %v5541
      %v5543 = vpop.f32.mrb[0].mxu0
      %5544 = vmatprep.mubr.f32.mxu0 0.0
      %5545 = vmatmul.mubr.f32.gmra.mrb[0].mxu0 %v2685
      %v5546 = vpop.f32.mrb[0].mxu0
      %v5547 = vadd.f32 %v5473, %v5546
      %v5548 = vpop.f32.mrb[0].mxu0
      %5549 = vmatprep.mubr.f32.mxu0 0.0
      %5550 = vmatmul.mubr.f32.gmra.mrb[0].mxu0 %v2688
      %v5551 = vpop.f32.mrb[0].mxu0
      %v5552 = vadd.f32 %v5473, %v5551
      %v5553 = vpop.f32.mrb[0].mxu0
      %5554 = vmatprep.mubr.f32.mxu0 0.0
      %5555 = vmatmul.mubr.f32.gmra.mrb[0].mxu0 %v2691
      %v5556 = vpop.f32.mrb[0].mxu0
      %v5557 = vadd.f32 %v5473, %v5556
      %v5558 = vpop.f32.mrb[0].mxu0
      %5559 = vmatprep.mubr.f32.mxu0 0.0
      %5560 = vmatmul.mubr.f32.gmra.mrb[0].mxu0 %v2694
      %v5561 = vpop.f32.mrb[0].mxu0
      %v5562 = vadd.f32 %v5473, %v5561
      %v5563 = vpop.f32.mrb[0].mxu0
      %5564 = vmatprep.mubr.f32.mxu0 0.0
      %5565 = vmatmul.mubr.f32.gmra.mrb[0].mxu0 %v2697
      %v5566 = vpop.f32.mrb[0].mxu0
      %v5567 = vadd.f32 %v5473, %v5566
      %v5568 = vpop.f32.mrb[0].mxu0
      %5569 = vmatprep.mubr.f32.mxu0 0.0
      %5570 = vmatmul.mubr.f32.gmra.mrb[0].mxu0 %v2700
      %v5571 = vpop.f32.mrb[0].mxu0
      %v5572 = vadd.f32 %v5473, %v5571
      %v5573 = vpop.f32.mrb[0].mxu0
      %5574 = vmatprep.mubr.f32.mxu0 0.0
      %5575 = vmatmul.mubr.f32.gmra.mrb[0].mxu0 %v2703
      %v5576 = vpop.f32.mrb[0].mxu0
      %v5577 = vadd.f32 %v5473, %v5576
      %v5578 = vpop.f32.mrb[0].mxu0
      %5579 = vmatprep.mubr.f32.mxu0 0.0
      %5580 = vmatmul.mubr.f32.gmra.mrb[0].mxu0 %v2706
      %v5581 = vpop.f32.mrb[0].mxu0
      %v5582 = vadd.f32 %v5473, %v5581
      %v5583 = vpop.f32.mrb[0].mxu0
      %5584 = vdwg.mxu0
      %s5585 = scalar_lea.vmem %s6, 96
      %v5586 = vld [vmem:[%s5585] sm:$0xff]
      %v5587 = vld [vmem:[%s5585 + $0x8] sm:$0xff]
      %v5588 = vld [vmem:[%s5585 + $0x10] sm:$0xff]
      %v5589 = vld [vmem:[%s5585 + $0x18] sm:$0xff]
      %s5590 = scalar_lea.vmem %s7, 3
      %v5591 = vld [vmem:[%s5590] sm:$0x1]
      %v5593 = vlaneseq
      %v5594 = vshrl.u32 %v5593, 7
      %v5595 = vsub.s32 0, %v5594
      %v5596 = vrot.slane %v5591, %v5595
      %5598 = vmatprep.subr.mxu0 0.0
      %5599 = vmatpush1.msra.mxu0 %v5586
      %5600 = vmatprep.subr.mxu0 0.0
      %5601 = vmatpush1.msra.mxu0 %v5587
      %5602 = vmatprep.subr.mxu0 0.0
      %5603 = vmatpush1.msra.mxu0 %v5588
      %5604 = vmatprep.subr.mxu0 0.0
      %5605 = vmatpush1.msra.mxu0 %v5589
      %5606 = vmatprep.subr.mxu0 0.0
      %5607 = vmatpush1.msra.mxu0 0.0
      %5608 = vmatprep.subr.mxu0 0.0
      %5609 = vmatpush1.msra.mxu0 0.0
      %5610 = vmatprep.subr.mxu0 0.0
      %5611 = vmatpush1.msra.mxu0 0.0
      %5612 = vmatprep.subr.mxu0 0.0
      %5613 = vmatpush1.msra.mxu0 0.0
      %5614 = vmatprep.subr.mxu0 0.0
      %5615 = vmatpush1.msra.mxu0 0.0
      %5616 = vmatprep.subr.mxu0 0.0
      %5617 = vmatpush1.msra.mxu0 0.0
      %5618 = vmatprep.subr.mxu0 0.0
      %5619 = vmatpush1.msra.mxu0 0.0
      %5620 = vmatprep.subr.mxu0 0.0
      %5621 = vmatpush1.msra.mxu0 0.0
      %5622 = vmatprep.subr.mxu0 0.0
      %5623 = vmatpush1.msra.mxu0 0.0
      %5624 = vmatprep.subr.mxu0 0.0
      %5625 = vmatpush1.msra.mxu0 0.0
      %5626 = vmatprep.subr.mxu0 0.0
      %5627 = vmatpush1.msra.mxu0 0.0
      %5628 = vmatprep.subr.mxu0 0.0
      %5629 = vmatpush1.msra.mxu0 0.0
      %5630 = vmatprep.subr.mxu0 0.0
      %5631 = vmatpush1.msra.mxu0 0.0
      %5632 = vmatprep.subr.mxu0 0.0
      %5633 = vmatpush1.msra.mxu0 0.0
      %5634 = vmatprep.subr.mxu0 0.0
      %5635 = vmatpush1.msra.mxu0 0.0
      %5636 = vmatprep.subr.mxu0 0.0
      %5637 = vmatpush1.msra.mxu0 0.0
      %5638 = vmatprep.subr.mxu0 0.0
      %5639 = vmatpush1.msra.mxu0 0.0
      %5640 = vmatprep.subr.mxu0 0.0
      %5641 = vmatpush1.msra.mxu0 0.0
      %5642 = vmatprep.subr.mxu0 0.0
      %5643 = vmatpush1.msra.mxu0 0.0
      %5644 = vmatprep.subr.mxu0 0.0
      %5645 = vmatpush1.msra.mxu0 0.0
      %5646 = vmatprep.subr.mxu0 0.0
      %5647 = vmatpush1.msra.mxu0 0.0
      %5648 = vmatprep.subr.mxu0 0.0
      %5649 = vmatpush1.msra.mxu0 0.0
      %5650 = vmatprep.subr.mxu0 0.0
      %5651 = vmatpush1.msra.mxu0 0.0
      %5652 = vmatprep.subr.mxu0 0.0
      %5653 = vmatpush1.msra.mxu0 0.0
      %5654 = vmatprep.subr.mxu0 0.0
      %5655 = vmatpush1.msra.mxu0 0.0
      %5656 = vmatprep.subr.mxu0 0.0
      %5657 = vmatpush1.msra.mxu0 0.0
      %5658 = vmatprep.subr.mxu0 0.0
      %5659 = vmatpush1.msra.mxu0 0.0
      %5660 = vmatprep.subr.mxu0 0.0
      %5661 = vmatpush1.msra.mxu0 0.0
      %5662 = vmatprep.mubr.f32.mxu0 0.0
      %5663 = vmatmul.mubr.f32.gmra.mrb[0].mxu0 %v2682
      %v5664 = vpop.f32.mrb[0].mxu0
      %v5665 = vadd.f32 %v5596, %v5664
      %v5666 = vpop.f32.mrb[0].mxu0
      %5667 = vmatprep.mubr.f32.mxu0 0.0
      %5668 = vmatmul.mubr.f32.gmra.mrb[0].mxu0 %v2685
      %v5669 = vpop.f32.mrb[0].mxu0
      %v5670 = vadd.f32 %v5596, %v5669
      %v5671 = vpop.f32.mrb[0].mxu0
      %5672 = vmatprep.mubr.f32.mxu0 0.0
      %5673 = vmatmul.mubr.f32.gmra.mrb[0].mxu0 %v2688
      %v5674 = vpop.f32.mrb[0].mxu0
      %v5675 = vadd.f32 %v5596, %v5674
      %v5676 = vpop.f32.mrb[0].mxu0
      %5677 = vmatprep.mubr.f32.mxu0 0.0
      %5678 = vmatmul.mubr.f32.gmra.mrb[0].mxu0 %v2691
      %v5679 = vpop.f32.mrb[0].mxu0
      %v5680 = vadd.f32 %v5596, %v5679
      %v5681 = vpop.f32.mrb[0].mxu0
      %5682 = vmatprep.mubr.f32.mxu0 0.0
      %5683 = vmatmul.mubr.f32.gmra.mrb[0].mxu0 %v2694
      %v5684 = vpop.f32.mrb[0].mxu0
      %v5685 = vadd.f32 %v5596, %v5684
      %v5686 = vpop.f32.mrb[0].mxu0
      %5687 = vmatprep.mubr.f32.mxu0 0.0
      %5688 = vmatmul.mubr.f32.gmra.mrb[0].mxu0 %v2697
      %v5689 = vpop.f32.mrb[0].mxu0
      %v5690 = vadd.f32 %v5596, %v5689
      %v5691 = vpop.f32.mrb[0].mxu0
      %5692 = vmatprep.mubr.f32.mxu0 0.0
      %5693 = vmatmul.mubr.f32.gmra.mrb[0].mxu0 %v2700
      %v5694 = vpop.f32.mrb[0].mxu0
      %v5695 = vadd.f32 %v5596, %v5694
      %v5696 = vpop.f32.mrb[0].mxu0
      %5697 = vmatprep.mubr.f32.mxu0 0.0
      %5698 = vmatmul.mubr.f32.gmra.mrb[0].mxu0 %v2703
      %v5699 = vpop.f32.mrb[0].mxu0
      %v5700 = vadd.f32 %v5596, %v5699
      %v5701 = vpop.f32.mrb[0].mxu0
      %5702 = vmatprep.mubr.f32.mxu0 0.0
      %5703 = vmatmul.mubr.f32.gmra.mrb[0].mxu0 %v2706
      %v5704 = vpop.f32.mrb[0].mxu0
      %v5705 = vadd.f32 %v5596, %v5704
      %v5706 = vpop.f32.mrb[0].mxu0
      %5707 = vdwg.mxu0
      %s5708 = scalar_lea.vmem %s8, 96
      %v5709 = vld [vmem:[%s5708] sm:$0xff]
      %v5710 = vld [vmem:[%s5708 + $0x8] sm:$0xff]
      %v5711 = vld [vmem:[%s5708 + $0x10] sm:$0xff]
      %v5712 = vld [vmem:[%s5708 + $0x18] sm:$0xff]
      %s5713 = scalar_lea.vmem %s9, 3
      %v5714 = vld [vmem:[%s5713] sm:$0x1]
      %v5716 = vlaneseq
      %v5717 = vshrl.u32 %v5716, 7
      %v5718 = vsub.s32 0, %v5717
      %v5719 = vrot.slane %v5714, %v5718
      %5721 = vmatprep.subr.mxu0 0.0
      %5722 = vmatpush1.msra.mxu0 %v5709
      %5723 = vmatprep.subr.mxu0 0.0
      %5724 = vmatpush1.msra.mxu0 %v5710
      %5725 = vmatprep.subr.mxu0 0.0
      %5726 = vmatpush1.msra.mxu0 %v5711
      %5727 = vmatprep.subr.mxu0 0.0
      %5728 = vmatpush1.msra.mxu0 %v5712
      %5729 = vmatprep.subr.mxu0 0.0
      %5730 = vmatpush1.msra.mxu0 0.0
      %5731 = vmatprep.subr.mxu0 0.0
      %5732 = vmatpush1.msra.mxu0 0.0
      %5733 = vmatprep.subr.mxu0 0.0
      %5734 = vmatpush1.msra.mxu0 0.0
      %5735 = vmatprep.subr.mxu0 0.0
      %5736 = vmatpush1.msra.mxu0 0.0
      %5737 = vmatprep.subr.mxu0 0.0
      %5738 = vmatpush1.msra.mxu0 0.0
      %5739 = vmatprep.subr.mxu0 0.0
      %5740 = vmatpush1.msra.mxu0 0.0
      %5741 = vmatprep.subr.mxu0 0.0
      %5742 = vmatpush1.msra.mxu0 0.0
      %5743 = vmatprep.subr.mxu0 0.0
      %5744 = vmatpush1.msra.mxu0 0.0
      %5745 = vmatprep.subr.mxu0 0.0
      %5746 = vmatpush1.msra.mxu0 0.0
      %5747 = vmatprep.subr.mxu0 0.0
      %5748 = vmatpush1.msra.mxu0 0.0
      %5749 = vmatprep.subr.mxu0 0.0
      %5750 = vmatpush1.msra.mxu0 0.0
      %5751 = vmatprep.subr.mxu0 0.0
      %5752 = vmatpush1.msra.mxu0 0.0
      %5753 = vmatprep.subr.mxu0 0.0
      %5754 = vmatpush1.msra.mxu0 0.0
      %5755 = vmatprep.subr.mxu0 0.0
      %5756 = vmatpush1.msra.mxu0 0.0
      %5757 = vmatprep.subr.mxu0 0.0
      %5758 = vmatpush1.msra.mxu0 0.0
      %5759 = vmatprep.subr.mxu0 0.0
      %5760 = vmatpush1.msra.mxu0 0.0
      %5761 = vmatprep.subr.mxu0 0.0
      %5762 = vmatpush1.msra.mxu0 0.0
      %5763 = vmatprep.subr.mxu0 0.0
      %5764 = vmatpush1.msra.mxu0 0.0
      %5765 = vmatprep.subr.mxu0 0.0
      %5766 = vmatpush1.msra.mxu0 0.0
      %5767 = vmatprep.subr.mxu0 0.0
      %5768 = vmatpush1.msra.mxu0 0.0
      %5769 = vmatprep.subr.mxu0 0.0
      %5770 = vmatpush1.msra.mxu0 0.0
      %5771 = vmatprep.subr.mxu0 0.0
      %5772 = vmatpush1.msra.mxu0 0.0
      %5773 = vmatprep.subr.mxu0 0.0
      %5774 = vmatpush1.msra.mxu0 0.0
      %5775 = vmatprep.subr.mxu0 0.0
      %5776 = vmatpush1.msra.mxu0 0.0
      %5777 = vmatprep.subr.mxu0 0.0
      %5778 = vmatpush1.msra.mxu0 0.0
      %5779 = vmatprep.subr.mxu0 0.0
      %5780 = vmatpush1.msra.mxu0 0.0
      %5781 = vmatprep.subr.mxu0 0.0
      %5782 = vmatpush1.msra.mxu0 0.0
      %5783 = vmatprep.subr.mxu0 0.0
      %5784 = vmatpush1.msra.mxu0 0.0
      %5785 = vmatprep.mubr.f32.mxu0 0.0
      %5786 = vmatmul.mubr.f32.gmra.mrb[0].mxu0 %v2682
      %v5787 = vpop.f32.mrb[0].mxu0
      %v5788 = vadd.f32 %v5719, %v5787
      %v5789 = vpop.f32.mrb[0].mxu0
      %5790 = vmatprep.mubr.f32.mxu0 0.0
      %5791 = vmatmul.mubr.f32.gmra.mrb[0].mxu0 %v2685
      %v5792 = vpop.f32.mrb[0].mxu0
      %v5793 = vadd.f32 %v5719, %v5792
      %v5794 = vpop.f32.mrb[0].mxu0
      %5795 = vmatprep.mubr.f32.mxu0 0.0
      %5796 = vmatmul.mubr.f32.gmra.mrb[0].mxu0 %v2688
      %v5797 = vpop.f32.mrb[0].mxu0
      %v5798 = vadd.f32 %v5719, %v5797
      %v5799 = vpop.f32.mrb[0].mxu0
      %5800 = vmatprep.mubr.f32.mxu0 0.0
      %5801 = vmatmul.mubr.f32.gmra.mrb[0].mxu0 %v2691
      %v5802 = vpop.f32.mrb[0].mxu0
      %v5803 = vadd.f32 %v5719, %v5802
      %v5804 = vpop.f32.mrb[0].mxu0
      %5805 = vmatprep.mubr.f32.mxu0 0.0
      %5806 = vmatmul.mubr.f32.gmra.mrb[0].mxu0 %v2694
      %v5807 = vpop.f32.mrb[0].mxu0
      %v5808 = vadd.f32 %v5719, %v5807
      %v5809 = vpop.f32.mrb[0].mxu0
      %5810 = vmatprep.mubr.f32.mxu0 0.0
      %5811 = vmatmul.mubr.f32.gmra.mrb[0].mxu0 %v2697
      %v5812 = vpop.f32.mrb[0].mxu0
      %v5813 = vadd.f32 %v5719, %v5812
      %v5814 = vpop.f32.mrb[0].mxu0
      %5815 = vmatprep.mubr.f32.mxu0 0.0
      %5816 = vmatmul.mubr.f32.gmra.mrb[0].mxu0 %v2700
      %v5817 = vpop.f32.mrb[0].mxu0
      %v5818 = vadd.f32 %v5719, %v5817
      %v5819 = vpop.f32.mrb[0].mxu0
      %5820 = vmatprep.mubr.f32.mxu0 0.0
      %5821 = vmatmul.mubr.f32.gmra.mrb[0].mxu0 %v2703
      %v5822 = vpop.f32.mrb[0].mxu0
      %v5823 = vadd.f32 %v5719, %v5822
      %v5824 = vpop.f32.mrb[0].mxu0
      %5825 = vmatprep.mubr.f32.mxu0 0.0
      %5826 = vmatmul.mubr.f32.gmra.mrb[0].mxu0 %v2706
      %v5827 = vpop.f32.mrb[0].mxu0
      %v5828 = vadd.f32 %v5719, %v5827
      %v5829 = vpop.f32.mrb[0].mxu0
      %5830 = vdwg.mxu0
      %v5832 = vsel %vm3060, %v5542, 0
      %v5835 = vsel %vm3060, %v5547, 0
      %v5838 = vsel %vm3060, %v5552, 0
      %v5841 = vsel %vm3060, %v5557, 0
      %v5844 = vsel %vm3060, %v5562, 0
      %v5847 = vsel %vm3060, %v5567, 0
      %v5850 = vsel %vm3060, %v5572, 0
      %v5853 = vsel %vm3060, %v5577, 0
      %v5856 = vsel %vm3060, %v5582, 0
      %v5859 = vsel %vm3060, %v5665, 0
      %v5862 = vsel %vm3060, %v5670, 0
      %v5865 = vsel %vm3060, %v5675, 0
      %v5868 = vsel %vm3060, %v5680, 0
      %v5871 = vsel %vm3060, %v5685, 0
      %v5874 = vsel %vm3060, %v5690, 0
      %v5877 = vsel %vm3060, %v5695, 0
      %v5880 = vsel %vm3060, %v5700, 0
      %v5883 = vsel %vm3060, %v5705, 0
      %5885 = vmatprep.subr.mxu0 0.0
      %5886 = vmatpush1.xpose.msra.mxu0 %v5859
      %5887 = vmatprep.subr.mxu0 0.0
      %5888 = vmatpush1.xpose.msra.mxu0 %v5862
      %5889 = vmatprep.subr.mxu0 0.0
      %5890 = vmatpush1.xpose.msra.mxu0 %v5865
      %5891 = vmatprep.subr.mxu0 0.0
      %5892 = vmatpush1.xpose.msra.mxu0 %v5868
      %5893 = vmatprep.subr.mxu0 0.0
      %5894 = vmatpush1.xpose.msra.mxu0 %v5871
      %5895 = vmatprep.subr.mxu0 0.0
      %5896 = vmatpush1.xpose.msra.mxu0 %v5874
      %5897 = vmatprep.subr.mxu0 0.0
      %5898 = vmatpush1.xpose.msra.mxu0 %v5877
      %5899 = vmatprep.subr.mxu0 0.0
      %5900 = vmatpush1.xpose.msra.mxu0 %v5880
      %5901 = vmatprep.subr.mxu0 0.0
      %5902 = vmatpush1.xpose.msra.mxu0 %v5883
      %5903 = vmatprep.subr.mxu0 0.0
      %5904 = vmatpush1.xpose.msra.mxu0 0.0
      %5905 = vmatprep.subr.mxu0 0.0
      %5906 = vmatpush1.xpose.msra.mxu0 0.0
      %5907 = vmatprep.subr.mxu0 0.0
      %5908 = vmatpush1.xpose.msra.mxu0 0.0
      %5909 = vmatprep.subr.mxu0 0.0
      %5910 = vmatpush1.xpose.msra.mxu0 0.0
      %5911 = vmatprep.subr.mxu0 0.0
      %5912 = vmatpush1.xpose.msra.mxu0 0.0
      %5913 = vmatprep.subr.mxu0 0.0
      %5914 = vmatpush1.xpose.msra.mxu0 0.0
      %5915 = vmatprep.subr.mxu0 0.0
      %5916 = vmatpush1.xpose.msra.mxu0 0.0
      %5917 = vmatprep.subr.mxu0 0.0
      %5918 = vmatpush1.xpose.msra.mxu0 0.0
      %5919 = vmatprep.subr.mxu0 0.0
      %5920 = vmatpush1.xpose.msra.mxu0 0.0
      %5921 = vmatprep.subr.mxu0 0.0
      %5922 = vmatpush1.xpose.msra.mxu0 0.0
      %5923 = vmatprep.subr.mxu0 0.0
      %5924 = vmatpush1.xpose.msra.mxu0 0.0
      %5925 = vmatprep.subr.mxu0 0.0
      %5926 = vmatpush1.xpose.msra.mxu0 0.0
      %5927 = vmatprep.subr.mxu0 0.0
      %5928 = vmatpush1.xpose.msra.mxu0 0.0
      %5929 = vmatprep.subr.mxu0 0.0
      %5930 = vmatpush1.xpose.msra.mxu0 0.0
      %5931 = vmatprep.subr.mxu0 0.0
      %5932 = vmatpush1.xpose.msra.mxu0 0.0
      %5933 = vmatprep.subr.mxu0 0.0
      %5934 = vmatpush1.xpose.msra.mxu0 0.0
      %5935 = vmatprep.subr.mxu0 0.0
      %5936 = vmatpush1.xpose.msra.mxu0 0.0
      %5937 = vmatprep.subr.mxu0 0.0
      %5938 = vmatpush1.xpose.msra.mxu0 0.0
      %5939 = vmatprep.subr.mxu0 0.0
      %5940 = vmatpush1.xpose.msra.mxu0 0.0
      %5941 = vmatprep.subr.mxu0 0.0
      %5942 = vmatpush1.xpose.msra.mxu0 0.0
      %5943 = vmatprep.subr.mxu0 0.0
      %5944 = vmatpush1.xpose.msra.mxu0 0.0
      %5945 = vmatprep.subr.mxu0 0.0
      %5946 = vmatpush1.xpose.msra.mxu0 0.0
      %5947 = vmatprep.subr.mxu0 0.0
      %5948 = vmatpush1.xpose.msra.mxu0 0.0
      %5949 = vmatprep.mubr.f32.mxu0 0.0
      %5950 = vmatmul.mubr.f32.gmra.mrb[0].mxu0 %v5832
      %v5951 = vpop.f32.mrb[0].mxu0
      %v5952 = vadd.f32 0.0, %v5951
      %v5953 = vpop.f32.mrb[0].mxu0
      %5954 = vmatprep.mubr.f32.mxu0 0.0
      %5955 = vmatmul.mubr.f32.gmra.mrb[0].mxu0 %v5835
      %v5956 = vpop.f32.mrb[0].mxu0
      %v5957 = vadd.f32 0.0, %v5956
      %v5958 = vpop.f32.mrb[0].mxu0
      %5959 = vmatprep.mubr.f32.mxu0 0.0
      %5960 = vmatmul.mubr.f32.gmra.mrb[0].mxu0 %v5838
      %v5961 = vpop.f32.mrb[0].mxu0
      %v5962 = vadd.f32 0.0, %v5961
      %v5963 = vpop.f32.mrb[0].mxu0
      %5964 = vmatprep.mubr.f32.mxu0 0.0
      %5965 = vmatmul.mubr.f32.gmra.mrb[0].mxu0 %v5841
      %v5966 = vpop.f32.mrb[0].mxu0
      %v5967 = vadd.f32 0.0, %v5966
      %v5968 = vpop.f32.mrb[0].mxu0
      %5969 = vmatprep.mubr.f32.mxu0 0.0
      %5970 = vmatmul.mubr.f32.gmra.mrb[0].mxu0 %v5844
      %v5971 = vpop.f32.mrb[0].mxu0
      %v5972 = vadd.f32 0.0, %v5971
      %v5973 = vpop.f32.mrb[0].mxu0
      %5974 = vmatprep.mubr.f32.mxu0 0.0
      %5975 = vmatmul.mubr.f32.gmra.mrb[0].mxu0 %v5847
      %v5976 = vpop.f32.mrb[0].mxu0
      %v5977 = vadd.f32 0.0, %v5976
      %v5978 = vpop.f32.mrb[0].mxu0
      %5979 = vmatprep.mubr.f32.mxu0 0.0
      %5980 = vmatmul.mubr.f32.gmra.mrb[0].mxu0 %v5850
      %v5981 = vpop.f32.mrb[0].mxu0
      %v5982 = vadd.f32 0.0, %v5981
      %v5983 = vpop.f32.mrb[0].mxu0
      %5984 = vmatprep.mubr.f32.mxu0 0.0
      %5985 = vmatmul.mubr.f32.gmra.mrb[0].mxu0 %v5853
      %v5986 = vpop.f32.mrb[0].mxu0
      %v5987 = vadd.f32 0.0, %v5986
      %v5988 = vpop.f32.mrb[0].mxu0
      %5989 = vmatprep.mubr.f32.mxu0 0.0
      %5990 = vmatmul.mubr.f32.gmra.mrb[0].mxu0 %v5856
      %v5991 = vpop.f32.mrb[0].mxu0
      %v5992 = vadd.f32 0.0, %v5991
      %v5993 = vpop.f32.mrb[0].mxu0
      %5994 = vdwg.mxu0
      %v5995 = vmul.f32 %v5952, 0.35355338
      %v5996 = vmul.f32 %v5957, 0.35355338
      %v5997 = vmul.f32 %v5962, 0.35355338
      %v5998 = vmul.f32 %v5967, 0.35355338
      %v5999 = vmul.f32 %v5972, 0.35355338
      %v6000 = vmul.f32 %v5977, 0.35355338
      %v6001 = vmul.f32 %v5982, 0.35355338
      %v6002 = vmul.f32 %v5987, 0.35355338
      %v6003 = vmul.f32 %v5992, 0.35355338
      %v6004 = vsel %vm3234, %v5995, -inf
      %6005 = vmax.xlane.f32.xlu0 %v6004
      %v6006 = vpop.xlane.xlu0 %6005
      %v6007 = vsel %vm3234, %v5996, -inf
      %6008 = vmax.xlane.f32.xlu0 %v6007
      %v6009 = vpop.xlane.xlu0 %6008
      %v6010 = vsel %vm3234, %v5997, -inf
      %6011 = vmax.xlane.f32.xlu0 %v6010
      %v6012 = vpop.xlane.xlu0 %6011
      %v6013 = vsel %vm3234, %v5998, -inf
      %6014 = vmax.xlane.f32.xlu0 %v6013
      %v6015 = vpop.xlane.xlu0 %6014
      %v6016 = vsel %vm3234, %v5999, -inf
      %6017 = vmax.xlane.f32.xlu0 %v6016
      %v6018 = vpop.xlane.xlu0 %6017
      %v6019 = vsel %vm3234, %v6000, -inf
      %6020 = vmax.xlane.f32.xlu0 %v6019
      %v6021 = vpop.xlane.xlu0 %6020
      %v6022 = vsel %vm3234, %v6001, -inf
      %6023 = vmax.xlane.f32.xlu0 %v6022
      %v6024 = vpop.xlane.xlu0 %6023
      %v6025 = vsel %vm3234, %v6002, -inf
      %6026 = vmax.xlane.f32.xlu0 %v6025
      %v6027 = vpop.xlane.xlu0 %6026
      %v6028 = vsel %vm3259, %v6003, -inf
      %6029 = vmax.xlane.f32.xlu0 %v6028
      %v6030 = vpop.xlane.xlu0 %6029
      %v6031 = vsub.f32 %v5995, %v6006
      %v6032 = vsub.f32 %v5996, %v6009
      %v6033 = vsub.f32 %v5997, %v6012
      %v6034 = vsub.f32 %v5998, %v6015
      %v6035 = vsub.f32 %v5999, %v6018
      %v6036 = vsub.f32 %v6000, %v6021
      %v6037 = vsub.f32 %v6001, %v6024
      %v6038 = vsub.f32 %v6002, %v6027
      %v6039 = vsub.f32 %v6003, %v6030
      %v6040 = vmul.f32 %v6031, 1.442695
      %v6041 = vpow.pop %v6040
      %v6042 = vmul.f32 %v6032, 1.442695
      %v6043 = vpow.pop %v6042
      %v6044 = vmul.f32 %v6033, 1.442695
      %v6045 = vpow.pop %v6044
      %v6046 = vmul.f32 %v6034, 1.442695
      %v6047 = vpow.pop %v6046
      %v6048 = vmul.f32 %v6035, 1.442695
      %v6049 = vpow.pop %v6048
      %v6050 = vmul.f32 %v6036, 1.442695
      %v6051 = vpow.pop %v6050
      %v6052 = vmul.f32 %v6037, 1.442695
      %v6053 = vpow.pop %v6052
      %v6054 = vmul.f32 %v6038, 1.442695
      %v6055 = vpow.pop %v6054
      %v6056 = vmul.f32 %v6039, 1.442695
      %v6057 = vpow.pop %v6056
      %v6058 = vsel %vm3234, %v6041, 0.0
      %6059 = vadd.xlane.f32.xlu0 %v6058
      %v6060 = vpop.xlane.xlu0 %6059
      %v6061 = vsel %vm3234, %v6043, 0.0
      %6062 = vadd.xlane.f32.xlu0 %v6061
      %v6063 = vpop.xlane.xlu0 %6062
      %v6064 = vsel %vm3234, %v6045, 0.0
      %6065 = vadd.xlane.f32.xlu0 %v6064
      %v6066 = vpop.xlane.xlu0 %6065
      %v6067 = vsel %vm3234, %v6047, 0.0
      %6068 = vadd.xlane.f32.xlu0 %v6067
      %v6069 = vpop.xlane.xlu0 %6068
      %v6070 = vsel %vm3234, %v6049, 0.0
      %6071 = vadd.xlane.f32.xlu0 %v6070
      %v6072 = vpop.xlane.xlu0 %6071
      %v6073 = vsel %vm3234, %v6051, 0.0
      %6074 = vadd.xlane.f32.xlu0 %v6073
      %v6075 = vpop.xlane.xlu0 %6074
      %v6076 = vsel %vm3234, %v6053, 0.0
      %6077 = vadd.xlane.f32.xlu0 %v6076
      %v6078 = vpop.xlane.xlu0 %6077
      %v6079 = vsel %vm3234, %v6055, 0.0
      %6080 = vadd.xlane.f32.xlu0 %v6079
      %v6081 = vpop.xlane.xlu0 %6080
      %v6082 = vsel %vm3259, %v6057, 0.0
      %6083 = vadd.xlane.f32.xlu0 %v6082
      %v6084 = vpop.xlane.xlu0 %6083
      %v6085 = vrcp.pop %v6060
      %v6086 = vmul.f32 %v6041, %v6085
      %v6087 = vrcp.pop %v6063
      %v6088 = vmul.f32 %v6043, %v6087
      %v6089 = vrcp.pop %v6066
      %v6090 = vmul.f32 %v6045, %v6089
      %v6091 = vrcp.pop %v6069
      %v6092 = vmul.f32 %v6047, %v6091
      %v6093 = vrcp.pop %v6072
      %v6094 = vmul.f32 %v6049, %v6093
      %v6095 = vrcp.pop %v6075
      %v6096 = vmul.f32 %v6051, %v6095
      %v6097 = vrcp.pop %v6078
      %v6098 = vmul.f32 %v6053, %v6097
      %v6099 = vrcp.pop %v6081
      %v6100 = vmul.f32 %v6055, %v6099
      %v6101 = vrcp.pop %v6084
      %v6102 = vmul.f32 %v6057, %v6101
      %v6104 = vsel %vm3234, %v6086, 0
      %v6107 = vsel %vm3234, %v6088, 0
      %v6110 = vsel %vm3234, %v6090, 0
      %v6113 = vsel %vm3234, %v6092, 0
      %v6116 = vsel %vm3234, %v6094, 0
      %v6119 = vsel %vm3234, %v6096, 0
      %v6122 = vsel %vm3234, %v6098, 0
      %v6125 = vsel %vm3234, %v6100, 0
      %v6128 = vsel %vm3234, %v6102, 0
      %v6131 = vsel %vm2126, %v5828, 0
      %6133 = vmatprep.subr.mxu0 0.0
      %6134 = vmatpush1.msra.mxu0 %v5788
      %6135 = vmatprep.subr.mxu0 0.0
      %6136 = vmatpush1.msra.mxu0 %v5793
      %6137 = vmatprep.subr.mxu0 0.0
      %6138 = vmatpush1.msra.mxu0 %v5798
      %6139 = vmatprep.subr.mxu0 0.0
      %6140 = vmatpush1.msra.mxu0 %v5803
      %6141 = vmatprep.subr.mxu0 0.0
      %6142 = vmatpush1.msra.mxu0 %v5808
      %6143 = vmatprep.subr.mxu0 0.0
      %6144 = vmatpush1.msra.mxu0 %v5813
      %6145 = vmatprep.subr.mxu0 0.0
      %6146 = vmatpush1.msra.mxu0 %v5818
      %6147 = vmatprep.subr.mxu0 0.0
      %6148 = vmatpush1.msra.mxu0 %v5823
      %6149 = vmatprep.subr.mxu0 0.0
      %6150 = vmatpush1.msra.mxu0 %v6131
      %6151 = vmatprep.subr.mxu0 0.0
      %6152 = vmatpush1.msra.mxu0 0.0
      %6153 = vmatprep.subr.mxu0 0.0
      %6154 = vmatpush1.msra.mxu0 0.0
      %6155 = vmatprep.subr.mxu0 0.0
      %6156 = vmatpush1.msra.mxu0 0.0
      %6157 = vmatprep.subr.mxu0 0.0
      %6158 = vmatpush1.msra.mxu0 0.0
      %6159 = vmatprep.subr.mxu0 0.0
      %6160 = vmatpush1.msra.mxu0 0.0
      %6161 = vmatprep.subr.mxu0 0.0
      %6162 = vmatpush1.msra.mxu0 0.0
      %6163 = vmatprep.subr.mxu0 0.0
      %6164 = vmatpush1.msra.mxu0 0.0
      %6165 = vmatprep.subr.mxu0 0.0
      %6166 = vmatpush1.msra.mxu0 0.0
      %6167 = vmatprep.subr.mxu0 0.0
      %6168 = vmatpush1.msra.mxu0 0.0
      %6169 = vmatprep.subr.mxu0 0.0
      %6170 = vmatpush1.msra.mxu0 0.0
      %6171 = vmatprep.subr.mxu0 0.0
      %6172 = vmatpush1.msra.mxu0 0.0
      %6173 = vmatprep.subr.mxu0 0.0
      %6174 = vmatpush1.msra.mxu0 0.0
      %6175 = vmatprep.subr.mxu0 0.0
      %6176 = vmatpush1.msra.mxu0 0.0
      %6177 = vmatprep.subr.mxu0 0.0
      %6178 = vmatpush1.msra.mxu0 0.0
      %6179 = vmatprep.subr.mxu0 0.0
      %6180 = vmatpush1.msra.mxu0 0.0
      %6181 = vmatprep.subr.mxu0 0.0
      %6182 = vmatpush1.msra.mxu0 0.0
      %6183 = vmatprep.subr.mxu0 0.0
      %6184 = vmatpush1.msra.mxu0 0.0
      %6185 = vmatprep.subr.mxu0 0.0
      %6186 = vmatpush1.msra.mxu0 0.0
      %6187 = vmatprep.subr.mxu0 0.0
      %6188 = vmatpush1.msra.mxu0 0.0
      %6189 = vmatprep.subr.mxu0 0.0
      %6190 = vmatpush1.msra.mxu0 0.0
      %6191 = vmatprep.subr.mxu0 0.0
      %6192 = vmatpush1.msra.mxu0 0.0
      %6193 = vmatprep.subr.mxu0 0.0
      %6194 = vmatpush1.msra.mxu0 0.0
      %6195 = vmatprep.subr.mxu0 0.0
      %6196 = vmatpush1.msra.mxu0 0.0
      %6197 = vmatprep.mubr.f32.mxu0 0.0
      %6198 = vmatmul.mubr.f32.gmra.mrb[0].mxu0 %v6104
      %v6199 = vpop.f32.mrb[0].mxu0
      %v6200 = vadd.f32 0.0, %v6199
      %v6201 = vpop.f32.mrb[0].mxu0
      %6202 = vmatprep.mubr.f32.mxu0 0.0
      %6203 = vmatmul.mubr.f32.gmra.mrb[0].mxu0 %v6107
      %v6204 = vpop.f32.mrb[0].mxu0
      %v6205 = vadd.f32 0.0, %v6204
      %v6206 = vpop.f32.mrb[0].mxu0
      %6207 = vmatprep.mubr.f32.mxu0 0.0
      %6208 = vmatmul.mubr.f32.gmra.mrb[0].mxu0 %v6110
      %v6209 = vpop.f32.mrb[0].mxu0
      %v6210 = vadd.f32 0.0, %v6209
      %v6211 = vpop.f32.mrb[0].mxu0
      %6212 = vmatprep.mubr.f32.mxu0 0.0
      %6213 = vmatmul.mubr.f32.gmra.mrb[0].mxu0 %v6113
      %v6214 = vpop.f32.mrb[0].mxu0
      %v6215 = vadd.f32 0.0, %v6214
      %v6216 = vpop.f32.mrb[0].mxu0
      %6217 = vmatprep.mubr.f32.mxu0 0.0
      %6218 = vmatmul.mubr.f32.gmra.mrb[0].mxu0 %v6116
      %v6219 = vpop.f32.mrb[0].mxu0
      %v6220 = vadd.f32 0.0, %v6219
      %v6221 = vpop.f32.mrb[0].mxu0
      %6222 = vmatprep.mubr.f32.mxu0 0.0
      %6223 = vmatmul.mubr.f32.gmra.mrb[0].mxu0 %v6119
      %v6224 = vpop.f32.mrb[0].mxu0
      %v6225 = vadd.f32 0.0, %v6224
      %v6226 = vpop.f32.mrb[0].mxu0
      %6227 = vmatprep.mubr.f32.mxu0 0.0
      %6228 = vmatmul.mubr.f32.gmra.mrb[0].mxu0 %v6122
      %v6229 = vpop.f32.mrb[0].mxu0
      %v6230 = vadd.f32 0.0, %v6229
      %v6231 = vpop.f32.mrb[0].mxu0
      %6232 = vmatprep.mubr.f32.mxu0 0.0
      %6233 = vmatmul.mubr.f32.gmra.mrb[0].mxu0 %v6125
      %v6234 = vpop.f32.mrb[0].mxu0
      %v6235 = vadd.f32 0.0, %v6234
      %v6236 = vpop.f32.mrb[0].mxu0
      %6237 = vmatprep.mubr.f32.mxu0 0.0
      %6238 = vmatmul.mubr.f32.gmra.mrb[0].mxu0 %v6128
      %v6239 = vpop.f32.mrb[0].mxu0
      %v6240 = vadd.f32 0.0, %v6239
      %v6241 = vpop.f32.mrb[0].mxu0
      %6242 = vdwg.mxu0
      %s6243 = scalar_lea.vmem %s10, 24
      %v6244 = vld [vmem:[%s6243] sm:$0xff]
      %v6246 = vsel %vm3060, %v6200, 0
      %v6249 = vsel %vm3060, %v6205, 0
      %v6252 = vsel %vm3060, %v6210, 0
      %v6255 = vsel %vm3060, %v6215, 0
      %v6258 = vsel %vm3060, %v6220, 0
      %v6261 = vsel %vm3060, %v6225, 0
      %v6264 = vsel %vm3060, %v6230, 0
      %v6267 = vsel %vm3060, %v6235, 0
      %v6270 = vsel %vm3060, %v6240, 0
      %6272 = vmatprep.subr.mxu0 0.0
      %6273 = vmatpush1.msra.mxu0 %v6244
      %6274 = vmatprep.subr.mxu0 0.0
      %6275 = vmatpush1.msra.mxu0 0.0
      %6276 = vmatprep.subr.mxu0 0.0
      %6277 = vmatpush1.msra.mxu0 0.0
      %6278 = vmatprep.subr.mxu0 0.0
      %6279 = vmatpush1.msra.mxu0 0.0
      %6280 = vmatprep.subr.mxu0 0.0
      %6281 = vmatpush1.msra.mxu0 0.0
      %6282 = vmatprep.subr.mxu0 0.0
      %6283 = vmatpush1.msra.mxu0 0.0
      %6284 = vmatprep.subr.mxu0 0.0
      %6285 = vmatpush1.msra.mxu0 0.0
      %6286 = vmatprep.subr.mxu0 0.0
      %6287 = vmatpush1.msra.mxu0 0.0
      %6288 = vmatprep.subr.mxu0 0.0
      %6289 = vmatpush1.msra.mxu0 0.0
      %6290 = vmatprep.subr.mxu0 0.0
      %6291 = vmatpush1.msra.mxu0 0.0
      %6292 = vmatprep.subr.mxu0 0.0
      %6293 = vmatpush1.msra.mxu0 0.0
      %6294 = vmatprep.subr.mxu0 0.0
      %6295 = vmatpush1.msra.mxu0 0.0
      %6296 = vmatprep.subr.mxu0 0.0
      %6297 = vmatpush1.msra.mxu0 0.0
      %6298 = vmatprep.subr.mxu0 0.0
      %6299 = vmatpush1.msra.mxu0 0.0
      %6300 = vmatprep.subr.mxu0 0.0
      %6301 = vmatpush1.msra.mxu0 0.0
      %6302 = vmatprep.subr.mxu0 0.0
      %6303 = vmatpush1.msra.mxu0 0.0
      %6304 = vmatprep.subr.mxu0 0.0
      %6305 = vmatpush1.msra.mxu0 0.0
      %6306 = vmatprep.subr.mxu0 0.0
      %6307 = vmatpush1.msra.mxu0 0.0
      %6308 = vmatprep.subr.mxu0 0.0
      %6309 = vmatpush1.msra.mxu0 0.0
      %6310 = vmatprep.subr.mxu0 0.0
      %6311 = vmatpush1.msra.mxu0 0.0
      %6312 = vmatprep.subr.mxu0 0.0
      %6313 = vmatpush1.msra.mxu0 0.0
      %6314 = vmatprep.subr.mxu0 0.0
      %6315 = vmatpush1.msra.mxu0 0.0
      %6316 = vmatprep.subr.mxu0 0.0
      %6317 = vmatpush1.msra.mxu0 0.0
      %6318 = vmatprep.subr.mxu0 0.0
      %6319 = vmatpush1.msra.mxu0 0.0
      %6320 = vmatprep.subr.mxu0 0.0
      %6321 = vmatpush1.msra.mxu0 0.0
      %6322 = vmatprep.subr.mxu0 0.0
      %6323 = vmatpush1.msra.mxu0 0.0
      %6324 = vmatprep.subr.mxu0 0.0
      %6325 = vmatpush1.msra.mxu0 0.0
      %6326 = vmatprep.subr.mxu0 0.0
      %6327 = vmatpush1.msra.mxu0 0.0
      %6328 = vmatprep.subr.mxu0 0.0
      %6329 = vmatpush1.msra.mxu0 0.0
      %6330 = vmatprep.subr.mxu0 0.0
      %6331 = vmatpush1.msra.mxu0 0.0
      %6332 = vmatprep.subr.mxu0 0.0
      %6333 = vmatpush1.msra.mxu0 0.0
      %6334 = vmatprep.subr.mxu0 0.0
      %6335 = vmatpush1.msra.mxu0 0.0
      %6336 = vmatprep.mubr.f32.mxu0 0.0
      %6337 = vmatmul.mubr.f32.gmra.mrb[0].mxu0 %v6246
      %v6338 = vpop.f32.mrb[0].mxu0
      %v6339 = vadd.f32 0.0, %v6338
      %v6340 = vpop.f32.mrb[0].mxu0
      %6341 = vmatprep.mubr.f32.mxu0 0.0
      %6342 = vmatmul.mubr.f32.gmra.mrb[0].mxu0 %v6249
      %v6343 = vpop.f32.mrb[0].mxu0
      %v6344 = vadd.f32 0.0, %v6343
      %v6345 = vpop.f32.mrb[0].mxu0
      %6346 = vmatprep.mubr.f32.mxu0 0.0
      %6347 = vmatmul.mubr.f32.gmra.mrb[0].mxu0 %v6252
      %v6348 = vpop.f32.mrb[0].mxu0
      %v6349 = vadd.f32 0.0, %v6348
      %v6350 = vpop.f32.mrb[0].mxu0
      %6351 = vmatprep.mubr.f32.mxu0 0.0
      %6352 = vmatmul.mubr.f32.gmra.mrb[0].mxu0 %v6255
      %v6353 = vpop.f32.mrb[0].mxu0
      %v6354 = vadd.f32 0.0, %v6353
      %v6355 = vpop.f32.mrb[0].mxu0
      %6356 = vmatprep.mubr.f32.mxu0 0.0
      %6357 = vmatmul.mubr.f32.gmra.mrb[0].mxu0 %v6258
      %v6358 = vpop.f32.mrb[0].mxu0
      %v6359 = vadd.f32 0.0, %v6358
      %v6360 = vpop.f32.mrb[0].mxu0
      %6361 = vmatprep.mubr.f32.mxu0 0.0
      %6362 = vmatmul.mubr.f32.gmra.mrb[0].mxu0 %v6261
      %v6363 = vpop.f32.mrb[0].mxu0
      %v6364 = vadd.f32 0.0, %v6363
      %v6365 = vpop.f32.mrb[0].mxu0
      %6366 = vmatprep.mubr.f32.mxu0 0.0
      %6367 = vmatmul.mubr.f32.gmra.mrb[0].mxu0 %v6264
      %v6368 = vpop.f32.mrb[0].mxu0
      %v6369 = vadd.f32 0.0, %v6368
      %v6370 = vpop.f32.mrb[0].mxu0
      %6371 = vmatprep.mubr.f32.mxu0 0.0
      %6372 = vmatmul.mubr.f32.gmra.mrb[0].mxu0 %v6267
      %v6373 = vpop.f32.mrb[0].mxu0
      %v6374 = vadd.f32 0.0, %v6373
      %v6375 = vpop.f32.mrb[0].mxu0
      %6376 = vmatprep.mubr.f32.mxu0 0.0
      %6377 = vmatmul.mubr.f32.gmra.mrb[0].mxu0 %v6270
      %v6378 = vpop.f32.mrb[0].mxu0
      %v6379 = vadd.f32 0.0, %v6378
      %v6380 = vpop.f32.mrb[0].mxu0
      %6381 = vdwg.mxu0
      %v6382 = vadd.f32 %v5453, %v6339
      %v6383 = vadd.f32 %v5454, %v6344
      %v6384 = vadd.f32 %v5455, %v6349
      %v6385 = vadd.f32 %v5456, %v6354
      %v6386 = vadd.f32 %v5457, %v6359
      %v6387 = vadd.f32 %v5458, %v6364
      %v6388 = vadd.f32 %v5459, %v6369
      %v6389 = vadd.f32 %v5460, %v6374
      %v6390 = vadd.f32 %v5461, %v6379
      %v6391 = vld [vmem:[%s11] sm:$0x1]
      %v6393 = vlaneseq
      %v6394 = vshrl.u32 %v6393, 7
      %v6395 = vsub.s32 0, %v6394
      %v6396 = vrot.slane %v6391, %v6395
      %v6398 = vadd.f32 %v6382, %v6396
      %v6399 = vadd.f32 %v6383, %v6396
      %v6400 = vadd.f32 %v6384, %v6396
      %v6401 = vadd.f32 %v6385, %v6396
      %v6402 = vadd.f32 %v6386, %v6396
      %v6403 = vadd.f32 %v6387, %v6396
      %v6404 = vadd.f32 %v6388, %v6396
      %v6405 = vadd.f32 %v6389, %v6396
      %v6406 = vadd.f32 %v6390, %v6396
      %v6407 = vadd.f32 %v2660, %v6398
      %v6408 = vadd.f32 %v2661, %v6399
      %v6409 = vadd.f32 %v2662, %v6400
      %v6410 = vadd.f32 %v2663, %v6401
      %v6411 = vadd.f32 %v2664, %v6402
      %v6412 = vadd.f32 %v2665, %v6403
      %v6413 = vadd.f32 %v2666, %v6404
      %v6414 = vadd.f32 %v2667, %v6405
      %v6415 = vadd.f32 %v2668, %v6406
      %v6416 = vld [vmem:[%s12] sm:$0x1]
      %v6417 = vld [vmem:[%s13] sm:$0x1]
      %v6418 = vsel %vm2680, %v6407, 0.0
      %6419 = vadd.xlane.f32.xlu0 %v6418
      %v6420 = vpop.xlane.xlu0 %6419
      %v6421 = vsel %vm2680, %v6408, 0.0
      %6422 = vadd.xlane.f32.xlu0 %v6421
      %v6423 = vpop.xlane.xlu0 %6422
      %v6424 = vsel %vm2680, %v6409, 0.0
      %6425 = vadd.xlane.f32.xlu0 %v6424
      %v6426 = vpop.xlane.xlu0 %6425
      %v6427 = vsel %vm2680, %v6410, 0.0
      %6428 = vadd.xlane.f32.xlu0 %v6427
      %v6429 = vpop.xlane.xlu0 %6428
      %v6430 = vsel %vm2680, %v6411, 0.0
      %6431 = vadd.xlane.f32.xlu0 %v6430
      %v6432 = vpop.xlane.xlu0 %6431
      %v6433 = vsel %vm2680, %v6412, 0.0
      %6434 = vadd.xlane.f32.xlu0 %v6433
      %v6435 = vpop.xlane.xlu0 %6434
      %v6436 = vsel %vm2680, %v6413, 0.0
      %6437 = vadd.xlane.f32.xlu0 %v6436
      %v6438 = vpop.xlane.xlu0 %6437
      %v6439 = vsel %vm2680, %v6414, 0.0
      %6440 = vadd.xlane.f32.xlu0 %v6439
      %v6441 = vpop.xlane.xlu0 %6440
      %vm6442 = vcmask 253952
      %v6443 = vsel %vm6442, %v6415, 0.0
      %6444 = vadd.xlane.f32.xlu0 %v6443
      %v6445 = vpop.xlane.xlu0 %6444
      %v6446 = vrcp.pop 32.0
      %v6447 = vmul.f32 %v6420, %v6446
      %v6448 = vmul.f32 %v6423, %v6446
      %v6449 = vmul.f32 %v6426, %v6446
      %v6450 = vmul.f32 %v6429, %v6446
      %v6451 = vmul.f32 %v6432, %v6446
      %v6452 = vmul.f32 %v6435, %v6446
      %v6453 = vmul.f32 %v6438, %v6446
      %v6454 = vmul.f32 %v6441, %v6446
      %v6455 = vmul.f32 %v6445, %v6446
      %v6456 = vsub.f32 %v6407, %v6447
      %v6457 = vsub.f32 %v6408, %v6448
      %v6458 = vsub.f32 %v6409, %v6449
      %v6459 = vsub.f32 %v6410, %v6450
      %v6460 = vsub.f32 %v6411, %v6451
      %v6461 = vsub.f32 %v6412, %v6452
      %v6462 = vsub.f32 %v6413, %v6453
      %v6463 = vsub.f32 %v6414, %v6454
      %v6464 = vsub.f32 %v6415, %v6455
      %v6465 = vmul.f32 %v6456, %v6456
      %v6466 = vmul.f32 %v6457, %v6457
      %v6467 = vmul.f32 %v6458, %v6458
      %v6468 = vmul.f32 %v6459, %v6459
      %v6469 = vmul.f32 %v6460, %v6460
      %v6470 = vmul.f32 %v6461, %v6461
      %v6471 = vmul.f32 %v6462, %v6462
      %v6472 = vmul.f32 %v6463, %v6463
      %v6473 = vmul.f32 %v6464, %v6464
      %v6474 = vsel %vm2680, %v6465, 0.0
      %6475 = vadd.xlane.f32.xlu0 %v6474
      %v6476 = vpop.xlane.xlu0 %6475
      %v6477 = vsel %vm2680, %v6466, 0.0
      %6478 = vadd.xlane.f32.xlu0 %v6477
      %v6479 = vpop.xlane.xlu0 %6478
      %v6480 = vsel %vm2680, %v6467, 0.0
      %6481 = vadd.xlane.f32.xlu0 %v6480
      %v6482 = vpop.xlane.xlu0 %6481
      %v6483 = vsel %vm2680, %v6468, 0.0
      %6484 = vadd.xlane.f32.xlu0 %v6483
      %v6485 = vpop.xlane.xlu0 %6484
      %v6486 = vsel %vm2680, %v6469, 0.0
      %6487 = vadd.xlane.f32.xlu0 %v6486
      %v6488 = vpop.xlane.xlu0 %6487
      %v6489 = vsel %vm2680, %v6470, 0.0
      %6490 = vadd.xlane.f32.xlu0 %v6489
      %v6491 = vpop.xlane.xlu0 %6490
      %v6492 = vsel %vm2680, %v6471, 0.0
      %6493 = vadd.xlane.f32.xlu0 %v6492
      %v6494 = vpop.xlane.xlu0 %6493
      %v6495 = vsel %vm2680, %v6472, 0.0
      %6496 = vadd.xlane.f32.xlu0 %v6495
      %v6497 = vpop.xlane.xlu0 %6496
      %v6498 = vsel %vm6442, %v6473, 0.0
      %6499 = vadd.xlane.f32.xlu0 %v6498
      %v6500 = vpop.xlane.xlu0 %6499
      %v6501 = vmul.f32 %v6476, %v6446
      %v6502 = vmul.f32 %v6479, %v6446
      %v6503 = vmul.f32 %v6482, %v6446
      %v6504 = vmul.f32 %v6485, %v6446
      %v6505 = vmul.f32 %v6488, %v6446
      %v6506 = vmul.f32 %v6491, %v6446
      %v6507 = vmul.f32 %v6494, %v6446
      %v6508 = vmul.f32 %v6497, %v6446
      %v6509 = vmul.f32 %v6500, %v6446
      %v6510 = vadd.f32 %v6501, 1e-05
      %v6511 = vadd.f32 %v6502, 1e-05
      %v6512 = vadd.f32 %v6503, 1e-05
      %v6513 = vadd.f32 %v6504, 1e-05
      %v6514 = vadd.f32 %v6505, 1e-05
      %v6515 = vadd.f32 %v6506, 1e-05
      %v6516 = vadd.f32 %v6507, 1e-05
      %v6517 = vadd.f32 %v6508, 1e-05
      %v6518 = vadd.f32 %v6509, 1e-05
      %v6519 = vrsqrt.pop %v6510
      %v6520 = vrsqrt.pop %v6511
      %v6521 = vrsqrt.pop %v6512
      %v6522 = vrsqrt.pop %v6513
      %v6523 = vrsqrt.pop %v6514
      %v6524 = vrsqrt.pop %v6515
      %v6525 = vrsqrt.pop %v6516
      %v6526 = vrsqrt.pop %v6517
      %v6527 = vrsqrt.pop %v6518
      %v6528 = vmul.f32 %v6456, %v6519
      %v6529 = vmul.f32 %v6457, %v6520
      %v6530 = vmul.f32 %v6458, %v6521
      %v6531 = vmul.f32 %v6459, %v6522
      %v6532 = vmul.f32 %v6460, %v6523
      %v6533 = vmul.f32 %v6461, %v6524
      %v6534 = vmul.f32 %v6462, %v6525
      %v6535 = vmul.f32 %v6463, %v6526
      %v6536 = vmul.f32 %v6464, %v6527
      %v6538 = vlaneseq
      %v6539 = vshrl.u32 %v6538, 7
      %v6540 = vsub.s32 0, %v6539
      %v6541 = vrot.slane %v6416, %v6540
      %v6543 = vmul.f32 %v6528, %v6541
      %v6544 = vmul.f32 %v6529, %v6541
      %v6545 = vmul.f32 %v6530, %v6541
      %v6546 = vmul.f32 %v6531, %v6541
      %v6547 = vmul.f32 %v6532, %v6541
      %v6548 = vmul.f32 %v6533, %v6541
      %v6549 = vmul.f32 %v6534, %v6541
      %v6550 = vmul.f32 %v6535, %v6541
      %v6551 = vmul.f32 %v6536, %v6541
      %v6553 = vlaneseq
      %v6554 = vshrl.u32 %v6553, 7
      %v6555 = vsub.s32 0, %v6554
      %v6556 = vrot.slane %v6417, %v6555
      %v6558 = vadd.f32 %v6543, %v6556
      %v6559 = vadd.f32 %v6544, %v6556
      %v6560 = vadd.f32 %v6545, %v6556
      %v6561 = vadd.f32 %v6546, %v6556
      %v6562 = vadd.f32 %v6547, %v6556
      %v6563 = vadd.f32 %v6548, %v6556
      %v6564 = vadd.f32 %v6549, %v6556
      %v6565 = vadd.f32 %v6550, %v6556
      %v6566 = vadd.f32 %v6551, %v6556
      %v6567 = vld [vmem:[%s14] sm:$0xff]
      %v6568 = vld [vmem:[%s14 + $0x8] sm:$0xff]
      %v6569 = vld [vmem:[%s14 + $0x10] sm:$0xff]
      %v6570 = vld [vmem:[%s14 + $0x18] sm:$0xff]
      %v6571 = vld [vmem:[%s15] sm:$0x1]
      %v6573 = vlaneseq
      %v6574 = vshrl.u32 %v6573, 7
      %v6575 = vsub.s32 0, %v6574
      %v6576 = vrot.slane %v6571, %v6575
      %v6579 = vsel %vm2680, %v6558, 0
      %v6582 = vsel %vm2680, %v6559, 0
      %v6585 = vsel %vm2680, %v6560, 0
      %v6588 = vsel %vm2680, %v6561, 0
      %v6591 = vsel %vm2680, %v6562, 0
      %v6594 = vsel %vm2680, %v6563, 0
      %v6597 = vsel %vm2680, %v6564, 0
      %v6600 = vsel %vm2680, %v6565, 0
      %v6603 = vsel %vm2680, %v6566, 0
      %6605 = vmatprep.subr.mxu0 0.0
      %6606 = vmatpush1.msra.mxu0 %v6567
      %6607 = vmatprep.subr.mxu0 0.0
      %6608 = vmatpush1.msra.mxu0 %v6568
      %6609 = vmatprep.subr.mxu0 0.0
      %6610 = vmatpush1.msra.mxu0 %v6569
      %6611 = vmatprep.subr.mxu0 0.0
      %6612 = vmatpush1.msra.mxu0 %v6570
      %6613 = vmatprep.subr.mxu0 0.0
      %6614 = vmatpush1.msra.mxu0 0.0
      %6615 = vmatprep.subr.mxu0 0.0
      %6616 = vmatpush1.msra.mxu0 0.0
      %6617 = vmatprep.subr.mxu0 0.0
      %6618 = vmatpush1.msra.mxu0 0.0
      %6619 = vmatprep.subr.mxu0 0.0
      %6620 = vmatpush1.msra.mxu0 0.0
      %6621 = vmatprep.subr.mxu0 0.0
      %6622 = vmatpush1.msra.mxu0 0.0
      %6623 = vmatprep.subr.mxu0 0.0
      %6624 = vmatpush1.msra.mxu0 0.0
      %6625 = vmatprep.subr.mxu0 0.0
      %6626 = vmatpush1.msra.mxu0 0.0
      %6627 = vmatprep.subr.mxu0 0.0
      %6628 = vmatpush1.msra.mxu0 0.0
      %6629 = vmatprep.subr.mxu0 0.0
      %6630 = vmatpush1.msra.mxu0 0.0
      %6631 = vmatprep.subr.mxu0 0.0
      %6632 = vmatpush1.msra.mxu0 0.0
      %6633 = vmatprep.subr.mxu0 0.0
      %6634 = vmatpush1.msra.mxu0 0.0
      %6635 = vmatprep.subr.mxu0 0.0
      %6636 = vmatpush1.msra.mxu0 0.0
      %6637 = vmatprep.subr.mxu0 0.0
      %6638 = vmatpush1.msra.mxu0 0.0
      %6639 = vmatprep.subr.mxu0 0.0
      %6640 = vmatpush1.msra.mxu0 0.0
      %6641 = vmatprep.subr.mxu0 0.0
      %6642 = vmatpush1.msra.mxu0 0.0
      %6643 = vmatprep.subr.mxu0 0.0
      %6644 = vmatpush1.msra.mxu0 0.0
      %6645 = vmatprep.subr.mxu0 0.0
      %6646 = vmatpush1.msra.mxu0 0.0
      %6647 = vmatprep.subr.mxu0 0.0
      %6648 = vmatpush1.msra.mxu0 0.0
      %6649 = vmatprep.subr.mxu0 0.0
      %6650 = vmatpush1.msra.mxu0 0.0
      %6651 = vmatprep.subr.mxu0 0.0
      %6652 = vmatpush1.msra.mxu0 0.0
      %6653 = vmatprep.subr.mxu0 0.0
      %6654 = vmatpush1.msra.mxu0 0.0
      %6655 = vmatprep.subr.mxu0 0.0
      %6656 = vmatpush1.msra.mxu0 0.0
      %6657 = vmatprep.subr.mxu0 0.0
      %6658 = vmatpush1.msra.mxu0 0.0
      %6659 = vmatprep.subr.mxu0 0.0
      %6660 = vmatpush1.msra.mxu0 0.0
      %6661 = vmatprep.subr.mxu0 0.0
      %6662 = vmatpush1.msra.mxu0 0.0
      %6663 = vmatprep.subr.mxu0 0.0
      %6664 = vmatpush1.msra.mxu0 0.0
      %6665 = vmatprep.subr.mxu0 0.0
      %6666 = vmatpush1.msra.mxu0 0.0
      %6667 = vmatprep.subr.mxu0 0.0
      %6668 = vmatpush1.msra.mxu0 0.0
      %6669 = vmatprep.mubr.f32.mxu0 0.0
      %6670 = vmatmul.mubr.f32.gmra.mrb[0].mxu0 %v6579
      %v6671 = vpop.f32.mrb[0].mxu0
      %v6672 = vadd.f32 %v6576, %v6671
      %v6673 = vpop.f32.mrb[0].mxu0
      %6674 = vmatprep.mubr.f32.mxu0 0.0
      %6675 = vmatmul.mubr.f32.gmra.mrb[0].mxu0 %v6582
      %v6676 = vpop.f32.mrb[0].mxu0
      %v6677 = vadd.f32 %v6576, %v6676
      %v6678 = vpop.f32.mrb[0].mxu0
      %6679 = vmatprep.mubr.f32.mxu0 0.0
      %6680 = vmatmul.mubr.f32.gmra.mrb[0].mxu0 %v6585
      %v6681 = vpop.f32.mrb[0].mxu0
      %v6682 = vadd.f32 %v6576, %v6681
      %v6683 = vpop.f32.mrb[0].mxu0
      %6684 = vmatprep.mubr.f32.mxu0 0.0
      %6685 = vmatmul.mubr.f32.gmra.mrb[0].mxu0 %v6588
      %v6686 = vpop.f32.mrb[0].mxu0
      %v6687 = vadd.f32 %v6576, %v6686
      %v6688 = vpop.f32.mrb[0].mxu0
      %6689 = vmatprep.mubr.f32.mxu0 0.0
      %6690 = vmatmul.mubr.f32.gmra.mrb[0].mxu0 %v6591
      %v6691 = vpop.f32.mrb[0].mxu0
      %v6692 = vadd.f32 %v6576, %v6691
      %v6693 = vpop.f32.mrb[0].mxu0
      %6694 = vmatprep.mubr.f32.mxu0 0.0
      %6695 = vmatmul.mubr.f32.gmra.mrb[0].mxu0 %v6594
      %v6696 = vpop.f32.mrb[0].mxu0
      %v6697 = vadd.f32 %v6576, %v6696
      %v6698 = vpop.f32.mrb[0].mxu0
      %6699 = vmatprep.mubr.f32.mxu0 0.0
      %6700 = vmatmul.mubr.f32.gmra.mrb[0].mxu0 %v6597
      %v6701 = vpop.f32.mrb[0].mxu0
      %v6702 = vadd.f32 %v6576, %v6701
      %v6703 = vpop.f32.mrb[0].mxu0
      %6704 = vmatprep.mubr.f32.mxu0 0.0
      %6705 = vmatmul.mubr.f32.gmra.mrb[0].mxu0 %v6600
      %v6706 = vpop.f32.mrb[0].mxu0
      %v6707 = vadd.f32 %v6576, %v6706
      %v6708 = vpop.f32.mrb[0].mxu0
      %6709 = vmatprep.mubr.f32.mxu0 0.0
      %6710 = vmatmul.mubr.f32.gmra.mrb[0].mxu0 %v6603
      %v6711 = vpop.f32.mrb[0].mxu0
      %v6712 = vadd.f32 %v6576, %v6711
      %v6713 = vpop.f32.mrb[0].mxu0
      %6714 = vdwg.mxu0
      %v6715 = vmax.f32 %v6672, 0.0
      %v6716 = vmax.f32 %v6677, 0.0
      %v6717 = vmax.f32 %v6682, 0.0
      %v6718 = vmax.f32 %v6687, 0.0
      %v6719 = vmax.f32 %v6692, 0.0
      %v6720 = vmax.f32 %v6697, 0.0
      %v6721 = vmax.f32 %v6702, 0.0
      %v6722 = vmax.f32 %v6707, 0.0
      %v6723 = vmax.f32 %v6712, 0.0
      %v6724 = vld [vmem:[%s16] sm:$0xff]
      %v6725 = vld [vmem:[%s16 + $0x8] sm:$0xff]
      %v6726 = vld [vmem:[%s17] sm:$0x1]
      %v6728 = vlaneseq
      %v6729 = vshrl.u32 %v6728, 7
      %v6730 = vsub.s32 0, %v6729
      %v6731 = vrot.slane %v6726, %v6730
      %vm6733 = vcmask 130048
      %v6735 = vsel %vm6733, %v6715, 0
      %v6738 = vsel %vm6733, %v6716, 0
      %v6741 = vsel %vm6733, %v6717, 0
      %v6744 = vsel %vm6733, %v6718, 0
      %v6747 = vsel %vm6733, %v6719, 0
      %v6750 = vsel %vm6733, %v6720, 0
      %v6753 = vsel %vm6733, %v6721, 0
      %v6756 = vsel %vm6733, %v6722, 0
      %v6759 = vsel %vm6733, %v6723, 0
      %6761 = vmatprep.subr.mxu0 0.0
      %6762 = vmatpush1.msra.mxu0 %v6724
      %6763 = vmatprep.subr.mxu0 0.0
      %6764 = vmatpush1.msra.mxu0 %v6725
      %6765 = vmatprep.subr.mxu0 0.0
      %6766 = vmatpush1.msra.mxu0 0.0
      %6767 = vmatprep.subr.mxu0 0.0
      %6768 = vmatpush1.msra.mxu0 0.0
      %6769 = vmatprep.subr.mxu0 0.0
      %6770 = vmatpush1.msra.mxu0 0.0
      %6771 = vmatprep.subr.mxu0 0.0
      %6772 = vmatpush1.msra.mxu0 0.0
      %6773 = vmatprep.subr.mxu0 0.0
      %6774 = vmatpush1.msra.mxu0 0.0
      %6775 = vmatprep.subr.mxu0 0.0
      %6776 = vmatpush1.msra.mxu0 0.0
      %6777 = vmatprep.subr.mxu0 0.0
      %6778 = vmatpush1.msra.mxu0 0.0
      %6779 = vmatprep.subr.mxu0 0.0
      %6780 = vmatpush1.msra.mxu0 0.0
      %6781 = vmatprep.subr.mxu0 0.0
      %6782 = vmatpush1.msra.mxu0 0.0
      %6783 = vmatprep.subr.mxu0 0.0
      %6784 = vmatpush1.msra.mxu0 0.0
      %6785 = vmatprep.subr.mxu0 0.0
      %6786 = vmatpush1.msra.mxu0 0.0
      %6787 = vmatprep.subr.mxu0 0.0
      %6788 = vmatpush1.msra.mxu0 0.0
      %6789 = vmatprep.subr.mxu0 0.0
      %6790 = vmatpush1.msra.mxu0 0.0
      %6791 = vmatprep.subr.mxu0 0.0
      %6792 = vmatpush1.msra.mxu0 0.0
      %6793 = vmatprep.subr.mxu0 0.0
      %6794 = vmatpush1.msra.mxu0 0.0
      %6795 = vmatprep.subr.mxu0 0.0
      %6796 = vmatpush1.msra.mxu0 0.0
      %6797 = vmatprep.subr.mxu0 0.0
      %6798 = vmatpush1.msra.mxu0 0.0
      %6799 = vmatprep.subr.mxu0 0.0
      %6800 = vmatpush1.msra.mxu0 0.0
      %6801 = vmatprep.subr.mxu0 0.0
      %6802 = vmatpush1.msra.mxu0 0.0
      %6803 = vmatprep.subr.mxu0 0.0
      %6804 = vmatpush1.msra.mxu0 0.0
      %6805 = vmatprep.subr.mxu0 0.0
      %6806 = vmatpush1.msra.mxu0 0.0
      %6807 = vmatprep.subr.mxu0 0.0
      %6808 = vmatpush1.msra.mxu0 0.0
      %6809 = vmatprep.subr.mxu0 0.0
      %6810 = vmatpush1.msra.mxu0 0.0
      %6811 = vmatprep.subr.mxu0 0.0
      %6812 = vmatpush1.msra.mxu0 0.0
      %6813 = vmatprep.subr.mxu0 0.0
      %6814 = vmatpush1.msra.mxu0 0.0
      %6815 = vmatprep.subr.mxu0 0.0
      %6816 = vmatpush1.msra.mxu0 0.0
      %6817 = vmatprep.subr.mxu0 0.0
      %6818 = vmatpush1.msra.mxu0 0.0
      %6819 = vmatprep.subr.mxu0 0.0
      %6820 = vmatpush1.msra.mxu0 0.0
      %6821 = vmatprep.subr.mxu0 0.0
      %6822 = vmatpush1.msra.mxu0 0.0
      %6823 = vmatprep.subr.mxu0 0.0
      %6824 = vmatpush1.msra.mxu0 0.0
      %6825 = vmatprep.mubr.f32.mxu0 0.0
      %6826 = vmatmul.mubr.f32.gmra.mrb[0].mxu0 %v6735
      %v6827 = vpop.f32.mrb[0].mxu0
      %v6828 = vadd.f32 %v6731, %v6827
      %v6829 = vpop.f32.mrb[0].mxu0
      %6830 = vmatprep.mubr.f32.mxu0 0.0
      %6831 = vmatmul.mubr.f32.gmra.mrb[0].mxu0 %v6738
      %v6832 = vpop.f32.mrb[0].mxu0
      %v6833 = vadd.f32 %v6731, %v6832
      %v6834 = vpop.f32.mrb[0].mxu0
      %6835 = vmatprep.mubr.f32.mxu0 0.0
      %6836 = vmatmul.mubr.f32.gmra.mrb[0].mxu0 %v6741
      %v6837 = vpop.f32.mrb[0].mxu0
      %v6838 = vadd.f32 %v6731, %v6837
      %v6839 = vpop.f32.mrb[0].mxu0
      %6840 = vmatprep.mubr.f32.mxu0 0.0
      %6841 = vmatmul.mubr.f32.gmra.mrb[0].mxu0 %v6744
      %v6842 = vpop.f32.mrb[0].mxu0
      %v6843 = vadd.f32 %v6731, %v6842
      %v6844 = vpop.f32.mrb[0].mxu0
      %6845 = vmatprep.mubr.f32.mxu0 0.0
      %6846 = vmatmul.mubr.f32.gmra.mrb[0].mxu0 %v6747
      %v6847 = vpop.f32.mrb[0].mxu0
      %v6848 = vadd.f32 %v6731, %v6847
      %v6849 = vpop.f32.mrb[0].mxu0
      %6850 = vmatprep.mubr.f32.mxu0 0.0
      %6851 = vmatmul.mubr.f32.gmra.mrb[0].mxu0 %v6750
      %v6852 = vpop.f32.mrb[0].mxu0
      %v6853 = vadd.f32 %v6731, %v6852
      %v6854 = vpop.f32.mrb[0].mxu0
      %6855 = vmatprep.mubr.f32.mxu0 0.0
      %6856 = vmatmul.mubr.f32.gmra.mrb[0].mxu0 %v6753
      %v6857 = vpop.f32.mrb[0].mxu0
      %v6858 = vadd.f32 %v6731, %v6857
      %v6859 = vpop.f32.mrb[0].mxu0
      %6860 = vmatprep.mubr.f32.mxu0 0.0
      %6861 = vmatmul.mubr.f32.gmra.mrb[0].mxu0 %v6756
      %v6862 = vpop.f32.mrb[0].mxu0
      %v6863 = vadd.f32 %v6731, %v6862
      %v6864 = vpop.f32.mrb[0].mxu0
      %6865 = vmatprep.mubr.f32.mxu0 0.0
      %6866 = vmatmul.mubr.f32.gmra.mrb[0].mxu0 %v6759
      %v6867 = vpop.f32.mrb[0].mxu0
      %v6868 = vadd.f32 %v6731, %v6867
      %v6869 = vpop.f32.mrb[0].mxu0
      %6870 = vdwg.mxu0
      %v6871 = vadd.f32 %v6558, %v6828
      %v6872 = vadd.f32 %v6559, %v6833
      %v6873 = vadd.f32 %v6560, %v6838
      %v6874 = vadd.f32 %v6561, %v6843
      %v6875 = vadd.f32 %v6562, %v6848
      %v6876 = vadd.f32 %v6563, %v6853
      %v6877 = vadd.f32 %v6564, %v6858
      %v6878 = vadd.f32 %v6565, %v6863
      %v6879 = vadd.f32 %v6566, %v6868
      %v6880 = vld [vmem:[%s18] sm:$0x1]
      %v6881 = vld [vmem:[%s19] sm:$0x1]
      %v6882 = vsel %vm2680, %v6871, 0.0
      %6883 = vadd.xlane.f32.xlu0 %v6882
      %v6884 = vpop.xlane.xlu0 %6883
      %v6885 = vsel %vm2680, %v6872, 0.0
      %6886 = vadd.xlane.f32.xlu0 %v6885
      %v6887 = vpop.xlane.xlu0 %6886
      %v6888 = vsel %vm2680, %v6873, 0.0
      %6889 = vadd.xlane.f32.xlu0 %v6888
      %v6890 = vpop.xlane.xlu0 %6889
      %v6891 = vsel %vm2680, %v6874, 0.0
      %6892 = vadd.xlane.f32.xlu0 %v6891
      %v6893 = vpop.xlane.xlu0 %6892
      %v6894 = vsel %vm2680, %v6875, 0.0
      %6895 = vadd.xlane.f32.xlu0 %v6894
      %v6896 = vpop.xlane.xlu0 %6895
      %v6897 = vsel %vm2680, %v6876, 0.0
      %6898 = vadd.xlane.f32.xlu0 %v6897
      %v6899 = vpop.xlane.xlu0 %6898
      %v6900 = vsel %vm2680, %v6877, 0.0
      %6901 = vadd.xlane.f32.xlu0 %v6900
      %v6902 = vpop.xlane.xlu0 %6901
      %v6903 = vsel %vm2680, %v6878, 0.0
      %6904 = vadd.xlane.f32.xlu0 %v6903
      %v6905 = vpop.xlane.xlu0 %6904
      %v6906 = vsel %vm6442, %v6879, 0.0
      %6907 = vadd.xlane.f32.xlu0 %v6906
      %v6908 = vpop.xlane.xlu0 %6907
      %v6909 = vmul.f32 %v6884, %v6446
      %v6910 = vmul.f32 %v6887, %v6446
      %v6911 = vmul.f32 %v6890, %v6446
      %v6912 = vmul.f32 %v6893, %v6446
      %v6913 = vmul.f32 %v6896, %v6446
      %v6914 = vmul.f32 %v6899, %v6446
      %v6915 = vmul.f32 %v6902, %v6446
      %v6916 = vmul.f32 %v6905, %v6446
      %v6917 = vmul.f32 %v6908, %v6446
      %v6918 = vsub.f32 %v6871, %v6909
      %v6919 = vsub.f32 %v6872, %v6910
      %v6920 = vsub.f32 %v6873, %v6911
      %v6921 = vsub.f32 %v6874, %v6912
      %v6922 = vsub.f32 %v6875, %v6913
      %v6923 = vsub.f32 %v6876, %v6914
      %v6924 = vsub.f32 %v6877, %v6915
      %v6925 = vsub.f32 %v6878, %v6916
      %v6926 = vsub.f32 %v6879, %v6917
      %v6927 = vmul.f32 %v6918, %v6918
      %v6928 = vmul.f32 %v6919, %v6919
      %v6929 = vmul.f32 %v6920, %v6920
      %v6930 = vmul.f32 %v6921, %v6921
      %v6931 = vmul.f32 %v6922, %v6922
      %v6932 = vmul.f32 %v6923, %v6923
      %v6933 = vmul.f32 %v6924, %v6924
      %v6934 = vmul.f32 %v6925, %v6925
      %v6935 = vmul.f32 %v6926, %v6926
      %v6936 = vsel %vm2680, %v6927, 0.0
      %6937 = vadd.xlane.f32.xlu0 %v6936
      %v6938 = vpop.xlane.xlu0 %6937
      %v6939 = vsel %vm2680, %v6928, 0.0
      %6940 = vadd.xlane.f32.xlu0 %v6939
      %v6941 = vpop.xlane.xlu0 %6940
      %v6942 = vsel %vm2680, %v6929, 0.0
      %6943 = vadd.xlane.f32.xlu0 %v6942
      %v6944 = vpop.xlane.xlu0 %6943
      %v6945 = vsel %vm2680, %v6930, 0.0
      %6946 = vadd.xlane.f32.xlu0 %v6945
      %v6947 = vpop.xlane.xlu0 %6946
      %v6948 = vsel %vm2680, %v6931, 0.0
      %6949 = vadd.xlane.f32.xlu0 %v6948
      %v6950 = vpop.xlane.xlu0 %6949
      %v6951 = vsel %vm2680, %v6932, 0.0
      %6952 = vadd.xlane.f32.xlu0 %v6951
      %v6953 = vpop.xlane.xlu0 %6952
      %v6954 = vsel %vm2680, %v6933, 0.0
      %6955 = vadd.xlane.f32.xlu0 %v6954
      %v6956 = vpop.xlane.xlu0 %6955
      %v6957 = vsel %vm2680, %v6934, 0.0
      %6958 = vadd.xlane.f32.xlu0 %v6957
      %v6959 = vpop.xlane.xlu0 %6958
      %v6960 = vsel %vm6442, %v6935, 0.0
      %6961 = vadd.xlane.f32.xlu0 %v6960
      %v6962 = vpop.xlane.xlu0 %6961
      %v6963 = vmul.f32 %v6938, %v6446
      %v6964 = vmul.f32 %v6941, %v6446
      %v6965 = vmul.f32 %v6944, %v6446
      %v6966 = vmul.f32 %v6947, %v6446
      %v6967 = vmul.f32 %v6950, %v6446
      %v6968 = vmul.f32 %v6953, %v6446
      %v6969 = vmul.f32 %v6956, %v6446
      %v6970 = vmul.f32 %v6959, %v6446
      %v6971 = vmul.f32 %v6962, %v6446
      %v6972 = vadd.f32 %v6963, 1e-05
      %v6973 = vadd.f32 %v6964, 1e-05
      %v6974 = vadd.f32 %v6965, 1e-05
      %v6975 = vadd.f32 %v6966, 1e-05
      %v6976 = vadd.f32 %v6967, 1e-05
      %v6977 = vadd.f32 %v6968, 1e-05
      %v6978 = vadd.f32 %v6969, 1e-05
      %v6979 = vadd.f32 %v6970, 1e-05
      %v6980 = vadd.f32 %v6971, 1e-05
      %v6981 = vrsqrt.pop %v6972
      %v6982 = vrsqrt.pop %v6973
      %v6983 = vrsqrt.pop %v6974
      %v6984 = vrsqrt.pop %v6975
      %v6985 = vrsqrt.pop %v6976
      %v6986 = vrsqrt.pop %v6977
      %v6987 = vrsqrt.pop %v6978
      %v6988 = vrsqrt.pop %v6979
      %v6989 = vrsqrt.pop %v6980
      %v6990 = vmul.f32 %v6918, %v6981
      %v6991 = vmul.f32 %v6919, %v6982
      %v6992 = vmul.f32 %v6920, %v6983
      %v6993 = vmul.f32 %v6921, %v6984
      %v6994 = vmul.f32 %v6922, %v6985
      %v6995 = vmul.f32 %v6923, %v6986
      %v6996 = vmul.f32 %v6924, %v6987
      %v6997 = vmul.f32 %v6925, %v6988
      %v6998 = vmul.f32 %v6926, %v6989
      %v7000 = vlaneseq
      %v7001 = vshrl.u32 %v7000, 7
      %v7002 = vsub.s32 0, %v7001
      %v7003 = vrot.slane %v6880, %v7002
      %v7005 = vmul.f32 %v6990, %v7003
      %v7006 = vmul.f32 %v6991, %v7003
      %v7007 = vmul.f32 %v6992, %v7003
      %v7008 = vmul.f32 %v6993, %v7003
      %v7009 = vmul.f32 %v6994, %v7003
      %v7010 = vmul.f32 %v6995, %v7003
      %v7011 = vmul.f32 %v6996, %v7003
      %v7012 = vmul.f32 %v6997, %v7003
      %v7013 = vmul.f32 %v6998, %v7003
      %v7015 = vlaneseq
      %v7016 = vshrl.u32 %v7015, 7
      %v7017 = vsub.s32 0, %v7016
      %v7018 = vrot.slane %v6881, %v7017
      %v7020 = vadd.f32 %v7005, %v7018
      %v7021 = vadd.f32 %v7006, %v7018
      %v7022 = vadd.f32 %v7007, %v7018
      %v7023 = vadd.f32 %v7008, %v7018
      %v7024 = vadd.f32 %v7009, %v7018
      %v7025 = vadd.f32 %v7010, %v7018
      %v7026 = vadd.f32 %v7011, %v7018
      %v7027 = vadd.f32 %v7012, %v7018
      %v7028 = vadd.f32 %v7013, %v7018
      %v7029 = vmax.f32 %v7020, 0.0
      %v7030 = vmax.f32 %v7021, 0.0
      %v7031 = vmax.f32 %v7022, 0.0
      %v7032 = vmax.f32 %v7023, 0.0
      %v7033 = vmax.f32 %v7024, 0.0
      %v7034 = vmax.f32 %v7025, 0.0
      %v7035 = vmax.f32 %v7026, 0.0
      %v7036 = vmax.f32 %v7027, 0.0
      %v7037 = vmax.f32 %v7028, 0.0
      %7038 = vst.msk [vmem:[%s629] sm:$0xff] %vm2680, %v7029
      %7039 = vst.msk [vmem:[%s629 + $0x8] sm:$0xff] %vm2680, %v7030
      %7040 = vst.msk [vmem:[%s629 + $0x10] sm:$0xff] %vm2680, %v7031
      %7041 = vst.msk [vmem:[%s629 + $0x18] sm:$0xff] %vm2680, %v7032
      %7042 = vst.msk [vmem:[%s629 + $0x20] sm:$0xff] %vm2680, %v7033
      %7043 = vst.msk [vmem:[%s629 + $0x28] sm:$0xff] %vm2680, %v7034
      %7044 = vst.msk [vmem:[%s629 + $0x30] sm:$0xff] %vm2680, %v7035
      %7045 = vst.msk [vmem:[%s629 + $0x38] sm:$0xff] %vm2680, %v7036
      %7046 = vst.msk [vmem:[%s629 + $0x40] sm:$0x1] %vm6442, %v7037
      %p7047 = scmp.lt.s32.totalorder %s31, 1
      %s7048 = scalar_select %p7047, %s31, 1
      %s7049 = smul.addr %s7048, 9
      %s7050 = smul.addr %s7049, 8
      %s7051 = scalar_lea.vmem %s20, %s7050
      // Predicated region
      $region101: #{tpu_custom_call.1} parent=99 // pred_check
        %p7052 = pneg %p474
      $region102: #{tpu_custom_call.1} parent=99 // pred_check_branch
        %7054 = sbr.rel (%p7052) target = $region104
      $region103: #{tpu_custom_call.1} parent=99 // pred_region
        _
      $region104: #{tpu_custom_call.1} parent=99 // pred_fallthru
        _
    $region100: #{tpu_custom_call.1} parent=5 // pred_fallthru
      _
    %p7055 = scmp.le.s32.totalorder 2, %s26
    // Predicated region
    $region105: #{tpu_custom_call.1} parent=5 // pred_check
      %p7056 = pneg %p7055
    $region106: #{tpu_custom_call.1} parent=5 // pred_check_branch
      %7058 = sbr.rel (%p7056) target = $region108
    $region107: #{tpu_custom_call.1} parent=5 // pred_region
      %s7059 = ssub.s32 %s26, 2
      // Predicated region
      $region109: #{tpu_custom_call.1} parent=107 // pred_check
        %p7060 = pneg %p480
      $region110: #{tpu_custom_call.1} parent=107 // pred_check_branch
        %7062 = sbr.rel (%p7060) target = $region112
      $region111: #{tpu_custom_call.1} parent=107 // pred_region
        %p7063 = scmp.lt.s32.totalorder %s32, 1
        %s7064 = scalar_select %p7063, %s32, 1
        %s7065 = smul.addr %s7064, 9
        %s7066 = smul.addr %s7065, 8
        %s7067 = scalar_lea.vmem %s20, %s7066
      $region112: #{tpu_custom_call.1} parent=107 // pred_fallthru
        _
    $region108: #{tpu_custom_call.1} parent=5 // pred_fallthru
      _
  $region6: #{tpu_custom_call.1} parent=0 // loop_footer
    %s30 = sadd.s32 1, %s26
  $region7: #{tpu_custom_call.1} parent=0 // loop_footer_branch
    %25 = sbr.rel target = $region3
  $region8: #{tpu_custom_call.1} parent=0 // loop_exit
    _

</llo_original>
